<compile_context>
chip_gen: v7x
topology: tpu7x:2x2x1
jax: 0.10.0
libtpu: 0.0.40
codegen_flags: <defaults>
</compile_context>

<pallas_src>
import math

import jax
import jax.numpy as jnp
from jax import lax
from jax.experimental import pallas as pl
from jax.experimental.pallas import tpu as pltpu

# ---- configuration (mirrors cfg passed to MaxPoolNetwork.__init__) ----
CFG = dict(
    num_features=8,
    layerwidth=32,
    num_layers=2,
    upper_spectral_norm=0.0,   # 0 => make_linear returns a plain nn.Linear
    num_power_iterations=1,
    do_neural_augment=True,
    probab1=0.7,
)
CTC = 4         # constants.CTC: number of "contact" leaf nodes
NUM_NODES = 8   # total nodes per example (CTC contact + NUM_NODES-CTC obs)
BATCH = 2

TILE_B = 128                     # examples per grid step (lane-dense output rows)
_N_LINEARS = CFG["num_layers"] + 1   # linears per sub-network (leaf & backbone)


def _gelu_exact(x):
    # torch nn.GELU() default: exact erf formulation.
    return 0.5 * x * (1.0 + lax.erf(x * jnp.float32(1.0 / math.sqrt(2.0))))


# --------------------------- Pallas kernel ----------------------------------
def maxpool_net_kernel(x_ref, fp_ref, lw_ref, lb_ref, bw_ref, bb_ref, bl_ref,
                       out_ref):
    # Static shape bookkeeping (all python ints at trace time).
    R, F = x_ref.shape                  # R = TILE_B * N node rows
    TB = fp_ref.shape[1]                # examples in this tile
    N = R // TB                         # nodes per example
    W2 = lw_ref.shape[1]                # 2 * layerwidth (contact | obs fused)
    W = W2 // 2
    half = W // 2
    L = bw_ref.shape[0] // W            # num_layers (backbone hidden layers)

    x = x_ref[...]                      # (R, F) f32
    lw = lw_ref[...]                    # (F + L*W2, W2) fused leaf weights
    lb = lb_ref[...]                    # (L+1, W2)      fused leaf biases
    bw = bw_ref[...]                    # (L*W, W)       backbone weights
    bb = bb_ref[...]                    # (L, W)         backbone biases
    bl = bl_ref[...]                    # (W+1, 1)       last weight column + last bias

    # ---- fused block-diagonal leaf MLP (contact-half | obs-half) over all rows ----
    h = jnp.dot(x, lw[0:F, :], preferred_element_type=jnp.float32) + lb[0:1, :]
    h = _gelu_exact(h)
    for i in range(1, L + 1):
        w_i = lw[F + (i - 1) * W2: F + i * W2, :]
        h = jnp.dot(h, w_i, preferred_element_type=jnp.float32) + lb[i:i + 1, :]
        if i < L:                       # no GELU after the final leaf linear
            h = _gelu_exact(h)

    # Select the contact half for the first CTC nodes of each example, obs half else.
    ridx = lax.broadcasted_iota(jnp.int32, (R, W), 0)
    if (N & (N - 1)) == 0:              # N is a power of two (8 here)
        node_idx = jnp.bitwise_and(ridx, N - 1)
    else:
        node_idx = jnp.mod(ridx, N)
    node = jnp.where(node_idx < CTC, h[:, 0:W], h[:, W:W2])        # (R, W)

    # ---- pooling over nodes: masked mean (first half) + unmasked max (second half) ----
    valid16 = jnp.where(x[:, 0:1] >= 0.0,
                        jnp.ones((1, half), jnp.float32),
                        jnp.float32(0.0))                           # (R, half)
    feat_sum = jnp.sum((node[:, 0:half] * valid16).reshape(TB, N, half), axis=1)
    cnt = jnp.sum(valid16.reshape(TB, N, half), axis=1) + jnp.float32(1e-9)
    feat_mean = feat_sum / cnt                                      # (TB, half)
    feat_max = jnp.max(node[:, half:W].reshape(TB, N, half), axis=1)  # (TB, half)

    # ---- backbone MLP (first layer weight split avoids concatenating mean|max) ----
    t = (jnp.dot(feat_mean, bw[0:half, :], preferred_element_type=jnp.float32)
         + jnp.dot(feat_max, bw[half:W, :], preferred_element_type=jnp.float32)
         + bb[0:1, :])
    t = _gelu_exact(t)
    for i in range(1, L):
        t = (jnp.dot(t, bw[i * W:(i + 1) * W, :],
                     preferred_element_type=jnp.float32) + bb[i:i + 1, :])
        t = _gelu_exact(t)

    # Final (W -> 1) layer as a VPU reduce on the transposed tile: the result is a
    # lane-dense (1, TB) row -> single unmasked store, MXU stays free.
    t_t = t.T                                                       # (W, TB)
    logits = jnp.sum(t_t * bl[0:W, :], axis=0, keepdims=True) + bl[W:W + 1, :]
    logits = logits * jnp.float32(CFG["probab1"])
    if CFG["do_neural_augment"]:
        logits = logits + fp_ref[...]                               # (1, TB)
    out_ref[...] = logits


# ---------------------- parameter packing for the kernel --------------------
def pack_params(params):
    """Pack the 18 per-layer tensors into 5 lane-dense slabs."""
    per = 2 * _N_LINEARS
    c, o, k = params[:per], params[per:2 * per], params[2 * per:]
    c_ws, c_bs = c[0::2], c[1::2]
    o_ws, o_bs = o[0::2], o[1::2]
    k_ws, k_bs = k[0::2], k[1::2]
    W = CFG["layerwidth"]
    L = CFG["num_layers"]

    # Fused leaf net: layer 0 is (F, 2W) = [Wc0 | Wo0]; deeper layers block-diag
    # (2W, 2W) so the two sub-networks remain independent through the stack.
    blocks = [jnp.concatenate([c_ws[0], o_ws[0]], axis=1)]
    z = jnp.zeros((W, W), jnp.float32)
    for i in range(1, L + 1):
        blocks.append(jnp.concatenate(
            [jnp.concatenate([c_ws[i], z], axis=1),
             jnp.concatenate([z, o_ws[i]], axis=1)], axis=0))
    leaf_w = jnp.concatenate(blocks, axis=0)                        # (F + L*2W, 2W)
    leaf_b = jnp.concatenate(
        [jnp.concatenate([c_bs[i], o_bs[i]], axis=1) for i in range(L + 1)],
        axis=0)                                                     # (L+1, 2W)

    bb_w = jnp.concatenate(k_ws[:-1], axis=0)                       # (L*W, W)
    bb_b = jnp.concatenate(k_bs[:-1], axis=0)                       # (L, W)
    bb_last = jnp.concatenate([k_ws[-1], k_bs[-1]], axis=0)         # (W+1, 1)
    return leaf_w, leaf_b, bb_w, bb_b, bb_last


# ------------------------------- wrapper -------------------------------------
def maxpool_network_forward(x, fn_pred, params, *, tile_b=TILE_B):
    B, N, F = x.shape
    leaf_w, leaf_b, bb_w, bb_b, bb_last = pack_params(params)

    num_tiles = pl.cdiv(B, tile_b)
    Bp = num_tiles * tile_b
    # Pad the batch to a whole number of tiles; padded rows are zeros (harmless,
    # their logits are sliced off below).
    x2 = jnp.pad(x.astype(jnp.float32),
                 ((0, Bp - B), (0, 0), (0, 0))).reshape(Bp * N, F)
    fp = jnp.pad(fn_pred.astype(jnp.float32),
                 (0, Bp - B)).reshape(num_tiles, 1, tile_b)

    out = pl.pallas_call(
        maxpool_net_kernel,
        out_shape=jax.ShapeDtypeStruct((num_tiles, 1, tile_b), jnp.float32),
        grid=(num_tiles,),
        in_specs=[
            pl.BlockSpec((tile_b * N, F), lambda i: (i, 0)),        # node rows
            pl.BlockSpec((None, 1, tile_b), lambda i: (i, 0, 0)),   # fn_pred (lane-dense)
            pl.BlockSpec(leaf_w.shape, lambda i: (0, 0)),           # param slabs:
            pl.BlockSpec(leaf_b.shape, lambda i: (0, 0)),           #   constant blocks,
            pl.BlockSpec(bb_w.shape, lambda i: (0, 0)),             #   fetched once and
            pl.BlockSpec(bb_b.shape, lambda i: (0, 0)),             #   kept resident
            pl.BlockSpec(bb_last.shape, lambda i: (0, 0)),
        ],
        out_specs=pl.BlockSpec((None, 1, tile_b), lambda i: (i, 0, 0)),
        compiler_params=pltpu.CompilerParams(
            dimension_semantics=("parallel",),       # 2x on v7x dual-TC
            vmem_limit_bytes=32 * 1024 * 1024,       # safe on v5e/v6e/v7x
        ),
    )(x2, fp, leaf_w, leaf_b, bb_w, bb_b, bb_last)
    return out.reshape(Bp)[:B]      # torch.squeeze(logits, 1)


# ---------------- deterministic parameter init (mirrors nn.Linear) ----------
def _init_linear(key, fan_in, fan_out):
    kw, kb = jax.random.split(key)
    bound = 1.0 / math.sqrt(fan_in)
    w = jax.random.uniform(kw, (fan_in, fan_out), jnp.float32, -bound, bound)
    b = jax.random.uniform(kb, (1, fan_out), jnp.float32, -bound, bound)
    return w, b


def init_params(key):
    F, W, L = CFG["num_features"], CFG["layerwidth"], CFG["num_layers"]
    leaf_dims = [(F, W)] + [(W, W)] * (L - 1) + [(W, W)]
    backbone_dims = [(W, W)] * L + [(W, 1)]
    flat = []
    for dims in (leaf_dims, leaf_dims, backbone_dims):   # contact, obs, backbone
        for (fi, fo) in dims:
            key, sub = jax.random.split(key)
            w, b = _init_linear(sub, fi, fo)
            flat += [w, b]
    return flat


# ---------------- pure-JAX reference (for correctness check) ----------------
def _mlp(h, ws, bs):
    n = len(ws)
    for i in range(n):
        h = jnp.dot(h, ws[i], preferred_element_type=jnp.float32) + bs[i]
        if i < n - 1:
            h = _gelu_exact(h)
    return h


def reference_forward(x, fn_pred, params):
    per = 2 * _N_LINEARS
    c_vals, o_vals, b_vals = params[:per], params[per:2 * per], params[2 * per:]
    c_ws, c_bs = c_vals[0::2], c_vals[1::2]
    o_ws, o_bs = o_vals[0::2], o_vals[1::2]
    k_ws, k_bs = b_vals[0::2], b_vals[1::2]

    W = CFG["layerwidth"]
    half = W // 2
    valid = (x[:, :, 0] >= 0).astype(jnp.float32)
    mask = valid / (jnp.sum(valid, axis=1, keepdims=True) + 1e-9)
    hc = _mlp(x[:, :CTC, :], c_ws, c_bs)
    ho = _mlp(x[:, CTC:, :], o_ws, o_bs)
    node = jnp.concatenate([hc, ho], axis=1)
    feat_mean = jnp.sum(node[:, :, :half] * mask[:, :, None], axis=1)
    feat_max = jnp.max(node[:, :, half:], axis=1)
    bf = jnp.concatenate([feat_mean, feat_max], axis=1)
    logits = _mlp(bf, k_ws, k_bs)[:, 0]
    logits = logits * CFG["probab1"]
    if CFG["do_neural_augment"]:
        logits = logits + fn_pred
    return logits


if __name__ == "__main__":
    key = jax.random.PRNGKey(0)
    kx, kf, kp = jax.random.split(key, 3)
    x = jax.random.normal(kx, (BATCH, NUM_NODES, CFG["num_features"]), jnp.float32)
    fn_pred = jax.random.normal(kf, (BATCH,), jnp.float32)
    params = init_params(kp)

    # Small-shape check (B=2, padded to one 128-example tile).
    logits = jax.block_until_ready(maxpool_network_forward(x, fn_pred, params))
    ref = reference_forward(x, fn_pred, params)
    assert logits.shape == (BATCH,)
    assert jnp.allclose(logits, ref, atol=1e-4, rtol=1e-4), (logits, ref)

    # Larger batch exercising multiple grid tiles + padding of the last tile.
    B2 = 300
    kx2, kf2 = jax.random.split(kx)
    x_big = jax.random.normal(kx2, (B2, NUM_NODES, CFG["num_features"]), jnp.float32)
    fn_big = jax.random.normal(kf2, (B2,), jnp.float32)
    logits_big = jax.block_until_ready(maxpool_network_forward(x_big, fn_big, params))
    ref_big = reference_forward(x_big, fn_big, params)
    assert logits_big.shape == (B2,)
    assert jnp.allclose(logits_big, ref_big, atol=1e-4, rtol=1e-4)

    # TODO(synk): spectral_norm power-iteration path (upper_spectral_norm > 0)
    # and training-mode Dropout RNG are not modeled; cfg uses the plain-Linear,
    # eval-mode configuration.
    print("KERNEL_OK")
</pallas_src>

<mosaic_0001>
module attributes {stable_mosaic.version = 11 : i64} {
  func.func @maxpool_net_kernel(%arg0: i32, %arg1: memref<1024x8xf32, #tpu.memory_space<vmem>>, %arg2: memref<1x1x128xf32, #tpu.memory_space<vmem>>, %arg3: memref<136x64xf32, #tpu.memory_space<vmem>>, %arg4: memref<3x64xf32, #tpu.memory_space<vmem>>, %arg5: memref<64x32xf32, #tpu.memory_space<vmem>>, %arg6: memref<2x32xf32, #tpu.memory_space<vmem>>, %arg7: memref<33x1xf32, #tpu.memory_space<vmem>>, %arg8: memref<1x1x128xf32, #tpu.memory_space<vmem>>) attributes {dimension_semantics = [#tpu.dimension_semantics<parallel>], iteration_bounds = array<i64: 1>, scalar_prefetch = 0 : i64, scratch_operands = 0 : i64, tpu.core_type = #tpu.core_type<tc>, window_params = [{transform_indices = @transform_0, window_bounds = array<i64: 1024, 8>}, {transform_indices = @transform_1, window_bounds = array<i64: 1, 1, 128>}, {pipeline_mode = #tpu.pipeline_mode<synchronous>, transform_indices = @transform_2, window_bounds = array<i64: 136, 64>}, {pipeline_mode = #tpu.pipeline_mode<synchronous>, transform_indices = @transform_3, window_bounds = array<i64: 3, 64>}, {pipeline_mode = #tpu.pipeline_mode<synchronous>, transform_indices = @transform_4, window_bounds = array<i64: 64, 32>}, {pipeline_mode = #tpu.pipeline_mode<synchronous>, transform_indices = @transform_5, window_bounds = array<i64: 2, 32>}, {pipeline_mode = #tpu.pipeline_mode<synchronous>, transform_indices = @transform_6, window_bounds = array<i64: 33, 1>}, {transform_indices = @transform_7, window_bounds = array<i64: 1, 1, 128>}]} {
    %c0 = arith.constant 0 : index
    %c0_0 = arith.constant 0 : index
    %0 = vector.load %arg1[%c0, %c0_0] : memref<1024x8xf32, #tpu.memory_space<vmem>>, vector<1024x8xf32>
    %c0_1 = arith.constant 0 : index
    %c0_2 = arith.constant 0 : index
    %1 = vector.load %arg3[%c0_1, %c0_2] : memref<136x64xf32, #tpu.memory_space<vmem>>, vector<136x64xf32>
    %c0_3 = arith.constant 0 : index
    %c0_4 = arith.constant 0 : index
    %2 = vector.load %arg4[%c0_3, %c0_4] : memref<3x64xf32, #tpu.memory_space<vmem>>, vector<3x64xf32>
    %c0_5 = arith.constant 0 : index
    %c0_6 = arith.constant 0 : index
    %3 = vector.load %arg5[%c0_5, %c0_6] : memref<64x32xf32, #tpu.memory_space<vmem>>, vector<64x32xf32>
    %c0_7 = arith.constant 0 : index
    %c0_8 = arith.constant 0 : index
    %4 = vector.load %arg6[%c0_7, %c0_8] : memref<2x32xf32, #tpu.memory_space<vmem>>, vector<2x32xf32>
    %c0_9 = arith.constant 0 : index
    %c0_10 = arith.constant 0 : index
    %5 = vector.load %arg7[%c0_9, %c0_10] : memref<33x1xf32, #tpu.memory_space<vmem>>, vector<33x1xf32>
    %6 = vector.extract_strided_slice %1 {offsets = [0, 0], sizes = [8, 64], strides = [1, 1]} : vector<136x64xf32> to vector<8x64xf32>
    %cst = arith.constant dense<0.000000e+00> : vector<1024x64xf32>
    %7 = tpu.matmul %0, %6, %cst {dimension_numbers = #tpu.dot_dimension_numbers<[1], [0], [0], [1], [0, 0, 1, 1], [], []>} : vector<1024x8xf32>, vector<8x64xf32>, vector<1024x64xf32> -> vector<1024x64xf32>
    %8 = vector.extract_strided_slice %2 {offsets = [0, 0], sizes = [1, 64], strides = [1, 1]} : vector<3x64xf32> to vector<1x64xf32>
    %9 = vector.broadcast %8 : vector<1x64xf32> to vector<1024x64xf32>
    %10 = arith.addf %7, %9 : vector<1024x64xf32>
    %cst_11 = arith.constant 5.000000e-01 : f32
    %11 = vector.broadcast %cst_11 : f32 to vector<1024x64xf32>
    %12 = arith.mulf %11, %10 : vector<1024x64xf32>
    %cst_12 = arith.constant 0.707106769 : f32
    %13 = vector.broadcast %cst_12 : f32 to vector<1024x64xf32>
    %14 = arith.mulf %10, %13 : vector<1024x64xf32>
    %15 = math.erf %14 : vector<1024x64xf32>
    %cst_13 = arith.constant 1.000000e+00 : f32
    %16 = vector.broadcast %cst_13 : f32 to vector<1024x64xf32>
    %17 = arith.addf %16, %15 : vector<1024x64xf32>
    %18 = arith.mulf %12, %17 : vector<1024x64xf32>
    %19 = vector.extract_strided_slice %1 {offsets = [8, 0], sizes = [64, 64], strides = [1, 1]} : vector<136x64xf32> to vector<64x64xf32>
    %cst_14 = arith.constant dense<0.000000e+00> : vector<1024x64xf32>
    %20 = tpu.matmul %18, %19, %cst_14 {dimension_numbers = #tpu.dot_dimension_numbers<[1], [0], [0], [1], [0, 0, 1, 1], [], []>} : vector<1024x64xf32>, vector<64x64xf32>, vector<1024x64xf32> -> vector<1024x64xf32>
    %21 = vector.extract_strided_slice %2 {offsets = [1, 0], sizes = [1, 64], strides = [1, 1]} : vector<3x64xf32> to vector<1x64xf32>
    %22 = vector.broadcast %21 : vector<1x64xf32> to vector<1024x64xf32>
    %23 = arith.addf %20, %22 : vector<1024x64xf32>
    %cst_15 = arith.constant 5.000000e-01 : f32
    %24 = vector.broadcast %cst_15 : f32 to vector<1024x64xf32>
    %25 = arith.mulf %24, %23 : vector<1024x64xf32>
    %cst_16 = arith.constant 0.707106769 : f32
    %26 = vector.broadcast %cst_16 : f32 to vector<1024x64xf32>
    %27 = arith.mulf %23, %26 : vector<1024x64xf32>
    %28 = math.erf %27 : vector<1024x64xf32>
    %cst_17 = arith.constant 1.000000e+00 : f32
    %29 = vector.broadcast %cst_17 : f32 to vector<1024x64xf32>
    %30 = arith.addf %29, %28 : vector<1024x64xf32>
    %31 = arith.mulf %25, %30 : vector<1024x64xf32>
    %32 = vector.extract_strided_slice %1 {offsets = [72, 0], sizes = [64, 64], strides = [1, 1]} : vector<136x64xf32> to vector<64x64xf32>
    %cst_18 = arith.constant dense<0.000000e+00> : vector<1024x64xf32>
    %33 = tpu.matmul %31, %32, %cst_18 {dimension_numbers = #tpu.dot_dimension_numbers<[1], [0], [0], [1], [0, 0, 1, 1], [], []>} : vector<1024x64xf32>, vector<64x64xf32>, vector<1024x64xf32> -> vector<1024x64xf32>
    %34 = vector.extract_strided_slice %2 {offsets = [2, 0], sizes = [1, 64], strides = [1, 1]} : vector<3x64xf32> to vector<1x64xf32>
    %35 = vector.broadcast %34 : vector<1x64xf32> to vector<1024x64xf32>
    %36 = arith.addf %33, %35 : vector<1024x64xf32>
    %37 = tpu.iota {dimensions = array<i32: 0>} : vector<1024x32xi32>
    %c7_i32 = arith.constant 7 : i32
    %38 = vector.broadcast %c7_i32 : i32 to vector<1024x32xi32>
    %39 = arith.andi %37, %38 : vector<1024x32xi32>
    %c4_i32 = arith.constant 4 : i32
    %40 = vector.broadcast %c4_i32 : i32 to vector<1024x32xi32>
    %41 = arith.cmpi slt, %39, %40 : vector<1024x32xi32>
    %42 = vector.extract_strided_slice %36 {offsets = [0, 0], sizes = [1024, 32], strides = [1, 1]} : vector<1024x64xf32> to vector<1024x32xf32>
    %43 = vector.extract_strided_slice %36 {offsets = [0, 32], sizes = [1024, 32], strides = [1, 1]} : vector<1024x64xf32> to vector<1024x32xf32>
    %44 = arith.select %41, %42, %43 : vector<1024x32xi1>, vector<1024x32xf32>
    %45 = vector.extract_strided_slice %0 {offsets = [0, 0], sizes = [1024, 1], strides = [1, 1]} : vector<1024x8xf32> to vector<1024x1xf32>
    %cst_19 = arith.constant 0.000000e+00 : f32
    %46 = vector.broadcast %cst_19 : f32 to vector<1024x1xf32>
    %47 = arith.cmpf oge, %45, %46 : vector<1024x1xf32>
    %cst_20 = arith.constant 1.000000e+00 : f32
    %48 = vector.broadcast %cst_20 : f32 to vector<1x16xf32>
    %cst_21 = arith.constant 0.000000e+00 : f32
    %49 = vector.shape_cast %47 : vector<1024x1xi1> to vector<1024x1xi1>
    %50 = vector.broadcast %49 : vector<1024x1xi1> to vector<1024x16xi1>
    %51 = vector.shape_cast %48 : vector<1x16xf32> to vector<1x16xf32>
    %52 = vector.broadcast %51 : vector<1x16xf32> to vector<1024x16xf32>
    %53 = vector.broadcast %cst_21 : f32 to vector<1024x16xf32>
    %54 = arith.select %50, %52, %53 : vector<1024x16xi1>, vector<1024x16xf32>
    %55 = vector.extract_strided_slice %44 {offsets = [0, 0], sizes = [1024, 16], strides = [1, 1]} : vector<1024x32xf32> to vector<1024x16xf32>
    %56 = arith.mulf %55, %54 : vector<1024x16xf32>
    %57 = vector.shape_cast %56 : vector<1024x16xf32> to vector<128x8x16xf32>
    %cst_22 = arith.constant dense<0.000000e+00> : vector<128x16xf32>
    %58 = vector.multi_reduction <add>, %57, %cst_22 [1] : vector<128x8x16xf32> to vector<128x16xf32>
    %59 = vector.shape_cast %54 : vector<1024x16xf32> to vector<128x8x16xf32>
    %cst_23 = arith.constant dense<0.000000e+00> : vector<128x16xf32>
    %60 = vector.multi_reduction <add>, %59, %cst_23 [1] : vector<128x8x16xf32> to vector<128x16xf32>
    %cst_24 = arith.constant 9.99999971E-10 : f32
    %61 = vector.broadcast %cst_24 : f32 to vector<128x16xf32>
    %62 = arith.addf %60, %61 : vector<128x16xf32>
    %63 = arith.divf %58, %62 : vector<128x16xf32>
    %64 = vector.extract_strided_slice %44 {offsets = [0, 16], sizes = [1024, 16], strides = [1, 1]} : vector<1024x32xf32> to vector<1024x16xf32>
    %65 = vector.shape_cast %64 : vector<1024x16xf32> to vector<128x8x16xf32>
    %cst_25 = arith.constant dense<0xFF800000> : vector<128x16xf32>
    %66 = vector.multi_reduction <maximumf>, %65, %cst_25 [1] : vector<128x8x16xf32> to vector<128x16xf32>
    %67 = vector.extract_strided_slice %3 {offsets = [0, 0], sizes = [16, 32], strides = [1, 1]} : vector<64x32xf32> to vector<16x32xf32>
    %cst_26 = arith.constant dense<0.000000e+00> : vector<128x32xf32>
    %68 = tpu.matmul %63, %67, %cst_26 {dimension_numbers = #tpu.dot_dimension_numbers<[1], [0], [0], [1], [0, 0, 1, 1], [], []>} : vector<128x16xf32>, vector<16x32xf32>, vector<128x32xf32> -> vector<128x32xf32>
    %69 = vector.extract_strided_slice %3 {offsets = [16, 0], sizes = [16, 32], strides = [1, 1]} : vector<64x32xf32> to vector<16x32xf32>
    %cst_27 = arith.constant dense<0.000000e+00> : vector<128x32xf32>
    %70 = tpu.matmul %66, %69, %cst_27 {dimension_numbers = #tpu.dot_dimension_numbers<[1], [0], [0], [1], [0, 0, 1, 1], [], []>} : vector<128x16xf32>, vector<16x32xf32>, vector<128x32xf32> -> vector<128x32xf32>
    %71 = arith.addf %68, %70 : vector<128x32xf32>
    %72 = vector.extract_strided_slice %4 {offsets = [0, 0], sizes = [1, 32], strides = [1, 1]} : vector<2x32xf32> to vector<1x32xf32>
    %73 = vector.broadcast %72 : vector<1x32xf32> to vector<128x32xf32>
    %74 = arith.addf %71, %73 : vector<128x32xf32>
    %cst_28 = arith.constant 5.000000e-01 : f32
    %75 = vector.broadcast %cst_28 : f32 to vector<128x32xf32>
    %76 = arith.mulf %75, %74 : vector<128x32xf32>
    %cst_29 = arith.constant 0.707106769 : f32
    %77 = vector.broadcast %cst_29 : f32 to vector<128x32xf32>
    %78 = arith.mulf %74, %77 : vector<128x32xf32>
    %79 = math.erf %78 : vector<128x32xf32>
    %cst_30 = arith.constant 1.000000e+00 : f32
    %80 = vector.broadcast %cst_30 : f32 to vector<128x32xf32>
    %81 = arith.addf %80, %79 : vector<128x32xf32>
    %82 = arith.mulf %76, %81 : vector<128x32xf32>
    %83 = vector.extract_strided_slice %3 {offsets = [32, 0], sizes = [32, 32], strides = [1, 1]} : vector<64x32xf32> to vector<32x32xf32>
    %cst_31 = arith.constant dense<0.000000e+00> : vector<128x32xf32>
    %84 = tpu.matmul %82, %83, %cst_31 {dimension_numbers = #tpu.dot_dimension_numbers<[1], [0], [0], [1], [0, 0, 1, 1], [], []>} : vector<128x32xf32>, vector<32x32xf32>, vector<128x32xf32> -> vector<128x32xf32>
    %85 = vector.extract_strided_slice %4 {offsets = [1, 0], sizes = [1, 32], strides = [1, 1]} : vector<2x32xf32> to vector<1x32xf32>
    %86 = vector.broadcast %85 : vector<1x32xf32> to vector<128x32xf32>
    %87 = arith.addf %84, %86 : vector<128x32xf32>
    %cst_32 = arith.constant 5.000000e-01 : f32
    %88 = vector.broadcast %cst_32 : f32 to vector<128x32xf32>
    %89 = arith.mulf %88, %87 : vector<128x32xf32>
    %cst_33 = arith.constant 0.707106769 : f32
    %90 = vector.broadcast %cst_33 : f32 to vector<128x32xf32>
    %91 = arith.mulf %87, %90 : vector<128x32xf32>
    %92 = math.erf %91 : vector<128x32xf32>
    %cst_34 = arith.constant 1.000000e+00 : f32
    %93 = vector.broadcast %cst_34 : f32 to vector<128x32xf32>
    %94 = arith.addf %93, %92 : vector<128x32xf32>
    %95 = arith.mulf %89, %94 : vector<128x32xf32>
    %96 = tpu.transpose %95, [1, 0] : vector<128x32xf32> -> vector<32x128xf32>
    %97 = vector.extract_strided_slice %5 {offsets = [0, 0], sizes = [32, 1], strides = [1, 1]} : vector<33x1xf32> to vector<32x1xf32>
    %98 = vector.broadcast %97 : vector<32x1xf32> to vector<32x128xf32>
    %99 = arith.mulf %96, %98 : vector<32x128xf32>
    %cst_35 = arith.constant dense<0.000000e+00> : vector<128xf32>
    %100 = vector.multi_reduction <add>, %99, %cst_35 [0] : vector<32x128xf32> to vector<128xf32>
    %101 = vector.shape_cast %100 : vector<128xf32> to vector<1x128xf32>
    %102 = vector.extract_strided_slice %5 {offsets = [32, 0], sizes = [1, 1], strides = [1, 1]} : vector<33x1xf32> to vector<1x1xf32>
    %103 = vector.broadcast %102 : vector<1x1xf32> to vector<1x128xf32>
    %104 = arith.addf %101, %103 : vector<1x128xf32>
    %cst_36 = arith.constant 0.699999988 : f32
    %105 = vector.broadcast %cst_36 : f32 to vector<1x128xf32>
    %106 = arith.mulf %104, %105 : vector<1x128xf32>
    %c0_37 = arith.constant 0 : index
    %c0_38 = arith.constant 0 : index
    %c0_39 = arith.constant 0 : index
    %107 = vector.load %arg2[%c0_37, %c0_38, %c0_39] : memref<1x1x128xf32, #tpu.memory_space<vmem>>, vector<1x1x128xf32>
    %108 = vector.shape_cast %107 : vector<1x1x128xf32> to vector<1x128xf32>
    %109 = arith.addf %106, %108 : vector<1x128xf32>
    %c0_40 = arith.constant 0 : index
    %c0_41 = arith.constant 0 : index
    %c0_42 = arith.constant 0 : index
    %110 = vector.load %arg8[%c0_40, %c0_41, %c0_42] : memref<1x1x128xf32, #tpu.memory_space<vmem>>, vector<1x1x128xf32>
    %111 = vector.shape_cast %110 : vector<1x1x128xf32> to vector<1x128xf32>
    %112 = vector.shape_cast %109 : vector<1x128xf32> to vector<1x1x128xf32>
    tpu.vector_store %arg8[%c0_40, %c0_41, %c0_42], %112 {strides = array<i32>} : memref<1x1x128xf32, #tpu.memory_space<vmem>>, vector<1x1x128xf32>,
    return
  }
  func.func @transform_0(%arg0: i32) -> (i32, i32) {
    %c0_i32 = arith.constant 0 : i32
    %c0_i32_0 = arith.constant 0 : i32
    return %arg0, %c0_i32 : i32, i32
  }
  func.func @transform_1(%arg0: i32) -> (i32, i32, i32) {
    %c0_i32 = arith.constant 0 : i32
    %c0_i32_0 = arith.constant 0 : i32
    %c0_i32_1 = arith.constant 0 : i32
    return %arg0, %c0_i32, %c0_i32_0 : i32, i32, i32
  }
  func.func @transform_2(%arg0: i32) -> (i32, i32) {
    %c0_i32 = arith.constant 0 : i32
    %c0_i32_0 = arith.constant 0 : i32
    %c0_i32_1 = arith.constant 0 : i32
    return %c0_i32, %c0_i32_0 : i32, i32
  }
  func.func @transform_3(%arg0: i32) -> (i32, i32) {
    %c0_i32 = arith.constant 0 : i32
    %c0_i32_0 = arith.constant 0 : i32
    %c0_i32_1 = arith.constant 0 : i32
    return %c0_i32, %c0_i32_0 : i32, i32
  }
  func.func @transform_4(%arg0: i32) -> (i32, i32) {
    %c0_i32 = arith.constant 0 : i32
    %c0_i32_0 = arith.constant 0 : i32
    %c0_i32_1 = arith.constant 0 : i32
    return %c0_i32, %c0_i32_0 : i32, i32
  }
  func.func @transform_5(%arg0: i32) -> (i32, i32) {
    %c0_i32 = arith.constant 0 : i32
    %c0_i32_0 = arith.constant 0 : i32
    %c0_i32_1 = arith.constant 0 : i32
    return %c0_i32, %c0_i32_0 : i32, i32
  }
  func.func @transform_6(%arg0: i32) -> (i32, i32) {
    %c0_i32 = arith.constant 0 : i32
    %c0_i32_0 = arith.constant 0 : i32
    %c0_i32_1 = arith.constant 0 : i32
    return %c0_i32, %c0_i32_0 : i32, i32
  }
  func.func @transform_7(%arg0: i32) -> (i32, i32, i32) {
    %c0_i32 = arith.constant 0 : i32
    %c0_i32_0 = arith.constant 0 : i32
    %c0_i32_1 = arith.constant 0 : i32
    return %arg0, %c0_i32, %c0_i32_0 : i32, i32, i32
  }
}

</mosaic_0001>

<llo_original>
// kernel: tpu_custom_call.1
$region0: #{tpu_custom_call.1}
  #allocation0 [shape = 'u32[]', space=smem, size = 0x4, offset = 0x4, fixed_abs, tag = 'smem constant byte address 0x4 - core index']
  #allocation1 [shape = 'u32[144,128]{1,0:T(1,128)}', space=vmem, size = 0x12000, scoped, tag = 'internal scratch']
  %s0 = inlined_call_operand.vmem [shape: f32[1024,8], index: 0, kind: input, shape index: {}]
  %s1 = inlined_call_operand.vmem [shape: f32[1,1,128], index: 1, kind: input, shape index: {}]
  %s2 = inlined_call_operand.vmem [shape: f32[136,64], index: 2, kind: input, shape index: {}]
  %s3 = inlined_call_operand.vmem [shape: f32[3,64], index: 3, kind: input, shape index: {}]
  %s4 = inlined_call_operand.vmem [shape: f32[64,32], index: 4, kind: input, shape index: {}]
  %s5 = inlined_call_operand.vmem [shape: f32[2,32], index: 5, kind: input, shape index: {}]
  %s6 = inlined_call_operand.vmem [shape: f32[33,1], index: 6, kind: input, shape index: {}]
  %s7 = inlined_call_operand.hbm [shape: f32[1,1,128], index: 7, kind: output, shape index: {}]
  %s8 = sld [smem:[#allocation0]]
  $region38: #{tpu_custom_call.1} parent=0
    _
  %s10 = ssub.s32 1, %s8
  %s11 = scalar_select 0, %s10, %s8
  $region1: #{tpu_custom_call.1} parent=0
    #allocation2 [shape = 'u8[512]{0}', space=vmem, size = 0x400, scoped, tag = 'output window, operand 0, single buffered']
    #allocation3 [shape = 's32[1]{0}', space=sflag, size = 0x4, scoped, tag = 'scoped memory for tpu_custom_call.1']
    %12 = vsyncpa [#allocation3], 0
    // Predicated region
    $region2: #{tpu_custom_call.1} parent=1 // pred_check
      _
    $region3: #{tpu_custom_call.1} parent=1 // pred_check_branch
      %14 = sbr.rel (0) target = $region5
    $region4: #{tpu_custom_call.1} parent=1 // pred_region
      _
    $region5: #{tpu_custom_call.1} parent=1 // pred_fallthru
      _
    // Predicated region
    $region6: #{tpu_custom_call.1} parent=1 // pred_check
      _
    $region7: #{tpu_custom_call.1} parent=1 // pred_check_branch
      %16 = sbr.rel (0) target = $region9
    $region8: #{tpu_custom_call.1} parent=1 // pred_region
      _
    $region9: #{tpu_custom_call.1} parent=1 // pred_fallthru
      _
    // Predicated region
    $region10: #{tpu_custom_call.1} parent=1 // pred_check
      _
    $region11: #{tpu_custom_call.1} parent=1 // pred_check_branch
      %18 = sbr.rel (0) target = $region13
    $region12: #{tpu_custom_call.1} parent=1 // pred_region
      _
    $region13: #{tpu_custom_call.1} parent=1 // pred_fallthru
      _
    // Predicated region
    $region14: #{tpu_custom_call.1} parent=1 // pred_check
      _
    $region15: #{tpu_custom_call.1} parent=1 // pred_check_branch
      %20 = sbr.rel (0) target = $region17
    $region16: #{tpu_custom_call.1} parent=1 // pred_region
      _
    $region17: #{tpu_custom_call.1} parent=1 // pred_fallthru
      _
    // Predicated region
    $region18: #{tpu_custom_call.1} parent=1 // pred_check
      _
    $region19: #{tpu_custom_call.1} parent=1 // pred_check_branch
      %22 = sbr.rel (0) target = $region21
    $region20: #{tpu_custom_call.1} parent=1 // pred_region
      _
    $region21: #{tpu_custom_call.1} parent=1 // pred_fallthru
      _
    // Predicated region
    $region22: #{tpu_custom_call.1} parent=1 // pred_check
      _
    $region23: #{tpu_custom_call.1} parent=1 // pred_check_branch
      %24 = sbr.rel (0) target = $region25
    $region24: #{tpu_custom_call.1} parent=1 // pred_region
      _
    $region25: #{tpu_custom_call.1} parent=1 // pred_fallthru
      _
    // Predicated region
    $region26: #{tpu_custom_call.1} parent=1 // pred_check
      _
    $region27: #{tpu_custom_call.1} parent=1 // pred_check_branch
      %26 = sbr.rel (0) target = $region29
    $region28: #{tpu_custom_call.1} parent=1 // pred_region
      _
    $region29: #{tpu_custom_call.1} parent=1 // pred_fallthru
      _
    %v27 = vld [vmem:[%s0] sm:$0xff]
    %v28 = vld [vmem:[%s0 + $0x8] sm:$0xff]
    %v29 = vld [vmem:[%s0 + $0x10] sm:$0xff]
    %v30 = vld [vmem:[%s0 + $0x18] sm:$0xff]
    %v31 = vld [vmem:[%s0 + $0x20] sm:$0xff]
    %v32 = vld [vmem:[%s0 + $0x28] sm:$0xff]
    %v33 = vld [vmem:[%s0 + $0x30] sm:$0xff]
    %v34 = vld [vmem:[%s0 + $0x38] sm:$0xff]
    %v35 = vld [vmem:[%s0 + $0x40] sm:$0xff]
    %v36 = vld [vmem:[%s0 + $0x48] sm:$0xff]
    %v37 = vld [vmem:[%s0 + $0x50] sm:$0xff]
    %v38 = vld [vmem:[%s0 + $0x58] sm:$0xff]
    %v39 = vld [vmem:[%s0 + $0x60] sm:$0xff]
    %v40 = vld [vmem:[%s0 + $0x68] sm:$0xff]
    %v41 = vld [vmem:[%s0 + $0x70] sm:$0xff]
    %v42 = vld [vmem:[%s0 + $0x78] sm:$0xff]
    %v43 = vld [vmem:[%s0 + $0x80] sm:$0xff]
    %v44 = vld [vmem:[%s0 + $0x88] sm:$0xff]
    %v45 = vld [vmem:[%s0 + $0x90] sm:$0xff]
    %v46 = vld [vmem:[%s0 + $0x98] sm:$0xff]
    %v47 = vld [vmem:[%s0 + $0xa0] sm:$0xff]
    %v48 = vld [vmem:[%s0 + $0xa8] sm:$0xff]
    %v49 = vld [vmem:[%s0 + $0xb0] sm:$0xff]
    %v50 = vld [vmem:[%s0 + $0xb8] sm:$0xff]
    %v51 = vld [vmem:[%s0 + $0xc0] sm:$0xff]
    %v52 = vld [vmem:[%s0 + $0xc8] sm:$0xff]
    %v53 = vld [vmem:[%s0 + $0xd0] sm:$0xff]
    %v54 = vld [vmem:[%s0 + $0xd8] sm:$0xff]
    %v55 = vld [vmem:[%s0 + $0xe0] sm:$0xff]
    %v56 = vld [vmem:[%s0 + $0xe8] sm:$0xff]
    %v57 = vld [vmem:[%s0 + $0xf0] sm:$0xff]
    %v58 = vld [vmem:[%s0 + $0xf8] sm:$0xff]
    %v59 = vld [vmem:[%s0 + $0x100] sm:$0xff]
    %v60 = vld [vmem:[%s0 + $0x108] sm:$0xff]
    %v61 = vld [vmem:[%s0 + $0x110] sm:$0xff]
    %v62 = vld [vmem:[%s0 + $0x118] sm:$0xff]
    %v63 = vld [vmem:[%s0 + $0x120] sm:$0xff]
    %v64 = vld [vmem:[%s0 + $0x128] sm:$0xff]
    %v65 = vld [vmem:[%s0 + $0x130] sm:$0xff]
    %v66 = vld [vmem:[%s0 + $0x138] sm:$0xff]
    %v67 = vld [vmem:[%s0 + $0x140] sm:$0xff]
    %v68 = vld [vmem:[%s0 + $0x148] sm:$0xff]
    %v69 = vld [vmem:[%s0 + $0x150] sm:$0xff]
    %v70 = vld [vmem:[%s0 + $0x158] sm:$0xff]
    %v71 = vld [vmem:[%s0 + $0x160] sm:$0xff]
    %v72 = vld [vmem:[%s0 + $0x168] sm:$0xff]
    %v73 = vld [vmem:[%s0 + $0x170] sm:$0xff]
    %v74 = vld [vmem:[%s0 + $0x178] sm:$0xff]
    %v75 = vld [vmem:[%s0 + $0x180] sm:$0xff]
    %v76 = vld [vmem:[%s0 + $0x188] sm:$0xff]
    %v77 = vld [vmem:[%s0 + $0x190] sm:$0xff]
    %v78 = vld [vmem:[%s0 + $0x198] sm:$0xff]
    %v79 = vld [vmem:[%s0 + $0x1a0] sm:$0xff]
    %v80 = vld [vmem:[%s0 + $0x1a8] sm:$0xff]
    %v81 = vld [vmem:[%s0 + $0x1b0] sm:$0xff]
    %v82 = vld [vmem:[%s0 + $0x1b8] sm:$0xff]
    %v83 = vld [vmem:[%s0 + $0x1c0] sm:$0xff]
    %v84 = vld [vmem:[%s0 + $0x1c8] sm:$0xff]
    %v85 = vld [vmem:[%s0 + $0x1d0] sm:$0xff]
    %v86 = vld [vmem:[%s0 + $0x1d8] sm:$0xff]
    %v87 = vld [vmem:[%s0 + $0x1e0] sm:$0xff]
    %v88 = vld [vmem:[%s0 + $0x1e8] sm:$0xff]
    %v89 = vld [vmem:[%s0 + $0x1f0] sm:$0xff]
    %v90 = vld [vmem:[%s0 + $0x1f8] sm:$0xff]
    %v91 = vld [vmem:[%s0 + $0x200] sm:$0xff]
    %v92 = vld [vmem:[%s0 + $0x208] sm:$0xff]
    %v93 = vld [vmem:[%s0 + $0x210] sm:$0xff]
    %v94 = vld [vmem:[%s0 + $0x218] sm:$0xff]
    %v95 = vld [vmem:[%s0 + $0x220] sm:$0xff]
    %v96 = vld [vmem:[%s0 + $0x228] sm:$0xff]
    %v97 = vld [vmem:[%s0 + $0x230] sm:$0xff]
    %v98 = vld [vmem:[%s0 + $0x238] sm:$0xff]
    %v99 = vld [vmem:[%s0 + $0x240] sm:$0xff]
    %v100 = vld [vmem:[%s0 + $0x248] sm:$0xff]
    %v101 = vld [vmem:[%s0 + $0x250] sm:$0xff]
    %v102 = vld [vmem:[%s0 + $0x258] sm:$0xff]
    %v103 = vld [vmem:[%s0 + $0x260] sm:$0xff]
    %v104 = vld [vmem:[%s0 + $0x268] sm:$0xff]
    %v105 = vld [vmem:[%s0 + $0x270] sm:$0xff]
    %v106 = vld [vmem:[%s0 + $0x278] sm:$0xff]
    %v107 = vld [vmem:[%s0 + $0x280] sm:$0xff]
    %v108 = vld [vmem:[%s0 + $0x288] sm:$0xff]
    %v109 = vld [vmem:[%s0 + $0x290] sm:$0xff]
    %v110 = vld [vmem:[%s0 + $0x298] sm:$0xff]
    %v111 = vld [vmem:[%s0 + $0x2a0] sm:$0xff]
    %v112 = vld [vmem:[%s0 + $0x2a8] sm:$0xff]
    %v113 = vld [vmem:[%s0 + $0x2b0] sm:$0xff]
    %v114 = vld [vmem:[%s0 + $0x2b8] sm:$0xff]
    %v115 = vld [vmem:[%s0 + $0x2c0] sm:$0xff]
    %v116 = vld [vmem:[%s0 + $0x2c8] sm:$0xff]
    %v117 = vld [vmem:[%s0 + $0x2d0] sm:$0xff]
    %v118 = vld [vmem:[%s0 + $0x2d8] sm:$0xff]
    %v119 = vld [vmem:[%s0 + $0x2e0] sm:$0xff]
    %v120 = vld [vmem:[%s0 + $0x2e8] sm:$0xff]
    %v121 = vld [vmem:[%s0 + $0x2f0] sm:$0xff]
    %v122 = vld [vmem:[%s0 + $0x2f8] sm:$0xff]
    %v123 = vld [vmem:[%s0 + $0x300] sm:$0xff]
    %v124 = vld [vmem:[%s0 + $0x308] sm:$0xff]
    %v125 = vld [vmem:[%s0 + $0x310] sm:$0xff]
    %v126 = vld [vmem:[%s0 + $0x318] sm:$0xff]
    %v127 = vld [vmem:[%s0 + $0x320] sm:$0xff]
    %v128 = vld [vmem:[%s0 + $0x328] sm:$0xff]
    %v129 = vld [vmem:[%s0 + $0x330] sm:$0xff]
    %v130 = vld [vmem:[%s0 + $0x338] sm:$0xff]
    %v131 = vld [vmem:[%s0 + $0x340] sm:$0xff]
    %v132 = vld [vmem:[%s0 + $0x348] sm:$0xff]
    %v133 = vld [vmem:[%s0 + $0x350] sm:$0xff]
    %v134 = vld [vmem:[%s0 + $0x358] sm:$0xff]
    %v135 = vld [vmem:[%s0 + $0x360] sm:$0xff]
    %v136 = vld [vmem:[%s0 + $0x368] sm:$0xff]
    %v137 = vld [vmem:[%s0 + $0x370] sm:$0xff]
    %v138 = vld [vmem:[%s0 + $0x378] sm:$0xff]
    %v139 = vld [vmem:[%s0 + $0x380] sm:$0xff]
    %v140 = vld [vmem:[%s0 + $0x388] sm:$0xff]
    %v141 = vld [vmem:[%s0 + $0x390] sm:$0xff]
    %v142 = vld [vmem:[%s0 + $0x398] sm:$0xff]
    %v143 = vld [vmem:[%s0 + $0x3a0] sm:$0xff]
    %v144 = vld [vmem:[%s0 + $0x3a8] sm:$0xff]
    %v145 = vld [vmem:[%s0 + $0x3b0] sm:$0xff]
    %v146 = vld [vmem:[%s0 + $0x3b8] sm:$0xff]
    %v147 = vld [vmem:[%s0 + $0x3c0] sm:$0xff]
    %v148 = vld [vmem:[%s0 + $0x3c8] sm:$0xff]
    %v149 = vld [vmem:[%s0 + $0x3d0] sm:$0xff]
    %v150 = vld [vmem:[%s0 + $0x3d8] sm:$0xff]
    %v151 = vld [vmem:[%s0 + $0x3e0] sm:$0xff]
    %v152 = vld [vmem:[%s0 + $0x3e8] sm:$0xff]
    %v153 = vld [vmem:[%s0 + $0x3f0] sm:$0xff]
    %v154 = vld [vmem:[%s0 + $0x3f8] sm:$0xff]
    %v155 = vld [vmem:[%s2] sm:$0xff]
    %v156 = vld [vmem:[%s2 + $0x8] sm:$0xff]
    %v157 = vld [vmem:[%s2 + $0x10] sm:$0xff]
    %v158 = vld [vmem:[%s2 + $0x18] sm:$0xff]
    %v159 = vld [vmem:[%s2 + $0x20] sm:$0xff]
    %v160 = vld [vmem:[%s2 + $0x28] sm:$0xff]
    %v161 = vld [vmem:[%s2 + $0x30] sm:$0xff]
    %v162 = vld [vmem:[%s2 + $0x38] sm:$0xff]
    %v163 = vld [vmem:[%s2 + $0x40] sm:$0xff]
    %v164 = vld [vmem:[%s2 + $0x48] sm:$0xff]
    %v165 = vld [vmem:[%s2 + $0x50] sm:$0xff]
    %v166 = vld [vmem:[%s2 + $0x58] sm:$0xff]
    %v167 = vld [vmem:[%s2 + $0x60] sm:$0xff]
    %v168 = vld [vmem:[%s2 + $0x68] sm:$0xff]
    %v169 = vld [vmem:[%s2 + $0x70] sm:$0xff]
    %v170 = vld [vmem:[%s2 + $0x78] sm:$0xff]
    %v171 = vld [vmem:[%s2 + $0x80] sm:$0xff]
    %v172 = vld [vmem:[%s3] sm:$0x7]
    %v173 = vld [vmem:[%s4] sm:$0xff]
    %v174 = vld [vmem:[%s4 + $0x8] sm:$0xff]
    %v175 = vld [vmem:[%s4 + $0x10] sm:$0xff]
    %v176 = vld [vmem:[%s4 + $0x18] sm:$0xff]
    %v177 = vld [vmem:[%s4 + $0x20] sm:$0xff]
    %v178 = vld [vmem:[%s4 + $0x28] sm:$0xff]
    %v179 = vld [vmem:[%s4 + $0x30] sm:$0xff]
    %v180 = vld [vmem:[%s4 + $0x38] sm:$0xff]
    %v181 = vld [vmem:[%s5] sm:$0x3]
    %v182 = vld [vmem:[%s6] sm:$0xff]
    %v183 = vld [vmem:[%s6 + $0x8] sm:$0xff]
    %v184 = vld [vmem:[%s6 + $0x10] sm:$0xff]
    %v185 = vld [vmem:[%s6 + $0x18] sm:$0xff]
    %v186 = vld [vmem:[%s6 + $0x20] sm:$0x1]
    %v187 = vlaneseq
    %v188 = vshrl.u32 %v187, 7
    %v189 = vsub.s32 0, %v188
    %v190 = vrot.slane %v172, %v189
    %vm191 = vcmask 64512
    %v193 = vsel %vm191, %v27, 0
    %v196 = vsel %vm191, %v28, 0
    %v199 = vsel %vm191, %v29, 0
    %v202 = vsel %vm191, %v30, 0
    %v205 = vsel %vm191, %v31, 0
    %v208 = vsel %vm191, %v32, 0
    %v211 = vsel %vm191, %v33, 0
    %v214 = vsel %vm191, %v34, 0
    %v217 = vsel %vm191, %v35, 0
    %v220 = vsel %vm191, %v36, 0
    %v223 = vsel %vm191, %v37, 0
    %v226 = vsel %vm191, %v38, 0
    %v229 = vsel %vm191, %v39, 0
    %v232 = vsel %vm191, %v40, 0
    %v235 = vsel %vm191, %v41, 0
    %v238 = vsel %vm191, %v42, 0
    %v241 = vsel %vm191, %v43, 0
    %v244 = vsel %vm191, %v44, 0
    %v247 = vsel %vm191, %v45, 0
    %v250 = vsel %vm191, %v46, 0
    %v253 = vsel %vm191, %v47, 0
    %v256 = vsel %vm191, %v48, 0
    %v259 = vsel %vm191, %v49, 0
    %v262 = vsel %vm191, %v50, 0
    %v265 = vsel %vm191, %v51, 0
    %v268 = vsel %vm191, %v52, 0
    %v271 = vsel %vm191, %v53, 0
    %v274 = vsel %vm191, %v54, 0
    %v277 = vsel %vm191, %v55, 0
    %v280 = vsel %vm191, %v56, 0
    %v283 = vsel %vm191, %v57, 0
    %v286 = vsel %vm191, %v58, 0
    %v289 = vsel %vm191, %v59, 0
    %v292 = vsel %vm191, %v60, 0
    %v295 = vsel %vm191, %v61, 0
    %v298 = vsel %vm191, %v62, 0
    %v301 = vsel %vm191, %v63, 0
    %v304 = vsel %vm191, %v64, 0
    %v307 = vsel %vm191, %v65, 0
    %v310 = vsel %vm191, %v66, 0
    %v313 = vsel %vm191, %v67, 0
    %v316 = vsel %vm191, %v68, 0
    %v319 = vsel %vm191, %v69, 0
    %v322 = vsel %vm191, %v70, 0
    %v325 = vsel %vm191, %v71, 0
    %v328 = vsel %vm191, %v72, 0
    %v331 = vsel %vm191, %v73, 0
    %v334 = vsel %vm191, %v74, 0
    %v337 = vsel %vm191, %v75, 0
    %v340 = vsel %vm191, %v76, 0
    %v343 = vsel %vm191, %v77, 0
    %v346 = vsel %vm191, %v78, 0
    %v349 = vsel %vm191, %v79, 0
    %v352 = vsel %vm191, %v80, 0
    %v355 = vsel %vm191, %v81, 0
    %v358 = vsel %vm191, %v82, 0
    %v361 = vsel %vm191, %v83, 0
    %v364 = vsel %vm191, %v84, 0
    %v367 = vsel %vm191, %v85, 0
    %v370 = vsel %vm191, %v86, 0
    %v373 = vsel %vm191, %v87, 0
    %v376 = vsel %vm191, %v88, 0
    %v379 = vsel %vm191, %v89, 0
    %v382 = vsel %vm191, %v90, 0
    %v385 = vsel %vm191, %v91, 0
    %v388 = vsel %vm191, %v92, 0
    %v391 = vsel %vm191, %v93, 0
    %v394 = vsel %vm191, %v94, 0
    %v397 = vsel %vm191, %v95, 0
    %v400 = vsel %vm191, %v96, 0
    %v403 = vsel %vm191, %v97, 0
    %v406 = vsel %vm191, %v98, 0
    %v409 = vsel %vm191, %v99, 0
    %v412 = vsel %vm191, %v100, 0
    %v415 = vsel %vm191, %v101, 0
    %v418 = vsel %vm191, %v102, 0
    %v421 = vsel %vm191, %v103, 0
    %v424 = vsel %vm191, %v104, 0
    %v427 = vsel %vm191, %v105, 0
    %v430 = vsel %vm191, %v106, 0
    %v433 = vsel %vm191, %v107, 0
    %v436 = vsel %vm191, %v108, 0
    %v439 = vsel %vm191, %v109, 0
    %v442 = vsel %vm191, %v110, 0
    %v445 = vsel %vm191, %v111, 0
    %v448 = vsel %vm191, %v112, 0
    %v451 = vsel %vm191, %v113, 0
    %v454 = vsel %vm191, %v114, 0
    %v457 = vsel %vm191, %v115, 0
    %v460 = vsel %vm191, %v116, 0
    %v463 = vsel %vm191, %v117, 0
    %v466 = vsel %vm191, %v118, 0
    %v469 = vsel %vm191, %v119, 0
    %v472 = vsel %vm191, %v120, 0
    %v475 = vsel %vm191, %v121, 0
    %v478 = vsel %vm191, %v122, 0
    %v481 = vsel %vm191, %v123, 0
    %v484 = vsel %vm191, %v124, 0
    %v487 = vsel %vm191, %v125, 0
    %v490 = vsel %vm191, %v126, 0
    %v493 = vsel %vm191, %v127, 0
    %v496 = vsel %vm191, %v128, 0
    %v499 = vsel %vm191, %v129, 0
    %v502 = vsel %vm191, %v130, 0
    %v505 = vsel %vm191, %v131, 0
    %v508 = vsel %vm191, %v132, 0
    %v511 = vsel %vm191, %v133, 0
    %v514 = vsel %vm191, %v134, 0
    %v517 = vsel %vm191, %v135, 0
    %v520 = vsel %vm191, %v136, 0
    %v523 = vsel %vm191, %v137, 0
    %v526 = vsel %vm191, %v138, 0
    %v529 = vsel %vm191, %v139, 0
    %v532 = vsel %vm191, %v140, 0
    %v535 = vsel %vm191, %v141, 0
    %v538 = vsel %vm191, %v142, 0
    %v541 = vsel %vm191, %v143, 0
    %v544 = vsel %vm191, %v144, 0
    %v547 = vsel %vm191, %v145, 0
    %v550 = vsel %vm191, %v146, 0
    %v553 = vsel %vm191, %v147, 0
    %v556 = vsel %vm191, %v148, 0
    %v559 = vsel %vm191, %v149, 0
    %v562 = vsel %vm191, %v150, 0
    %v565 = vsel %vm191, %v151, 0
    %v568 = vsel %vm191, %v152, 0
    %v571 = vsel %vm191, %v153, 0
    %v574 = vsel %vm191, %v154, 0
    %576 = vmatprep.subr.mxu0 0.0
    %577 = vmatpush1.msra.mxu0 %v155
    %578 = vmatprep.subr.mxu0 0.0
    %579 = vmatpush1.msra.mxu0 0.0
    %580 = vmatprep.subr.mxu0 0.0
    %581 = vmatpush1.msra.mxu0 0.0
    %582 = vmatprep.subr.mxu0 0.0
    %583 = vmatpush1.msra.mxu0 0.0
    %584 = vmatprep.subr.mxu0 0.0
    %585 = vmatpush1.msra.mxu0 0.0
    %586 = vmatprep.subr.mxu0 0.0
    %587 = vmatpush1.msra.mxu0 0.0
    %588 = vmatprep.subr.mxu0 0.0
    %589 = vmatpush1.msra.mxu0 0.0
    %590 = vmatprep.subr.mxu0 0.0
    %591 = vmatpush1.msra.mxu0 0.0
    %592 = vmatprep.subr.mxu0 0.0
    %593 = vmatpush1.msra.mxu0 0.0
    %594 = vmatprep.subr.mxu0 0.0
    %595 = vmatpush1.msra.mxu0 0.0
    %596 = vmatprep.subr.mxu0 0.0
    %597 = vmatpush1.msra.mxu0 0.0
    %598 = vmatprep.subr.mxu0 0.0
    %599 = vmatpush1.msra.mxu0 0.0
    %600 = vmatprep.subr.mxu0 0.0
    %601 = vmatpush1.msra.mxu0 0.0
    %602 = vmatprep.subr.mxu0 0.0
    %603 = vmatpush1.msra.mxu0 0.0
    %604 = vmatprep.subr.mxu0 0.0
    %605 = vmatpush1.msra.mxu0 0.0
    %606 = vmatprep.subr.mxu0 0.0
    %607 = vmatpush1.msra.mxu0 0.0
    %608 = vmatprep.subr.mxu0 0.0
    %609 = vmatpush1.msra.mxu0 0.0
    %610 = vmatprep.subr.mxu0 0.0
    %611 = vmatpush1.msra.mxu0 0.0
    %612 = vmatprep.subr.mxu0 0.0
    %613 = vmatpush1.msra.mxu0 0.0
    %614 = vmatprep.subr.mxu0 0.0
    %615 = vmatpush1.msra.mxu0 0.0
    %616 = vmatprep.subr.mxu0 0.0
    %617 = vmatpush1.msra.mxu0 0.0
    %618 = vmatprep.subr.mxu0 0.0
    %619 = vmatpush1.msra.mxu0 0.0
    %620 = vmatprep.subr.mxu0 0.0
    %621 = vmatpush1.msra.mxu0 0.0
    %622 = vmatprep.subr.mxu0 0.0
    %623 = vmatpush1.msra.mxu0 0.0
    %624 = vmatprep.subr.mxu0 0.0
    %625 = vmatpush1.msra.mxu0 0.0
    %626 = vmatprep.subr.mxu0 0.0
    %627 = vmatpush1.msra.mxu0 0.0
    %628 = vmatprep.subr.mxu0 0.0
    %629 = vmatpush1.msra.mxu0 0.0
    %630 = vmatprep.subr.mxu0 0.0
    %631 = vmatpush1.msra.mxu0 0.0
    %632 = vmatprep.subr.mxu0 0.0
    %633 = vmatpush1.msra.mxu0 0.0
    %634 = vmatprep.subr.mxu0 0.0
    %635 = vmatpush1.msra.mxu0 0.0
    %636 = vmatprep.subr.mxu0 0.0
    %637 = vmatpush1.msra.mxu0 0.0
    %638 = vmatprep.subr.mxu0 0.0
    %639 = vmatpush1.msra.mxu0 0.0
    %640 = vmatprep.mubr.f32.mxu0 0.0
    %641 = vmatmul.mubr.f32.gmra.mrb[0].mxu0 %v193
    %v642 = vpop.f32.mrb[0].mxu0
    %v643 = vadd.f32 %v190, %v642
    %v644 = vpop.f32.mrb[0].mxu0
    %645 = vmatprep.mubr.f32.mxu0 0.0
    %646 = vmatmul.mubr.f32.gmra.mrb[0].mxu0 %v196
    %v647 = vpop.f32.mrb[0].mxu0
    %v648 = vadd.f32 %v190, %v647
    %v649 = vpop.f32.mrb[0].mxu0
    %650 = vmatprep.mubr.f32.mxu0 0.0
    %651 = vmatmul.mubr.f32.gmra.mrb[0].mxu0 %v199
    %v652 = vpop.f32.mrb[0].mxu0
    %v653 = vadd.f32 %v190, %v652
    %v654 = vpop.f32.mrb[0].mxu0
    %655 = vmatprep.mubr.f32.mxu0 0.0
    %656 = vmatmul.mubr.f32.gmra.mrb[0].mxu0 %v202
    %v657 = vpop.f32.mrb[0].mxu0
    %v658 = vadd.f32 %v190, %v657
    %v659 = vpop.f32.mrb[0].mxu0
    %660 = vmatprep.mubr.f32.mxu0 0.0
    %661 = vmatmul.mubr.f32.gmra.mrb[0].mxu0 %v205
    %v662 = vpop.f32.mrb[0].mxu0
    %v663 = vadd.f32 %v190, %v662
    %v664 = vpop.f32.mrb[0].mxu0
    %665 = vmatprep.mubr.f32.mxu0 0.0
    %666 = vmatmul.mubr.f32.gmra.mrb[0].mxu0 %v208
    %v667 = vpop.f32.mrb[0].mxu0
    %v668 = vadd.f32 %v190, %v667
    %v669 = vpop.f32.mrb[0].mxu0
    %670 = vmatprep.mubr.f32.mxu0 0.0
    %671 = vmatmul.mubr.f32.gmra.mrb[0].mxu0 %v211
    %v672 = vpop.f32.mrb[0].mxu0
    %v673 = vadd.f32 %v190, %v672
    %v674 = vpop.f32.mrb[0].mxu0
    %675 = vmatprep.mubr.f32.mxu0 0.0
    %676 = vmatmul.mubr.f32.gmra.mrb[0].mxu0 %v214
    %v677 = vpop.f32.mrb[0].mxu0
    %v678 = vadd.f32 %v190, %v677
    %v679 = vpop.f32.mrb[0].mxu0
    %680 = vmatprep.mubr.f32.mxu0 0.0
    %681 = vmatmul.mubr.f32.gmra.mrb[0].mxu0 %v217
    %v682 = vpop.f32.mrb[0].mxu0
    %v683 = vadd.f32 %v190, %v682
    %v684 = vpop.f32.mrb[0].mxu0
    %685 = vmatprep.mubr.f32.mxu0 0.0
    %686 = vmatmul.mubr.f32.gmra.mrb[0].mxu0 %v220
    %v687 = vpop.f32.mrb[0].mxu0
    %v688 = vadd.f32 %v190, %v687
    %v689 = vpop.f32.mrb[0].mxu0
    %690 = vmatprep.mubr.f32.mxu0 0.0
    %691 = vmatmul.mubr.f32.gmra.mrb[0].mxu0 %v223
    %v692 = vpop.f32.mrb[0].mxu0
    %v693 = vadd.f32 %v190, %v692
    %v694 = vpop.f32.mrb[0].mxu0
    %695 = vmatprep.mubr.f32.mxu0 0.0
    %696 = vmatmul.mubr.f32.gmra.mrb[0].mxu0 %v226
    %v697 = vpop.f32.mrb[0].mxu0
    %v698 = vadd.f32 %v190, %v697
    %v699 = vpop.f32.mrb[0].mxu0
    %700 = vmatprep.mubr.f32.mxu0 0.0
    %701 = vmatmul.mubr.f32.gmra.mrb[0].mxu0 %v229
    %v702 = vpop.f32.mrb[0].mxu0
    %v703 = vadd.f32 %v190, %v702
    %v704 = vpop.f32.mrb[0].mxu0
    %705 = vmatprep.mubr.f32.mxu0 0.0
    %706 = vmatmul.mubr.f32.gmra.mrb[0].mxu0 %v232
    %v707 = vpop.f32.mrb[0].mxu0
    %v708 = vadd.f32 %v190, %v707
    %v709 = vpop.f32.mrb[0].mxu0
    %710 = vmatprep.mubr.f32.mxu0 0.0
    %711 = vmatmul.mubr.f32.gmra.mrb[0].mxu0 %v235
    %v712 = vpop.f32.mrb[0].mxu0
    %v713 = vadd.f32 %v190, %v712
    %v714 = vpop.f32.mrb[0].mxu0
    %715 = vmatprep.mubr.f32.mxu0 0.0
    %716 = vmatmul.mubr.f32.gmra.mrb[0].mxu0 %v238
    %v717 = vpop.f32.mrb[0].mxu0
    %v718 = vadd.f32 %v190, %v717
    %v719 = vpop.f32.mrb[0].mxu0
    %720 = vmatprep.mubr.f32.mxu0 0.0
    %721 = vmatmul.mubr.f32.gmra.mrb[0].mxu0 %v241
    %v722 = vpop.f32.mrb[0].mxu0
    %v723 = vadd.f32 %v190, %v722
    %v724 = vpop.f32.mrb[0].mxu0
    %725 = vmatprep.mubr.f32.mxu0 0.0
    %726 = vmatmul.mubr.f32.gmra.mrb[0].mxu0 %v244
    %v727 = vpop.f32.mrb[0].mxu0
    %v728 = vadd.f32 %v190, %v727
    %v729 = vpop.f32.mrb[0].mxu0
    %730 = vmatprep.mubr.f32.mxu0 0.0
    %731 = vmatmul.mubr.f32.gmra.mrb[0].mxu0 %v247
    %v732 = vpop.f32.mrb[0].mxu0
    %v733 = vadd.f32 %v190, %v732
    %v734 = vpop.f32.mrb[0].mxu0
    %735 = vmatprep.mubr.f32.mxu0 0.0
    %736 = vmatmul.mubr.f32.gmra.mrb[0].mxu0 %v250
    %v737 = vpop.f32.mrb[0].mxu0
    %v738 = vadd.f32 %v190, %v737
    %v739 = vpop.f32.mrb[0].mxu0
    %740 = vmatprep.mubr.f32.mxu0 0.0
    %741 = vmatmul.mubr.f32.gmra.mrb[0].mxu0 %v253
    %v742 = vpop.f32.mrb[0].mxu0
    %v743 = vadd.f32 %v190, %v742
    %v744 = vpop.f32.mrb[0].mxu0
    %745 = vmatprep.mubr.f32.mxu0 0.0
    %746 = vmatmul.mubr.f32.gmra.mrb[0].mxu0 %v256
    %v747 = vpop.f32.mrb[0].mxu0
    %v748 = vadd.f32 %v190, %v747
    %v749 = vpop.f32.mrb[0].mxu0
    %750 = vmatprep.mubr.f32.mxu0 0.0
    %751 = vmatmul.mubr.f32.gmra.mrb[0].mxu0 %v259
    %v752 = vpop.f32.mrb[0].mxu0
    %v753 = vadd.f32 %v190, %v752
    %v754 = vpop.f32.mrb[0].mxu0
    %755 = vmatprep.mubr.f32.mxu0 0.0
    %756 = vmatmul.mubr.f32.gmra.mrb[0].mxu0 %v262
    %v757 = vpop.f32.mrb[0].mxu0
    %v758 = vadd.f32 %v190, %v757
    %v759 = vpop.f32.mrb[0].mxu0
    %760 = vmatprep.mubr.f32.mxu0 0.0
    %761 = vmatmul.mubr.f32.gmra.mrb[0].mxu0 %v265
    %v762 = vpop.f32.mrb[0].mxu0
    %v763 = vadd.f32 %v190, %v762
    %v764 = vpop.f32.mrb[0].mxu0
    %765 = vmatprep.mubr.f32.mxu0 0.0
    %766 = vmatmul.mubr.f32.gmra.mrb[0].mxu0 %v268
    %v767 = vpop.f32.mrb[0].mxu0
    %v768 = vadd.f32 %v190, %v767
    %v769 = vpop.f32.mrb[0].mxu0
    %770 = vmatprep.mubr.f32.mxu0 0.0
    %771 = vmatmul.mubr.f32.gmra.mrb[0].mxu0 %v271
    %v772 = vpop.f32.mrb[0].mxu0
    %v773 = vadd.f32 %v190, %v772
    %v774 = vpop.f32.mrb[0].mxu0
    %775 = vmatprep.mubr.f32.mxu0 0.0
    %776 = vmatmul.mubr.f32.gmra.mrb[0].mxu0 %v274
    %v777 = vpop.f32.mrb[0].mxu0
    %v778 = vadd.f32 %v190, %v777
    %v779 = vpop.f32.mrb[0].mxu0
    %780 = vmatprep.mubr.f32.mxu0 0.0
    %781 = vmatmul.mubr.f32.gmra.mrb[0].mxu0 %v277
    %v782 = vpop.f32.mrb[0].mxu0
    %v783 = vadd.f32 %v190, %v782
    %v784 = vpop.f32.mrb[0].mxu0
    %785 = vmatprep.mubr.f32.mxu0 0.0
    %786 = vmatmul.mubr.f32.gmra.mrb[0].mxu0 %v280
    %v787 = vpop.f32.mrb[0].mxu0
    %v788 = vadd.f32 %v190, %v787
    %v789 = vpop.f32.mrb[0].mxu0
    %790 = vmatprep.mubr.f32.mxu0 0.0
    %791 = vmatmul.mubr.f32.gmra.mrb[0].mxu0 %v283
    %v792 = vpop.f32.mrb[0].mxu0
    %v793 = vadd.f32 %v190, %v792
    %v794 = vpop.f32.mrb[0].mxu0
    %795 = vmatprep.mubr.f32.mxu0 0.0
    %796 = vmatmul.mubr.f32.gmra.mrb[0].mxu0 %v286
    %v797 = vpop.f32.mrb[0].mxu0
    %v798 = vadd.f32 %v190, %v797
    %v799 = vpop.f32.mrb[0].mxu0
    %800 = vmatprep.mubr.f32.mxu0 0.0
    %801 = vmatmul.mubr.f32.gmra.mrb[0].mxu0 %v289
    %v802 = vpop.f32.mrb[0].mxu0
    %v803 = vadd.f32 %v190, %v802
    %v804 = vpop.f32.mrb[0].mxu0
    %805 = vmatprep.mubr.f32.mxu0 0.0
    %806 = vmatmul.mubr.f32.gmra.mrb[0].mxu0 %v292
    %v807 = vpop.f32.mrb[0].mxu0
    %v808 = vadd.f32 %v190, %v807
    %v809 = vpop.f32.mrb[0].mxu0
    %810 = vmatprep.mubr.f32.mxu0 0.0
    %811 = vmatmul.mubr.f32.gmra.mrb[0].mxu0 %v295
    %v812 = vpop.f32.mrb[0].mxu0
    %v813 = vadd.f32 %v190, %v812
    %v814 = vpop.f32.mrb[0].mxu0
    %815 = vmatprep.mubr.f32.mxu0 0.0
    %816 = vmatmul.mubr.f32.gmra.mrb[0].mxu0 %v298
    %v817 = vpop.f32.mrb[0].mxu0
    %v818 = vadd.f32 %v190, %v817
    %v819 = vpop.f32.mrb[0].mxu0
    %820 = vmatprep.mubr.f32.mxu0 0.0
    %821 = vmatmul.mubr.f32.gmra.mrb[0].mxu0 %v301
    %v822 = vpop.f32.mrb[0].mxu0
    %v823 = vadd.f32 %v190, %v822
    %v824 = vpop.f32.mrb[0].mxu0
    %825 = vmatprep.mubr.f32.mxu0 0.0
    %826 = vmatmul.mubr.f32.gmra.mrb[0].mxu0 %v304
    %v827 = vpop.f32.mrb[0].mxu0
    %v828 = vadd.f32 %v190, %v827
    %v829 = vpop.f32.mrb[0].mxu0
    %830 = vmatprep.mubr.f32.mxu0 0.0
    %831 = vmatmul.mubr.f32.gmra.mrb[0].mxu0 %v307
    %v832 = vpop.f32.mrb[0].mxu0
    %v833 = vadd.f32 %v190, %v832
    %v834 = vpop.f32.mrb[0].mxu0
    %835 = vmatprep.mubr.f32.mxu0 0.0
    %836 = vmatmul.mubr.f32.gmra.mrb[0].mxu0 %v310
    %v837 = vpop.f32.mrb[0].mxu0
    %v838 = vadd.f32 %v190, %v837
    %v839 = vpop.f32.mrb[0].mxu0
    %840 = vmatprep.mubr.f32.mxu0 0.0
    %841 = vmatmul.mubr.f32.gmra.mrb[0].mxu0 %v313
    %v842 = vpop.f32.mrb[0].mxu0
    %v843 = vadd.f32 %v190, %v842
    %v844 = vpop.f32.mrb[0].mxu0
    %845 = vmatprep.mubr.f32.mxu0 0.0
    %846 = vmatmul.mubr.f32.gmra.mrb[0].mxu0 %v316
    %v847 = vpop.f32.mrb[0].mxu0
    %v848 = vadd.f32 %v190, %v847
    %v849 = vpop.f32.mrb[0].mxu0
    %850 = vmatprep.mubr.f32.mxu0 0.0
    %851 = vmatmul.mubr.f32.gmra.mrb[0].mxu0 %v319
    %v852 = vpop.f32.mrb[0].mxu0
    %v853 = vadd.f32 %v190, %v852
    %v854 = vpop.f32.mrb[0].mxu0
    %855 = vmatprep.mubr.f32.mxu0 0.0
    %856 = vmatmul.mubr.f32.gmra.mrb[0].mxu0 %v322
    %v857 = vpop.f32.mrb[0].mxu0
    %v858 = vadd.f32 %v190, %v857
    %v859 = vpop.f32.mrb[0].mxu0
    %860 = vmatprep.mubr.f32.mxu0 0.0
    %861 = vmatmul.mubr.f32.gmra.mrb[0].mxu0 %v325
    %v862 = vpop.f32.mrb[0].mxu0
    %v863 = vadd.f32 %v190, %v862
    %v864 = vpop.f32.mrb[0].mxu0
    %865 = vmatprep.mubr.f32.mxu0 0.0
    %866 = vmatmul.mubr.f32.gmra.mrb[0].mxu0 %v328
    %v867 = vpop.f32.mrb[0].mxu0
    %v868 = vadd.f32 %v190, %v867
    %v869 = vpop.f32.mrb[0].mxu0
    %870 = vmatprep.mubr.f32.mxu0 0.0
    %871 = vmatmul.mubr.f32.gmra.mrb[0].mxu0 %v331
    %v872 = vpop.f32.mrb[0].mxu0
    %v873 = vadd.f32 %v190, %v872
    %v874 = vpop.f32.mrb[0].mxu0
    %875 = vmatprep.mubr.f32.mxu0 0.0
    %876 = vmatmul.mubr.f32.gmra.mrb[0].mxu0 %v334
    %v877 = vpop.f32.mrb[0].mxu0
    %v878 = vadd.f32 %v190, %v877
    %v879 = vpop.f32.mrb[0].mxu0
    %880 = vmatprep.mubr.f32.mxu0 0.0
    %881 = vmatmul.mubr.f32.gmra.mrb[0].mxu0 %v337
    %v882 = vpop.f32.mrb[0].mxu0
    %v883 = vadd.f32 %v190, %v882
    %v884 = vpop.f32.mrb[0].mxu0
    %885 = vmatprep.mubr.f32.mxu0 0.0
    %886 = vmatmul.mubr.f32.gmra.mrb[0].mxu0 %v340
    %v887 = vpop.f32.mrb[0].mxu0
    %v888 = vadd.f32 %v190, %v887
    %v889 = vpop.f32.mrb[0].mxu0
    %890 = vmatprep.mubr.f32.mxu0 0.0
    %891 = vmatmul.mubr.f32.gmra.mrb[0].mxu0 %v343
    %v892 = vpop.f32.mrb[0].mxu0
    %v893 = vadd.f32 %v190, %v892
    %v894 = vpop.f32.mrb[0].mxu0
    %895 = vmatprep.mubr.f32.mxu0 0.0
    %896 = vmatmul.mubr.f32.gmra.mrb[0].mxu0 %v346
    %v897 = vpop.f32.mrb[0].mxu0
    %v898 = vadd.f32 %v190, %v897
    %v899 = vpop.f32.mrb[0].mxu0
    %900 = vmatprep.mubr.f32.mxu0 0.0
    %901 = vmatmul.mubr.f32.gmra.mrb[0].mxu0 %v349
    %v902 = vpop.f32.mrb[0].mxu0
    %v903 = vadd.f32 %v190, %v902
    %v904 = vpop.f32.mrb[0].mxu0
    %905 = vmatprep.mubr.f32.mxu0 0.0
    %906 = vmatmul.mubr.f32.gmra.mrb[0].mxu0 %v352
    %v907 = vpop.f32.mrb[0].mxu0
    %v908 = vadd.f32 %v190, %v907
    %v909 = vpop.f32.mrb[0].mxu0
    %910 = vmatprep.mubr.f32.mxu0 0.0
    %911 = vmatmul.mubr.f32.gmra.mrb[0].mxu0 %v355
    %v912 = vpop.f32.mrb[0].mxu0
    %v913 = vadd.f32 %v190, %v912
    %v914 = vpop.f32.mrb[0].mxu0
    %915 = vmatprep.mubr.f32.mxu0 0.0
    %916 = vmatmul.mubr.f32.gmra.mrb[0].mxu0 %v358
    %v917 = vpop.f32.mrb[0].mxu0
    %v918 = vadd.f32 %v190, %v917
    %v919 = vpop.f32.mrb[0].mxu0
    %920 = vmatprep.mubr.f32.mxu0 0.0
    %921 = vmatmul.mubr.f32.gmra.mrb[0].mxu0 %v361
    %v922 = vpop.f32.mrb[0].mxu0
    %v923 = vadd.f32 %v190, %v922
    %v924 = vpop.f32.mrb[0].mxu0
    %925 = vmatprep.mubr.f32.mxu0 0.0
    %926 = vmatmul.mubr.f32.gmra.mrb[0].mxu0 %v364
    %v927 = vpop.f32.mrb[0].mxu0
    %v928 = vadd.f32 %v190, %v927
    %v929 = vpop.f32.mrb[0].mxu0
    %930 = vmatprep.mubr.f32.mxu0 0.0
    %931 = vmatmul.mubr.f32.gmra.mrb[0].mxu0 %v367
    %v932 = vpop.f32.mrb[0].mxu0
    %v933 = vadd.f32 %v190, %v932
    %v934 = vpop.f32.mrb[0].mxu0
    %935 = vmatprep.mubr.f32.mxu0 0.0
    %936 = vmatmul.mubr.f32.gmra.mrb[0].mxu0 %v370
    %v937 = vpop.f32.mrb[0].mxu0
    %v938 = vadd.f32 %v190, %v937
    %v939 = vpop.f32.mrb[0].mxu0
    %940 = vmatprep.mubr.f32.mxu0 0.0
    %941 = vmatmul.mubr.f32.gmra.mrb[0].mxu0 %v373
    %v942 = vpop.f32.mrb[0].mxu0
    %v943 = vadd.f32 %v190, %v942
    %v944 = vpop.f32.mrb[0].mxu0
    %945 = vmatprep.mubr.f32.mxu0 0.0
    %946 = vmatmul.mubr.f32.gmra.mrb[0].mxu0 %v376
    %v947 = vpop.f32.mrb[0].mxu0
    %v948 = vadd.f32 %v190, %v947
    %v949 = vpop.f32.mrb[0].mxu0
    %950 = vmatprep.mubr.f32.mxu0 0.0
    %951 = vmatmul.mubr.f32.gmra.mrb[0].mxu0 %v379
    %v952 = vpop.f32.mrb[0].mxu0
    %v953 = vadd.f32 %v190, %v952
    %v954 = vpop.f32.mrb[0].mxu0
    %955 = vmatprep.mubr.f32.mxu0 0.0
    %956 = vmatmul.mubr.f32.gmra.mrb[0].mxu0 %v382
    %v957 = vpop.f32.mrb[0].mxu0
    %v958 = vadd.f32 %v190, %v957
    %v959 = vpop.f32.mrb[0].mxu0
    %960 = vmatprep.mubr.f32.mxu0 0.0
    %961 = vmatmul.mubr.f32.gmra.mrb[0].mxu0 %v385
    %v962 = vpop.f32.mrb[0].mxu0
    %v963 = vadd.f32 %v190, %v962
    %v964 = vpop.f32.mrb[0].mxu0
    %965 = vmatprep.mubr.f32.mxu0 0.0
    %966 = vmatmul.mubr.f32.gmra.mrb[0].mxu0 %v388
    %v967 = vpop.f32.mrb[0].mxu0
    %v968 = vadd.f32 %v190, %v967
    %v969 = vpop.f32.mrb[0].mxu0
    %970 = vmatprep.mubr.f32.mxu0 0.0
    %971 = vmatmul.mubr.f32.gmra.mrb[0].mxu0 %v391
    %v972 = vpop.f32.mrb[0].mxu0
    %v973 = vadd.f32 %v190, %v972
    %v974 = vpop.f32.mrb[0].mxu0
    %975 = vmatprep.mubr.f32.mxu0 0.0
    %976 = vmatmul.mubr.f32.gmra.mrb[0].mxu0 %v394
    %v977 = vpop.f32.mrb[0].mxu0
    %v978 = vadd.f32 %v190, %v977
    %v979 = vpop.f32.mrb[0].mxu0
    %980 = vmatprep.mubr.f32.mxu0 0.0
    %981 = vmatmul.mubr.f32.gmra.mrb[0].mxu0 %v397
    %v982 = vpop.f32.mrb[0].mxu0
    %v983 = vadd.f32 %v190, %v982
    %v984 = vpop.f32.mrb[0].mxu0
    %985 = vmatprep.mubr.f32.mxu0 0.0
    %986 = vmatmul.mubr.f32.gmra.mrb[0].mxu0 %v400
    %v987 = vpop.f32.mrb[0].mxu0
    %v988 = vadd.f32 %v190, %v987
    %v989 = vpop.f32.mrb[0].mxu0
    %990 = vmatprep.mubr.f32.mxu0 0.0
    %991 = vmatmul.mubr.f32.gmra.mrb[0].mxu0 %v403
    %v992 = vpop.f32.mrb[0].mxu0
    %v993 = vadd.f32 %v190, %v992
    %v994 = vpop.f32.mrb[0].mxu0
    %995 = vmatprep.mubr.f32.mxu0 0.0
    %996 = vmatmul.mubr.f32.gmra.mrb[0].mxu0 %v406
    %v997 = vpop.f32.mrb[0].mxu0
    %v998 = vadd.f32 %v190, %v997
    %v999 = vpop.f32.mrb[0].mxu0
    %1000 = vmatprep.mubr.f32.mxu0 0.0
    %1001 = vmatmul.mubr.f32.gmra.mrb[0].mxu0 %v409
    %v1002 = vpop.f32.mrb[0].mxu0
    %v1003 = vadd.f32 %v190, %v1002
    %v1004 = vpop.f32.mrb[0].mxu0
    %1005 = vmatprep.mubr.f32.mxu0 0.0
    %1006 = vmatmul.mubr.f32.gmra.mrb[0].mxu0 %v412
    %v1007 = vpop.f32.mrb[0].mxu0
    %v1008 = vadd.f32 %v190, %v1007
    %v1009 = vpop.f32.mrb[0].mxu0
    %1010 = vmatprep.mubr.f32.mxu0 0.0
    %1011 = vmatmul.mubr.f32.gmra.mrb[0].mxu0 %v415
    %v1012 = vpop.f32.mrb[0].mxu0
    %v1013 = vadd.f32 %v190, %v1012
    %v1014 = vpop.f32.mrb[0].mxu0
    %1015 = vmatprep.mubr.f32.mxu0 0.0
    %1016 = vmatmul.mubr.f32.gmra.mrb[0].mxu0 %v418
    %v1017 = vpop.f32.mrb[0].mxu0
    %v1018 = vadd.f32 %v190, %v1017
    %v1019 = vpop.f32.mrb[0].mxu0
    %1020 = vmatprep.mubr.f32.mxu0 0.0
    %1021 = vmatmul.mubr.f32.gmra.mrb[0].mxu0 %v421
    %v1022 = vpop.f32.mrb[0].mxu0
    %v1023 = vadd.f32 %v190, %v1022
    %v1024 = vpop.f32.mrb[0].mxu0
    %1025 = vmatprep.mubr.f32.mxu0 0.0
    %1026 = vmatmul.mubr.f32.gmra.mrb[0].mxu0 %v424
    %v1027 = vpop.f32.mrb[0].mxu0
    %v1028 = vadd.f32 %v190, %v1027
    %v1029 = vpop.f32.mrb[0].mxu0
    %1030 = vmatprep.mubr.f32.mxu0 0.0
    %1031 = vmatmul.mubr.f32.gmra.mrb[0].mxu0 %v427
    %v1032 = vpop.f32.mrb[0].mxu0
    %v1033 = vadd.f32 %v190, %v1032
    %v1034 = vpop.f32.mrb[0].mxu0
    %1035 = vmatprep.mubr.f32.mxu0 0.0
    %1036 = vmatmul.mubr.f32.gmra.mrb[0].mxu0 %v430
    %v1037 = vpop.f32.mrb[0].mxu0
    %v1038 = vadd.f32 %v190, %v1037
    %v1039 = vpop.f32.mrb[0].mxu0
    %1040 = vmatprep.mubr.f32.mxu0 0.0
    %1041 = vmatmul.mubr.f32.gmra.mrb[0].mxu0 %v433
    %v1042 = vpop.f32.mrb[0].mxu0
    %v1043 = vadd.f32 %v190, %v1042
    %v1044 = vpop.f32.mrb[0].mxu0
    %1045 = vmatprep.mubr.f32.mxu0 0.0
    %1046 = vmatmul.mubr.f32.gmra.mrb[0].mxu0 %v436
    %v1047 = vpop.f32.mrb[0].mxu0
    %v1048 = vadd.f32 %v190, %v1047
    %v1049 = vpop.f32.mrb[0].mxu0
    %1050 = vmatprep.mubr.f32.mxu0 0.0
    %1051 = vmatmul.mubr.f32.gmra.mrb[0].mxu0 %v439
    %v1052 = vpop.f32.mrb[0].mxu0
    %v1053 = vadd.f32 %v190, %v1052
    %v1054 = vpop.f32.mrb[0].mxu0
    %1055 = vmatprep.mubr.f32.mxu0 0.0
    %1056 = vmatmul.mubr.f32.gmra.mrb[0].mxu0 %v442
    %v1057 = vpop.f32.mrb[0].mxu0
    %v1058 = vadd.f32 %v190, %v1057
    %v1059 = vpop.f32.mrb[0].mxu0
    %1060 = vmatprep.mubr.f32.mxu0 0.0
    %1061 = vmatmul.mubr.f32.gmra.mrb[0].mxu0 %v445
    %v1062 = vpop.f32.mrb[0].mxu0
    %v1063 = vadd.f32 %v190, %v1062
    %v1064 = vpop.f32.mrb[0].mxu0
    %1065 = vmatprep.mubr.f32.mxu0 0.0
    %1066 = vmatmul.mubr.f32.gmra.mrb[0].mxu0 %v448
    %v1067 = vpop.f32.mrb[0].mxu0
    %v1068 = vadd.f32 %v190, %v1067
    %v1069 = vpop.f32.mrb[0].mxu0
    %1070 = vmatprep.mubr.f32.mxu0 0.0
    %1071 = vmatmul.mubr.f32.gmra.mrb[0].mxu0 %v451
    %v1072 = vpop.f32.mrb[0].mxu0
    %v1073 = vadd.f32 %v190, %v1072
    %v1074 = vpop.f32.mrb[0].mxu0
    %1075 = vmatprep.mubr.f32.mxu0 0.0
    %1076 = vmatmul.mubr.f32.gmra.mrb[0].mxu0 %v454
    %v1077 = vpop.f32.mrb[0].mxu0
    %v1078 = vadd.f32 %v190, %v1077
    %v1079 = vpop.f32.mrb[0].mxu0
    %1080 = vmatprep.mubr.f32.mxu0 0.0
    %1081 = vmatmul.mubr.f32.gmra.mrb[0].mxu0 %v457
    %v1082 = vpop.f32.mrb[0].mxu0
    %v1083 = vadd.f32 %v190, %v1082
    %v1084 = vpop.f32.mrb[0].mxu0
    %1085 = vmatprep.mubr.f32.mxu0 0.0
    %1086 = vmatmul.mubr.f32.gmra.mrb[0].mxu0 %v460
    %v1087 = vpop.f32.mrb[0].mxu0
    %v1088 = vadd.f32 %v190, %v1087
    %v1089 = vpop.f32.mrb[0].mxu0
    %1090 = vmatprep.mubr.f32.mxu0 0.0
    %1091 = vmatmul.mubr.f32.gmra.mrb[0].mxu0 %v463
    %v1092 = vpop.f32.mrb[0].mxu0
    %v1093 = vadd.f32 %v190, %v1092
    %v1094 = vpop.f32.mrb[0].mxu0
    %1095 = vmatprep.mubr.f32.mxu0 0.0
    %1096 = vmatmul.mubr.f32.gmra.mrb[0].mxu0 %v466
    %v1097 = vpop.f32.mrb[0].mxu0
    %v1098 = vadd.f32 %v190, %v1097
    %v1099 = vpop.f32.mrb[0].mxu0
    %1100 = vmatprep.mubr.f32.mxu0 0.0
    %1101 = vmatmul.mubr.f32.gmra.mrb[0].mxu0 %v469
    %v1102 = vpop.f32.mrb[0].mxu0
    %v1103 = vadd.f32 %v190, %v1102
    %v1104 = vpop.f32.mrb[0].mxu0
    %1105 = vmatprep.mubr.f32.mxu0 0.0
    %1106 = vmatmul.mubr.f32.gmra.mrb[0].mxu0 %v472
    %v1107 = vpop.f32.mrb[0].mxu0
    %v1108 = vadd.f32 %v190, %v1107
    %v1109 = vpop.f32.mrb[0].mxu0
    %1110 = vmatprep.mubr.f32.mxu0 0.0
    %1111 = vmatmul.mubr.f32.gmra.mrb[0].mxu0 %v475
    %v1112 = vpop.f32.mrb[0].mxu0
    %v1113 = vadd.f32 %v190, %v1112
    %v1114 = vpop.f32.mrb[0].mxu0
    %1115 = vmatprep.mubr.f32.mxu0 0.0
    %1116 = vmatmul.mubr.f32.gmra.mrb[0].mxu0 %v478
    %v1117 = vpop.f32.mrb[0].mxu0
    %v1118 = vadd.f32 %v190, %v1117
    %v1119 = vpop.f32.mrb[0].mxu0
    %1120 = vmatprep.mubr.f32.mxu0 0.0
    %1121 = vmatmul.mubr.f32.gmra.mrb[0].mxu0 %v481
    %v1122 = vpop.f32.mrb[0].mxu0
    %v1123 = vadd.f32 %v190, %v1122
    %v1124 = vpop.f32.mrb[0].mxu0
    %1125 = vmatprep.mubr.f32.mxu0 0.0
    %1126 = vmatmul.mubr.f32.gmra.mrb[0].mxu0 %v484
    %v1127 = vpop.f32.mrb[0].mxu0
    %v1128 = vadd.f32 %v190, %v1127
    %v1129 = vpop.f32.mrb[0].mxu0
    %1130 = vmatprep.mubr.f32.mxu0 0.0
    %1131 = vmatmul.mubr.f32.gmra.mrb[0].mxu0 %v487
    %v1132 = vpop.f32.mrb[0].mxu0
    %v1133 = vadd.f32 %v190, %v1132
    %v1134 = vpop.f32.mrb[0].mxu0
    %1135 = vmatprep.mubr.f32.mxu0 0.0
    %1136 = vmatmul.mubr.f32.gmra.mrb[0].mxu0 %v490
    %v1137 = vpop.f32.mrb[0].mxu0
    %v1138 = vadd.f32 %v190, %v1137
    %v1139 = vpop.f32.mrb[0].mxu0
    %1140 = vmatprep.mubr.f32.mxu0 0.0
    %1141 = vmatmul.mubr.f32.gmra.mrb[0].mxu0 %v493
    %v1142 = vpop.f32.mrb[0].mxu0
    %v1143 = vadd.f32 %v190, %v1142
    %v1144 = vpop.f32.mrb[0].mxu0
    %1145 = vmatprep.mubr.f32.mxu0 0.0
    %1146 = vmatmul.mubr.f32.gmra.mrb[0].mxu0 %v496
    %v1147 = vpop.f32.mrb[0].mxu0
    %v1148 = vadd.f32 %v190, %v1147
    %v1149 = vpop.f32.mrb[0].mxu0
    %1150 = vmatprep.mubr.f32.mxu0 0.0
    %1151 = vmatmul.mubr.f32.gmra.mrb[0].mxu0 %v499
    %v1152 = vpop.f32.mrb[0].mxu0
    %v1153 = vadd.f32 %v190, %v1152
    %v1154 = vpop.f32.mrb[0].mxu0
    %1155 = vmatprep.mubr.f32.mxu0 0.0
    %1156 = vmatmul.mubr.f32.gmra.mrb[0].mxu0 %v502
    %v1157 = vpop.f32.mrb[0].mxu0
    %v1158 = vadd.f32 %v190, %v1157
    %v1159 = vpop.f32.mrb[0].mxu0
    %1160 = vmatprep.mubr.f32.mxu0 0.0
    %1161 = vmatmul.mubr.f32.gmra.mrb[0].mxu0 %v505
    %v1162 = vpop.f32.mrb[0].mxu0
    %v1163 = vadd.f32 %v190, %v1162
    %v1164 = vpop.f32.mrb[0].mxu0
    %1165 = vmatprep.mubr.f32.mxu0 0.0
    %1166 = vmatmul.mubr.f32.gmra.mrb[0].mxu0 %v508
    %v1167 = vpop.f32.mrb[0].mxu0
    %v1168 = vadd.f32 %v190, %v1167
    %v1169 = vpop.f32.mrb[0].mxu0
    %1170 = vmatprep.mubr.f32.mxu0 0.0
    %1171 = vmatmul.mubr.f32.gmra.mrb[0].mxu0 %v511
    %v1172 = vpop.f32.mrb[0].mxu0
    %v1173 = vadd.f32 %v190, %v1172
    %v1174 = vpop.f32.mrb[0].mxu0
    %1175 = vmatprep.mubr.f32.mxu0 0.0
    %1176 = vmatmul.mubr.f32.gmra.mrb[0].mxu0 %v514
    %v1177 = vpop.f32.mrb[0].mxu0
    %v1178 = vadd.f32 %v190, %v1177
    %v1179 = vpop.f32.mrb[0].mxu0
    %1180 = vmatprep.mubr.f32.mxu0 0.0
    %1181 = vmatmul.mubr.f32.gmra.mrb[0].mxu0 %v517
    %v1182 = vpop.f32.mrb[0].mxu0
    %v1183 = vadd.f32 %v190, %v1182
    %v1184 = vpop.f32.mrb[0].mxu0
    %1185 = vmatprep.mubr.f32.mxu0 0.0
    %1186 = vmatmul.mubr.f32.gmra.mrb[0].mxu0 %v520
    %v1187 = vpop.f32.mrb[0].mxu0
    %v1188 = vadd.f32 %v190, %v1187
    %v1189 = vpop.f32.mrb[0].mxu0
    %1190 = vmatprep.mubr.f32.mxu0 0.0
    %1191 = vmatmul.mubr.f32.gmra.mrb[0].mxu0 %v523
    %v1192 = vpop.f32.mrb[0].mxu0
    %v1193 = vadd.f32 %v190, %v1192
    %v1194 = vpop.f32.mrb[0].mxu0
    %1195 = vmatprep.mubr.f32.mxu0 0.0
    %1196 = vmatmul.mubr.f32.gmra.mrb[0].mxu0 %v526
    %v1197 = vpop.f32.mrb[0].mxu0
    %v1198 = vadd.f32 %v190, %v1197
    %v1199 = vpop.f32.mrb[0].mxu0
    %1200 = vmatprep.mubr.f32.mxu0 0.0
    %1201 = vmatmul.mubr.f32.gmra.mrb[0].mxu0 %v529
    %v1202 = vpop.f32.mrb[0].mxu0
    %v1203 = vadd.f32 %v190, %v1202
    %v1204 = vpop.f32.mrb[0].mxu0
    %1205 = vmatprep.mubr.f32.mxu0 0.0
    %1206 = vmatmul.mubr.f32.gmra.mrb[0].mxu0 %v532
    %v1207 = vpop.f32.mrb[0].mxu0
    %v1208 = vadd.f32 %v190, %v1207
    %v1209 = vpop.f32.mrb[0].mxu0
    %1210 = vmatprep.mubr.f32.mxu0 0.0
    %1211 = vmatmul.mubr.f32.gmra.mrb[0].mxu0 %v535
    %v1212 = vpop.f32.mrb[0].mxu0
    %v1213 = vadd.f32 %v190, %v1212
    %v1214 = vpop.f32.mrb[0].mxu0
    %1215 = vmatprep.mubr.f32.mxu0 0.0
    %1216 = vmatmul.mubr.f32.gmra.mrb[0].mxu0 %v538
    %v1217 = vpop.f32.mrb[0].mxu0
    %v1218 = vadd.f32 %v190, %v1217
    %v1219 = vpop.f32.mrb[0].mxu0
    %1220 = vmatprep.mubr.f32.mxu0 0.0
    %1221 = vmatmul.mubr.f32.gmra.mrb[0].mxu0 %v541
    %v1222 = vpop.f32.mrb[0].mxu0
    %v1223 = vadd.f32 %v190, %v1222
    %v1224 = vpop.f32.mrb[0].mxu0
    %1225 = vmatprep.mubr.f32.mxu0 0.0
    %1226 = vmatmul.mubr.f32.gmra.mrb[0].mxu0 %v544
    %v1227 = vpop.f32.mrb[0].mxu0
    %v1228 = vadd.f32 %v190, %v1227
    %v1229 = vpop.f32.mrb[0].mxu0
    %1230 = vmatprep.mubr.f32.mxu0 0.0
    %1231 = vmatmul.mubr.f32.gmra.mrb[0].mxu0 %v547
    %v1232 = vpop.f32.mrb[0].mxu0
    %v1233 = vadd.f32 %v190, %v1232
    %v1234 = vpop.f32.mrb[0].mxu0
    %1235 = vmatprep.mubr.f32.mxu0 0.0
    %1236 = vmatmul.mubr.f32.gmra.mrb[0].mxu0 %v550
    %v1237 = vpop.f32.mrb[0].mxu0
    %v1238 = vadd.f32 %v190, %v1237
    %v1239 = vpop.f32.mrb[0].mxu0
    %1240 = vmatprep.mubr.f32.mxu0 0.0
    %1241 = vmatmul.mubr.f32.gmra.mrb[0].mxu0 %v553
    %v1242 = vpop.f32.mrb[0].mxu0
    %v1243 = vadd.f32 %v190, %v1242
    %v1244 = vpop.f32.mrb[0].mxu0
    %1245 = vmatprep.mubr.f32.mxu0 0.0
    %1246 = vmatmul.mubr.f32.gmra.mrb[0].mxu0 %v556
    %v1247 = vpop.f32.mrb[0].mxu0
    %v1248 = vadd.f32 %v190, %v1247
    %v1249 = vpop.f32.mrb[0].mxu0
    %1250 = vmatprep.mubr.f32.mxu0 0.0
    %1251 = vmatmul.mubr.f32.gmra.mrb[0].mxu0 %v559
    %v1252 = vpop.f32.mrb[0].mxu0
    %v1253 = vadd.f32 %v190, %v1252
    %v1254 = vpop.f32.mrb[0].mxu0
    %1255 = vmatprep.mubr.f32.mxu0 0.0
    %1256 = vmatmul.mubr.f32.gmra.mrb[0].mxu0 %v562
    %v1257 = vpop.f32.mrb[0].mxu0
    %v1258 = vadd.f32 %v190, %v1257
    %v1259 = vpop.f32.mrb[0].mxu0
    %1260 = vmatprep.mubr.f32.mxu0 0.0
    %1261 = vmatmul.mubr.f32.gmra.mrb[0].mxu0 %v565
    %v1262 = vpop.f32.mrb[0].mxu0
    %v1263 = vadd.f32 %v190, %v1262
    %v1264 = vpop.f32.mrb[0].mxu0
    %1265 = vmatprep.mubr.f32.mxu0 0.0
    %1266 = vmatmul.mubr.f32.gmra.mrb[0].mxu0 %v568
    %v1267 = vpop.f32.mrb[0].mxu0
    %v1268 = vadd.f32 %v190, %v1267
    %v1269 = vpop.f32.mrb[0].mxu0
    %1270 = vmatprep.mubr.f32.mxu0 0.0
    %1271 = vmatmul.mubr.f32.gmra.mrb[0].mxu0 %v571
    %v1272 = vpop.f32.mrb[0].mxu0
    %v1273 = vadd.f32 %v190, %v1272
    %v1274 = vpop.f32.mrb[0].mxu0
    %1275 = vmatprep.mubr.f32.mxu0 0.0
    %1276 = vmatmul.mubr.f32.gmra.mrb[0].mxu0 %v574
    %v1277 = vpop.f32.mrb[0].mxu0
    %v1278 = vadd.f32 %v190, %v1277
    %v1279 = vpop.f32.mrb[0].mxu0
    %1280 = vdwg.mxu0
    %v1281 = vmul.f32 %v643, 0.5
    %v1282 = vmul.f32 %v648, 0.5
    %v1283 = vmul.f32 %v653, 0.5
    %v1284 = vmul.f32 %v658, 0.5
    %v1285 = vmul.f32 %v663, 0.5
    %v1286 = vmul.f32 %v668, 0.5
    %v1287 = vmul.f32 %v673, 0.5
    %v1288 = vmul.f32 %v678, 0.5
    %v1289 = vmul.f32 %v683, 0.5
    %v1290 = vmul.f32 %v688, 0.5
    %v1291 = vmul.f32 %v693, 0.5
    %v1292 = vmul.f32 %v698, 0.5
    %v1293 = vmul.f32 %v703, 0.5
    %v1294 = vmul.f32 %v708, 0.5
    %v1295 = vmul.f32 %v713, 0.5
    %v1296 = vmul.f32 %v718, 0.5
    %v1297 = vmul.f32 %v723, 0.5
    %v1298 = vmul.f32 %v728, 0.5
    %v1299 = vmul.f32 %v733, 0.5
    %v1300 = vmul.f32 %v738, 0.5
    %v1301 = vmul.f32 %v743, 0.5
    %v1302 = vmul.f32 %v748, 0.5
    %v1303 = vmul.f32 %v753, 0.5
    %v1304 = vmul.f32 %v758, 0.5
    %v1305 = vmul.f32 %v763, 0.5
    %v1306 = vmul.f32 %v768, 0.5
    %v1307 = vmul.f32 %v773, 0.5
    %v1308 = vmul.f32 %v778, 0.5
    %v1309 = vmul.f32 %v783, 0.5
    %v1310 = vmul.f32 %v788, 0.5
    %v1311 = vmul.f32 %v793, 0.5
    %v1312 = vmul.f32 %v798, 0.5
    %v1313 = vmul.f32 %v803, 0.5
    %v1314 = vmul.f32 %v808, 0.5
    %v1315 = vmul.f32 %v813, 0.5
    %v1316 = vmul.f32 %v818, 0.5
    %v1317 = vmul.f32 %v823, 0.5
    %v1318 = vmul.f32 %v828, 0.5
    %v1319 = vmul.f32 %v833, 0.5
    %v1320 = vmul.f32 %v838, 0.5
    %v1321 = vmul.f32 %v843, 0.5
    %v1322 = vmul.f32 %v848, 0.5
    %v1323 = vmul.f32 %v853, 0.5
    %v1324 = vmul.f32 %v858, 0.5
    %v1325 = vmul.f32 %v863, 0.5
    %v1326 = vmul.f32 %v868, 0.5
    %v1327 = vmul.f32 %v873, 0.5
    %v1328 = vmul.f32 %v878, 0.5
    %v1329 = vmul.f32 %v883, 0.5
    %v1330 = vmul.f32 %v888, 0.5
    %v1331 = vmul.f32 %v893, 0.5
    %v1332 = vmul.f32 %v898, 0.5
    %v1333 = vmul.f32 %v903, 0.5
    %v1334 = vmul.f32 %v908, 0.5
    %v1335 = vmul.f32 %v913, 0.5
    %v1336 = vmul.f32 %v918, 0.5
    %v1337 = vmul.f32 %v923, 0.5
    %v1338 = vmul.f32 %v928, 0.5
    %v1339 = vmul.f32 %v933, 0.5
    %v1340 = vmul.f32 %v938, 0.5
    %v1341 = vmul.f32 %v943, 0.5
    %v1342 = vmul.f32 %v948, 0.5
    %v1343 = vmul.f32 %v953, 0.5
    %v1344 = vmul.f32 %v958, 0.5
    %v1345 = vmul.f32 %v963, 0.5
    %v1346 = vmul.f32 %v968, 0.5
    %v1347 = vmul.f32 %v973, 0.5
    %v1348 = vmul.f32 %v978, 0.5
    %v1349 = vmul.f32 %v983, 0.5
    %v1350 = vmul.f32 %v988, 0.5
    %v1351 = vmul.f32 %v993, 0.5
    %v1352 = vmul.f32 %v998, 0.5
    %v1353 = vmul.f32 %v1003, 0.5
    %v1354 = vmul.f32 %v1008, 0.5
    %v1355 = vmul.f32 %v1013, 0.5
    %v1356 = vmul.f32 %v1018, 0.5
    %v1357 = vmul.f32 %v1023, 0.5
    %v1358 = vmul.f32 %v1028, 0.5
    %v1359 = vmul.f32 %v1033, 0.5
    %v1360 = vmul.f32 %v1038, 0.5
    %v1361 = vmul.f32 %v1043, 0.5
    %v1362 = vmul.f32 %v1048, 0.5
    %v1363 = vmul.f32 %v1053, 0.5
    %v1364 = vmul.f32 %v1058, 0.5
    %v1365 = vmul.f32 %v1063, 0.5
    %v1366 = vmul.f32 %v1068, 0.5
    %v1367 = vmul.f32 %v1073, 0.5
    %v1368 = vmul.f32 %v1078, 0.5
    %v1369 = vmul.f32 %v1083, 0.5
    %v1370 = vmul.f32 %v1088, 0.5
    %v1371 = vmul.f32 %v1093, 0.5
    %v1372 = vmul.f32 %v1098, 0.5
    %v1373 = vmul.f32 %v1103, 0.5
    %v1374 = vmul.f32 %v1108, 0.5
    %v1375 = vmul.f32 %v1113, 0.5
    %v1376 = vmul.f32 %v1118, 0.5
    %v1377 = vmul.f32 %v1123, 0.5
    %v1378 = vmul.f32 %v1128, 0.5
    %v1379 = vmul.f32 %v1133, 0.5
    %v1380 = vmul.f32 %v1138, 0.5
    %v1381 = vmul.f32 %v1143, 0.5
    %v1382 = vmul.f32 %v1148, 0.5
    %v1383 = vmul.f32 %v1153, 0.5
    %v1384 = vmul.f32 %v1158, 0.5
    %v1385 = vmul.f32 %v1163, 0.5
    %v1386 = vmul.f32 %v1168, 0.5
    %v1387 = vmul.f32 %v1173, 0.5
    %v1388 = vmul.f32 %v1178, 0.5
    %v1389 = vmul.f32 %v1183, 0.5
    %v1390 = vmul.f32 %v1188, 0.5
    %v1391 = vmul.f32 %v1193, 0.5
    %v1392 = vmul.f32 %v1198, 0.5
    %v1393 = vmul.f32 %v1203, 0.5
    %v1394 = vmul.f32 %v1208, 0.5
    %v1395 = vmul.f32 %v1213, 0.5
    %v1396 = vmul.f32 %v1218, 0.5
    %v1397 = vmul.f32 %v1223, 0.5
    %v1398 = vmul.f32 %v1228, 0.5
    %v1399 = vmul.f32 %v1233, 0.5
    %v1400 = vmul.f32 %v1238, 0.5
    %v1401 = vmul.f32 %v1243, 0.5
    %v1402 = vmul.f32 %v1248, 0.5
    %v1403 = vmul.f32 %v1253, 0.5
    %v1404 = vmul.f32 %v1258, 0.5
    %v1405 = vmul.f32 %v1263, 0.5
    %v1406 = vmul.f32 %v1268, 0.5
    %v1407 = vmul.f32 %v1273, 0.5
    %v1408 = vmul.f32 %v1278, 0.5
    %v1409 = vmul.f32 %v643, 0.70710677
    %v1410 = vmul.f32 %v648, 0.70710677
    %v1411 = vmul.f32 %v653, 0.70710677
    %v1412 = vmul.f32 %v658, 0.70710677
    %v1413 = vmul.f32 %v663, 0.70710677
    %v1414 = vmul.f32 %v668, 0.70710677
    %v1415 = vmul.f32 %v673, 0.70710677
    %v1416 = vmul.f32 %v678, 0.70710677
    %v1417 = vmul.f32 %v683, 0.70710677
    %v1418 = vmul.f32 %v688, 0.70710677
    %v1419 = vmul.f32 %v693, 0.70710677
    %v1420 = vmul.f32 %v698, 0.70710677
    %v1421 = vmul.f32 %v703, 0.70710677
    %v1422 = vmul.f32 %v708, 0.70710677
    %v1423 = vmul.f32 %v713, 0.70710677
    %v1424 = vmul.f32 %v718, 0.70710677
    %v1425 = vmul.f32 %v723, 0.70710677
    %v1426 = vmul.f32 %v728, 0.70710677
    %v1427 = vmul.f32 %v733, 0.70710677
    %v1428 = vmul.f32 %v738, 0.70710677
    %v1429 = vmul.f32 %v743, 0.70710677
    %v1430 = vmul.f32 %v748, 0.70710677
    %v1431 = vmul.f32 %v753, 0.70710677
    %v1432 = vmul.f32 %v758, 0.70710677
    %v1433 = vmul.f32 %v763, 0.70710677
    %v1434 = vmul.f32 %v768, 0.70710677
    %v1435 = vmul.f32 %v773, 0.70710677
    %v1436 = vmul.f32 %v778, 0.70710677
    %v1437 = vmul.f32 %v783, 0.70710677
    %v1438 = vmul.f32 %v788, 0.70710677
    %v1439 = vmul.f32 %v793, 0.70710677
    %v1440 = vmul.f32 %v798, 0.70710677
    %v1441 = vmul.f32 %v803, 0.70710677
    %v1442 = vmul.f32 %v808, 0.70710677
    %v1443 = vmul.f32 %v813, 0.70710677
    %v1444 = vmul.f32 %v818, 0.70710677
    %v1445 = vmul.f32 %v823, 0.70710677
    %v1446 = vmul.f32 %v828, 0.70710677
    %v1447 = vmul.f32 %v833, 0.70710677
    %v1448 = vmul.f32 %v838, 0.70710677
    %v1449 = vmul.f32 %v843, 0.70710677
    %v1450 = vmul.f32 %v848, 0.70710677
    %v1451 = vmul.f32 %v853, 0.70710677
    %v1452 = vmul.f32 %v858, 0.70710677
    %v1453 = vmul.f32 %v863, 0.70710677
    %v1454 = vmul.f32 %v868, 0.70710677
    %v1455 = vmul.f32 %v873, 0.70710677
    %v1456 = vmul.f32 %v878, 0.70710677
    %v1457 = vmul.f32 %v883, 0.70710677
    %v1458 = vmul.f32 %v888, 0.70710677
    %v1459 = vmul.f32 %v893, 0.70710677
    %v1460 = vmul.f32 %v898, 0.70710677
    %v1461 = vmul.f32 %v903, 0.70710677
    %v1462 = vmul.f32 %v908, 0.70710677
    %v1463 = vmul.f32 %v913, 0.70710677
    %v1464 = vmul.f32 %v918, 0.70710677
    %v1465 = vmul.f32 %v923, 0.70710677
    %v1466 = vmul.f32 %v928, 0.70710677
    %v1467 = vmul.f32 %v933, 0.70710677
    %v1468 = vmul.f32 %v938, 0.70710677
    %v1469 = vmul.f32 %v943, 0.70710677
    %v1470 = vmul.f32 %v948, 0.70710677
    %v1471 = vmul.f32 %v953, 0.70710677
    %v1472 = vmul.f32 %v958, 0.70710677
    %v1473 = vmul.f32 %v963, 0.70710677
    %v1474 = vmul.f32 %v968, 0.70710677
    %v1475 = vmul.f32 %v973, 0.70710677
    %v1476 = vmul.f32 %v978, 0.70710677
    %v1477 = vmul.f32 %v983, 0.70710677
    %v1478 = vmul.f32 %v988, 0.70710677
    %v1479 = vmul.f32 %v993, 0.70710677
    %v1480 = vmul.f32 %v998, 0.70710677
    %v1481 = vmul.f32 %v1003, 0.70710677
    %v1482 = vmul.f32 %v1008, 0.70710677
    %v1483 = vmul.f32 %v1013, 0.70710677
    %v1484 = vmul.f32 %v1018, 0.70710677
    %v1485 = vmul.f32 %v1023, 0.70710677
    %v1486 = vmul.f32 %v1028, 0.70710677
    %v1487 = vmul.f32 %v1033, 0.70710677
    %v1488 = vmul.f32 %v1038, 0.70710677
    %v1489 = vmul.f32 %v1043, 0.70710677
    %v1490 = vmul.f32 %v1048, 0.70710677
    %v1491 = vmul.f32 %v1053, 0.70710677
    %v1492 = vmul.f32 %v1058, 0.70710677
    %v1493 = vmul.f32 %v1063, 0.70710677
    %v1494 = vmul.f32 %v1068, 0.70710677
    %v1495 = vmul.f32 %v1073, 0.70710677
    %v1496 = vmul.f32 %v1078, 0.70710677
    %v1497 = vmul.f32 %v1083, 0.70710677
    %v1498 = vmul.f32 %v1088, 0.70710677
    %v1499 = vmul.f32 %v1093, 0.70710677
    %v1500 = vmul.f32 %v1098, 0.70710677
    %v1501 = vmul.f32 %v1103, 0.70710677
    %v1502 = vmul.f32 %v1108, 0.70710677
    %v1503 = vmul.f32 %v1113, 0.70710677
    %v1504 = vmul.f32 %v1118, 0.70710677
    %v1505 = vmul.f32 %v1123, 0.70710677
    %v1506 = vmul.f32 %v1128, 0.70710677
    %v1507 = vmul.f32 %v1133, 0.70710677
    %v1508 = vmul.f32 %v1138, 0.70710677
    %v1509 = vmul.f32 %v1143, 0.70710677
    %v1510 = vmul.f32 %v1148, 0.70710677
    %v1511 = vmul.f32 %v1153, 0.70710677
    %v1512 = vmul.f32 %v1158, 0.70710677
    %v1513 = vmul.f32 %v1163, 0.70710677
    %v1514 = vmul.f32 %v1168, 0.70710677
    %v1515 = vmul.f32 %v1173, 0.70710677
    %v1516 = vmul.f32 %v1178, 0.70710677
    %v1517 = vmul.f32 %v1183, 0.70710677
    %v1518 = vmul.f32 %v1188, 0.70710677
    %v1519 = vmul.f32 %v1193, 0.70710677
    %v1520 = vmul.f32 %v1198, 0.70710677
    %v1521 = vmul.f32 %v1203, 0.70710677
    %v1522 = vmul.f32 %v1208, 0.70710677
    %v1523 = vmul.f32 %v1213, 0.70710677
    %v1524 = vmul.f32 %v1218, 0.70710677
    %v1525 = vmul.f32 %v1223, 0.70710677
    %v1526 = vmul.f32 %v1228, 0.70710677
    %v1527 = vmul.f32 %v1233, 0.70710677
    %v1528 = vmul.f32 %v1238, 0.70710677
    %v1529 = vmul.f32 %v1243, 0.70710677
    %v1530 = vmul.f32 %v1248, 0.70710677
    %v1531 = vmul.f32 %v1253, 0.70710677
    %v1532 = vmul.f32 %v1258, 0.70710677
    %v1533 = vmul.f32 %v1263, 0.70710677
    %v1534 = vmul.f32 %v1268, 0.70710677
    %v1535 = vmul.f32 %v1273, 0.70710677
    %v1536 = vmul.f32 %v1278, 0.70710677
    %v1537 = verf.f32.pop %v1409
    %v1538 = verf.f32.pop %v1410
    %v1539 = verf.f32.pop %v1411
    %v1540 = verf.f32.pop %v1412
    %v1541 = verf.f32.pop %v1413
    %v1542 = verf.f32.pop %v1414
    %v1543 = verf.f32.pop %v1415
    %v1544 = verf.f32.pop %v1416
    %v1545 = verf.f32.pop %v1417
    %v1546 = verf.f32.pop %v1418
    %v1547 = verf.f32.pop %v1419
    %v1548 = verf.f32.pop %v1420
    %v1549 = verf.f32.pop %v1421
    %v1550 = verf.f32.pop %v1422
    %v1551 = verf.f32.pop %v1423
    %v1552 = verf.f32.pop %v1424
    %v1553 = verf.f32.pop %v1425
    %v1554 = verf.f32.pop %v1426
    %v1555 = verf.f32.pop %v1427
    %v1556 = verf.f32.pop %v1428
    %v1557 = verf.f32.pop %v1429
    %v1558 = verf.f32.pop %v1430
    %v1559 = verf.f32.pop %v1431
    %v1560 = verf.f32.pop %v1432
    %v1561 = verf.f32.pop %v1433
    %v1562 = verf.f32.pop %v1434
    %v1563 = verf.f32.pop %v1435
    %v1564 = verf.f32.pop %v1436
    %v1565 = verf.f32.pop %v1437
    %v1566 = verf.f32.pop %v1438
    %v1567 = verf.f32.pop %v1439
    %v1568 = verf.f32.pop %v1440
    %v1569 = verf.f32.pop %v1441
    %v1570 = verf.f32.pop %v1442
    %v1571 = verf.f32.pop %v1443
    %v1572 = verf.f32.pop %v1444
    %v1573 = verf.f32.pop %v1445
    %v1574 = verf.f32.pop %v1446
    %v1575 = verf.f32.pop %v1447
    %v1576 = verf.f32.pop %v1448
    %v1577 = verf.f32.pop %v1449
    %v1578 = verf.f32.pop %v1450
    %v1579 = verf.f32.pop %v1451
    %v1580 = verf.f32.pop %v1452
    %v1581 = verf.f32.pop %v1453
    %v1582 = verf.f32.pop %v1454
    %v1583 = verf.f32.pop %v1455
    %v1584 = verf.f32.pop %v1456
    %v1585 = verf.f32.pop %v1457
    %v1586 = verf.f32.pop %v1458
    %v1587 = verf.f32.pop %v1459
    %v1588 = verf.f32.pop %v1460
    %v1589 = verf.f32.pop %v1461
    %v1590 = verf.f32.pop %v1462
    %v1591 = verf.f32.pop %v1463
    %v1592 = verf.f32.pop %v1464
    %v1593 = verf.f32.pop %v1465
    %v1594 = verf.f32.pop %v1466
    %v1595 = verf.f32.pop %v1467
    %v1596 = verf.f32.pop %v1468
    %v1597 = verf.f32.pop %v1469
    %v1598 = verf.f32.pop %v1470
    %v1599 = verf.f32.pop %v1471
    %v1600 = verf.f32.pop %v1472
    %v1601 = verf.f32.pop %v1473
    %v1602 = verf.f32.pop %v1474
    %v1603 = verf.f32.pop %v1475
    %v1604 = verf.f32.pop %v1476
    %v1605 = verf.f32.pop %v1477
    %v1606 = verf.f32.pop %v1478
    %v1607 = verf.f32.pop %v1479
    %v1608 = verf.f32.pop %v1480
    %v1609 = verf.f32.pop %v1481
    %v1610 = verf.f32.pop %v1482
    %v1611 = verf.f32.pop %v1483
    %v1612 = verf.f32.pop %v1484
    %v1613 = verf.f32.pop %v1485
    %v1614 = verf.f32.pop %v1486
    %v1615 = verf.f32.pop %v1487
    %v1616 = verf.f32.pop %v1488
    %v1617 = verf.f32.pop %v1489
    %v1618 = verf.f32.pop %v1490
    %v1619 = verf.f32.pop %v1491
    %v1620 = verf.f32.pop %v1492
    %v1621 = verf.f32.pop %v1493
    %v1622 = verf.f32.pop %v1494
    %v1623 = verf.f32.pop %v1495
    %v1624 = verf.f32.pop %v1496
    %v1625 = verf.f32.pop %v1497
    %v1626 = verf.f32.pop %v1498
    %v1627 = verf.f32.pop %v1499
    %v1628 = verf.f32.pop %v1500
    %v1629 = verf.f32.pop %v1501
    %v1630 = verf.f32.pop %v1502
    %v1631 = verf.f32.pop %v1503
    %v1632 = verf.f32.pop %v1504
    %v1633 = verf.f32.pop %v1505
    %v1634 = verf.f32.pop %v1506
    %v1635 = verf.f32.pop %v1507
    %v1636 = verf.f32.pop %v1508
    %v1637 = verf.f32.pop %v1509
    %v1638 = verf.f32.pop %v1510
    %v1639 = verf.f32.pop %v1511
    %v1640 = verf.f32.pop %v1512
    %v1641 = verf.f32.pop %v1513
    %v1642 = verf.f32.pop %v1514
    %v1643 = verf.f32.pop %v1515
    %v1644 = verf.f32.pop %v1516
    %v1645 = verf.f32.pop %v1517
    %v1646 = verf.f32.pop %v1518
    %v1647 = verf.f32.pop %v1519
    %v1648 = verf.f32.pop %v1520
    %v1649 = verf.f32.pop %v1521
    %v1650 = verf.f32.pop %v1522
    %v1651 = verf.f32.pop %v1523
    %v1652 = verf.f32.pop %v1524
    %v1653 = verf.f32.pop %v1525
    %v1654 = verf.f32.pop %v1526
    %v1655 = verf.f32.pop %v1527
    %v1656 = verf.f32.pop %v1528
    %v1657 = verf.f32.pop %v1529
    %v1658 = verf.f32.pop %v1530
    %v1659 = verf.f32.pop %v1531
    %v1660 = verf.f32.pop %v1532
    %v1661 = verf.f32.pop %v1533
    %v1662 = verf.f32.pop %v1534
    %v1663 = verf.f32.pop %v1535
    %v1664 = verf.f32.pop %v1536
    %v1665 = vadd.f32 %v1537, 1.0
    %v1666 = vadd.f32 %v1538, 1.0
    %v1667 = vadd.f32 %v1539, 1.0
    %v1668 = vadd.f32 %v1540, 1.0
    %v1669 = vadd.f32 %v1541, 1.0
    %v1670 = vadd.f32 %v1542, 1.0
    %v1671 = vadd.f32 %v1543, 1.0
    %v1672 = vadd.f32 %v1544, 1.0
    %v1673 = vadd.f32 %v1545, 1.0
    %v1674 = vadd.f32 %v1546, 1.0
    %v1675 = vadd.f32 %v1547, 1.0
    %v1676 = vadd.f32 %v1548, 1.0
    %v1677 = vadd.f32 %v1549, 1.0
    %v1678 = vadd.f32 %v1550, 1.0
    %v1679 = vadd.f32 %v1551, 1.0
    %v1680 = vadd.f32 %v1552, 1.0
    %v1681 = vadd.f32 %v1553, 1.0
    %v1682 = vadd.f32 %v1554, 1.0
    %v1683 = vadd.f32 %v1555, 1.0
    %v1684 = vadd.f32 %v1556, 1.0
    %v1685 = vadd.f32 %v1557, 1.0
    %v1686 = vadd.f32 %v1558, 1.0
    %v1687 = vadd.f32 %v1559, 1.0
    %v1688 = vadd.f32 %v1560, 1.0
    %v1689 = vadd.f32 %v1561, 1.0
    %v1690 = vadd.f32 %v1562, 1.0
    %v1691 = vadd.f32 %v1563, 1.0
    %v1692 = vadd.f32 %v1564, 1.0
    %v1693 = vadd.f32 %v1565, 1.0
    %v1694 = vadd.f32 %v1566, 1.0
    %v1695 = vadd.f32 %v1567, 1.0
    %v1696 = vadd.f32 %v1568, 1.0
    %v1697 = vadd.f32 %v1569, 1.0
    %v1698 = vadd.f32 %v1570, 1.0
    %v1699 = vadd.f32 %v1571, 1.0
    %v1700 = vadd.f32 %v1572, 1.0
    %v1701 = vadd.f32 %v1573, 1.0
    %v1702 = vadd.f32 %v1574, 1.0
    %v1703 = vadd.f32 %v1575, 1.0
    %v1704 = vadd.f32 %v1576, 1.0
    %v1705 = vadd.f32 %v1577, 1.0
    %v1706 = vadd.f32 %v1578, 1.0
    %v1707 = vadd.f32 %v1579, 1.0
    %v1708 = vadd.f32 %v1580, 1.0
    %v1709 = vadd.f32 %v1581, 1.0
    %v1710 = vadd.f32 %v1582, 1.0
    %v1711 = vadd.f32 %v1583, 1.0
    %v1712 = vadd.f32 %v1584, 1.0
    %v1713 = vadd.f32 %v1585, 1.0
    %v1714 = vadd.f32 %v1586, 1.0
    %v1715 = vadd.f32 %v1587, 1.0
    %v1716 = vadd.f32 %v1588, 1.0
    %v1717 = vadd.f32 %v1589, 1.0
    %v1718 = vadd.f32 %v1590, 1.0
    %v1719 = vadd.f32 %v1591, 1.0
    %v1720 = vadd.f32 %v1592, 1.0
    %v1721 = vadd.f32 %v1593, 1.0
    %v1722 = vadd.f32 %v1594, 1.0
    %v1723 = vadd.f32 %v1595, 1.0
    %v1724 = vadd.f32 %v1596, 1.0
    %v1725 = vadd.f32 %v1597, 1.0
    %v1726 = vadd.f32 %v1598, 1.0
    %v1727 = vadd.f32 %v1599, 1.0
    %v1728 = vadd.f32 %v1600, 1.0
    %v1729 = vadd.f32 %v1601, 1.0
    %v1730 = vadd.f32 %v1602, 1.0
    %v1731 = vadd.f32 %v1603, 1.0
    %v1732 = vadd.f32 %v1604, 1.0
    %v1733 = vadd.f32 %v1605, 1.0
    %v1734 = vadd.f32 %v1606, 1.0
    %v1735 = vadd.f32 %v1607, 1.0
    %v1736 = vadd.f32 %v1608, 1.0
    %v1737 = vadd.f32 %v1609, 1.0
    %v1738 = vadd.f32 %v1610, 1.0
    %v1739 = vadd.f32 %v1611, 1.0
    %v1740 = vadd.f32 %v1612, 1.0
    %v1741 = vadd.f32 %v1613, 1.0
    %v1742 = vadd.f32 %v1614, 1.0
    %v1743 = vadd.f32 %v1615, 1.0
    %v1744 = vadd.f32 %v1616, 1.0
    %v1745 = vadd.f32 %v1617, 1.0
    %v1746 = vadd.f32 %v1618, 1.0
    %v1747 = vadd.f32 %v1619, 1.0
    %v1748 = vadd.f32 %v1620, 1.0
    %v1749 = vadd.f32 %v1621, 1.0
    %v1750 = vadd.f32 %v1622, 1.0
    %v1751 = vadd.f32 %v1623, 1.0
    %v1752 = vadd.f32 %v1624, 1.0
    %v1753 = vadd.f32 %v1625, 1.0
    %v1754 = vadd.f32 %v1626, 1.0
    %v1755 = vadd.f32 %v1627, 1.0
    %v1756 = vadd.f32 %v1628, 1.0
    %v1757 = vadd.f32 %v1629, 1.0
    %v1758 = vadd.f32 %v1630, 1.0
    %v1759 = vadd.f32 %v1631, 1.0
    %v1760 = vadd.f32 %v1632, 1.0
    %v1761 = vadd.f32 %v1633, 1.0
    %v1762 = vadd.f32 %v1634, 1.0
    %v1763 = vadd.f32 %v1635, 1.0
    %v1764 = vadd.f32 %v1636, 1.0
    %v1765 = vadd.f32 %v1637, 1.0
    %v1766 = vadd.f32 %v1638, 1.0
    %v1767 = vadd.f32 %v1639, 1.0
    %v1768 = vadd.f32 %v1640, 1.0
    %v1769 = vadd.f32 %v1641, 1.0
    %v1770 = vadd.f32 %v1642, 1.0
    %v1771 = vadd.f32 %v1643, 1.0
    %v1772 = vadd.f32 %v1644, 1.0
    %v1773 = vadd.f32 %v1645, 1.0
    %v1774 = vadd.f32 %v1646, 1.0
    %v1775 = vadd.f32 %v1647, 1.0
    %v1776 = vadd.f32 %v1648, 1.0
    %v1777 = vadd.f32 %v1649, 1.0
    %v1778 = vadd.f32 %v1650, 1.0
    %v1779 = vadd.f32 %v1651, 1.0
    %v1780 = vadd.f32 %v1652, 1.0
    %v1781 = vadd.f32 %v1653, 1.0
    %v1782 = vadd.f32 %v1654, 1.0
    %v1783 = vadd.f32 %v1655, 1.0
    %v1784 = vadd.f32 %v1656, 1.0
    %v1785 = vadd.f32 %v1657, 1.0
    %v1786 = vadd.f32 %v1658, 1.0
    %v1787 = vadd.f32 %v1659, 1.0
    %v1788 = vadd.f32 %v1660, 1.0
    %v1789 = vadd.f32 %v1661, 1.0
    %v1790 = vadd.f32 %v1662, 1.0
    %v1791 = vadd.f32 %v1663, 1.0
    %v1792 = vadd.f32 %v1664, 1.0
    %v1793 = vmul.f32 %v1281, %v1665
    %v1794 = vmul.f32 %v1282, %v1666
    %v1795 = vmul.f32 %v1283, %v1667
    %v1796 = vmul.f32 %v1284, %v1668
    %v1797 = vmul.f32 %v1285, %v1669
    %v1798 = vmul.f32 %v1286, %v1670
    %v1799 = vmul.f32 %v1287, %v1671
    %v1800 = vmul.f32 %v1288, %v1672
    %v1801 = vmul.f32 %v1289, %v1673
    %v1802 = vmul.f32 %v1290, %v1674
    %v1803 = vmul.f32 %v1291, %v1675
    %v1804 = vmul.f32 %v1292, %v1676
    %v1805 = vmul.f32 %v1293, %v1677
    %v1806 = vmul.f32 %v1294, %v1678
    %v1807 = vmul.f32 %v1295, %v1679
    %v1808 = vmul.f32 %v1296, %v1680
    %v1809 = vmul.f32 %v1297, %v1681
    %v1810 = vmul.f32 %v1298, %v1682
    %v1811 = vmul.f32 %v1299, %v1683
    %v1812 = vmul.f32 %v1300, %v1684
    %v1813 = vmul.f32 %v1301, %v1685
    %v1814 = vmul.f32 %v1302, %v1686
    %v1815 = vmul.f32 %v1303, %v1687
    %v1816 = vmul.f32 %v1304, %v1688
    %v1817 = vmul.f32 %v1305, %v1689
    %v1818 = vmul.f32 %v1306, %v1690
    %v1819 = vmul.f32 %v1307, %v1691
    %v1820 = vmul.f32 %v1308, %v1692
    %v1821 = vmul.f32 %v1309, %v1693
    %v1822 = vmul.f32 %v1310, %v1694
    %v1823 = vmul.f32 %v1311, %v1695
    %v1824 = vmul.f32 %v1312, %v1696
    %v1825 = vmul.f32 %v1313, %v1697
    %v1826 = vmul.f32 %v1314, %v1698
    %v1827 = vmul.f32 %v1315, %v1699
    %v1828 = vmul.f32 %v1316, %v1700
    %v1829 = vmul.f32 %v1317, %v1701
    %v1830 = vmul.f32 %v1318, %v1702
    %v1831 = vmul.f32 %v1319, %v1703
    %v1832 = vmul.f32 %v1320, %v1704
    %v1833 = vmul.f32 %v1321, %v1705
    %v1834 = vmul.f32 %v1322, %v1706
    %v1835 = vmul.f32 %v1323, %v1707
    %v1836 = vmul.f32 %v1324, %v1708
    %v1837 = vmul.f32 %v1325, %v1709
    %v1838 = vmul.f32 %v1326, %v1710
    %v1839 = vmul.f32 %v1327, %v1711
    %v1840 = vmul.f32 %v1328, %v1712
    %v1841 = vmul.f32 %v1329, %v1713
    %v1842 = vmul.f32 %v1330, %v1714
    %v1843 = vmul.f32 %v1331, %v1715
    %v1844 = vmul.f32 %v1332, %v1716
    %v1845 = vmul.f32 %v1333, %v1717
    %v1846 = vmul.f32 %v1334, %v1718
    %v1847 = vmul.f32 %v1335, %v1719
    %v1848 = vmul.f32 %v1336, %v1720
    %v1849 = vmul.f32 %v1337, %v1721
    %v1850 = vmul.f32 %v1338, %v1722
    %v1851 = vmul.f32 %v1339, %v1723
    %v1852 = vmul.f32 %v1340, %v1724
    %v1853 = vmul.f32 %v1341, %v1725
    %v1854 = vmul.f32 %v1342, %v1726
    %v1855 = vmul.f32 %v1343, %v1727
    %v1856 = vmul.f32 %v1344, %v1728
    %v1857 = vmul.f32 %v1345, %v1729
    %v1858 = vmul.f32 %v1346, %v1730
    %v1859 = vmul.f32 %v1347, %v1731
    %v1860 = vmul.f32 %v1348, %v1732
    %v1861 = vmul.f32 %v1349, %v1733
    %v1862 = vmul.f32 %v1350, %v1734
    %v1863 = vmul.f32 %v1351, %v1735
    %v1864 = vmul.f32 %v1352, %v1736
    %v1865 = vmul.f32 %v1353, %v1737
    %v1866 = vmul.f32 %v1354, %v1738
    %v1867 = vmul.f32 %v1355, %v1739
    %v1868 = vmul.f32 %v1356, %v1740
    %v1869 = vmul.f32 %v1357, %v1741
    %v1870 = vmul.f32 %v1358, %v1742
    %v1871 = vmul.f32 %v1359, %v1743
    %v1872 = vmul.f32 %v1360, %v1744
    %v1873 = vmul.f32 %v1361, %v1745
    %v1874 = vmul.f32 %v1362, %v1746
    %v1875 = vmul.f32 %v1363, %v1747
    %v1876 = vmul.f32 %v1364, %v1748
    %v1877 = vmul.f32 %v1365, %v1749
    %v1878 = vmul.f32 %v1366, %v1750
    %v1879 = vmul.f32 %v1367, %v1751
    %v1880 = vmul.f32 %v1368, %v1752
    %v1881 = vmul.f32 %v1369, %v1753
    %v1882 = vmul.f32 %v1370, %v1754
    %v1883 = vmul.f32 %v1371, %v1755
    %v1884 = vmul.f32 %v1372, %v1756
    %v1885 = vmul.f32 %v1373, %v1757
    %v1886 = vmul.f32 %v1374, %v1758
    %v1887 = vmul.f32 %v1375, %v1759
    %v1888 = vmul.f32 %v1376, %v1760
    %v1889 = vmul.f32 %v1377, %v1761
    %v1890 = vmul.f32 %v1378, %v1762
    %v1891 = vmul.f32 %v1379, %v1763
    %v1892 = vmul.f32 %v1380, %v1764
    %v1893 = vmul.f32 %v1381, %v1765
    %v1894 = vmul.f32 %v1382, %v1766
    %v1895 = vmul.f32 %v1383, %v1767
    %v1896 = vmul.f32 %v1384, %v1768
    %v1897 = vmul.f32 %v1385, %v1769
    %v1898 = vmul.f32 %v1386, %v1770
    %v1899 = vmul.f32 %v1387, %v1771
    %v1900 = vmul.f32 %v1388, %v1772
    %v1901 = vmul.f32 %v1389, %v1773
    %v1902 = vmul.f32 %v1390, %v1774
    %v1903 = vmul.f32 %v1391, %v1775
    %v1904 = vmul.f32 %v1392, %v1776
    %v1905 = vmul.f32 %v1393, %v1777
    %v1906 = vmul.f32 %v1394, %v1778
    %v1907 = vmul.f32 %v1395, %v1779
    %v1908 = vmul.f32 %v1396, %v1780
    %v1909 = vmul.f32 %v1397, %v1781
    %v1910 = vmul.f32 %v1398, %v1782
    %v1911 = vmul.f32 %v1399, %v1783
    %v1912 = vmul.f32 %v1400, %v1784
    %v1913 = vmul.f32 %v1401, %v1785
    %v1914 = vmul.f32 %v1402, %v1786
    %v1915 = vmul.f32 %v1403, %v1787
    %v1916 = vmul.f32 %v1404, %v1788
    %v1917 = vmul.f32 %v1405, %v1789
    %v1918 = vmul.f32 %v1406, %v1790
    %v1919 = vmul.f32 %v1407, %v1791
    %v1920 = vmul.f32 %v1408, %v1792
    %v1921 = vlaneseq
    %v1922 = vshrl.u32 %v1921, 7
    %v1923 = vsub.s32 1, %v1922
    %v1924 = vrot.slane %v172, %v1923
    %vm1925 = vcmask 523264
    %v1927 = vsel %vm1925, %v1793, 0
    %v1930 = vsel %vm1925, %v1794, 0
    %v1933 = vsel %vm1925, %v1795, 0
    %v1936 = vsel %vm1925, %v1796, 0
    %v1939 = vsel %vm1925, %v1797, 0
    %v1942 = vsel %vm1925, %v1798, 0
    %v1945 = vsel %vm1925, %v1799, 0
    %v1948 = vsel %vm1925, %v1800, 0
    %v1951 = vsel %vm1925, %v1801, 0
    %v1954 = vsel %vm1925, %v1802, 0
    %v1957 = vsel %vm1925, %v1803, 0
    %v1960 = vsel %vm1925, %v1804, 0
    %v1963 = vsel %vm1925, %v1805, 0
    %v1966 = vsel %vm1925, %v1806, 0
    %v1969 = vsel %vm1925, %v1807, 0
    %v1972 = vsel %vm1925, %v1808, 0
    %v1975 = vsel %vm1925, %v1809, 0
    %v1978 = vsel %vm1925, %v1810, 0
    %v1981 = vsel %vm1925, %v1811, 0
    %v1984 = vsel %vm1925, %v1812, 0
    %v1987 = vsel %vm1925, %v1813, 0
    %v1990 = vsel %vm1925, %v1814, 0
    %v1993 = vsel %vm1925, %v1815, 0
    %v1996 = vsel %vm1925, %v1816, 0
    %v1999 = vsel %vm1925, %v1817, 0
    %v2002 = vsel %vm1925, %v1818, 0
    %v2005 = vsel %vm1925, %v1819, 0
    %v2008 = vsel %vm1925, %v1820, 0
    %v2011 = vsel %vm1925, %v1821, 0
    %v2014 = vsel %vm1925, %v1822, 0
    %v2017 = vsel %vm1925, %v1823, 0
    %v2020 = vsel %vm1925, %v1824, 0
    %v2023 = vsel %vm1925, %v1825, 0
    %v2026 = vsel %vm1925, %v1826, 0
    %v2029 = vsel %vm1925, %v1827, 0
    %v2032 = vsel %vm1925, %v1828, 0
    %v2035 = vsel %vm1925, %v1829, 0
    %v2038 = vsel %vm1925, %v1830, 0
    %v2041 = vsel %vm1925, %v1831, 0
    %v2044 = vsel %vm1925, %v1832, 0
    %v2047 = vsel %vm1925, %v1833, 0
    %v2050 = vsel %vm1925, %v1834, 0
    %v2053 = vsel %vm1925, %v1835, 0
    %v2056 = vsel %vm1925, %v1836, 0
    %v2059 = vsel %vm1925, %v1837, 0
    %v2062 = vsel %vm1925, %v1838, 0
    %v2065 = vsel %vm1925, %v1839, 0
    %v2068 = vsel %vm1925, %v1840, 0
    %v2071 = vsel %vm1925, %v1841, 0
    %v2074 = vsel %vm1925, %v1842, 0
    %v2077 = vsel %vm1925, %v1843, 0
    %v2080 = vsel %vm1925, %v1844, 0
    %v2083 = vsel %vm1925, %v1845, 0
    %v2086 = vsel %vm1925, %v1846, 0
    %v2089 = vsel %vm1925, %v1847, 0
    %v2092 = vsel %vm1925, %v1848, 0
    %v2095 = vsel %vm1925, %v1849, 0
    %v2098 = vsel %vm1925, %v1850, 0
    %v2101 = vsel %vm1925, %v1851, 0
    %v2104 = vsel %vm1925, %v1852, 0
    %v2107 = vsel %vm1925, %v1853, 0
    %v2110 = vsel %vm1925, %v1854, 0
    %v2113 = vsel %vm1925, %v1855, 0
    %v2116 = vsel %vm1925, %v1856, 0
    %v2119 = vsel %vm1925, %v1857, 0
    %v2122 = vsel %vm1925, %v1858, 0
    %v2125 = vsel %vm1925, %v1859, 0
    %v2128 = vsel %vm1925, %v1860, 0
    %v2131 = vsel %vm1925, %v1861, 0
    %v2134 = vsel %vm1925, %v1862, 0
    %v2137 = vsel %vm1925, %v1863, 0
    %v2140 = vsel %vm1925, %v1864, 0
    %v2143 = vsel %vm1925, %v1865, 0
    %v2146 = vsel %vm1925, %v1866, 0
    %v2149 = vsel %vm1925, %v1867, 0
    %v2152 = vsel %vm1925, %v1868, 0
    %v2155 = vsel %vm1925, %v1869, 0
    %v2158 = vsel %vm1925, %v1870, 0
    %v2161 = vsel %vm1925, %v1871, 0
    %v2164 = vsel %vm1925, %v1872, 0
    %v2167 = vsel %vm1925, %v1873, 0
    %v2170 = vsel %vm1925, %v1874, 0
    %v2173 = vsel %vm1925, %v1875, 0
    %v2176 = vsel %vm1925, %v1876, 0
    %v2179 = vsel %vm1925, %v1877, 0
    %v2182 = vsel %vm1925, %v1878, 0
    %v2185 = vsel %vm1925, %v1879, 0
    %v2188 = vsel %vm1925, %v1880, 0
    %v2191 = vsel %vm1925, %v1881, 0
    %v2194 = vsel %vm1925, %v1882, 0
    %v2197 = vsel %vm1925, %v1883, 0
    %v2200 = vsel %vm1925, %v1884, 0
    %v2203 = vsel %vm1925, %v1885, 0
    %v2206 = vsel %vm1925, %v1886, 0
    %v2209 = vsel %vm1925, %v1887, 0
    %v2212 = vsel %vm1925, %v1888, 0
    %v2215 = vsel %vm1925, %v1889, 0
    %v2218 = vsel %vm1925, %v1890, 0
    %v2221 = vsel %vm1925, %v1891, 0
    %v2224 = vsel %vm1925, %v1892, 0
    %v2227 = vsel %vm1925, %v1893, 0
    %v2230 = vsel %vm1925, %v1894, 0
    %v2233 = vsel %vm1925, %v1895, 0
    %v2236 = vsel %vm1925, %v1896, 0
    %v2239 = vsel %vm1925, %v1897, 0
    %v2242 = vsel %vm1925, %v1898, 0
    %v2245 = vsel %vm1925, %v1899, 0
    %v2248 = vsel %vm1925, %v1900, 0
    %v2251 = vsel %vm1925, %v1901, 0
    %v2254 = vsel %vm1925, %v1902, 0
    %v2257 = vsel %vm1925, %v1903, 0
    %v2260 = vsel %vm1925, %v1904, 0
    %v2263 = vsel %vm1925, %v1905, 0
    %v2266 = vsel %vm1925, %v1906, 0
    %v2269 = vsel %vm1925, %v1907, 0
    %v2272 = vsel %vm1925, %v1908, 0
    %v2275 = vsel %vm1925, %v1909, 0
    %v2278 = vsel %vm1925, %v1910, 0
    %v2281 = vsel %vm1925, %v1911, 0
    %v2284 = vsel %vm1925, %v1912, 0
    %v2287 = vsel %vm1925, %v1913, 0
    %v2290 = vsel %vm1925, %v1914, 0
    %v2293 = vsel %vm1925, %v1915, 0
    %v2296 = vsel %vm1925, %v1916, 0
    %v2299 = vsel %vm1925, %v1917, 0
    %v2302 = vsel %vm1925, %v1918, 0
    %v2305 = vsel %vm1925, %v1919, 0
    %v2308 = vsel %vm1925, %v1920, 0
    %2310 = vmatprep.subr.mxu0 0.0
    %2311 = vmatpush1.msra.mxu0 %v156
    %2312 = vmatprep.subr.mxu0 0.0
    %2313 = vmatpush1.msra.mxu0 %v157
    %2314 = vmatprep.subr.mxu0 0.0
    %2315 = vmatpush1.msra.mxu0 %v158
    %2316 = vmatprep.subr.mxu0 0.0
    %2317 = vmatpush1.msra.mxu0 %v159
    %2318 = vmatprep.subr.mxu0 0.0
    %2319 = vmatpush1.msra.mxu0 %v160
    %2320 = vmatprep.subr.mxu0 0.0
    %2321 = vmatpush1.msra.mxu0 %v161
    %2322 = vmatprep.subr.mxu0 0.0
    %2323 = vmatpush1.msra.mxu0 %v162
    %2324 = vmatprep.subr.mxu0 0.0
    %2325 = vmatpush1.msra.mxu0 %v163
    %2326 = vmatprep.subr.mxu0 0.0
    %2327 = vmatpush1.msra.mxu0 0.0
    %2328 = vmatprep.subr.mxu0 0.0
    %2329 = vmatpush1.msra.mxu0 0.0
    %2330 = vmatprep.subr.mxu0 0.0
    %2331 = vmatpush1.msra.mxu0 0.0
    %2332 = vmatprep.subr.mxu0 0.0
    %2333 = vmatpush1.msra.mxu0 0.0
    %2334 = vmatprep.subr.mxu0 0.0
    %2335 = vmatpush1.msra.mxu0 0.0
    %2336 = vmatprep.subr.mxu0 0.0
    %2337 = vmatpush1.msra.mxu0 0.0
    %2338 = vmatprep.subr.mxu0 0.0
    %2339 = vmatpush1.msra.mxu0 0.0
    %2340 = vmatprep.subr.mxu0 0.0
    %2341 = vmatpush1.msra.mxu0 0.0
    %2342 = vmatprep.subr.mxu0 0.0
    %2343 = vmatpush1.msra.mxu0 0.0
    %2344 = vmatprep.subr.mxu0 0.0
    %2345 = vmatpush1.msra.mxu0 0.0
    %2346 = vmatprep.subr.mxu0 0.0
    %2347 = vmatpush1.msra.mxu0 0.0
    %2348 = vmatprep.subr.mxu0 0.0
    %2349 = vmatpush1.msra.mxu0 0.0
    %2350 = vmatprep.subr.mxu0 0.0
    %2351 = vmatpush1.msra.mxu0 0.0
    %2352 = vmatprep.subr.mxu0 0.0
    %2353 = vmatpush1.msra.mxu0 0.0
    %2354 = vmatprep.subr.mxu0 0.0
    %2355 = vmatpush1.msra.mxu0 0.0
    %2356 = vmatprep.subr.mxu0 0.0
    %2357 = vmatpush1.msra.mxu0 0.0
    %2358 = vmatprep.subr.mxu0 0.0
    %2359 = vmatpush1.msra.mxu0 0.0
    %2360 = vmatprep.subr.mxu0 0.0
    %2361 = vmatpush1.msra.mxu0 0.0
    %2362 = vmatprep.subr.mxu0 0.0
    %2363 = vmatpush1.msra.mxu0 0.0
    %2364 = vmatprep.subr.mxu0 0.0
    %2365 = vmatpush1.msra.mxu0 0.0
    %2366 = vmatprep.subr.mxu0 0.0
    %2367 = vmatpush1.msra.mxu0 0.0
    %2368 = vmatprep.subr.mxu0 0.0
    %2369 = vmatpush1.msra.mxu0 0.0
    %2370 = vmatprep.subr.mxu0 0.0
    %2371 = vmatpush1.msra.mxu0 0.0
    %2372 = vmatprep.subr.mxu0 0.0
    %2373 = vmatpush1.msra.mxu0 0.0
    %2374 = vmatprep.mubr.f32.mxu0 0.0
    %2375 = vmatmul.mubr.f32.gmra.mrb[0].mxu0 %v1927
    %v2376 = vpop.f32.mrb[0].mxu0
    %v2377 = vadd.f32 %v1924, %v2376
    %v2378 = vpop.f32.mrb[0].mxu0
    %2379 = vmatprep.mubr.f32.mxu0 0.0
    %2380 = vmatmul.mubr.f32.gmra.mrb[0].mxu0 %v1930
    %v2381 = vpop.f32.mrb[0].mxu0
    %v2382 = vadd.f32 %v1924, %v2381
    %v2383 = vpop.f32.mrb[0].mxu0
    %2384 = vmatprep.mubr.f32.mxu0 0.0
    %2385 = vmatmul.mubr.f32.gmra.mrb[0].mxu0 %v1933
    %v2386 = vpop.f32.mrb[0].mxu0
    %v2387 = vadd.f32 %v1924, %v2386
    %v2388 = vpop.f32.mrb[0].mxu0
    %2389 = vmatprep.mubr.f32.mxu0 0.0
    %2390 = vmatmul.mubr.f32.gmra.mrb[0].mxu0 %v1936
    %v2391 = vpop.f32.mrb[0].mxu0
    %v2392 = vadd.f32 %v1924, %v2391
    %v2393 = vpop.f32.mrb[0].mxu0
    %2394 = vmatprep.mubr.f32.mxu0 0.0
    %2395 = vmatmul.mubr.f32.gmra.mrb[0].mxu0 %v1939
    %v2396 = vpop.f32.mrb[0].mxu0
    %v2397 = vadd.f32 %v1924, %v2396
    %v2398 = vpop.f32.mrb[0].mxu0
    %2399 = vmatprep.mubr.f32.mxu0 0.0
    %2400 = vmatmul.mubr.f32.gmra.mrb[0].mxu0 %v1942
    %v2401 = vpop.f32.mrb[0].mxu0
    %v2402 = vadd.f32 %v1924, %v2401
    %v2403 = vpop.f32.mrb[0].mxu0
    %2404 = vmatprep.mubr.f32.mxu0 0.0
    %2405 = vmatmul.mubr.f32.gmra.mrb[0].mxu0 %v1945
    %v2406 = vpop.f32.mrb[0].mxu0
    %v2407 = vadd.f32 %v1924, %v2406
    %v2408 = vpop.f32.mrb[0].mxu0
    %2409 = vmatprep.mubr.f32.mxu0 0.0
    %2410 = vmatmul.mubr.f32.gmra.mrb[0].mxu0 %v1948
    %v2411 = vpop.f32.mrb[0].mxu0
    %v2412 = vadd.f32 %v1924, %v2411
    %v2413 = vpop.f32.mrb[0].mxu0
    %2414 = vmatprep.mubr.f32.mxu0 0.0
    %2415 = vmatmul.mubr.f32.gmra.mrb[0].mxu0 %v1951
    %v2416 = vpop.f32.mrb[0].mxu0
    %v2417 = vadd.f32 %v1924, %v2416
    %v2418 = vpop.f32.mrb[0].mxu0
    %2419 = vmatprep.mubr.f32.mxu0 0.0
    %2420 = vmatmul.mubr.f32.gmra.mrb[0].mxu0 %v1954
    %v2421 = vpop.f32.mrb[0].mxu0
    %v2422 = vadd.f32 %v1924, %v2421
    %v2423 = vpop.f32.mrb[0].mxu0
    %2424 = vmatprep.mubr.f32.mxu0 0.0
    %2425 = vmatmul.mubr.f32.gmra.mrb[0].mxu0 %v1957
    %v2426 = vpop.f32.mrb[0].mxu0
    %v2427 = vadd.f32 %v1924, %v2426
    %v2428 = vpop.f32.mrb[0].mxu0
    %2429 = vmatprep.mubr.f32.mxu0 0.0
    %2430 = vmatmul.mubr.f32.gmra.mrb[0].mxu0 %v1960
    %v2431 = vpop.f32.mrb[0].mxu0
    %v2432 = vadd.f32 %v1924, %v2431
    %v2433 = vpop.f32.mrb[0].mxu0
    %2434 = vmatprep.mubr.f32.mxu0 0.0
    %2435 = vmatmul.mubr.f32.gmra.mrb[0].mxu0 %v1963
    %v2436 = vpop.f32.mrb[0].mxu0
    %v2437 = vadd.f32 %v1924, %v2436
    %v2438 = vpop.f32.mrb[0].mxu0
    %2439 = vmatprep.mubr.f32.mxu0 0.0
    %2440 = vmatmul.mubr.f32.gmra.mrb[0].mxu0 %v1966
    %v2441 = vpop.f32.mrb[0].mxu0
    %v2442 = vadd.f32 %v1924, %v2441
    %v2443 = vpop.f32.mrb[0].mxu0
    %2444 = vmatprep.mubr.f32.mxu0 0.0
    %2445 = vmatmul.mubr.f32.gmra.mrb[0].mxu0 %v1969
    %v2446 = vpop.f32.mrb[0].mxu0
    %v2447 = vadd.f32 %v1924, %v2446
    %v2448 = vpop.f32.mrb[0].mxu0
    %2449 = vmatprep.mubr.f32.mxu0 0.0
    %2450 = vmatmul.mubr.f32.gmra.mrb[0].mxu0 %v1972
    %v2451 = vpop.f32.mrb[0].mxu0
    %v2452 = vadd.f32 %v1924, %v2451
    %v2453 = vpop.f32.mrb[0].mxu0
    %2454 = vmatprep.mubr.f32.mxu0 0.0
    %2455 = vmatmul.mubr.f32.gmra.mrb[0].mxu0 %v1975
    %v2456 = vpop.f32.mrb[0].mxu0
    %v2457 = vadd.f32 %v1924, %v2456
    %v2458 = vpop.f32.mrb[0].mxu0
    %2459 = vmatprep.mubr.f32.mxu0 0.0
    %2460 = vmatmul.mubr.f32.gmra.mrb[0].mxu0 %v1978
    %v2461 = vpop.f32.mrb[0].mxu0
    %v2462 = vadd.f32 %v1924, %v2461
    %v2463 = vpop.f32.mrb[0].mxu0
    %2464 = vmatprep.mubr.f32.mxu0 0.0
    %2465 = vmatmul.mubr.f32.gmra.mrb[0].mxu0 %v1981
    %v2466 = vpop.f32.mrb[0].mxu0
    %v2467 = vadd.f32 %v1924, %v2466
    %v2468 = vpop.f32.mrb[0].mxu0
    %2469 = vmatprep.mubr.f32.mxu0 0.0
    %2470 = vmatmul.mubr.f32.gmra.mrb[0].mxu0 %v1984
    %v2471 = vpop.f32.mrb[0].mxu0
    %v2472 = vadd.f32 %v1924, %v2471
    %v2473 = vpop.f32.mrb[0].mxu0
    %2474 = vmatprep.mubr.f32.mxu0 0.0
    %2475 = vmatmul.mubr.f32.gmra.mrb[0].mxu0 %v1987
    %v2476 = vpop.f32.mrb[0].mxu0
    %v2477 = vadd.f32 %v1924, %v2476
    %v2478 = vpop.f32.mrb[0].mxu0
    %2479 = vmatprep.mubr.f32.mxu0 0.0
    %2480 = vmatmul.mubr.f32.gmra.mrb[0].mxu0 %v1990
    %v2481 = vpop.f32.mrb[0].mxu0
    %v2482 = vadd.f32 %v1924, %v2481
    %v2483 = vpop.f32.mrb[0].mxu0
    %2484 = vmatprep.mubr.f32.mxu0 0.0
    %2485 = vmatmul.mubr.f32.gmra.mrb[0].mxu0 %v1993
    %v2486 = vpop.f32.mrb[0].mxu0
    %v2487 = vadd.f32 %v1924, %v2486
    %v2488 = vpop.f32.mrb[0].mxu0
    %2489 = vmatprep.mubr.f32.mxu0 0.0
    %2490 = vmatmul.mubr.f32.gmra.mrb[0].mxu0 %v1996
    %v2491 = vpop.f32.mrb[0].mxu0
    %v2492 = vadd.f32 %v1924, %v2491
    %v2493 = vpop.f32.mrb[0].mxu0
    %2494 = vmatprep.mubr.f32.mxu0 0.0
    %2495 = vmatmul.mubr.f32.gmra.mrb[0].mxu0 %v1999
    %v2496 = vpop.f32.mrb[0].mxu0
    %v2497 = vadd.f32 %v1924, %v2496
    %v2498 = vpop.f32.mrb[0].mxu0
    %2499 = vmatprep.mubr.f32.mxu0 0.0
    %2500 = vmatmul.mubr.f32.gmra.mrb[0].mxu0 %v2002
    %v2501 = vpop.f32.mrb[0].mxu0
    %v2502 = vadd.f32 %v1924, %v2501
    %v2503 = vpop.f32.mrb[0].mxu0
    %2504 = vmatprep.mubr.f32.mxu0 0.0
    %2505 = vmatmul.mubr.f32.gmra.mrb[0].mxu0 %v2005
    %v2506 = vpop.f32.mrb[0].mxu0
    %v2507 = vadd.f32 %v1924, %v2506
    %v2508 = vpop.f32.mrb[0].mxu0
    %2509 = vmatprep.mubr.f32.mxu0 0.0
    %2510 = vmatmul.mubr.f32.gmra.mrb[0].mxu0 %v2008
    %v2511 = vpop.f32.mrb[0].mxu0
    %v2512 = vadd.f32 %v1924, %v2511
    %v2513 = vpop.f32.mrb[0].mxu0
    %2514 = vmatprep.mubr.f32.mxu0 0.0
    %2515 = vmatmul.mubr.f32.gmra.mrb[0].mxu0 %v2011
    %v2516 = vpop.f32.mrb[0].mxu0
    %v2517 = vadd.f32 %v1924, %v2516
    %v2518 = vpop.f32.mrb[0].mxu0
    %2519 = vmatprep.mubr.f32.mxu0 0.0
    %2520 = vmatmul.mubr.f32.gmra.mrb[0].mxu0 %v2014
    %v2521 = vpop.f32.mrb[0].mxu0
    %v2522 = vadd.f32 %v1924, %v2521
    %v2523 = vpop.f32.mrb[0].mxu0
    %2524 = vmatprep.mubr.f32.mxu0 0.0
    %2525 = vmatmul.mubr.f32.gmra.mrb[0].mxu0 %v2017
    %v2526 = vpop.f32.mrb[0].mxu0
    %v2527 = vadd.f32 %v1924, %v2526
    %v2528 = vpop.f32.mrb[0].mxu0
    %2529 = vmatprep.mubr.f32.mxu0 0.0
    %2530 = vmatmul.mubr.f32.gmra.mrb[0].mxu0 %v2020
    %v2531 = vpop.f32.mrb[0].mxu0
    %v2532 = vadd.f32 %v1924, %v2531
    %v2533 = vpop.f32.mrb[0].mxu0
    %2534 = vmatprep.mubr.f32.mxu0 0.0
    %2535 = vmatmul.mubr.f32.gmra.mrb[0].mxu0 %v2023
    %v2536 = vpop.f32.mrb[0].mxu0
    %v2537 = vadd.f32 %v1924, %v2536
    %v2538 = vpop.f32.mrb[0].mxu0
    %2539 = vmatprep.mubr.f32.mxu0 0.0
    %2540 = vmatmul.mubr.f32.gmra.mrb[0].mxu0 %v2026
    %v2541 = vpop.f32.mrb[0].mxu0
    %v2542 = vadd.f32 %v1924, %v2541
    %v2543 = vpop.f32.mrb[0].mxu0
    %2544 = vmatprep.mubr.f32.mxu0 0.0
    %2545 = vmatmul.mubr.f32.gmra.mrb[0].mxu0 %v2029
    %v2546 = vpop.f32.mrb[0].mxu0
    %v2547 = vadd.f32 %v1924, %v2546
    %v2548 = vpop.f32.mrb[0].mxu0
    %2549 = vmatprep.mubr.f32.mxu0 0.0
    %2550 = vmatmul.mubr.f32.gmra.mrb[0].mxu0 %v2032
    %v2551 = vpop.f32.mrb[0].mxu0
    %v2552 = vadd.f32 %v1924, %v2551
    %v2553 = vpop.f32.mrb[0].mxu0
    %2554 = vmatprep.mubr.f32.mxu0 0.0
    %2555 = vmatmul.mubr.f32.gmra.mrb[0].mxu0 %v2035
    %v2556 = vpop.f32.mrb[0].mxu0
    %v2557 = vadd.f32 %v1924, %v2556
    %v2558 = vpop.f32.mrb[0].mxu0
    %2559 = vmatprep.mubr.f32.mxu0 0.0
    %2560 = vmatmul.mubr.f32.gmra.mrb[0].mxu0 %v2038
    %v2561 = vpop.f32.mrb[0].mxu0
    %v2562 = vadd.f32 %v1924, %v2561
    %v2563 = vpop.f32.mrb[0].mxu0
    %2564 = vmatprep.mubr.f32.mxu0 0.0
    %2565 = vmatmul.mubr.f32.gmra.mrb[0].mxu0 %v2041
    %v2566 = vpop.f32.mrb[0].mxu0
    %v2567 = vadd.f32 %v1924, %v2566
    %v2568 = vpop.f32.mrb[0].mxu0
    %2569 = vmatprep.mubr.f32.mxu0 0.0
    %2570 = vmatmul.mubr.f32.gmra.mrb[0].mxu0 %v2044
    %v2571 = vpop.f32.mrb[0].mxu0
    %v2572 = vadd.f32 %v1924, %v2571
    %v2573 = vpop.f32.mrb[0].mxu0
    %2574 = vmatprep.mubr.f32.mxu0 0.0
    %2575 = vmatmul.mubr.f32.gmra.mrb[0].mxu0 %v2047
    %v2576 = vpop.f32.mrb[0].mxu0
    %v2577 = vadd.f32 %v1924, %v2576
    %v2578 = vpop.f32.mrb[0].mxu0
    %2579 = vmatprep.mubr.f32.mxu0 0.0
    %2580 = vmatmul.mubr.f32.gmra.mrb[0].mxu0 %v2050
    %v2581 = vpop.f32.mrb[0].mxu0
    %v2582 = vadd.f32 %v1924, %v2581
    %v2583 = vpop.f32.mrb[0].mxu0
    %2584 = vmatprep.mubr.f32.mxu0 0.0
    %2585 = vmatmul.mubr.f32.gmra.mrb[0].mxu0 %v2053
    %v2586 = vpop.f32.mrb[0].mxu0
    %v2587 = vadd.f32 %v1924, %v2586
    %v2588 = vpop.f32.mrb[0].mxu0
    %2589 = vmatprep.mubr.f32.mxu0 0.0
    %2590 = vmatmul.mubr.f32.gmra.mrb[0].mxu0 %v2056
    %v2591 = vpop.f32.mrb[0].mxu0
    %v2592 = vadd.f32 %v1924, %v2591
    %v2593 = vpop.f32.mrb[0].mxu0
    %2594 = vmatprep.mubr.f32.mxu0 0.0
    %2595 = vmatmul.mubr.f32.gmra.mrb[0].mxu0 %v2059
    %v2596 = vpop.f32.mrb[0].mxu0
    %v2597 = vadd.f32 %v1924, %v2596
    %v2598 = vpop.f32.mrb[0].mxu0
    %2599 = vmatprep.mubr.f32.mxu0 0.0
    %2600 = vmatmul.mubr.f32.gmra.mrb[0].mxu0 %v2062
    %v2601 = vpop.f32.mrb[0].mxu0
    %v2602 = vadd.f32 %v1924, %v2601
    %v2603 = vpop.f32.mrb[0].mxu0
    %2604 = vmatprep.mubr.f32.mxu0 0.0
    %2605 = vmatmul.mubr.f32.gmra.mrb[0].mxu0 %v2065
    %v2606 = vpop.f32.mrb[0].mxu0
    %v2607 = vadd.f32 %v1924, %v2606
    %v2608 = vpop.f32.mrb[0].mxu0
    %2609 = vmatprep.mubr.f32.mxu0 0.0
    %2610 = vmatmul.mubr.f32.gmra.mrb[0].mxu0 %v2068
    %v2611 = vpop.f32.mrb[0].mxu0
    %v2612 = vadd.f32 %v1924, %v2611
    %v2613 = vpop.f32.mrb[0].mxu0
    %2614 = vmatprep.mubr.f32.mxu0 0.0
    %2615 = vmatmul.mubr.f32.gmra.mrb[0].mxu0 %v2071
    %v2616 = vpop.f32.mrb[0].mxu0
    %v2617 = vadd.f32 %v1924, %v2616
    %v2618 = vpop.f32.mrb[0].mxu0
    %2619 = vmatprep.mubr.f32.mxu0 0.0
    %2620 = vmatmul.mubr.f32.gmra.mrb[0].mxu0 %v2074
    %v2621 = vpop.f32.mrb[0].mxu0
    %v2622 = vadd.f32 %v1924, %v2621
    %v2623 = vpop.f32.mrb[0].mxu0
    %2624 = vmatprep.mubr.f32.mxu0 0.0
    %2625 = vmatmul.mubr.f32.gmra.mrb[0].mxu0 %v2077
    %v2626 = vpop.f32.mrb[0].mxu0
    %v2627 = vadd.f32 %v1924, %v2626
    %v2628 = vpop.f32.mrb[0].mxu0
    %2629 = vmatprep.mubr.f32.mxu0 0.0
    %2630 = vmatmul.mubr.f32.gmra.mrb[0].mxu0 %v2080
    %v2631 = vpop.f32.mrb[0].mxu0
    %v2632 = vadd.f32 %v1924, %v2631
    %v2633 = vpop.f32.mrb[0].mxu0
    %2634 = vmatprep.mubr.f32.mxu0 0.0
    %2635 = vmatmul.mubr.f32.gmra.mrb[0].mxu0 %v2083
    %v2636 = vpop.f32.mrb[0].mxu0
    %v2637 = vadd.f32 %v1924, %v2636
    %v2638 = vpop.f32.mrb[0].mxu0
    %2639 = vmatprep.mubr.f32.mxu0 0.0
    %2640 = vmatmul.mubr.f32.gmra.mrb[0].mxu0 %v2086
    %v2641 = vpop.f32.mrb[0].mxu0
    %v2642 = vadd.f32 %v1924, %v2641
    %v2643 = vpop.f32.mrb[0].mxu0
    %2644 = vmatprep.mubr.f32.mxu0 0.0
    %2645 = vmatmul.mubr.f32.gmra.mrb[0].mxu0 %v2089
    %v2646 = vpop.f32.mrb[0].mxu0
    %v2647 = vadd.f32 %v1924, %v2646
    %v2648 = vpop.f32.mrb[0].mxu0
    %2649 = vmatprep.mubr.f32.mxu0 0.0
    %2650 = vmatmul.mubr.f32.gmra.mrb[0].mxu0 %v2092
    %v2651 = vpop.f32.mrb[0].mxu0
    %v2652 = vadd.f32 %v1924, %v2651
    %v2653 = vpop.f32.mrb[0].mxu0
    %2654 = vmatprep.mubr.f32.mxu0 0.0
    %2655 = vmatmul.mubr.f32.gmra.mrb[0].mxu0 %v2095
    %v2656 = vpop.f32.mrb[0].mxu0
    %v2657 = vadd.f32 %v1924, %v2656
    %v2658 = vpop.f32.mrb[0].mxu0
    %2659 = vmatprep.mubr.f32.mxu0 0.0
    %2660 = vmatmul.mubr.f32.gmra.mrb[0].mxu0 %v2098
    %v2661 = vpop.f32.mrb[0].mxu0
    %v2662 = vadd.f32 %v1924, %v2661
    %v2663 = vpop.f32.mrb[0].mxu0
    %2664 = vmatprep.mubr.f32.mxu0 0.0
    %2665 = vmatmul.mubr.f32.gmra.mrb[0].mxu0 %v2101
    %v2666 = vpop.f32.mrb[0].mxu0
    %v2667 = vadd.f32 %v1924, %v2666
    %v2668 = vpop.f32.mrb[0].mxu0
    %2669 = vmatprep.mubr.f32.mxu0 0.0
    %2670 = vmatmul.mubr.f32.gmra.mrb[0].mxu0 %v2104
    %v2671 = vpop.f32.mrb[0].mxu0
    %v2672 = vadd.f32 %v1924, %v2671
    %v2673 = vpop.f32.mrb[0].mxu0
    %2674 = vmatprep.mubr.f32.mxu0 0.0
    %2675 = vmatmul.mubr.f32.gmra.mrb[0].mxu0 %v2107
    %v2676 = vpop.f32.mrb[0].mxu0
    %v2677 = vadd.f32 %v1924, %v2676
    %v2678 = vpop.f32.mrb[0].mxu0
    %2679 = vmatprep.mubr.f32.mxu0 0.0
    %2680 = vmatmul.mubr.f32.gmra.mrb[0].mxu0 %v2110
    %v2681 = vpop.f32.mrb[0].mxu0
    %v2682 = vadd.f32 %v1924, %v2681
    %v2683 = vpop.f32.mrb[0].mxu0
    %2684 = vmatprep.mubr.f32.mxu0 0.0
    %2685 = vmatmul.mubr.f32.gmra.mrb[0].mxu0 %v2113
    %v2686 = vpop.f32.mrb[0].mxu0
    %v2687 = vadd.f32 %v1924, %v2686
    %v2688 = vpop.f32.mrb[0].mxu0
    %2689 = vmatprep.mubr.f32.mxu0 0.0
    %2690 = vmatmul.mubr.f32.gmra.mrb[0].mxu0 %v2116
    %v2691 = vpop.f32.mrb[0].mxu0
    %v2692 = vadd.f32 %v1924, %v2691
    %v2693 = vpop.f32.mrb[0].mxu0
    %2694 = vmatprep.mubr.f32.mxu0 0.0
    %2695 = vmatmul.mubr.f32.gmra.mrb[0].mxu0 %v2119
    %v2696 = vpop.f32.mrb[0].mxu0
    %v2697 = vadd.f32 %v1924, %v2696
    %v2698 = vpop.f32.mrb[0].mxu0
    %2699 = vmatprep.mubr.f32.mxu0 0.0
    %2700 = vmatmul.mubr.f32.gmra.mrb[0].mxu0 %v2122
    %v2701 = vpop.f32.mrb[0].mxu0
    %v2702 = vadd.f32 %v1924, %v2701
    %v2703 = vpop.f32.mrb[0].mxu0
    %2704 = vmatprep.mubr.f32.mxu0 0.0
    %2705 = vmatmul.mubr.f32.gmra.mrb[0].mxu0 %v2125
    %v2706 = vpop.f32.mrb[0].mxu0
    %v2707 = vadd.f32 %v1924, %v2706
    %v2708 = vpop.f32.mrb[0].mxu0
    %2709 = vmatprep.mubr.f32.mxu0 0.0
    %2710 = vmatmul.mubr.f32.gmra.mrb[0].mxu0 %v2128
    %v2711 = vpop.f32.mrb[0].mxu0
    %v2712 = vadd.f32 %v1924, %v2711
    %v2713 = vpop.f32.mrb[0].mxu0
    %2714 = vmatprep.mubr.f32.mxu0 0.0
    %2715 = vmatmul.mubr.f32.gmra.mrb[0].mxu0 %v2131
    %v2716 = vpop.f32.mrb[0].mxu0
    %v2717 = vadd.f32 %v1924, %v2716
    %v2718 = vpop.f32.mrb[0].mxu0
    %2719 = vmatprep.mubr.f32.mxu0 0.0
    %2720 = vmatmul.mubr.f32.gmra.mrb[0].mxu0 %v2134
    %v2721 = vpop.f32.mrb[0].mxu0
    %v2722 = vadd.f32 %v1924, %v2721
    %v2723 = vpop.f32.mrb[0].mxu0
    %2724 = vmatprep.mubr.f32.mxu0 0.0
    %2725 = vmatmul.mubr.f32.gmra.mrb[0].mxu0 %v2137
    %v2726 = vpop.f32.mrb[0].mxu0
    %v2727 = vadd.f32 %v1924, %v2726
    %v2728 = vpop.f32.mrb[0].mxu0
    %2729 = vmatprep.mubr.f32.mxu0 0.0
    %2730 = vmatmul.mubr.f32.gmra.mrb[0].mxu0 %v2140
    %v2731 = vpop.f32.mrb[0].mxu0
    %v2732 = vadd.f32 %v1924, %v2731
    %v2733 = vpop.f32.mrb[0].mxu0
    %2734 = vmatprep.mubr.f32.mxu0 0.0
    %2735 = vmatmul.mubr.f32.gmra.mrb[0].mxu0 %v2143
    %v2736 = vpop.f32.mrb[0].mxu0
    %v2737 = vadd.f32 %v1924, %v2736
    %v2738 = vpop.f32.mrb[0].mxu0
    %2739 = vmatprep.mubr.f32.mxu0 0.0
    %2740 = vmatmul.mubr.f32.gmra.mrb[0].mxu0 %v2146
    %v2741 = vpop.f32.mrb[0].mxu0
    %v2742 = vadd.f32 %v1924, %v2741
    %v2743 = vpop.f32.mrb[0].mxu0
    %2744 = vmatprep.mubr.f32.mxu0 0.0
    %2745 = vmatmul.mubr.f32.gmra.mrb[0].mxu0 %v2149
    %v2746 = vpop.f32.mrb[0].mxu0
    %v2747 = vadd.f32 %v1924, %v2746
    %v2748 = vpop.f32.mrb[0].mxu0
    %2749 = vmatprep.mubr.f32.mxu0 0.0
    %2750 = vmatmul.mubr.f32.gmra.mrb[0].mxu0 %v2152
    %v2751 = vpop.f32.mrb[0].mxu0
    %v2752 = vadd.f32 %v1924, %v2751
    %v2753 = vpop.f32.mrb[0].mxu0
    %2754 = vmatprep.mubr.f32.mxu0 0.0
    %2755 = vmatmul.mubr.f32.gmra.mrb[0].mxu0 %v2155
    %v2756 = vpop.f32.mrb[0].mxu0
    %v2757 = vadd.f32 %v1924, %v2756
    %v2758 = vpop.f32.mrb[0].mxu0
    %2759 = vmatprep.mubr.f32.mxu0 0.0
    %2760 = vmatmul.mubr.f32.gmra.mrb[0].mxu0 %v2158
    %v2761 = vpop.f32.mrb[0].mxu0
    %v2762 = vadd.f32 %v1924, %v2761
    %v2763 = vpop.f32.mrb[0].mxu0
    %2764 = vmatprep.mubr.f32.mxu0 0.0
    %2765 = vmatmul.mubr.f32.gmra.mrb[0].mxu0 %v2161
    %v2766 = vpop.f32.mrb[0].mxu0
    %v2767 = vadd.f32 %v1924, %v2766
    %v2768 = vpop.f32.mrb[0].mxu0
    %2769 = vmatprep.mubr.f32.mxu0 0.0
    %2770 = vmatmul.mubr.f32.gmra.mrb[0].mxu0 %v2164
    %v2771 = vpop.f32.mrb[0].mxu0
    %v2772 = vadd.f32 %v1924, %v2771
    %v2773 = vpop.f32.mrb[0].mxu0
    %2774 = vmatprep.mubr.f32.mxu0 0.0
    %2775 = vmatmul.mubr.f32.gmra.mrb[0].mxu0 %v2167
    %v2776 = vpop.f32.mrb[0].mxu0
    %v2777 = vadd.f32 %v1924, %v2776
    %v2778 = vpop.f32.mrb[0].mxu0
    %2779 = vmatprep.mubr.f32.mxu0 0.0
    %2780 = vmatmul.mubr.f32.gmra.mrb[0].mxu0 %v2170
    %v2781 = vpop.f32.mrb[0].mxu0
    %v2782 = vadd.f32 %v1924, %v2781
    %v2783 = vpop.f32.mrb[0].mxu0
    %2784 = vmatprep.mubr.f32.mxu0 0.0
    %2785 = vmatmul.mubr.f32.gmra.mrb[0].mxu0 %v2173
    %v2786 = vpop.f32.mrb[0].mxu0
    %v2787 = vadd.f32 %v1924, %v2786
    %v2788 = vpop.f32.mrb[0].mxu0
    %2789 = vmatprep.mubr.f32.mxu0 0.0
    %2790 = vmatmul.mubr.f32.gmra.mrb[0].mxu0 %v2176
    %v2791 = vpop.f32.mrb[0].mxu0
    %v2792 = vadd.f32 %v1924, %v2791
    %v2793 = vpop.f32.mrb[0].mxu0
    %2794 = vmatprep.mubr.f32.mxu0 0.0
    %2795 = vmatmul.mubr.f32.gmra.mrb[0].mxu0 %v2179
    %v2796 = vpop.f32.mrb[0].mxu0
    %v2797 = vadd.f32 %v1924, %v2796
    %v2798 = vpop.f32.mrb[0].mxu0
    %2799 = vmatprep.mubr.f32.mxu0 0.0
    %2800 = vmatmul.mubr.f32.gmra.mrb[0].mxu0 %v2182
    %v2801 = vpop.f32.mrb[0].mxu0
    %v2802 = vadd.f32 %v1924, %v2801
    %v2803 = vpop.f32.mrb[0].mxu0
    %2804 = vmatprep.mubr.f32.mxu0 0.0
    %2805 = vmatmul.mubr.f32.gmra.mrb[0].mxu0 %v2185
    %v2806 = vpop.f32.mrb[0].mxu0
    %v2807 = vadd.f32 %v1924, %v2806
    %v2808 = vpop.f32.mrb[0].mxu0
    %2809 = vmatprep.mubr.f32.mxu0 0.0
    %2810 = vmatmul.mubr.f32.gmra.mrb[0].mxu0 %v2188
    %v2811 = vpop.f32.mrb[0].mxu0
    %v2812 = vadd.f32 %v1924, %v2811
    %v2813 = vpop.f32.mrb[0].mxu0
    %2814 = vmatprep.mubr.f32.mxu0 0.0
    %2815 = vmatmul.mubr.f32.gmra.mrb[0].mxu0 %v2191
    %v2816 = vpop.f32.mrb[0].mxu0
    %v2817 = vadd.f32 %v1924, %v2816
    %v2818 = vpop.f32.mrb[0].mxu0
    %2819 = vmatprep.mubr.f32.mxu0 0.0
    %2820 = vmatmul.mubr.f32.gmra.mrb[0].mxu0 %v2194
    %v2821 = vpop.f32.mrb[0].mxu0
    %v2822 = vadd.f32 %v1924, %v2821
    %v2823 = vpop.f32.mrb[0].mxu0
    %2824 = vmatprep.mubr.f32.mxu0 0.0
    %2825 = vmatmul.mubr.f32.gmra.mrb[0].mxu0 %v2197
    %v2826 = vpop.f32.mrb[0].mxu0
    %v2827 = vadd.f32 %v1924, %v2826
    %v2828 = vpop.f32.mrb[0].mxu0
    %2829 = vmatprep.mubr.f32.mxu0 0.0
    %2830 = vmatmul.mubr.f32.gmra.mrb[0].mxu0 %v2200
    %v2831 = vpop.f32.mrb[0].mxu0
    %v2832 = vadd.f32 %v1924, %v2831
    %v2833 = vpop.f32.mrb[0].mxu0
    %2834 = vmatprep.mubr.f32.mxu0 0.0
    %2835 = vmatmul.mubr.f32.gmra.mrb[0].mxu0 %v2203
    %v2836 = vpop.f32.mrb[0].mxu0
    %v2837 = vadd.f32 %v1924, %v2836
    %v2838 = vpop.f32.mrb[0].mxu0
    %2839 = vmatprep.mubr.f32.mxu0 0.0
    %2840 = vmatmul.mubr.f32.gmra.mrb[0].mxu0 %v2206
    %v2841 = vpop.f32.mrb[0].mxu0
    %v2842 = vadd.f32 %v1924, %v2841
    %v2843 = vpop.f32.mrb[0].mxu0
    %2844 = vmatprep.mubr.f32.mxu0 0.0
    %2845 = vmatmul.mubr.f32.gmra.mrb[0].mxu0 %v2209
    %v2846 = vpop.f32.mrb[0].mxu0
    %v2847 = vadd.f32 %v1924, %v2846
    %v2848 = vpop.f32.mrb[0].mxu0
    %2849 = vmatprep.mubr.f32.mxu0 0.0
    %2850 = vmatmul.mubr.f32.gmra.mrb[0].mxu0 %v2212
    %v2851 = vpop.f32.mrb[0].mxu0
    %v2852 = vadd.f32 %v1924, %v2851
    %v2853 = vpop.f32.mrb[0].mxu0
    %2854 = vmatprep.mubr.f32.mxu0 0.0
    %2855 = vmatmul.mubr.f32.gmra.mrb[0].mxu0 %v2215
    %v2856 = vpop.f32.mrb[0].mxu0
    %v2857 = vadd.f32 %v1924, %v2856
    %v2858 = vpop.f32.mrb[0].mxu0
    %2859 = vmatprep.mubr.f32.mxu0 0.0
    %2860 = vmatmul.mubr.f32.gmra.mrb[0].mxu0 %v2218
    %v2861 = vpop.f32.mrb[0].mxu0
    %v2862 = vadd.f32 %v1924, %v2861
    %v2863 = vpop.f32.mrb[0].mxu0
    %2864 = vmatprep.mubr.f32.mxu0 0.0
    %2865 = vmatmul.mubr.f32.gmra.mrb[0].mxu0 %v2221
    %v2866 = vpop.f32.mrb[0].mxu0
    %v2867 = vadd.f32 %v1924, %v2866
    %v2868 = vpop.f32.mrb[0].mxu0
    %2869 = vmatprep.mubr.f32.mxu0 0.0
    %2870 = vmatmul.mubr.f32.gmra.mrb[0].mxu0 %v2224
    %v2871 = vpop.f32.mrb[0].mxu0
    %v2872 = vadd.f32 %v1924, %v2871
    %v2873 = vpop.f32.mrb[0].mxu0
    %2874 = vmatprep.mubr.f32.mxu0 0.0
    %2875 = vmatmul.mubr.f32.gmra.mrb[0].mxu0 %v2227
    %v2876 = vpop.f32.mrb[0].mxu0
    %v2877 = vadd.f32 %v1924, %v2876
    %v2878 = vpop.f32.mrb[0].mxu0
    %2879 = vmatprep.mubr.f32.mxu0 0.0
    %2880 = vmatmul.mubr.f32.gmra.mrb[0].mxu0 %v2230
    %v2881 = vpop.f32.mrb[0].mxu0
    %v2882 = vadd.f32 %v1924, %v2881
    %v2883 = vpop.f32.mrb[0].mxu0
    %2884 = vmatprep.mubr.f32.mxu0 0.0
    %2885 = vmatmul.mubr.f32.gmra.mrb[0].mxu0 %v2233
    %v2886 = vpop.f32.mrb[0].mxu0
    %v2887 = vadd.f32 %v1924, %v2886
    %v2888 = vpop.f32.mrb[0].mxu0
    %2889 = vmatprep.mubr.f32.mxu0 0.0
    %2890 = vmatmul.mubr.f32.gmra.mrb[0].mxu0 %v2236
    %v2891 = vpop.f32.mrb[0].mxu0
    %v2892 = vadd.f32 %v1924, %v2891
    %v2893 = vpop.f32.mrb[0].mxu0
    %2894 = vmatprep.mubr.f32.mxu0 0.0
    %2895 = vmatmul.mubr.f32.gmra.mrb[0].mxu0 %v2239
    %v2896 = vpop.f32.mrb[0].mxu0
    %v2897 = vadd.f32 %v1924, %v2896
    %v2898 = vpop.f32.mrb[0].mxu0
    %2899 = vmatprep.mubr.f32.mxu0 0.0
    %2900 = vmatmul.mubr.f32.gmra.mrb[0].mxu0 %v2242
    %v2901 = vpop.f32.mrb[0].mxu0
    %v2902 = vadd.f32 %v1924, %v2901
    %v2903 = vpop.f32.mrb[0].mxu0
    %2904 = vmatprep.mubr.f32.mxu0 0.0
    %2905 = vmatmul.mubr.f32.gmra.mrb[0].mxu0 %v2245
    %v2906 = vpop.f32.mrb[0].mxu0
    %v2907 = vadd.f32 %v1924, %v2906
    %v2908 = vpop.f32.mrb[0].mxu0
    %2909 = vmatprep.mubr.f32.mxu0 0.0
    %2910 = vmatmul.mubr.f32.gmra.mrb[0].mxu0 %v2248
    %v2911 = vpop.f32.mrb[0].mxu0
    %v2912 = vadd.f32 %v1924, %v2911
    %v2913 = vpop.f32.mrb[0].mxu0
    %2914 = vmatprep.mubr.f32.mxu0 0.0
    %2915 = vmatmul.mubr.f32.gmra.mrb[0].mxu0 %v2251
    %v2916 = vpop.f32.mrb[0].mxu0
    %v2917 = vadd.f32 %v1924, %v2916
    %v2918 = vpop.f32.mrb[0].mxu0
    %2919 = vmatprep.mubr.f32.mxu0 0.0
    %2920 = vmatmul.mubr.f32.gmra.mrb[0].mxu0 %v2254
    %v2921 = vpop.f32.mrb[0].mxu0
    %v2922 = vadd.f32 %v1924, %v2921
    %v2923 = vpop.f32.mrb[0].mxu0
    %2924 = vmatprep.mubr.f32.mxu0 0.0
    %2925 = vmatmul.mubr.f32.gmra.mrb[0].mxu0 %v2257
    %v2926 = vpop.f32.mrb[0].mxu0
    %v2927 = vadd.f32 %v1924, %v2926
    %v2928 = vpop.f32.mrb[0].mxu0
    %2929 = vmatprep.mubr.f32.mxu0 0.0
    %2930 = vmatmul.mubr.f32.gmra.mrb[0].mxu0 %v2260
    %v2931 = vpop.f32.mrb[0].mxu0
    %v2932 = vadd.f32 %v1924, %v2931
    %v2933 = vpop.f32.mrb[0].mxu0
    %2934 = vmatprep.mubr.f32.mxu0 0.0
    %2935 = vmatmul.mubr.f32.gmra.mrb[0].mxu0 %v2263
    %v2936 = vpop.f32.mrb[0].mxu0
    %v2937 = vadd.f32 %v1924, %v2936
    %v2938 = vpop.f32.mrb[0].mxu0
    %2939 = vmatprep.mubr.f32.mxu0 0.0
    %2940 = vmatmul.mubr.f32.gmra.mrb[0].mxu0 %v2266
    %v2941 = vpop.f32.mrb[0].mxu0
    %v2942 = vadd.f32 %v1924, %v2941
    %v2943 = vpop.f32.mrb[0].mxu0
    %2944 = vmatprep.mubr.f32.mxu0 0.0
    %2945 = vmatmul.mubr.f32.gmra.mrb[0].mxu0 %v2269
    %v2946 = vpop.f32.mrb[0].mxu0
    %v2947 = vadd.f32 %v1924, %v2946
    %v2948 = vpop.f32.mrb[0].mxu0
    %2949 = vmatprep.mubr.f32.mxu0 0.0
    %2950 = vmatmul.mubr.f32.gmra.mrb[0].mxu0 %v2272
    %v2951 = vpop.f32.mrb[0].mxu0
    %v2952 = vadd.f32 %v1924, %v2951
    %v2953 = vpop.f32.mrb[0].mxu0
    %2954 = vmatprep.mubr.f32.mxu0 0.0
    %2955 = vmatmul.mubr.f32.gmra.mrb[0].mxu0 %v2275
    %v2956 = vpop.f32.mrb[0].mxu0
    %v2957 = vadd.f32 %v1924, %v2956
    %v2958 = vpop.f32.mrb[0].mxu0
    %2959 = vmatprep.mubr.f32.mxu0 0.0
    %2960 = vmatmul.mubr.f32.gmra.mrb[0].mxu0 %v2278
    %v2961 = vpop.f32.mrb[0].mxu0
    %v2962 = vadd.f32 %v1924, %v2961
    %v2963 = vpop.f32.mrb[0].mxu0
    %2964 = vmatprep.mubr.f32.mxu0 0.0
    %2965 = vmatmul.mubr.f32.gmra.mrb[0].mxu0 %v2281
    %v2966 = vpop.f32.mrb[0].mxu0
    %v2967 = vadd.f32 %v1924, %v2966
    %v2968 = vpop.f32.mrb[0].mxu0
    %2969 = vmatprep.mubr.f32.mxu0 0.0
    %2970 = vmatmul.mubr.f32.gmra.mrb[0].mxu0 %v2284
    %v2971 = vpop.f32.mrb[0].mxu0
    %v2972 = vadd.f32 %v1924, %v2971
    %v2973 = vpop.f32.mrb[0].mxu0
    %2974 = vmatprep.mubr.f32.mxu0 0.0
    %2975 = vmatmul.mubr.f32.gmra.mrb[0].mxu0 %v2287
    %v2976 = vpop.f32.mrb[0].mxu0
    %v2977 = vadd.f32 %v1924, %v2976
    %v2978 = vpop.f32.mrb[0].mxu0
    %2979 = vmatprep.mubr.f32.mxu0 0.0
    %2980 = vmatmul.mubr.f32.gmra.mrb[0].mxu0 %v2290
    %v2981 = vpop.f32.mrb[0].mxu0
    %v2982 = vadd.f32 %v1924, %v2981
    %v2983 = vpop.f32.mrb[0].mxu0
    %2984 = vmatprep.mubr.f32.mxu0 0.0
    %2985 = vmatmul.mubr.f32.gmra.mrb[0].mxu0 %v2293
    %v2986 = vpop.f32.mrb[0].mxu0
    %v2987 = vadd.f32 %v1924, %v2986
    %v2988 = vpop.f32.mrb[0].mxu0
    %2989 = vmatprep.mubr.f32.mxu0 0.0
    %2990 = vmatmul.mubr.f32.gmra.mrb[0].mxu0 %v2296
    %v2991 = vpop.f32.mrb[0].mxu0
    %v2992 = vadd.f32 %v1924, %v2991
    %v2993 = vpop.f32.mrb[0].mxu0
    %2994 = vmatprep.mubr.f32.mxu0 0.0
    %2995 = vmatmul.mubr.f32.gmra.mrb[0].mxu0 %v2299
    %v2996 = vpop.f32.mrb[0].mxu0
    %v2997 = vadd.f32 %v1924, %v2996
    %v2998 = vpop.f32.mrb[0].mxu0
    %2999 = vmatprep.mubr.f32.mxu0 0.0
    %3000 = vmatmul.mubr.f32.gmra.mrb[0].mxu0 %v2302
    %v3001 = vpop.f32.mrb[0].mxu0
    %v3002 = vadd.f32 %v1924, %v3001
    %v3003 = vpop.f32.mrb[0].mxu0
    %3004 = vmatprep.mubr.f32.mxu0 0.0
    %3005 = vmatmul.mubr.f32.gmra.mrb[0].mxu0 %v2305
    %v3006 = vpop.f32.mrb[0].mxu0
    %v3007 = vadd.f32 %v1924, %v3006
    %v3008 = vpop.f32.mrb[0].mxu0
    %3009 = vmatprep.mubr.f32.mxu0 0.0
    %3010 = vmatmul.mubr.f32.gmra.mrb[0].mxu0 %v2308
    %v3011 = vpop.f32.mrb[0].mxu0
    %v3012 = vadd.f32 %v1924, %v3011
    %v3013 = vpop.f32.mrb[0].mxu0
    %3014 = vdwg.mxu0
    %v3015 = vmul.f32 %v2377, 0.5
    %v3016 = vmul.f32 %v2382, 0.5
    %v3017 = vmul.f32 %v2387, 0.5
    %v3018 = vmul.f32 %v2392, 0.5
    %v3019 = vmul.f32 %v2397, 0.5
    %v3020 = vmul.f32 %v2402, 0.5
    %v3021 = vmul.f32 %v2407, 0.5
    %v3022 = vmul.f32 %v2412, 0.5
    %v3023 = vmul.f32 %v2417, 0.5
    %v3024 = vmul.f32 %v2422, 0.5
    %v3025 = vmul.f32 %v2427, 0.5
    %v3026 = vmul.f32 %v2432, 0.5
    %v3027 = vmul.f32 %v2437, 0.5
    %v3028 = vmul.f32 %v2442, 0.5
    %v3029 = vmul.f32 %v2447, 0.5
    %v3030 = vmul.f32 %v2452, 0.5
    %v3031 = vmul.f32 %v2457, 0.5
    %v3032 = vmul.f32 %v2462, 0.5
    %v3033 = vmul.f32 %v2467, 0.5
    %v3034 = vmul.f32 %v2472, 0.5
    %v3035 = vmul.f32 %v2477, 0.5
    %v3036 = vmul.f32 %v2482, 0.5
    %v3037 = vmul.f32 %v2487, 0.5
    %v3038 = vmul.f32 %v2492, 0.5
    %v3039 = vmul.f32 %v2497, 0.5
    %v3040 = vmul.f32 %v2502, 0.5
    %v3041 = vmul.f32 %v2507, 0.5
    %v3042 = vmul.f32 %v2512, 0.5
    %v3043 = vmul.f32 %v2517, 0.5
    %v3044 = vmul.f32 %v2522, 0.5
    %v3045 = vmul.f32 %v2527, 0.5
    %v3046 = vmul.f32 %v2532, 0.5
    %v3047 = vmul.f32 %v2537, 0.5
    %v3048 = vmul.f32 %v2542, 0.5
    %v3049 = vmul.f32 %v2547, 0.5
    %v3050 = vmul.f32 %v2552, 0.5
    %v3051 = vmul.f32 %v2557, 0.5
    %v3052 = vmul.f32 %v2562, 0.5
    %v3053 = vmul.f32 %v2567, 0.5
    %v3054 = vmul.f32 %v2572, 0.5
    %v3055 = vmul.f32 %v2577, 0.5
    %v3056 = vmul.f32 %v2582, 0.5
    %v3057 = vmul.f32 %v2587, 0.5
    %v3058 = vmul.f32 %v2592, 0.5
    %v3059 = vmul.f32 %v2597, 0.5
    %v3060 = vmul.f32 %v2602, 0.5
    %v3061 = vmul.f32 %v2607, 0.5
    %v3062 = vmul.f32 %v2612, 0.5
    %v3063 = vmul.f32 %v2617, 0.5
    %v3064 = vmul.f32 %v2622, 0.5
    %v3065 = vmul.f32 %v2627, 0.5
    %v3066 = vmul.f32 %v2632, 0.5
    %v3067 = vmul.f32 %v2637, 0.5
    %v3068 = vmul.f32 %v2642, 0.5
    %v3069 = vmul.f32 %v2647, 0.5
    %v3070 = vmul.f32 %v2652, 0.5
    %v3071 = vmul.f32 %v2657, 0.5
    %v3072 = vmul.f32 %v2662, 0.5
    %v3073 = vmul.f32 %v2667, 0.5
    %v3074 = vmul.f32 %v2672, 0.5
    %v3075 = vmul.f32 %v2677, 0.5
    %v3076 = vmul.f32 %v2682, 0.5
    %v3077 = vmul.f32 %v2687, 0.5
    %v3078 = vmul.f32 %v2692, 0.5
    %v3079 = vmul.f32 %v2697, 0.5
    %v3080 = vmul.f32 %v2702, 0.5
    %v3081 = vmul.f32 %v2707, 0.5
    %v3082 = vmul.f32 %v2712, 0.5
    %v3083 = vmul.f32 %v2717, 0.5
    %v3084 = vmul.f32 %v2722, 0.5
    %v3085 = vmul.f32 %v2727, 0.5
    %v3086 = vmul.f32 %v2732, 0.5
    %v3087 = vmul.f32 %v2737, 0.5
    %v3088 = vmul.f32 %v2742, 0.5
    %v3089 = vmul.f32 %v2747, 0.5
    %v3090 = vmul.f32 %v2752, 0.5
    %v3091 = vmul.f32 %v2757, 0.5
    %v3092 = vmul.f32 %v2762, 0.5
    %v3093 = vmul.f32 %v2767, 0.5
    %v3094 = vmul.f32 %v2772, 0.5
    %v3095 = vmul.f32 %v2777, 0.5
    %v3096 = vmul.f32 %v2782, 0.5
    %v3097 = vmul.f32 %v2787, 0.5
    %v3098 = vmul.f32 %v2792, 0.5
    %v3099 = vmul.f32 %v2797, 0.5
    %v3100 = vmul.f32 %v2802, 0.5
    %v3101 = vmul.f32 %v2807, 0.5
    %v3102 = vmul.f32 %v2812, 0.5
    %v3103 = vmul.f32 %v2817, 0.5
    %v3104 = vmul.f32 %v2822, 0.5
    %v3105 = vmul.f32 %v2827, 0.5
    %v3106 = vmul.f32 %v2832, 0.5
    %v3107 = vmul.f32 %v2837, 0.5
    %v3108 = vmul.f32 %v2842, 0.5
    %v3109 = vmul.f32 %v2847, 0.5
    %v3110 = vmul.f32 %v2852, 0.5
    %v3111 = vmul.f32 %v2857, 0.5
    %v3112 = vmul.f32 %v2862, 0.5
    %v3113 = vmul.f32 %v2867, 0.5
    %v3114 = vmul.f32 %v2872, 0.5
    %v3115 = vmul.f32 %v2877, 0.5
    %v3116 = vmul.f32 %v2882, 0.5
    %v3117 = vmul.f32 %v2887, 0.5
    %v3118 = vmul.f32 %v2892, 0.5
    %v3119 = vmul.f32 %v2897, 0.5
    %v3120 = vmul.f32 %v2902, 0.5
    %v3121 = vmul.f32 %v2907, 0.5
    %v3122 = vmul.f32 %v2912, 0.5
    %v3123 = vmul.f32 %v2917, 0.5
    %v3124 = vmul.f32 %v2922, 0.5
    %v3125 = vmul.f32 %v2927, 0.5
    %v3126 = vmul.f32 %v2932, 0.5
    %v3127 = vmul.f32 %v2937, 0.5
    %v3128 = vmul.f32 %v2942, 0.5
    %v3129 = vmul.f32 %v2947, 0.5
    %v3130 = vmul.f32 %v2952, 0.5
    %v3131 = vmul.f32 %v2957, 0.5
    %v3132 = vmul.f32 %v2962, 0.5
    %v3133 = vmul.f32 %v2967, 0.5
    %v3134 = vmul.f32 %v2972, 0.5
    %v3135 = vmul.f32 %v2977, 0.5
    %v3136 = vmul.f32 %v2982, 0.5
    %v3137 = vmul.f32 %v2987, 0.5
    %v3138 = vmul.f32 %v2992, 0.5
    %v3139 = vmul.f32 %v2997, 0.5
    %v3140 = vmul.f32 %v3002, 0.5
    %v3141 = vmul.f32 %v3007, 0.5
    %v3142 = vmul.f32 %v3012, 0.5
    %v3143 = vmul.f32 %v2377, 0.70710677
    %v3144 = vmul.f32 %v2382, 0.70710677
    %v3145 = vmul.f32 %v2387, 0.70710677
    %v3146 = vmul.f32 %v2392, 0.70710677
    %v3147 = vmul.f32 %v2397, 0.70710677
    %v3148 = vmul.f32 %v2402, 0.70710677
    %v3149 = vmul.f32 %v2407, 0.70710677
    %v3150 = vmul.f32 %v2412, 0.70710677
    %v3151 = vmul.f32 %v2417, 0.70710677
    %v3152 = vmul.f32 %v2422, 0.70710677
    %v3153 = vmul.f32 %v2427, 0.70710677
    %v3154 = vmul.f32 %v2432, 0.70710677
    %v3155 = vmul.f32 %v2437, 0.70710677
    %v3156 = vmul.f32 %v2442, 0.70710677
    %v3157 = vmul.f32 %v2447, 0.70710677
    %v3158 = vmul.f32 %v2452, 0.70710677
    %v3159 = vmul.f32 %v2457, 0.70710677
    %v3160 = vmul.f32 %v2462, 0.70710677
    %v3161 = vmul.f32 %v2467, 0.70710677
    %v3162 = vmul.f32 %v2472, 0.70710677
    %v3163 = vmul.f32 %v2477, 0.70710677
    %v3164 = vmul.f32 %v2482, 0.70710677
    %v3165 = vmul.f32 %v2487, 0.70710677
    %v3166 = vmul.f32 %v2492, 0.70710677
    %v3167 = vmul.f32 %v2497, 0.70710677
    %v3168 = vmul.f32 %v2502, 0.70710677
    %v3169 = vmul.f32 %v2507, 0.70710677
    %v3170 = vmul.f32 %v2512, 0.70710677
    %v3171 = vmul.f32 %v2517, 0.70710677
    %v3172 = vmul.f32 %v2522, 0.70710677
    %v3173 = vmul.f32 %v2527, 0.70710677
    %v3174 = vmul.f32 %v2532, 0.70710677
    %v3175 = vmul.f32 %v2537, 0.70710677
    %v3176 = vmul.f32 %v2542, 0.70710677
    %v3177 = vmul.f32 %v2547, 0.70710677
    %v3178 = vmul.f32 %v2552, 0.70710677
    %v3179 = vmul.f32 %v2557, 0.70710677
    %v3180 = vmul.f32 %v2562, 0.70710677
    %v3181 = vmul.f32 %v2567, 0.70710677
    %v3182 = vmul.f32 %v2572, 0.70710677
    %v3183 = vmul.f32 %v2577, 0.70710677
    %v3184 = vmul.f32 %v2582, 0.70710677
    %v3185 = vmul.f32 %v2587, 0.70710677
    %v3186 = vmul.f32 %v2592, 0.70710677
    %v3187 = vmul.f32 %v2597, 0.70710677
    %v3188 = vmul.f32 %v2602, 0.70710677
    %v3189 = vmul.f32 %v2607, 0.70710677
    %v3190 = vmul.f32 %v2612, 0.70710677
    %v3191 = vmul.f32 %v2617, 0.70710677
    %v3192 = vmul.f32 %v2622, 0.70710677
    %v3193 = vmul.f32 %v2627, 0.70710677
    %v3194 = vmul.f32 %v2632, 0.70710677
    %v3195 = vmul.f32 %v2637, 0.70710677
    %v3196 = vmul.f32 %v2642, 0.70710677
    %v3197 = vmul.f32 %v2647, 0.70710677
    %v3198 = vmul.f32 %v2652, 0.70710677
    %v3199 = vmul.f32 %v2657, 0.70710677
    %v3200 = vmul.f32 %v2662, 0.70710677
    %v3201 = vmul.f32 %v2667, 0.70710677
    %v3202 = vmul.f32 %v2672, 0.70710677
    %v3203 = vmul.f32 %v2677, 0.70710677
    %v3204 = vmul.f32 %v2682, 0.70710677
    %v3205 = vmul.f32 %v2687, 0.70710677
    %v3206 = vmul.f32 %v2692, 0.70710677
    %v3207 = vmul.f32 %v2697, 0.70710677
    %v3208 = vmul.f32 %v2702, 0.70710677
    %v3209 = vmul.f32 %v2707, 0.70710677
    %v3210 = vmul.f32 %v2712, 0.70710677
    %v3211 = vmul.f32 %v2717, 0.70710677
    %v3212 = vmul.f32 %v2722, 0.70710677
    %v3213 = vmul.f32 %v2727, 0.70710677
    %v3214 = vmul.f32 %v2732, 0.70710677
    %v3215 = vmul.f32 %v2737, 0.70710677
    %v3216 = vmul.f32 %v2742, 0.70710677
    %v3217 = vmul.f32 %v2747, 0.70710677
    %v3218 = vmul.f32 %v2752, 0.70710677
    %v3219 = vmul.f32 %v2757, 0.70710677
    %v3220 = vmul.f32 %v2762, 0.70710677
    %v3221 = vmul.f32 %v2767, 0.70710677
    %v3222 = vmul.f32 %v2772, 0.70710677
    %v3223 = vmul.f32 %v2777, 0.70710677
    %v3224 = vmul.f32 %v2782, 0.70710677
    %v3225 = vmul.f32 %v2787, 0.70710677
    %v3226 = vmul.f32 %v2792, 0.70710677
    %v3227 = vmul.f32 %v2797, 0.70710677
    %v3228 = vmul.f32 %v2802, 0.70710677
    %v3229 = vmul.f32 %v2807, 0.70710677
    %v3230 = vmul.f32 %v2812, 0.70710677
    %v3231 = vmul.f32 %v2817, 0.70710677
    %v3232 = vmul.f32 %v2822, 0.70710677
    %v3233 = vmul.f32 %v2827, 0.70710677
    %v3234 = vmul.f32 %v2832, 0.70710677
    %v3235 = vmul.f32 %v2837, 0.70710677
    %v3236 = vmul.f32 %v2842, 0.70710677
    %v3237 = vmul.f32 %v2847, 0.70710677
    %v3238 = vmul.f32 %v2852, 0.70710677
    %v3239 = vmul.f32 %v2857, 0.70710677
    %v3240 = vmul.f32 %v2862, 0.70710677
    %v3241 = vmul.f32 %v2867, 0.70710677
    %v3242 = vmul.f32 %v2872, 0.70710677
    %v3243 = vmul.f32 %v2877, 0.70710677
    %v3244 = vmul.f32 %v2882, 0.70710677
    %v3245 = vmul.f32 %v2887, 0.70710677
    %v3246 = vmul.f32 %v2892, 0.70710677
    %v3247 = vmul.f32 %v2897, 0.70710677
    %v3248 = vmul.f32 %v2902, 0.70710677
    %v3249 = vmul.f32 %v2907, 0.70710677
    %v3250 = vmul.f32 %v2912, 0.70710677
    %v3251 = vmul.f32 %v2917, 0.70710677
    %v3252 = vmul.f32 %v2922, 0.70710677
    %v3253 = vmul.f32 %v2927, 0.70710677
    %v3254 = vmul.f32 %v2932, 0.70710677
    %v3255 = vmul.f32 %v2937, 0.70710677
    %v3256 = vmul.f32 %v2942, 0.70710677
    %v3257 = vmul.f32 %v2947, 0.70710677
    %v3258 = vmul.f32 %v2952, 0.70710677
    %v3259 = vmul.f32 %v2957, 0.70710677
    %v3260 = vmul.f32 %v2962, 0.70710677
    %v3261 = vmul.f32 %v2967, 0.70710677
    %v3262 = vmul.f32 %v2972, 0.70710677
    %v3263 = vmul.f32 %v2977, 0.70710677
    %v3264 = vmul.f32 %v2982, 0.70710677
    %v3265 = vmul.f32 %v2987, 0.70710677
    %v3266 = vmul.f32 %v2992, 0.70710677
    %v3267 = vmul.f32 %v2997, 0.70710677
    %v3268 = vmul.f32 %v3002, 0.70710677
    %v3269 = vmul.f32 %v3007, 0.70710677
    %v3270 = vmul.f32 %v3012, 0.70710677
    %v3271 = verf.f32.pop %v3143
    %v3272 = verf.f32.pop %v3144
    %v3273 = verf.f32.pop %v3145
    %v3274 = verf.f32.pop %v3146
    %v3275 = verf.f32.pop %v3147
    %v3276 = verf.f32.pop %v3148
    %v3277 = verf.f32.pop %v3149
    %v3278 = verf.f32.pop %v3150
    %v3279 = verf.f32.pop %v3151
    %v3280 = verf.f32.pop %v3152
    %v3281 = verf.f32.pop %v3153
    %v3282 = verf.f32.pop %v3154
    %v3283 = verf.f32.pop %v3155
    %v3284 = verf.f32.pop %v3156
    %v3285 = verf.f32.pop %v3157
    %v3286 = verf.f32.pop %v3158
    %v3287 = verf.f32.pop %v3159
    %v3288 = verf.f32.pop %v3160
    %v3289 = verf.f32.pop %v3161
    %v3290 = verf.f32.pop %v3162
    %v3291 = verf.f32.pop %v3163
    %v3292 = verf.f32.pop %v3164
    %v3293 = verf.f32.pop %v3165
    %v3294 = verf.f32.pop %v3166
    %v3295 = verf.f32.pop %v3167
    %v3296 = verf.f32.pop %v3168
    %v3297 = verf.f32.pop %v3169
    %v3298 = verf.f32.pop %v3170
    %v3299 = verf.f32.pop %v3171
    %v3300 = verf.f32.pop %v3172
    %v3301 = verf.f32.pop %v3173
    %v3302 = verf.f32.pop %v3174
    %v3303 = verf.f32.pop %v3175
    %v3304 = verf.f32.pop %v3176
    %v3305 = verf.f32.pop %v3177
    %v3306 = verf.f32.pop %v3178
    %v3307 = verf.f32.pop %v3179
    %v3308 = verf.f32.pop %v3180
    %v3309 = verf.f32.pop %v3181
    %v3310 = verf.f32.pop %v3182
    %v3311 = verf.f32.pop %v3183
    %v3312 = verf.f32.pop %v3184
    %v3313 = verf.f32.pop %v3185
    %v3314 = verf.f32.pop %v3186
    %v3315 = verf.f32.pop %v3187
    %v3316 = verf.f32.pop %v3188
    %v3317 = verf.f32.pop %v3189
    %v3318 = verf.f32.pop %v3190
    %v3319 = verf.f32.pop %v3191
    %v3320 = verf.f32.pop %v3192
    %v3321 = verf.f32.pop %v3193
    %v3322 = verf.f32.pop %v3194
    %v3323 = verf.f32.pop %v3195
    %v3324 = verf.f32.pop %v3196
    %v3325 = verf.f32.pop %v3197
    %v3326 = verf.f32.pop %v3198
    %v3327 = verf.f32.pop %v3199
    %v3328 = verf.f32.pop %v3200
    %v3329 = verf.f32.pop %v3201
    %v3330 = verf.f32.pop %v3202
    %v3331 = verf.f32.pop %v3203
    %v3332 = verf.f32.pop %v3204
    %v3333 = verf.f32.pop %v3205
    %v3334 = verf.f32.pop %v3206
    %v3335 = verf.f32.pop %v3207
    %v3336 = verf.f32.pop %v3208
    %v3337 = verf.f32.pop %v3209
    %v3338 = verf.f32.pop %v3210
    %v3339 = verf.f32.pop %v3211
    %v3340 = verf.f32.pop %v3212
    %v3341 = verf.f32.pop %v3213
    %v3342 = verf.f32.pop %v3214
    %v3343 = verf.f32.pop %v3215
    %v3344 = verf.f32.pop %v3216
    %v3345 = verf.f32.pop %v3217
    %v3346 = verf.f32.pop %v3218
    %v3347 = verf.f32.pop %v3219
    %v3348 = verf.f32.pop %v3220
    %v3349 = verf.f32.pop %v3221
    %v3350 = verf.f32.pop %v3222
    %v3351 = verf.f32.pop %v3223
    %v3352 = verf.f32.pop %v3224
    %v3353 = verf.f32.pop %v3225
    %v3354 = verf.f32.pop %v3226
    %v3355 = verf.f32.pop %v3227
    %v3356 = verf.f32.pop %v3228
    %v3357 = verf.f32.pop %v3229
    %v3358 = verf.f32.pop %v3230
    %v3359 = verf.f32.pop %v3231
    %v3360 = verf.f32.pop %v3232
    %v3361 = verf.f32.pop %v3233
    %v3362 = verf.f32.pop %v3234
    %v3363 = verf.f32.pop %v3235
    %v3364 = verf.f32.pop %v3236
    %v3365 = verf.f32.pop %v3237
    %v3366 = verf.f32.pop %v3238
    %v3367 = verf.f32.pop %v3239
    %v3368 = verf.f32.pop %v3240
    %v3369 = verf.f32.pop %v3241
    %v3370 = verf.f32.pop %v3242
    %v3371 = verf.f32.pop %v3243
    %v3372 = verf.f32.pop %v3244
    %v3373 = verf.f32.pop %v3245
    %v3374 = verf.f32.pop %v3246
    %v3375 = verf.f32.pop %v3247
    %v3376 = verf.f32.pop %v3248
    %v3377 = verf.f32.pop %v3249
    %v3378 = verf.f32.pop %v3250
    %v3379 = verf.f32.pop %v3251
    %v3380 = verf.f32.pop %v3252
    %v3381 = verf.f32.pop %v3253
    %v3382 = verf.f32.pop %v3254
    %v3383 = verf.f32.pop %v3255
    %v3384 = verf.f32.pop %v3256
    %v3385 = verf.f32.pop %v3257
    %v3386 = verf.f32.pop %v3258
    %v3387 = verf.f32.pop %v3259
    %v3388 = verf.f32.pop %v3260
    %v3389 = verf.f32.pop %v3261
    %v3390 = verf.f32.pop %v3262
    %v3391 = verf.f32.pop %v3263
    %v3392 = verf.f32.pop %v3264
    %v3393 = verf.f32.pop %v3265
    %v3394 = verf.f32.pop %v3266
    %v3395 = verf.f32.pop %v3267
    %v3396 = verf.f32.pop %v3268
    %v3397 = verf.f32.pop %v3269
    %v3398 = verf.f32.pop %v3270
    %v3399 = vadd.f32 %v3271, 1.0
    %v3400 = vadd.f32 %v3272, 1.0
    %v3401 = vadd.f32 %v3273, 1.0
    %v3402 = vadd.f32 %v3274, 1.0
    %v3403 = vadd.f32 %v3275, 1.0
    %v3404 = vadd.f32 %v3276, 1.0
    %v3405 = vadd.f32 %v3277, 1.0
    %v3406 = vadd.f32 %v3278, 1.0
    %v3407 = vadd.f32 %v3279, 1.0
    %v3408 = vadd.f32 %v3280, 1.0
    %v3409 = vadd.f32 %v3281, 1.0
    %v3410 = vadd.f32 %v3282, 1.0
    %v3411 = vadd.f32 %v3283, 1.0
    %v3412 = vadd.f32 %v3284, 1.0
    %v3413 = vadd.f32 %v3285, 1.0
    %v3414 = vadd.f32 %v3286, 1.0
    %v3415 = vadd.f32 %v3287, 1.0
    %v3416 = vadd.f32 %v3288, 1.0
    %v3417 = vadd.f32 %v3289, 1.0
    %v3418 = vadd.f32 %v3290, 1.0
    %v3419 = vadd.f32 %v3291, 1.0
    %v3420 = vadd.f32 %v3292, 1.0
    %v3421 = vadd.f32 %v3293, 1.0
    %v3422 = vadd.f32 %v3294, 1.0
    %v3423 = vadd.f32 %v3295, 1.0
    %v3424 = vadd.f32 %v3296, 1.0
    %v3425 = vadd.f32 %v3297, 1.0
    %v3426 = vadd.f32 %v3298, 1.0
    %v3427 = vadd.f32 %v3299, 1.0
    %v3428 = vadd.f32 %v3300, 1.0
    %v3429 = vadd.f32 %v3301, 1.0
    %v3430 = vadd.f32 %v3302, 1.0
    %v3431 = vadd.f32 %v3303, 1.0
    %v3432 = vadd.f32 %v3304, 1.0
    %v3433 = vadd.f32 %v3305, 1.0
    %v3434 = vadd.f32 %v3306, 1.0
    %v3435 = vadd.f32 %v3307, 1.0
    %v3436 = vadd.f32 %v3308, 1.0
    %v3437 = vadd.f32 %v3309, 1.0
    %v3438 = vadd.f32 %v3310, 1.0
    %v3439 = vadd.f32 %v3311, 1.0
    %v3440 = vadd.f32 %v3312, 1.0
    %v3441 = vadd.f32 %v3313, 1.0
    %v3442 = vadd.f32 %v3314, 1.0
    %v3443 = vadd.f32 %v3315, 1.0
    %v3444 = vadd.f32 %v3316, 1.0
    %v3445 = vadd.f32 %v3317, 1.0
    %v3446 = vadd.f32 %v3318, 1.0
    %v3447 = vadd.f32 %v3319, 1.0
    %v3448 = vadd.f32 %v3320, 1.0
    %v3449 = vadd.f32 %v3321, 1.0
    %v3450 = vadd.f32 %v3322, 1.0
    %v3451 = vadd.f32 %v3323, 1.0
    %v3452 = vadd.f32 %v3324, 1.0
    %v3453 = vadd.f32 %v3325, 1.0
    %v3454 = vadd.f32 %v3326, 1.0
    %v3455 = vadd.f32 %v3327, 1.0
    %v3456 = vadd.f32 %v3328, 1.0
    %v3457 = vadd.f32 %v3329, 1.0
    %v3458 = vadd.f32 %v3330, 1.0
    %v3459 = vadd.f32 %v3331, 1.0
    %v3460 = vadd.f32 %v3332, 1.0
    %v3461 = vadd.f32 %v3333, 1.0
    %v3462 = vadd.f32 %v3334, 1.0
    %v3463 = vadd.f32 %v3335, 1.0
    %v3464 = vadd.f32 %v3336, 1.0
    %v3465 = vadd.f32 %v3337, 1.0
    %v3466 = vadd.f32 %v3338, 1.0
    %v3467 = vadd.f32 %v3339, 1.0
    %v3468 = vadd.f32 %v3340, 1.0
    %v3469 = vadd.f32 %v3341, 1.0
    %v3470 = vadd.f32 %v3342, 1.0
    %v3471 = vadd.f32 %v3343, 1.0
    %v3472 = vadd.f32 %v3344, 1.0
    %v3473 = vadd.f32 %v3345, 1.0
    %v3474 = vadd.f32 %v3346, 1.0
    %v3475 = vadd.f32 %v3347, 1.0
    %v3476 = vadd.f32 %v3348, 1.0
    %v3477 = vadd.f32 %v3349, 1.0
    %v3478 = vadd.f32 %v3350, 1.0
    %v3479 = vadd.f32 %v3351, 1.0
    %v3480 = vadd.f32 %v3352, 1.0
    %v3481 = vadd.f32 %v3353, 1.0
    %v3482 = vadd.f32 %v3354, 1.0
    %v3483 = vadd.f32 %v3355, 1.0
    %v3484 = vadd.f32 %v3356, 1.0
    %v3485 = vadd.f32 %v3357, 1.0
    %v3486 = vadd.f32 %v3358, 1.0
    %v3487 = vadd.f32 %v3359, 1.0
    %v3488 = vadd.f32 %v3360, 1.0
    %v3489 = vadd.f32 %v3361, 1.0
    %v3490 = vadd.f32 %v3362, 1.0
    %v3491 = vadd.f32 %v3363, 1.0
    %v3492 = vadd.f32 %v3364, 1.0
    %v3493 = vadd.f32 %v3365, 1.0
    %v3494 = vadd.f32 %v3366, 1.0
    %v3495 = vadd.f32 %v3367, 1.0
    %v3496 = vadd.f32 %v3368, 1.0
    %v3497 = vadd.f32 %v3369, 1.0
    %v3498 = vadd.f32 %v3370, 1.0
    %v3499 = vadd.f32 %v3371, 1.0
    %v3500 = vadd.f32 %v3372, 1.0
    %v3501 = vadd.f32 %v3373, 1.0
    %v3502 = vadd.f32 %v3374, 1.0
    %v3503 = vadd.f32 %v3375, 1.0
    %v3504 = vadd.f32 %v3376, 1.0
    %v3505 = vadd.f32 %v3377, 1.0
    %v3506 = vadd.f32 %v3378, 1.0
    %v3507 = vadd.f32 %v3379, 1.0
    %v3508 = vadd.f32 %v3380, 1.0
    %v3509 = vadd.f32 %v3381, 1.0
    %v3510 = vadd.f32 %v3382, 1.0
    %v3511 = vadd.f32 %v3383, 1.0
    %v3512 = vadd.f32 %v3384, 1.0
    %v3513 = vadd.f32 %v3385, 1.0
    %v3514 = vadd.f32 %v3386, 1.0
    %v3515 = vadd.f32 %v3387, 1.0
    %v3516 = vadd.f32 %v3388, 1.0
    %v3517 = vadd.f32 %v3389, 1.0
    %v3518 = vadd.f32 %v3390, 1.0
    %v3519 = vadd.f32 %v3391, 1.0
    %v3520 = vadd.f32 %v3392, 1.0
    %v3521 = vadd.f32 %v3393, 1.0
    %v3522 = vadd.f32 %v3394, 1.0
    %v3523 = vadd.f32 %v3395, 1.0
    %v3524 = vadd.f32 %v3396, 1.0
    %v3525 = vadd.f32 %v3397, 1.0
    %v3526 = vadd.f32 %v3398, 1.0
    %v3527 = vmul.f32 %v3015, %v3399
    %v3528 = vmul.f32 %v3016, %v3400
    %v3529 = vmul.f32 %v3017, %v3401
    %v3530 = vmul.f32 %v3018, %v3402
    %v3531 = vmul.f32 %v3019, %v3403
    %v3532 = vmul.f32 %v3020, %v3404
    %v3533 = vmul.f32 %v3021, %v3405
    %v3534 = vmul.f32 %v3022, %v3406
    %v3535 = vmul.f32 %v3023, %v3407
    %v3536 = vmul.f32 %v3024, %v3408
    %v3537 = vmul.f32 %v3025, %v3409
    %v3538 = vmul.f32 %v3026, %v3410
    %v3539 = vmul.f32 %v3027, %v3411
    %v3540 = vmul.f32 %v3028, %v3412
    %v3541 = vmul.f32 %v3029, %v3413
    %v3542 = vmul.f32 %v3030, %v3414
    %v3543 = vmul.f32 %v3031, %v3415
    %v3544 = vmul.f32 %v3032, %v3416
    %v3545 = vmul.f32 %v3033, %v3417
    %v3546 = vmul.f32 %v3034, %v3418
    %v3547 = vmul.f32 %v3035, %v3419
    %v3548 = vmul.f32 %v3036, %v3420
    %v3549 = vmul.f32 %v3037, %v3421
    %v3550 = vmul.f32 %v3038, %v3422
    %v3551 = vmul.f32 %v3039, %v3423
    %v3552 = vmul.f32 %v3040, %v3424
    %v3553 = vmul.f32 %v3041, %v3425
    %v3554 = vmul.f32 %v3042, %v3426
    %v3555 = vmul.f32 %v3043, %v3427
    %v3556 = vmul.f32 %v3044, %v3428
    %v3557 = vmul.f32 %v3045, %v3429
    %v3558 = vmul.f32 %v3046, %v3430
    %v3559 = vmul.f32 %v3047, %v3431
    %v3560 = vmul.f32 %v3048, %v3432
    %v3561 = vmul.f32 %v3049, %v3433
    %v3562 = vmul.f32 %v3050, %v3434
    %v3563 = vmul.f32 %v3051, %v3435
    %v3564 = vmul.f32 %v3052, %v3436
    %v3565 = vmul.f32 %v3053, %v3437
    %v3566 = vmul.f32 %v3054, %v3438
    %v3567 = vmul.f32 %v3055, %v3439
    %v3568 = vmul.f32 %v3056, %v3440
    %v3569 = vmul.f32 %v3057, %v3441
    %v3570 = vmul.f32 %v3058, %v3442
    %v3571 = vmul.f32 %v3059, %v3443
    %v3572 = vmul.f32 %v3060, %v3444
    %v3573 = vmul.f32 %v3061, %v3445
    %v3574 = vmul.f32 %v3062, %v3446
    %v3575 = vmul.f32 %v3063, %v3447
    %v3576 = vmul.f32 %v3064, %v3448
    %v3577 = vmul.f32 %v3065, %v3449
    %v3578 = vmul.f32 %v3066, %v3450
    %v3579 = vmul.f32 %v3067, %v3451
    %v3580 = vmul.f32 %v3068, %v3452
    %v3581 = vmul.f32 %v3069, %v3453
    %v3582 = vmul.f32 %v3070, %v3454
    %v3583 = vmul.f32 %v3071, %v3455
    %v3584 = vmul.f32 %v3072, %v3456
    %v3585 = vmul.f32 %v3073, %v3457
    %v3586 = vmul.f32 %v3074, %v3458
    %v3587 = vmul.f32 %v3075, %v3459
    %v3588 = vmul.f32 %v3076, %v3460
    %v3589 = vmul.f32 %v3077, %v3461
    %v3590 = vmul.f32 %v3078, %v3462
    %v3591 = vmul.f32 %v3079, %v3463
    %v3592 = vmul.f32 %v3080, %v3464
    %v3593 = vmul.f32 %v3081, %v3465
    %v3594 = vmul.f32 %v3082, %v3466
    %v3595 = vmul.f32 %v3083, %v3467
    %v3596 = vmul.f32 %v3084, %v3468
    %v3597 = vmul.f32 %v3085, %v3469
    %v3598 = vmul.f32 %v3086, %v3470
    %v3599 = vmul.f32 %v3087, %v3471
    %v3600 = vmul.f32 %v3088, %v3472
    %v3601 = vmul.f32 %v3089, %v3473
    %v3602 = vmul.f32 %v3090, %v3474
    %v3603 = vmul.f32 %v3091, %v3475
    %v3604 = vmul.f32 %v3092, %v3476
    %v3605 = vmul.f32 %v3093, %v3477
    %v3606 = vmul.f32 %v3094, %v3478
    %v3607 = vmul.f32 %v3095, %v3479
    %v3608 = vmul.f32 %v3096, %v3480
    %v3609 = vmul.f32 %v3097, %v3481
    %v3610 = vmul.f32 %v3098, %v3482
    %v3611 = vmul.f32 %v3099, %v3483
    %v3612 = vmul.f32 %v3100, %v3484
    %v3613 = vmul.f32 %v3101, %v3485
    %v3614 = vmul.f32 %v3102, %v3486
    %v3615 = vmul.f32 %v3103, %v3487
    %v3616 = vmul.f32 %v3104, %v3488
    %v3617 = vmul.f32 %v3105, %v3489
    %v3618 = vmul.f32 %v3106, %v3490
    %v3619 = vmul.f32 %v3107, %v3491
    %v3620 = vmul.f32 %v3108, %v3492
    %v3621 = vmul.f32 %v3109, %v3493
    %v3622 = vmul.f32 %v3110, %v3494
    %v3623 = vmul.f32 %v3111, %v3495
    %v3624 = vmul.f32 %v3112, %v3496
    %v3625 = vmul.f32 %v3113, %v3497
    %v3626 = vmul.f32 %v3114, %v3498
    %v3627 = vmul.f32 %v3115, %v3499
    %v3628 = vmul.f32 %v3116, %v3500
    %v3629 = vmul.f32 %v3117, %v3501
    %v3630 = vmul.f32 %v3118, %v3502
    %v3631 = vmul.f32 %v3119, %v3503
    %v3632 = vmul.f32 %v3120, %v3504
    %v3633 = vmul.f32 %v3121, %v3505
    %v3634 = vmul.f32 %v3122, %v3506
    %v3635 = vmul.f32 %v3123, %v3507
    %v3636 = vmul.f32 %v3124, %v3508
    %v3637 = vmul.f32 %v3125, %v3509
    %v3638 = vmul.f32 %v3126, %v3510
    %v3639 = vmul.f32 %v3127, %v3511
    %v3640 = vmul.f32 %v3128, %v3512
    %v3641 = vmul.f32 %v3129, %v3513
    %v3642 = vmul.f32 %v3130, %v3514
    %v3643 = vmul.f32 %v3131, %v3515
    %v3644 = vmul.f32 %v3132, %v3516
    %v3645 = vmul.f32 %v3133, %v3517
    %v3646 = vmul.f32 %v3134, %v3518
    %v3647 = vmul.f32 %v3135, %v3519
    %v3648 = vmul.f32 %v3136, %v3520
    %v3649 = vmul.f32 %v3137, %v3521
    %v3650 = vmul.f32 %v3138, %v3522
    %v3651 = vmul.f32 %v3139, %v3523
    %v3652 = vmul.f32 %v3140, %v3524
    %v3653 = vmul.f32 %v3141, %v3525
    %v3654 = vmul.f32 %v3142, %v3526
    %v3655 = vlaneseq
    %v3656 = vshrl.u32 %v3655, 7
    %v3657 = vsub.s32 2, %v3656
    %v3658 = vrot.slane %v172, %v3657
    %v3660 = vsel %vm1925, %v3527, 0
    %v3663 = vsel %vm1925, %v3528, 0
    %v3666 = vsel %vm1925, %v3529, 0
    %v3669 = vsel %vm1925, %v3530, 0
    %v3672 = vsel %vm1925, %v3531, 0
    %v3675 = vsel %vm1925, %v3532, 0
    %v3678 = vsel %vm1925, %v3533, 0
    %v3681 = vsel %vm1925, %v3534, 0
    %v3684 = vsel %vm1925, %v3535, 0
    %v3687 = vsel %vm1925, %v3536, 0
    %v3690 = vsel %vm1925, %v3537, 0
    %v3693 = vsel %vm1925, %v3538, 0
    %v3696 = vsel %vm1925, %v3539, 0
    %v3699 = vsel %vm1925, %v3540, 0
    %v3702 = vsel %vm1925, %v3541, 0
    %v3705 = vsel %vm1925, %v3542, 0
    %v3708 = vsel %vm1925, %v3543, 0
    %v3711 = vsel %vm1925, %v3544, 0
    %v3714 = vsel %vm1925, %v3545, 0
    %v3717 = vsel %vm1925, %v3546, 0
    %v3720 = vsel %vm1925, %v3547, 0
    %v3723 = vsel %vm1925, %v3548, 0
    %v3726 = vsel %vm1925, %v3549, 0
    %v3729 = vsel %vm1925, %v3550, 0
    %v3732 = vsel %vm1925, %v3551, 0
    %v3735 = vsel %vm1925, %v3552, 0
    %v3738 = vsel %vm1925, %v3553, 0
    %v3741 = vsel %vm1925, %v3554, 0
    %v3744 = vsel %vm1925, %v3555, 0
    %v3747 = vsel %vm1925, %v3556, 0
    %v3750 = vsel %vm1925, %v3557, 0
    %v3753 = vsel %vm1925, %v3558, 0
    %v3756 = vsel %vm1925, %v3559, 0
    %v3759 = vsel %vm1925, %v3560, 0
    %v3762 = vsel %vm1925, %v3561, 0
    %v3765 = vsel %vm1925, %v3562, 0
    %v3768 = vsel %vm1925, %v3563, 0
    %v3771 = vsel %vm1925, %v3564, 0
    %v3774 = vsel %vm1925, %v3565, 0
    %v3777 = vsel %vm1925, %v3566, 0
    %v3780 = vsel %vm1925, %v3567, 0
    %v3783 = vsel %vm1925, %v3568, 0
    %v3786 = vsel %vm1925, %v3569, 0
    %v3789 = vsel %vm1925, %v3570, 0
    %v3792 = vsel %vm1925, %v3571, 0
    %v3795 = vsel %vm1925, %v3572, 0
    %v3798 = vsel %vm1925, %v3573, 0
    %v3801 = vsel %vm1925, %v3574, 0
    %v3804 = vsel %vm1925, %v3575, 0
    %v3807 = vsel %vm1925, %v3576, 0
    %v3810 = vsel %vm1925, %v3577, 0
    %v3813 = vsel %vm1925, %v3578, 0
    %v3816 = vsel %vm1925, %v3579, 0
    %v3819 = vsel %vm1925, %v3580, 0
    %v3822 = vsel %vm1925, %v3581, 0
    %v3825 = vsel %vm1925, %v3582, 0
    %v3828 = vsel %vm1925, %v3583, 0
    %v3831 = vsel %vm1925, %v3584, 0
    %v3834 = vsel %vm1925, %v3585, 0
    %v3837 = vsel %vm1925, %v3586, 0
    %v3840 = vsel %vm1925, %v3587, 0
    %v3843 = vsel %vm1925, %v3588, 0
    %v3846 = vsel %vm1925, %v3589, 0
    %v3849 = vsel %vm1925, %v3590, 0
    %v3852 = vsel %vm1925, %v3591, 0
    %v3855 = vsel %vm1925, %v3592, 0
    %v3858 = vsel %vm1925, %v3593, 0
    %v3861 = vsel %vm1925, %v3594, 0
    %v3864 = vsel %vm1925, %v3595, 0
    %v3867 = vsel %vm1925, %v3596, 0
    %v3870 = vsel %vm1925, %v3597, 0
    %v3873 = vsel %vm1925, %v3598, 0
    %v3876 = vsel %vm1925, %v3599, 0
    %v3879 = vsel %vm1925, %v3600, 0
    %v3882 = vsel %vm1925, %v3601, 0
    %v3885 = vsel %vm1925, %v3602, 0
    %v3888 = vsel %vm1925, %v3603, 0
    %v3891 = vsel %vm1925, %v3604, 0
    %v3894 = vsel %vm1925, %v3605, 0
    %v3897 = vsel %vm1925, %v3606, 0
    %v3900 = vsel %vm1925, %v3607, 0
    %v3903 = vsel %vm1925, %v3608, 0
    %v3906 = vsel %vm1925, %v3609, 0
    %v3909 = vsel %vm1925, %v3610, 0
    %v3912 = vsel %vm1925, %v3611, 0
    %v3915 = vsel %vm1925, %v3612, 0
    %v3918 = vsel %vm1925, %v3613, 0
    %v3921 = vsel %vm1925, %v3614, 0
    %v3924 = vsel %vm1925, %v3615, 0
    %v3927 = vsel %vm1925, %v3616, 0
    %v3930 = vsel %vm1925, %v3617, 0
    %v3933 = vsel %vm1925, %v3618, 0
    %v3936 = vsel %vm1925, %v3619, 0
    %v3939 = vsel %vm1925, %v3620, 0
    %v3942 = vsel %vm1925, %v3621, 0
    %v3945 = vsel %vm1925, %v3622, 0
    %v3948 = vsel %vm1925, %v3623, 0
    %v3951 = vsel %vm1925, %v3624, 0
    %v3954 = vsel %vm1925, %v3625, 0
    %v3957 = vsel %vm1925, %v3626, 0
    %v3960 = vsel %vm1925, %v3627, 0
    %v3963 = vsel %vm1925, %v3628, 0
    %v3966 = vsel %vm1925, %v3629, 0
    %v3969 = vsel %vm1925, %v3630, 0
    %v3972 = vsel %vm1925, %v3631, 0
    %v3975 = vsel %vm1925, %v3632, 0
    %v3978 = vsel %vm1925, %v3633, 0
    %v3981 = vsel %vm1925, %v3634, 0
    %v3984 = vsel %vm1925, %v3635, 0
    %v3987 = vsel %vm1925, %v3636, 0
    %v3990 = vsel %vm1925, %v3637, 0
    %v3993 = vsel %vm1925, %v3638, 0
    %v3996 = vsel %vm1925, %v3639, 0
    %v3999 = vsel %vm1925, %v3640, 0
    %v4002 = vsel %vm1925, %v3641, 0
    %v4005 = vsel %vm1925, %v3642, 0
    %v4008 = vsel %vm1925, %v3643, 0
    %v4011 = vsel %vm1925, %v3644, 0
    %v4014 = vsel %vm1925, %v3645, 0
    %v4017 = vsel %vm1925, %v3646, 0
    %v4020 = vsel %vm1925, %v3647, 0
    %v4023 = vsel %vm1925, %v3648, 0
    %v4026 = vsel %vm1925, %v3649, 0
    %v4029 = vsel %vm1925, %v3650, 0
    %v4032 = vsel %vm1925, %v3651, 0
    %v4035 = vsel %vm1925, %v3652, 0
    %v4038 = vsel %vm1925, %v3653, 0
    %v4041 = vsel %vm1925, %v3654, 0
    %4043 = vmatprep.subr.mxu0 0.0
    %4044 = vmatpush1.msra.mxu0 %v164
    %4045 = vmatprep.subr.mxu0 0.0
    %4046 = vmatpush1.msra.mxu0 %v165
    %4047 = vmatprep.subr.mxu0 0.0
    %4048 = vmatpush1.msra.mxu0 %v166
    %4049 = vmatprep.subr.mxu0 0.0
    %4050 = vmatpush1.msra.mxu0 %v167
    %4051 = vmatprep.subr.mxu0 0.0
    %4052 = vmatpush1.msra.mxu0 %v168
    %4053 = vmatprep.subr.mxu0 0.0
    %4054 = vmatpush1.msra.mxu0 %v169
    %4055 = vmatprep.subr.mxu0 0.0
    %4056 = vmatpush1.msra.mxu0 %v170
    %4057 = vmatprep.subr.mxu0 0.0
    %4058 = vmatpush1.msra.mxu0 %v171
    %4059 = vmatprep.subr.mxu0 0.0
    %4060 = vmatpush1.msra.mxu0 0.0
    %4061 = vmatprep.subr.mxu0 0.0
    %4062 = vmatpush1.msra.mxu0 0.0
    %4063 = vmatprep.subr.mxu0 0.0
    %4064 = vmatpush1.msra.mxu0 0.0
    %4065 = vmatprep.subr.mxu0 0.0
    %4066 = vmatpush1.msra.mxu0 0.0
    %4067 = vmatprep.subr.mxu0 0.0
    %4068 = vmatpush1.msra.mxu0 0.0
    %4069 = vmatprep.subr.mxu0 0.0
    %4070 = vmatpush1.msra.mxu0 0.0
    %4071 = vmatprep.subr.mxu0 0.0
    %4072 = vmatpush1.msra.mxu0 0.0
    %4073 = vmatprep.subr.mxu0 0.0
    %4074 = vmatpush1.msra.mxu0 0.0
    %4075 = vmatprep.subr.mxu0 0.0
    %4076 = vmatpush1.msra.mxu0 0.0
    %4077 = vmatprep.subr.mxu0 0.0
    %4078 = vmatpush1.msra.mxu0 0.0
    %4079 = vmatprep.subr.mxu0 0.0
    %4080 = vmatpush1.msra.mxu0 0.0
    %4081 = vmatprep.subr.mxu0 0.0
    %4082 = vmatpush1.msra.mxu0 0.0
    %4083 = vmatprep.subr.mxu0 0.0
    %4084 = vmatpush1.msra.mxu0 0.0
    %4085 = vmatprep.subr.mxu0 0.0
    %4086 = vmatpush1.msra.mxu0 0.0
    %4087 = vmatprep.subr.mxu0 0.0
    %4088 = vmatpush1.msra.mxu0 0.0
    %4089 = vmatprep.subr.mxu0 0.0
    %4090 = vmatpush1.msra.mxu0 0.0
    %4091 = vmatprep.subr.mxu0 0.0
    %4092 = vmatpush1.msra.mxu0 0.0
    %4093 = vmatprep.subr.mxu0 0.0
    %4094 = vmatpush1.msra.mxu0 0.0
    %4095 = vmatprep.subr.mxu0 0.0
    %4096 = vmatpush1.msra.mxu0 0.0
    %4097 = vmatprep.subr.mxu0 0.0
    %4098 = vmatpush1.msra.mxu0 0.0
    %4099 = vmatprep.subr.mxu0 0.0
    %4100 = vmatpush1.msra.mxu0 0.0
    %4101 = vmatprep.subr.mxu0 0.0
    %4102 = vmatpush1.msra.mxu0 0.0
    %4103 = vmatprep.subr.mxu0 0.0
    %4104 = vmatpush1.msra.mxu0 0.0
    %4105 = vmatprep.subr.mxu0 0.0
    %4106 = vmatpush1.msra.mxu0 0.0
    %4107 = vmatprep.mubr.f32.mxu0 0.0
    %4108 = vmatmul.mubr.f32.gmra.mrb[0].mxu0 %v3660
    %v4109 = vpop.f32.mrb[0].mxu0
    %v4110 = vadd.f32 %v3658, %v4109
    %v4111 = vpop.f32.mrb[0].mxu0
    %4112 = vmatprep.mubr.f32.mxu0 0.0
    %4113 = vmatmul.mubr.f32.gmra.mrb[0].mxu0 %v3663
    %v4114 = vpop.f32.mrb[0].mxu0
    %v4115 = vadd.f32 %v3658, %v4114
    %v4116 = vpop.f32.mrb[0].mxu0
    %4117 = vmatprep.mubr.f32.mxu0 0.0
    %4118 = vmatmul.mubr.f32.gmra.mrb[0].mxu0 %v3666
    %v4119 = vpop.f32.mrb[0].mxu0
    %v4120 = vadd.f32 %v3658, %v4119
    %v4121 = vpop.f32.mrb[0].mxu0
    %4122 = vmatprep.mubr.f32.mxu0 0.0
    %4123 = vmatmul.mubr.f32.gmra.mrb[0].mxu0 %v3669
    %v4124 = vpop.f32.mrb[0].mxu0
    %v4125 = vadd.f32 %v3658, %v4124
    %v4126 = vpop.f32.mrb[0].mxu0
    %4127 = vmatprep.mubr.f32.mxu0 0.0
    %4128 = vmatmul.mubr.f32.gmra.mrb[0].mxu0 %v3672
    %v4129 = vpop.f32.mrb[0].mxu0
    %v4130 = vadd.f32 %v3658, %v4129
    %v4131 = vpop.f32.mrb[0].mxu0
    %4132 = vmatprep.mubr.f32.mxu0 0.0
    %4133 = vmatmul.mubr.f32.gmra.mrb[0].mxu0 %v3675
    %v4134 = vpop.f32.mrb[0].mxu0
    %v4135 = vadd.f32 %v3658, %v4134
    %v4136 = vpop.f32.mrb[0].mxu0
    %4137 = vmatprep.mubr.f32.mxu0 0.0
    %4138 = vmatmul.mubr.f32.gmra.mrb[0].mxu0 %v3678
    %v4139 = vpop.f32.mrb[0].mxu0
    %v4140 = vadd.f32 %v3658, %v4139
    %v4141 = vpop.f32.mrb[0].mxu0
    %4142 = vmatprep.mubr.f32.mxu0 0.0
    %4143 = vmatmul.mubr.f32.gmra.mrb[0].mxu0 %v3681
    %v4144 = vpop.f32.mrb[0].mxu0
    %v4145 = vadd.f32 %v3658, %v4144
    %v4146 = vpop.f32.mrb[0].mxu0
    %4147 = vmatprep.mubr.f32.mxu0 0.0
    %4148 = vmatmul.mubr.f32.gmra.mrb[0].mxu0 %v3684
    %v4149 = vpop.f32.mrb[0].mxu0
    %v4150 = vadd.f32 %v3658, %v4149
    %v4151 = vpop.f32.mrb[0].mxu0
    %4152 = vmatprep.mubr.f32.mxu0 0.0
    %4153 = vmatmul.mubr.f32.gmra.mrb[0].mxu0 %v3687
    %v4154 = vpop.f32.mrb[0].mxu0
    %v4155 = vadd.f32 %v3658, %v4154
    %v4156 = vpop.f32.mrb[0].mxu0
    %4157 = vmatprep.mubr.f32.mxu0 0.0
    %4158 = vmatmul.mubr.f32.gmra.mrb[0].mxu0 %v3690
    %v4159 = vpop.f32.mrb[0].mxu0
    %v4160 = vadd.f32 %v3658, %v4159
    %v4161 = vpop.f32.mrb[0].mxu0
    %4162 = vmatprep.mubr.f32.mxu0 0.0
    %4163 = vmatmul.mubr.f32.gmra.mrb[0].mxu0 %v3693
    %v4164 = vpop.f32.mrb[0].mxu0
    %v4165 = vadd.f32 %v3658, %v4164
    %v4166 = vpop.f32.mrb[0].mxu0
    %4167 = vmatprep.mubr.f32.mxu0 0.0
    %4168 = vmatmul.mubr.f32.gmra.mrb[0].mxu0 %v3696
    %v4169 = vpop.f32.mrb[0].mxu0
    %v4170 = vadd.f32 %v3658, %v4169
    %v4171 = vpop.f32.mrb[0].mxu0
    %4172 = vmatprep.mubr.f32.mxu0 0.0
    %4173 = vmatmul.mubr.f32.gmra.mrb[0].mxu0 %v3699
    %v4174 = vpop.f32.mrb[0].mxu0
    %v4175 = vadd.f32 %v3658, %v4174
    %v4176 = vpop.f32.mrb[0].mxu0
    %4177 = vmatprep.mubr.f32.mxu0 0.0
    %4178 = vmatmul.mubr.f32.gmra.mrb[0].mxu0 %v3702
    %v4179 = vpop.f32.mrb[0].mxu0
    %v4180 = vadd.f32 %v3658, %v4179
    %v4181 = vpop.f32.mrb[0].mxu0
    %4182 = vmatprep.mubr.f32.mxu0 0.0
    %4183 = vmatmul.mubr.f32.gmra.mrb[0].mxu0 %v3705
    %v4184 = vpop.f32.mrb[0].mxu0
    %v4185 = vadd.f32 %v3658, %v4184
    %v4186 = vpop.f32.mrb[0].mxu0
    %4187 = vmatprep.mubr.f32.mxu0 0.0
    %4188 = vmatmul.mubr.f32.gmra.mrb[0].mxu0 %v3708
    %v4189 = vpop.f32.mrb[0].mxu0
    %v4190 = vadd.f32 %v3658, %v4189
    %v4191 = vpop.f32.mrb[0].mxu0
    %4192 = vmatprep.mubr.f32.mxu0 0.0
    %4193 = vmatmul.mubr.f32.gmra.mrb[0].mxu0 %v3711
    %v4194 = vpop.f32.mrb[0].mxu0
    %v4195 = vadd.f32 %v3658, %v4194
    %v4196 = vpop.f32.mrb[0].mxu0
    %4197 = vmatprep.mubr.f32.mxu0 0.0
    %4198 = vmatmul.mubr.f32.gmra.mrb[0].mxu0 %v3714
    %v4199 = vpop.f32.mrb[0].mxu0
    %v4200 = vadd.f32 %v3658, %v4199
    %v4201 = vpop.f32.mrb[0].mxu0
    %4202 = vmatprep.mubr.f32.mxu0 0.0
    %4203 = vmatmul.mubr.f32.gmra.mrb[0].mxu0 %v3717
    %v4204 = vpop.f32.mrb[0].mxu0
    %v4205 = vadd.f32 %v3658, %v4204
    %v4206 = vpop.f32.mrb[0].mxu0
    %4207 = vmatprep.mubr.f32.mxu0 0.0
    %4208 = vmatmul.mubr.f32.gmra.mrb[0].mxu0 %v3720
    %v4209 = vpop.f32.mrb[0].mxu0
    %v4210 = vadd.f32 %v3658, %v4209
    %v4211 = vpop.f32.mrb[0].mxu0
    %4212 = vmatprep.mubr.f32.mxu0 0.0
    %4213 = vmatmul.mubr.f32.gmra.mrb[0].mxu0 %v3723
    %v4214 = vpop.f32.mrb[0].mxu0
    %v4215 = vadd.f32 %v3658, %v4214
    %v4216 = vpop.f32.mrb[0].mxu0
    %4217 = vmatprep.mubr.f32.mxu0 0.0
    %4218 = vmatmul.mubr.f32.gmra.mrb[0].mxu0 %v3726
    %v4219 = vpop.f32.mrb[0].mxu0
    %v4220 = vadd.f32 %v3658, %v4219
    %v4221 = vpop.f32.mrb[0].mxu0
    %4222 = vmatprep.mubr.f32.mxu0 0.0
    %4223 = vmatmul.mubr.f32.gmra.mrb[0].mxu0 %v3729
    %v4224 = vpop.f32.mrb[0].mxu0
    %v4225 = vadd.f32 %v3658, %v4224
    %v4226 = vpop.f32.mrb[0].mxu0
    %4227 = vmatprep.mubr.f32.mxu0 0.0
    %4228 = vmatmul.mubr.f32.gmra.mrb[0].mxu0 %v3732
    %v4229 = vpop.f32.mrb[0].mxu0
    %v4230 = vadd.f32 %v3658, %v4229
    %v4231 = vpop.f32.mrb[0].mxu0
    %4232 = vmatprep.mubr.f32.mxu0 0.0
    %4233 = vmatmul.mubr.f32.gmra.mrb[0].mxu0 %v3735
    %v4234 = vpop.f32.mrb[0].mxu0
    %v4235 = vadd.f32 %v3658, %v4234
    %v4236 = vpop.f32.mrb[0].mxu0
    %4237 = vmatprep.mubr.f32.mxu0 0.0
    %4238 = vmatmul.mubr.f32.gmra.mrb[0].mxu0 %v3738
    %v4239 = vpop.f32.mrb[0].mxu0
    %v4240 = vadd.f32 %v3658, %v4239
    %v4241 = vpop.f32.mrb[0].mxu0
    %4242 = vmatprep.mubr.f32.mxu0 0.0
    %4243 = vmatmul.mubr.f32.gmra.mrb[0].mxu0 %v3741
    %v4244 = vpop.f32.mrb[0].mxu0
    %v4245 = vadd.f32 %v3658, %v4244
    %v4246 = vpop.f32.mrb[0].mxu0
    %4247 = vmatprep.mubr.f32.mxu0 0.0
    %4248 = vmatmul.mubr.f32.gmra.mrb[0].mxu0 %v3744
    %v4249 = vpop.f32.mrb[0].mxu0
    %v4250 = vadd.f32 %v3658, %v4249
    %v4251 = vpop.f32.mrb[0].mxu0
    %4252 = vmatprep.mubr.f32.mxu0 0.0
    %4253 = vmatmul.mubr.f32.gmra.mrb[0].mxu0 %v3747
    %v4254 = vpop.f32.mrb[0].mxu0
    %v4255 = vadd.f32 %v3658, %v4254
    %v4256 = vpop.f32.mrb[0].mxu0
    %4257 = vmatprep.mubr.f32.mxu0 0.0
    %4258 = vmatmul.mubr.f32.gmra.mrb[0].mxu0 %v3750
    %v4259 = vpop.f32.mrb[0].mxu0
    %v4260 = vadd.f32 %v3658, %v4259
    %v4261 = vpop.f32.mrb[0].mxu0
    %4262 = vmatprep.mubr.f32.mxu0 0.0
    %4263 = vmatmul.mubr.f32.gmra.mrb[0].mxu0 %v3753
    %v4264 = vpop.f32.mrb[0].mxu0
    %v4265 = vadd.f32 %v3658, %v4264
    %v4266 = vpop.f32.mrb[0].mxu0
    %4267 = vmatprep.mubr.f32.mxu0 0.0
    %4268 = vmatmul.mubr.f32.gmra.mrb[0].mxu0 %v3756
    %v4269 = vpop.f32.mrb[0].mxu0
    %v4270 = vadd.f32 %v3658, %v4269
    %v4271 = vpop.f32.mrb[0].mxu0
    %4272 = vmatprep.mubr.f32.mxu0 0.0
    %4273 = vmatmul.mubr.f32.gmra.mrb[0].mxu0 %v3759
    %v4274 = vpop.f32.mrb[0].mxu0
    %v4275 = vadd.f32 %v3658, %v4274
    %v4276 = vpop.f32.mrb[0].mxu0
    %4277 = vmatprep.mubr.f32.mxu0 0.0
    %4278 = vmatmul.mubr.f32.gmra.mrb[0].mxu0 %v3762
    %v4279 = vpop.f32.mrb[0].mxu0
    %v4280 = vadd.f32 %v3658, %v4279
    %v4281 = vpop.f32.mrb[0].mxu0
    %4282 = vmatprep.mubr.f32.mxu0 0.0
    %4283 = vmatmul.mubr.f32.gmra.mrb[0].mxu0 %v3765
    %v4284 = vpop.f32.mrb[0].mxu0
    %v4285 = vadd.f32 %v3658, %v4284
    %v4286 = vpop.f32.mrb[0].mxu0
    %4287 = vmatprep.mubr.f32.mxu0 0.0
    %4288 = vmatmul.mubr.f32.gmra.mrb[0].mxu0 %v3768
    %v4289 = vpop.f32.mrb[0].mxu0
    %v4290 = vadd.f32 %v3658, %v4289
    %v4291 = vpop.f32.mrb[0].mxu0
    %4292 = vmatprep.mubr.f32.mxu0 0.0
    %4293 = vmatmul.mubr.f32.gmra.mrb[0].mxu0 %v3771
    %v4294 = vpop.f32.mrb[0].mxu0
    %v4295 = vadd.f32 %v3658, %v4294
    %v4296 = vpop.f32.mrb[0].mxu0
    %4297 = vmatprep.mubr.f32.mxu0 0.0
    %4298 = vmatmul.mubr.f32.gmra.mrb[0].mxu0 %v3774
    %v4299 = vpop.f32.mrb[0].mxu0
    %v4300 = vadd.f32 %v3658, %v4299
    %v4301 = vpop.f32.mrb[0].mxu0
    %4302 = vmatprep.mubr.f32.mxu0 0.0
    %4303 = vmatmul.mubr.f32.gmra.mrb[0].mxu0 %v3777
    %v4304 = vpop.f32.mrb[0].mxu0
    %v4305 = vadd.f32 %v3658, %v4304
    %v4306 = vpop.f32.mrb[0].mxu0
    %4307 = vmatprep.mubr.f32.mxu0 0.0
    %4308 = vmatmul.mubr.f32.gmra.mrb[0].mxu0 %v3780
    %v4309 = vpop.f32.mrb[0].mxu0
    %v4310 = vadd.f32 %v3658, %v4309
    %v4311 = vpop.f32.mrb[0].mxu0
    %4312 = vmatprep.mubr.f32.mxu0 0.0
    %4313 = vmatmul.mubr.f32.gmra.mrb[0].mxu0 %v3783
    %v4314 = vpop.f32.mrb[0].mxu0
    %v4315 = vadd.f32 %v3658, %v4314
    %v4316 = vpop.f32.mrb[0].mxu0
    %4317 = vmatprep.mubr.f32.mxu0 0.0
    %4318 = vmatmul.mubr.f32.gmra.mrb[0].mxu0 %v3786
    %v4319 = vpop.f32.mrb[0].mxu0
    %v4320 = vadd.f32 %v3658, %v4319
    %v4321 = vpop.f32.mrb[0].mxu0
    %4322 = vmatprep.mubr.f32.mxu0 0.0
    %4323 = vmatmul.mubr.f32.gmra.mrb[0].mxu0 %v3789
    %v4324 = vpop.f32.mrb[0].mxu0
    %v4325 = vadd.f32 %v3658, %v4324
    %v4326 = vpop.f32.mrb[0].mxu0
    %4327 = vmatprep.mubr.f32.mxu0 0.0
    %4328 = vmatmul.mubr.f32.gmra.mrb[0].mxu0 %v3792
    %v4329 = vpop.f32.mrb[0].mxu0
    %v4330 = vadd.f32 %v3658, %v4329
    %v4331 = vpop.f32.mrb[0].mxu0
    %4332 = vmatprep.mubr.f32.mxu0 0.0
    %4333 = vmatmul.mubr.f32.gmra.mrb[0].mxu0 %v3795
    %v4334 = vpop.f32.mrb[0].mxu0
    %v4335 = vadd.f32 %v3658, %v4334
    %v4336 = vpop.f32.mrb[0].mxu0
    %4337 = vmatprep.mubr.f32.mxu0 0.0
    %4338 = vmatmul.mubr.f32.gmra.mrb[0].mxu0 %v3798
    %v4339 = vpop.f32.mrb[0].mxu0
    %v4340 = vadd.f32 %v3658, %v4339
    %v4341 = vpop.f32.mrb[0].mxu0
    %4342 = vmatprep.mubr.f32.mxu0 0.0
    %4343 = vmatmul.mubr.f32.gmra.mrb[0].mxu0 %v3801
    %v4344 = vpop.f32.mrb[0].mxu0
    %v4345 = vadd.f32 %v3658, %v4344
    %v4346 = vpop.f32.mrb[0].mxu0
    %4347 = vmatprep.mubr.f32.mxu0 0.0
    %4348 = vmatmul.mubr.f32.gmra.mrb[0].mxu0 %v3804
    %v4349 = vpop.f32.mrb[0].mxu0
    %v4350 = vadd.f32 %v3658, %v4349
    %v4351 = vpop.f32.mrb[0].mxu0
    %4352 = vmatprep.mubr.f32.mxu0 0.0
    %4353 = vmatmul.mubr.f32.gmra.mrb[0].mxu0 %v3807
    %v4354 = vpop.f32.mrb[0].mxu0
    %v4355 = vadd.f32 %v3658, %v4354
    %v4356 = vpop.f32.mrb[0].mxu0
    %4357 = vmatprep.mubr.f32.mxu0 0.0
    %4358 = vmatmul.mubr.f32.gmra.mrb[0].mxu0 %v3810
    %v4359 = vpop.f32.mrb[0].mxu0
    %v4360 = vadd.f32 %v3658, %v4359
    %v4361 = vpop.f32.mrb[0].mxu0
    %4362 = vmatprep.mubr.f32.mxu0 0.0
    %4363 = vmatmul.mubr.f32.gmra.mrb[0].mxu0 %v3813
    %v4364 = vpop.f32.mrb[0].mxu0
    %v4365 = vadd.f32 %v3658, %v4364
    %v4366 = vpop.f32.mrb[0].mxu0
    %4367 = vmatprep.mubr.f32.mxu0 0.0
    %4368 = vmatmul.mubr.f32.gmra.mrb[0].mxu0 %v3816
    %v4369 = vpop.f32.mrb[0].mxu0
    %v4370 = vadd.f32 %v3658, %v4369
    %v4371 = vpop.f32.mrb[0].mxu0
    %4372 = vmatprep.mubr.f32.mxu0 0.0
    %4373 = vmatmul.mubr.f32.gmra.mrb[0].mxu0 %v3819
    %v4374 = vpop.f32.mrb[0].mxu0
    %v4375 = vadd.f32 %v3658, %v4374
    %v4376 = vpop.f32.mrb[0].mxu0
    %4377 = vmatprep.mubr.f32.mxu0 0.0
    %4378 = vmatmul.mubr.f32.gmra.mrb[0].mxu0 %v3822
    %v4379 = vpop.f32.mrb[0].mxu0
    %v4380 = vadd.f32 %v3658, %v4379
    %v4381 = vpop.f32.mrb[0].mxu0
    %4382 = vmatprep.mubr.f32.mxu0 0.0
    %4383 = vmatmul.mubr.f32.gmra.mrb[0].mxu0 %v3825
    %v4384 = vpop.f32.mrb[0].mxu0
    %v4385 = vadd.f32 %v3658, %v4384
    %v4386 = vpop.f32.mrb[0].mxu0
    %4387 = vmatprep.mubr.f32.mxu0 0.0
    %4388 = vmatmul.mubr.f32.gmra.mrb[0].mxu0 %v3828
    %v4389 = vpop.f32.mrb[0].mxu0
    %v4390 = vadd.f32 %v3658, %v4389
    %v4391 = vpop.f32.mrb[0].mxu0
    %4392 = vmatprep.mubr.f32.mxu0 0.0
    %4393 = vmatmul.mubr.f32.gmra.mrb[0].mxu0 %v3831
    %v4394 = vpop.f32.mrb[0].mxu0
    %v4395 = vadd.f32 %v3658, %v4394
    %v4396 = vpop.f32.mrb[0].mxu0
    %4397 = vmatprep.mubr.f32.mxu0 0.0
    %4398 = vmatmul.mubr.f32.gmra.mrb[0].mxu0 %v3834
    %v4399 = vpop.f32.mrb[0].mxu0
    %v4400 = vadd.f32 %v3658, %v4399
    %v4401 = vpop.f32.mrb[0].mxu0
    %4402 = vmatprep.mubr.f32.mxu0 0.0
    %4403 = vmatmul.mubr.f32.gmra.mrb[0].mxu0 %v3837
    %v4404 = vpop.f32.mrb[0].mxu0
    %v4405 = vadd.f32 %v3658, %v4404
    %v4406 = vpop.f32.mrb[0].mxu0
    %4407 = vmatprep.mubr.f32.mxu0 0.0
    %4408 = vmatmul.mubr.f32.gmra.mrb[0].mxu0 %v3840
    %v4409 = vpop.f32.mrb[0].mxu0
    %v4410 = vadd.f32 %v3658, %v4409
    %v4411 = vpop.f32.mrb[0].mxu0
    %4412 = vmatprep.mubr.f32.mxu0 0.0
    %4413 = vmatmul.mubr.f32.gmra.mrb[0].mxu0 %v3843
    %v4414 = vpop.f32.mrb[0].mxu0
    %v4415 = vadd.f32 %v3658, %v4414
    %v4416 = vpop.f32.mrb[0].mxu0
    %4417 = vmatprep.mubr.f32.mxu0 0.0
    %4418 = vmatmul.mubr.f32.gmra.mrb[0].mxu0 %v3846
    %v4419 = vpop.f32.mrb[0].mxu0
    %v4420 = vadd.f32 %v3658, %v4419
    %v4421 = vpop.f32.mrb[0].mxu0
    %4422 = vmatprep.mubr.f32.mxu0 0.0
    %4423 = vmatmul.mubr.f32.gmra.mrb[0].mxu0 %v3849
    %v4424 = vpop.f32.mrb[0].mxu0
    %v4425 = vadd.f32 %v3658, %v4424
    %v4426 = vpop.f32.mrb[0].mxu0
    %4427 = vmatprep.mubr.f32.mxu0 0.0
    %4428 = vmatmul.mubr.f32.gmra.mrb[0].mxu0 %v3852
    %v4429 = vpop.f32.mrb[0].mxu0
    %v4430 = vadd.f32 %v3658, %v4429
    %v4431 = vpop.f32.mrb[0].mxu0
    %4432 = vmatprep.mubr.f32.mxu0 0.0
    %4433 = vmatmul.mubr.f32.gmra.mrb[0].mxu0 %v3855
    %v4434 = vpop.f32.mrb[0].mxu0
    %v4435 = vadd.f32 %v3658, %v4434
    %v4436 = vpop.f32.mrb[0].mxu0
    %4437 = vmatprep.mubr.f32.mxu0 0.0
    %4438 = vmatmul.mubr.f32.gmra.mrb[0].mxu0 %v3858
    %v4439 = vpop.f32.mrb[0].mxu0
    %v4440 = vadd.f32 %v3658, %v4439
    %v4441 = vpop.f32.mrb[0].mxu0
    %4442 = vmatprep.mubr.f32.mxu0 0.0
    %4443 = vmatmul.mubr.f32.gmra.mrb[0].mxu0 %v3861
    %v4444 = vpop.f32.mrb[0].mxu0
    %v4445 = vadd.f32 %v3658, %v4444
    %v4446 = vpop.f32.mrb[0].mxu0
    %4447 = vmatprep.mubr.f32.mxu0 0.0
    %4448 = vmatmul.mubr.f32.gmra.mrb[0].mxu0 %v3864
    %v4449 = vpop.f32.mrb[0].mxu0
    %v4450 = vadd.f32 %v3658, %v4449
    %v4451 = vpop.f32.mrb[0].mxu0
    %4452 = vmatprep.mubr.f32.mxu0 0.0
    %4453 = vmatmul.mubr.f32.gmra.mrb[0].mxu0 %v3867
    %v4454 = vpop.f32.mrb[0].mxu0
    %v4455 = vadd.f32 %v3658, %v4454
    %v4456 = vpop.f32.mrb[0].mxu0
    %4457 = vmatprep.mubr.f32.mxu0 0.0
    %4458 = vmatmul.mubr.f32.gmra.mrb[0].mxu0 %v3870
    %v4459 = vpop.f32.mrb[0].mxu0
    %v4460 = vadd.f32 %v3658, %v4459
    %v4461 = vpop.f32.mrb[0].mxu0
    %4462 = vmatprep.mubr.f32.mxu0 0.0
    %4463 = vmatmul.mubr.f32.gmra.mrb[0].mxu0 %v3873
    %v4464 = vpop.f32.mrb[0].mxu0
    %v4465 = vadd.f32 %v3658, %v4464
    %v4466 = vpop.f32.mrb[0].mxu0
    %4467 = vmatprep.mubr.f32.mxu0 0.0
    %4468 = vmatmul.mubr.f32.gmra.mrb[0].mxu0 %v3876
    %v4469 = vpop.f32.mrb[0].mxu0
    %v4470 = vadd.f32 %v3658, %v4469
    %v4471 = vpop.f32.mrb[0].mxu0
    %4472 = vmatprep.mubr.f32.mxu0 0.0
    %4473 = vmatmul.mubr.f32.gmra.mrb[0].mxu0 %v3879
    %v4474 = vpop.f32.mrb[0].mxu0
    %v4475 = vadd.f32 %v3658, %v4474
    %v4476 = vpop.f32.mrb[0].mxu0
    %4477 = vmatprep.mubr.f32.mxu0 0.0
    %4478 = vmatmul.mubr.f32.gmra.mrb[0].mxu0 %v3882
    %v4479 = vpop.f32.mrb[0].mxu0
    %v4480 = vadd.f32 %v3658, %v4479
    %v4481 = vpop.f32.mrb[0].mxu0
    %4482 = vmatprep.mubr.f32.mxu0 0.0
    %4483 = vmatmul.mubr.f32.gmra.mrb[0].mxu0 %v3885
    %v4484 = vpop.f32.mrb[0].mxu0
    %v4485 = vadd.f32 %v3658, %v4484
    %v4486 = vpop.f32.mrb[0].mxu0
    %4487 = vmatprep.mubr.f32.mxu0 0.0
    %4488 = vmatmul.mubr.f32.gmra.mrb[0].mxu0 %v3888
    %v4489 = vpop.f32.mrb[0].mxu0
    %v4490 = vadd.f32 %v3658, %v4489
    %v4491 = vpop.f32.mrb[0].mxu0
    %4492 = vmatprep.mubr.f32.mxu0 0.0
    %4493 = vmatmul.mubr.f32.gmra.mrb[0].mxu0 %v3891
    %v4494 = vpop.f32.mrb[0].mxu0
    %v4495 = vadd.f32 %v3658, %v4494
    %v4496 = vpop.f32.mrb[0].mxu0
    %4497 = vmatprep.mubr.f32.mxu0 0.0
    %4498 = vmatmul.mubr.f32.gmra.mrb[0].mxu0 %v3894
    %v4499 = vpop.f32.mrb[0].mxu0
    %v4500 = vadd.f32 %v3658, %v4499
    %v4501 = vpop.f32.mrb[0].mxu0
    %4502 = vmatprep.mubr.f32.mxu0 0.0
    %4503 = vmatmul.mubr.f32.gmra.mrb[0].mxu0 %v3897
    %v4504 = vpop.f32.mrb[0].mxu0
    %v4505 = vadd.f32 %v3658, %v4504
    %v4506 = vpop.f32.mrb[0].mxu0
    %4507 = vmatprep.mubr.f32.mxu0 0.0
    %4508 = vmatmul.mubr.f32.gmra.mrb[0].mxu0 %v3900
    %v4509 = vpop.f32.mrb[0].mxu0
    %v4510 = vadd.f32 %v3658, %v4509
    %v4511 = vpop.f32.mrb[0].mxu0
    %4512 = vmatprep.mubr.f32.mxu0 0.0
    %4513 = vmatmul.mubr.f32.gmra.mrb[0].mxu0 %v3903
    %v4514 = vpop.f32.mrb[0].mxu0
    %v4515 = vadd.f32 %v3658, %v4514
    %v4516 = vpop.f32.mrb[0].mxu0
    %4517 = vmatprep.mubr.f32.mxu0 0.0
    %4518 = vmatmul.mubr.f32.gmra.mrb[0].mxu0 %v3906
    %v4519 = vpop.f32.mrb[0].mxu0
    %v4520 = vadd.f32 %v3658, %v4519
    %v4521 = vpop.f32.mrb[0].mxu0
    %4522 = vmatprep.mubr.f32.mxu0 0.0
    %4523 = vmatmul.mubr.f32.gmra.mrb[0].mxu0 %v3909
    %v4524 = vpop.f32.mrb[0].mxu0
    %v4525 = vadd.f32 %v3658, %v4524
    %v4526 = vpop.f32.mrb[0].mxu0
    %4527 = vmatprep.mubr.f32.mxu0 0.0
    %4528 = vmatmul.mubr.f32.gmra.mrb[0].mxu0 %v3912
    %v4529 = vpop.f32.mrb[0].mxu0
    %v4530 = vadd.f32 %v3658, %v4529
    %v4531 = vpop.f32.mrb[0].mxu0
    %4532 = vmatprep.mubr.f32.mxu0 0.0
    %4533 = vmatmul.mubr.f32.gmra.mrb[0].mxu0 %v3915
    %v4534 = vpop.f32.mrb[0].mxu0
    %v4535 = vadd.f32 %v3658, %v4534
    %v4536 = vpop.f32.mrb[0].mxu0
    %4537 = vmatprep.mubr.f32.mxu0 0.0
    %4538 = vmatmul.mubr.f32.gmra.mrb[0].mxu0 %v3918
    %v4539 = vpop.f32.mrb[0].mxu0
    %v4540 = vadd.f32 %v3658, %v4539
    %v4541 = vpop.f32.mrb[0].mxu0
    %4542 = vmatprep.mubr.f32.mxu0 0.0
    %4543 = vmatmul.mubr.f32.gmra.mrb[0].mxu0 %v3921
    %v4544 = vpop.f32.mrb[0].mxu0
    %v4545 = vadd.f32 %v3658, %v4544
    %v4546 = vpop.f32.mrb[0].mxu0
    %4547 = vmatprep.mubr.f32.mxu0 0.0
    %4548 = vmatmul.mubr.f32.gmra.mrb[0].mxu0 %v3924
    %v4549 = vpop.f32.mrb[0].mxu0
    %v4550 = vadd.f32 %v3658, %v4549
    %v4551 = vpop.f32.mrb[0].mxu0
    %4552 = vmatprep.mubr.f32.mxu0 0.0
    %4553 = vmatmul.mubr.f32.gmra.mrb[0].mxu0 %v3927
    %v4554 = vpop.f32.mrb[0].mxu0
    %v4555 = vadd.f32 %v3658, %v4554
    %v4556 = vpop.f32.mrb[0].mxu0
    %4557 = vmatprep.mubr.f32.mxu0 0.0
    %4558 = vmatmul.mubr.f32.gmra.mrb[0].mxu0 %v3930
    %v4559 = vpop.f32.mrb[0].mxu0
    %v4560 = vadd.f32 %v3658, %v4559
    %v4561 = vpop.f32.mrb[0].mxu0
    %4562 = vmatprep.mubr.f32.mxu0 0.0
    %4563 = vmatmul.mubr.f32.gmra.mrb[0].mxu0 %v3933
    %v4564 = vpop.f32.mrb[0].mxu0
    %v4565 = vadd.f32 %v3658, %v4564
    %v4566 = vpop.f32.mrb[0].mxu0
    %4567 = vmatprep.mubr.f32.mxu0 0.0
    %4568 = vmatmul.mubr.f32.gmra.mrb[0].mxu0 %v3936
    %v4569 = vpop.f32.mrb[0].mxu0
    %v4570 = vadd.f32 %v3658, %v4569
    %v4571 = vpop.f32.mrb[0].mxu0
    %4572 = vmatprep.mubr.f32.mxu0 0.0
    %4573 = vmatmul.mubr.f32.gmra.mrb[0].mxu0 %v3939
    %v4574 = vpop.f32.mrb[0].mxu0
    %v4575 = vadd.f32 %v3658, %v4574
    %v4576 = vpop.f32.mrb[0].mxu0
    %4577 = vmatprep.mubr.f32.mxu0 0.0
    %4578 = vmatmul.mubr.f32.gmra.mrb[0].mxu0 %v3942
    %v4579 = vpop.f32.mrb[0].mxu0
    %v4580 = vadd.f32 %v3658, %v4579
    %v4581 = vpop.f32.mrb[0].mxu0
    %4582 = vmatprep.mubr.f32.mxu0 0.0
    %4583 = vmatmul.mubr.f32.gmra.mrb[0].mxu0 %v3945
    %v4584 = vpop.f32.mrb[0].mxu0
    %v4585 = vadd.f32 %v3658, %v4584
    %v4586 = vpop.f32.mrb[0].mxu0
    %4587 = vmatprep.mubr.f32.mxu0 0.0
    %4588 = vmatmul.mubr.f32.gmra.mrb[0].mxu0 %v3948
    %v4589 = vpop.f32.mrb[0].mxu0
    %v4590 = vadd.f32 %v3658, %v4589
    %v4591 = vpop.f32.mrb[0].mxu0
    %4592 = vmatprep.mubr.f32.mxu0 0.0
    %4593 = vmatmul.mubr.f32.gmra.mrb[0].mxu0 %v3951
    %v4594 = vpop.f32.mrb[0].mxu0
    %v4595 = vadd.f32 %v3658, %v4594
    %v4596 = vpop.f32.mrb[0].mxu0
    %4597 = vmatprep.mubr.f32.mxu0 0.0
    %4598 = vmatmul.mubr.f32.gmra.mrb[0].mxu0 %v3954
    %v4599 = vpop.f32.mrb[0].mxu0
    %v4600 = vadd.f32 %v3658, %v4599
    %v4601 = vpop.f32.mrb[0].mxu0
    %4602 = vmatprep.mubr.f32.mxu0 0.0
    %4603 = vmatmul.mubr.f32.gmra.mrb[0].mxu0 %v3957
    %v4604 = vpop.f32.mrb[0].mxu0
    %v4605 = vadd.f32 %v3658, %v4604
    %v4606 = vpop.f32.mrb[0].mxu0
    %4607 = vmatprep.mubr.f32.mxu0 0.0
    %4608 = vmatmul.mubr.f32.gmra.mrb[0].mxu0 %v3960
    %v4609 = vpop.f32.mrb[0].mxu0
    %v4610 = vadd.f32 %v3658, %v4609
    %v4611 = vpop.f32.mrb[0].mxu0
    %4612 = vmatprep.mubr.f32.mxu0 0.0
    %4613 = vmatmul.mubr.f32.gmra.mrb[0].mxu0 %v3963
    %v4614 = vpop.f32.mrb[0].mxu0
    %v4615 = vadd.f32 %v3658, %v4614
    %v4616 = vpop.f32.mrb[0].mxu0
    %4617 = vmatprep.mubr.f32.mxu0 0.0
    %4618 = vmatmul.mubr.f32.gmra.mrb[0].mxu0 %v3966
    %v4619 = vpop.f32.mrb[0].mxu0
    %v4620 = vadd.f32 %v3658, %v4619
    %v4621 = vpop.f32.mrb[0].mxu0
    %4622 = vmatprep.mubr.f32.mxu0 0.0
    %4623 = vmatmul.mubr.f32.gmra.mrb[0].mxu0 %v3969
    %v4624 = vpop.f32.mrb[0].mxu0
    %v4625 = vadd.f32 %v3658, %v4624
    %v4626 = vpop.f32.mrb[0].mxu0
    %4627 = vmatprep.mubr.f32.mxu0 0.0
    %4628 = vmatmul.mubr.f32.gmra.mrb[0].mxu0 %v3972
    %v4629 = vpop.f32.mrb[0].mxu0
    %v4630 = vadd.f32 %v3658, %v4629
    %v4631 = vpop.f32.mrb[0].mxu0
    %4632 = vmatprep.mubr.f32.mxu0 0.0
    %4633 = vmatmul.mubr.f32.gmra.mrb[0].mxu0 %v3975
    %v4634 = vpop.f32.mrb[0].mxu0
    %v4635 = vadd.f32 %v3658, %v4634
    %v4636 = vpop.f32.mrb[0].mxu0
    %4637 = vmatprep.mubr.f32.mxu0 0.0
    %4638 = vmatmul.mubr.f32.gmra.mrb[0].mxu0 %v3978
    %v4639 = vpop.f32.mrb[0].mxu0
    %v4640 = vadd.f32 %v3658, %v4639
    %v4641 = vpop.f32.mrb[0].mxu0
    %4642 = vmatprep.mubr.f32.mxu0 0.0
    %4643 = vmatmul.mubr.f32.gmra.mrb[0].mxu0 %v3981
    %v4644 = vpop.f32.mrb[0].mxu0
    %v4645 = vadd.f32 %v3658, %v4644
    %v4646 = vpop.f32.mrb[0].mxu0
    %4647 = vmatprep.mubr.f32.mxu0 0.0
    %4648 = vmatmul.mubr.f32.gmra.mrb[0].mxu0 %v3984
    %v4649 = vpop.f32.mrb[0].mxu0
    %v4650 = vadd.f32 %v3658, %v4649
    %v4651 = vpop.f32.mrb[0].mxu0
    %4652 = vmatprep.mubr.f32.mxu0 0.0
    %4653 = vmatmul.mubr.f32.gmra.mrb[0].mxu0 %v3987
    %v4654 = vpop.f32.mrb[0].mxu0
    %v4655 = vadd.f32 %v3658, %v4654
    %v4656 = vpop.f32.mrb[0].mxu0
    %4657 = vmatprep.mubr.f32.mxu0 0.0
    %4658 = vmatmul.mubr.f32.gmra.mrb[0].mxu0 %v3990
    %v4659 = vpop.f32.mrb[0].mxu0
    %v4660 = vadd.f32 %v3658, %v4659
    %v4661 = vpop.f32.mrb[0].mxu0
    %4662 = vmatprep.mubr.f32.mxu0 0.0
    %4663 = vmatmul.mubr.f32.gmra.mrb[0].mxu0 %v3993
    %v4664 = vpop.f32.mrb[0].mxu0
    %v4665 = vadd.f32 %v3658, %v4664
    %v4666 = vpop.f32.mrb[0].mxu0
    %4667 = vmatprep.mubr.f32.mxu0 0.0
    %4668 = vmatmul.mubr.f32.gmra.mrb[0].mxu0 %v3996
    %v4669 = vpop.f32.mrb[0].mxu0
    %v4670 = vadd.f32 %v3658, %v4669
    %v4671 = vpop.f32.mrb[0].mxu0
    %4672 = vmatprep.mubr.f32.mxu0 0.0
    %4673 = vmatmul.mubr.f32.gmra.mrb[0].mxu0 %v3999
    %v4674 = vpop.f32.mrb[0].mxu0
    %v4675 = vadd.f32 %v3658, %v4674
    %v4676 = vpop.f32.mrb[0].mxu0
    %4677 = vmatprep.mubr.f32.mxu0 0.0
    %4678 = vmatmul.mubr.f32.gmra.mrb[0].mxu0 %v4002
    %v4679 = vpop.f32.mrb[0].mxu0
    %v4680 = vadd.f32 %v3658, %v4679
    %v4681 = vpop.f32.mrb[0].mxu0
    %4682 = vmatprep.mubr.f32.mxu0 0.0
    %4683 = vmatmul.mubr.f32.gmra.mrb[0].mxu0 %v4005
    %v4684 = vpop.f32.mrb[0].mxu0
    %v4685 = vadd.f32 %v3658, %v4684
    %v4686 = vpop.f32.mrb[0].mxu0
    %4687 = vmatprep.mubr.f32.mxu0 0.0
    %4688 = vmatmul.mubr.f32.gmra.mrb[0].mxu0 %v4008
    %v4689 = vpop.f32.mrb[0].mxu0
    %v4690 = vadd.f32 %v3658, %v4689
    %v4691 = vpop.f32.mrb[0].mxu0
    %4692 = vmatprep.mubr.f32.mxu0 0.0
    %4693 = vmatmul.mubr.f32.gmra.mrb[0].mxu0 %v4011
    %v4694 = vpop.f32.mrb[0].mxu0
    %v4695 = vadd.f32 %v3658, %v4694
    %v4696 = vpop.f32.mrb[0].mxu0
    %4697 = vmatprep.mubr.f32.mxu0 0.0
    %4698 = vmatmul.mubr.f32.gmra.mrb[0].mxu0 %v4014
    %v4699 = vpop.f32.mrb[0].mxu0
    %v4700 = vadd.f32 %v3658, %v4699
    %v4701 = vpop.f32.mrb[0].mxu0
    %4702 = vmatprep.mubr.f32.mxu0 0.0
    %4703 = vmatmul.mubr.f32.gmra.mrb[0].mxu0 %v4017
    %v4704 = vpop.f32.mrb[0].mxu0
    %v4705 = vadd.f32 %v3658, %v4704
    %v4706 = vpop.f32.mrb[0].mxu0
    %4707 = vmatprep.mubr.f32.mxu0 0.0
    %4708 = vmatmul.mubr.f32.gmra.mrb[0].mxu0 %v4020
    %v4709 = vpop.f32.mrb[0].mxu0
    %v4710 = vadd.f32 %v3658, %v4709
    %v4711 = vpop.f32.mrb[0].mxu0
    %4712 = vmatprep.mubr.f32.mxu0 0.0
    %4713 = vmatmul.mubr.f32.gmra.mrb[0].mxu0 %v4023
    %v4714 = vpop.f32.mrb[0].mxu0
    %v4715 = vadd.f32 %v3658, %v4714
    %v4716 = vpop.f32.mrb[0].mxu0
    %4717 = vmatprep.mubr.f32.mxu0 0.0
    %4718 = vmatmul.mubr.f32.gmra.mrb[0].mxu0 %v4026
    %v4719 = vpop.f32.mrb[0].mxu0
    %v4720 = vadd.f32 %v3658, %v4719
    %v4721 = vpop.f32.mrb[0].mxu0
    %4722 = vmatprep.mubr.f32.mxu0 0.0
    %4723 = vmatmul.mubr.f32.gmra.mrb[0].mxu0 %v4029
    %v4724 = vpop.f32.mrb[0].mxu0
    %v4725 = vadd.f32 %v3658, %v4724
    %v4726 = vpop.f32.mrb[0].mxu0
    %4727 = vmatprep.mubr.f32.mxu0 0.0
    %4728 = vmatmul.mubr.f32.gmra.mrb[0].mxu0 %v4032
    %v4729 = vpop.f32.mrb[0].mxu0
    %v4730 = vadd.f32 %v3658, %v4729
    %v4731 = vpop.f32.mrb[0].mxu0
    %4732 = vmatprep.mubr.f32.mxu0 0.0
    %4733 = vmatmul.mubr.f32.gmra.mrb[0].mxu0 %v4035
    %v4734 = vpop.f32.mrb[0].mxu0
    %v4735 = vadd.f32 %v3658, %v4734
    %v4736 = vpop.f32.mrb[0].mxu0
    %4737 = vmatprep.mubr.f32.mxu0 0.0
    %4738 = vmatmul.mubr.f32.gmra.mrb[0].mxu0 %v4038
    %v4739 = vpop.f32.mrb[0].mxu0
    %v4740 = vadd.f32 %v3658, %v4739
    %v4741 = vpop.f32.mrb[0].mxu0
    %4742 = vmatprep.mubr.f32.mxu0 0.0
    %4743 = vmatmul.mubr.f32.gmra.mrb[0].mxu0 %v4041
    %v4744 = vpop.f32.mrb[0].mxu0
    %v4745 = vadd.f32 %v3658, %v4744
    %v4746 = vpop.f32.mrb[0].mxu0
    %4747 = vdwg.mxu0
    %v4748 = vlaneseq
    %v4749 = vshrl.u32 %v4748, 7
    %v4750 = vadd.s32 %v4749, 8
    %v4751 = vadd.s32 %v4749, 16
    %v4752 = vadd.s32 %v4749, 24
    %v4753 = vadd.s32 %v4749, 32
    %v4754 = vadd.s32 %v4749, 40
    %v4755 = vadd.s32 %v4749, 48
    %v4756 = vadd.s32 %v4749, 56
    %v4757 = vadd.s32 %v4749, 64
    %v4758 = vadd.s32 %v4749, 72
    %v4759 = vadd.s32 %v4749, 80
    %v4760 = vadd.s32 %v4749, 88
    %v4761 = vadd.s32 %v4749, 96
    %v4762 = vadd.s32 %v4749, 104
    %v4763 = vadd.s32 %v4749, 112
    %v4764 = vadd.s32 %v4749, 120
    %v4765 = vadd.s32 %v4749, 128
    %v4766 = vadd.s32 %v4749, 136
    %v4767 = vadd.s32 %v4749, 144
    %v4768 = vadd.s32 %v4749, 152
    %v4769 = vadd.s32 %v4749, 160
    %v4770 = vadd.s32 %v4749, 168
    %v4771 = vadd.s32 %v4749, 176
    %v4772 = vadd.s32 %v4749, 184
    %v4773 = vadd.s32 %v4749, 192
    %v4774 = vadd.s32 %v4749, 200
    %v4775 = vadd.s32 %v4749, 208
    %v4776 = vadd.s32 %v4749, 216
    %v4777 = vadd.s32 %v4749, 224
    %v4778 = vadd.s32 %v4749, 232
    %v4779 = vadd.s32 %v4749, 240
    %v4780 = vadd.s32 %v4749, 248
    %v4781 = vadd.s32 %v4749, 256
    %v4782 = vadd.s32 %v4749, 264
    %v4783 = vadd.s32 %v4749, 272
    %v4784 = vadd.s32 %v4749, 280
    %v4785 = vadd.s32 %v4749, 288
    %v4786 = vadd.s32 %v4749, 296
    %v4787 = vadd.s32 %v4749, 304
    %v4788 = vadd.s32 %v4749, 312
    %v4789 = vadd.s32 %v4749, 320
    %v4790 = vadd.s32 %v4749, 328
    %v4791 = vadd.s32 %v4749, 336
    %v4792 = vadd.s32 %v4749, 344
    %v4793 = vadd.s32 %v4749, 352
    %v4794 = vadd.s32 %v4749, 360
    %v4795 = vadd.s32 %v4749, 368
    %v4796 = vadd.s32 %v4749, 376
    %v4797 = vadd.s32 %v4749, 384
    %v4798 = vadd.s32 %v4749, 392
    %v4799 = vadd.s32 %v4749, 400
    %v4800 = vadd.s32 %v4749, 408
    %v4801 = vadd.s32 %v4749, 416
    %v4802 = vadd.s32 %v4749, 424
    %v4803 = vadd.s32 %v4749, 432
    %v4804 = vadd.s32 %v4749, 440
    %v4805 = vadd.s32 %v4749, 448
    %v4806 = vadd.s32 %v4749, 456
    %v4807 = vadd.s32 %v4749, 464
    %v4808 = vadd.s32 %v4749, 472
    %v4809 = vadd.s32 %v4749, 480
    %v4810 = vadd.s32 %v4749, 488
    %v4811 = vadd.s32 %v4749, 496
    %v4812 = vadd.s32 %v4749, 504
    %v4813 = vadd.s32 %v4749, 512
    %v4814 = vadd.s32 %v4749, 520
    %v4815 = vadd.s32 %v4749, 528
    %v4816 = vadd.s32 %v4749, 536
    %v4817 = vadd.s32 %v4749, 544
    %v4818 = vadd.s32 %v4749, 552
    %v4819 = vadd.s32 %v4749, 560
    %v4820 = vadd.s32 %v4749, 568
    %v4821 = vadd.s32 %v4749, 576
    %v4822 = vadd.s32 %v4749, 584
    %v4823 = vadd.s32 %v4749, 592
    %v4824 = vadd.s32 %v4749, 600
    %v4825 = vadd.s32 %v4749, 608
    %v4826 = vadd.s32 %v4749, 616
    %v4827 = vadd.s32 %v4749, 624
    %v4828 = vadd.s32 %v4749, 632
    %v4829 = vadd.s32 %v4749, 640
    %v4830 = vadd.s32 %v4749, 648
    %v4831 = vadd.s32 %v4749, 656
    %v4832 = vadd.s32 %v4749, 664
    %v4833 = vadd.s32 %v4749, 672
    %v4834 = vadd.s32 %v4749, 680
    %v4835 = vadd.s32 %v4749, 688
    %v4836 = vadd.s32 %v4749, 696
    %v4837 = vadd.s32 %v4749, 704
    %v4838 = vadd.s32 %v4749, 712
    %v4839 = vadd.s32 %v4749, 720
    %v4840 = vadd.s32 %v4749, 728
    %v4841 = vadd.s32 %v4749, 736
    %v4842 = vadd.s32 %v4749, 744
    %v4843 = vadd.s32 %v4749, 752
    %v4844 = vadd.s32 %v4749, 760
    %v4845 = vadd.s32 %v4749, 768
    %v4846 = vadd.s32 %v4749, 776
    %v4847 = vadd.s32 %v4749, 784
    %v4848 = vadd.s32 %v4749, 792
    %v4849 = vadd.s32 %v4749, 800
    %v4850 = vadd.s32 %v4749, 808
    %v4851 = vadd.s32 %v4749, 816
    %v4852 = vadd.s32 %v4749, 824
    %v4853 = vadd.s32 %v4749, 832
    %v4854 = vadd.s32 %v4749, 840
    %v4855 = vadd.s32 %v4749, 848
    %v4856 = vadd.s32 %v4749, 856
    %v4857 = vadd.s32 %v4749, 864
    %v4858 = vadd.s32 %v4749, 872
    %v4859 = vadd.s32 %v4749, 880
    %v4860 = vadd.s32 %v4749, 888
    %v4861 = vadd.s32 %v4749, 896
    %v4862 = vadd.s32 %v4749, 904
    %v4863 = vadd.s32 %v4749, 912
    %v4864 = vadd.s32 %v4749, 920
    %v4865 = vadd.s32 %v4749, 928
    %v4866 = vadd.s32 %v4749, 936
    %v4867 = vadd.s32 %v4749, 944
    %v4868 = vadd.s32 %v4749, 952
    %v4869 = vadd.s32 %v4749, 960
    %v4870 = vadd.s32 %v4749, 968
    %v4871 = vadd.s32 %v4749, 976
    %v4872 = vadd.s32 %v4749, 984
    %v4873 = vadd.s32 %v4749, 992
    %v4874 = vadd.s32 %v4749, 1000
    %v4875 = vadd.s32 %v4749, 1008
    %v4876 = vadd.s32 %v4749, 1016
    %v4877 = vand.u32 %v4749, 7
    %v4878 = vand.u32 %v4750, 7
    %v4879 = vand.u32 %v4751, 7
    %v4880 = vand.u32 %v4752, 7
    %v4881 = vand.u32 %v4753, 7
    %v4882 = vand.u32 %v4754, 7
    %v4883 = vand.u32 %v4755, 7
    %v4884 = vand.u32 %v4756, 7
    %v4885 = vand.u32 %v4757, 7
    %v4886 = vand.u32 %v4758, 7
    %v4887 = vand.u32 %v4759, 7
    %v4888 = vand.u32 %v4760, 7
    %v4889 = vand.u32 %v4761, 7
    %v4890 = vand.u32 %v4762, 7
    %v4891 = vand.u32 %v4763, 7
    %v4892 = vand.u32 %v4764, 7
    %v4893 = vand.u32 %v4765, 7
    %v4894 = vand.u32 %v4766, 7
    %v4895 = vand.u32 %v4767, 7
    %v4896 = vand.u32 %v4768, 7
    %v4897 = vand.u32 %v4769, 7
    %v4898 = vand.u32 %v4770, 7
    %v4899 = vand.u32 %v4771, 7
    %v4900 = vand.u32 %v4772, 7
    %v4901 = vand.u32 %v4773, 7
    %v4902 = vand.u32 %v4774, 7
    %v4903 = vand.u32 %v4775, 7
    %v4904 = vand.u32 %v4776, 7
    %v4905 = vand.u32 %v4777, 7
    %v4906 = vand.u32 %v4778, 7
    %v4907 = vand.u32 %v4779, 7
    %v4908 = vand.u32 %v4780, 7
    %v4909 = vand.u32 %v4781, 7
    %v4910 = vand.u32 %v4782, 7
    %v4911 = vand.u32 %v4783, 7
    %v4912 = vand.u32 %v4784, 7
    %v4913 = vand.u32 %v4785, 7
    %v4914 = vand.u32 %v4786, 7
    %v4915 = vand.u32 %v4787, 7
    %v4916 = vand.u32 %v4788, 7
    %v4917 = vand.u32 %v4789, 7
    %v4918 = vand.u32 %v4790, 7
    %v4919 = vand.u32 %v4791, 7
    %v4920 = vand.u32 %v4792, 7
    %v4921 = vand.u32 %v4793, 7
    %v4922 = vand.u32 %v4794, 7
    %v4923 = vand.u32 %v4795, 7
    %v4924 = vand.u32 %v4796, 7
    %v4925 = vand.u32 %v4797, 7
    %v4926 = vand.u32 %v4798, 7
    %v4927 = vand.u32 %v4799, 7
    %v4928 = vand.u32 %v4800, 7
    %v4929 = vand.u32 %v4801, 7
    %v4930 = vand.u32 %v4802, 7
    %v4931 = vand.u32 %v4803, 7
    %v4932 = vand.u32 %v4804, 7
    %v4933 = vand.u32 %v4805, 7
    %v4934 = vand.u32 %v4806, 7
    %v4935 = vand.u32 %v4807, 7
    %v4936 = vand.u32 %v4808, 7
    %v4937 = vand.u32 %v4809, 7
    %v4938 = vand.u32 %v4810, 7
    %v4939 = vand.u32 %v4811, 7
    %v4940 = vand.u32 %v4812, 7
    %v4941 = vand.u32 %v4813, 7
    %v4942 = vand.u32 %v4814, 7
    %v4943 = vand.u32 %v4815, 7
    %v4944 = vand.u32 %v4816, 7
    %v4945 = vand.u32 %v4817, 7
    %v4946 = vand.u32 %v4818, 7
    %v4947 = vand.u32 %v4819, 7
    %v4948 = vand.u32 %v4820, 7
    %v4949 = vand.u32 %v4821, 7
    %v4950 = vand.u32 %v4822, 7
    %v4951 = vand.u32 %v4823, 7
    %v4952 = vand.u32 %v4824, 7
    %v4953 = vand.u32 %v4825, 7
    %v4954 = vand.u32 %v4826, 7
    %v4955 = vand.u32 %v4827, 7
    %v4956 = vand.u32 %v4828, 7
    %v4957 = vand.u32 %v4829, 7
    %v4958 = vand.u32 %v4830, 7
    %v4959 = vand.u32 %v4831, 7
    %v4960 = vand.u32 %v4832, 7
    %v4961 = vand.u32 %v4833, 7
    %v4962 = vand.u32 %v4834, 7
    %v4963 = vand.u32 %v4835, 7
    %v4964 = vand.u32 %v4836, 7
    %v4965 = vand.u32 %v4837, 7
    %v4966 = vand.u32 %v4838, 7
    %v4967 = vand.u32 %v4839, 7
    %v4968 = vand.u32 %v4840, 7
    %v4969 = vand.u32 %v4841, 7
    %v4970 = vand.u32 %v4842, 7
    %v4971 = vand.u32 %v4843, 7
    %v4972 = vand.u32 %v4844, 7
    %v4973 = vand.u32 %v4845, 7
    %v4974 = vand.u32 %v4846, 7
    %v4975 = vand.u32 %v4847, 7
    %v4976 = vand.u32 %v4848, 7
    %v4977 = vand.u32 %v4849, 7
    %v4978 = vand.u32 %v4850, 7
    %v4979 = vand.u32 %v4851, 7
    %v4980 = vand.u32 %v4852, 7
    %v4981 = vand.u32 %v4853, 7
    %v4982 = vand.u32 %v4854, 7
    %v4983 = vand.u32 %v4855, 7
    %v4984 = vand.u32 %v4856, 7
    %v4985 = vand.u32 %v4857, 7
    %v4986 = vand.u32 %v4858, 7
    %v4987 = vand.u32 %v4859, 7
    %v4988 = vand.u32 %v4860, 7
    %v4989 = vand.u32 %v4861, 7
    %v4990 = vand.u32 %v4862, 7
    %v4991 = vand.u32 %v4863, 7
    %v4992 = vand.u32 %v4864, 7
    %v4993 = vand.u32 %v4865, 7
    %v4994 = vand.u32 %v4866, 7
    %v4995 = vand.u32 %v4867, 7
    %v4996 = vand.u32 %v4868, 7
    %v4997 = vand.u32 %v4869, 7
    %v4998 = vand.u32 %v4870, 7
    %v4999 = vand.u32 %v4871, 7
    %v5000 = vand.u32 %v4872, 7
    %v5001 = vand.u32 %v4873, 7
    %v5002 = vand.u32 %v4874, 7
    %v5003 = vand.u32 %v4875, 7
    %v5004 = vand.u32 %v4876, 7
    %vm5005 = vcmp.lt.s32.totalorder %v4877, 4
    %vm5006 = vcmp.lt.s32.totalorder %v4878, 4
    %vm5007 = vcmp.lt.s32.totalorder %v4879, 4
    %vm5008 = vcmp.lt.s32.totalorder %v4880, 4
    %vm5009 = vcmp.lt.s32.totalorder %v4881, 4
    %vm5010 = vcmp.lt.s32.totalorder %v4882, 4
    %vm5011 = vcmp.lt.s32.totalorder %v4883, 4
    %vm5012 = vcmp.lt.s32.totalorder %v4884, 4
    %vm5013 = vcmp.lt.s32.totalorder %v4885, 4
    %vm5014 = vcmp.lt.s32.totalorder %v4886, 4
    %vm5015 = vcmp.lt.s32.totalorder %v4887, 4
    %vm5016 = vcmp.lt.s32.totalorder %v4888, 4
    %vm5017 = vcmp.lt.s32.totalorder %v4889, 4
    %vm5018 = vcmp.lt.s32.totalorder %v4890, 4
    %vm5019 = vcmp.lt.s32.totalorder %v4891, 4
    %vm5020 = vcmp.lt.s32.totalorder %v4892, 4
    %vm5021 = vcmp.lt.s32.totalorder %v4893, 4
    %vm5022 = vcmp.lt.s32.totalorder %v4894, 4
    %vm5023 = vcmp.lt.s32.totalorder %v4895, 4
    %vm5024 = vcmp.lt.s32.totalorder %v4896, 4
    %vm5025 = vcmp.lt.s32.totalorder %v4897, 4
    %vm5026 = vcmp.lt.s32.totalorder %v4898, 4
    %vm5027 = vcmp.lt.s32.totalorder %v4899, 4
    %vm5028 = vcmp.lt.s32.totalorder %v4900, 4
    %vm5029 = vcmp.lt.s32.totalorder %v4901, 4
    %vm5030 = vcmp.lt.s32.totalorder %v4902, 4
    %vm5031 = vcmp.lt.s32.totalorder %v4903, 4
    %vm5032 = vcmp.lt.s32.totalorder %v4904, 4
    %vm5033 = vcmp.lt.s32.totalorder %v4905, 4
    %vm5034 = vcmp.lt.s32.totalorder %v4906, 4
    %vm5035 = vcmp.lt.s32.totalorder %v4907, 4
    %vm5036 = vcmp.lt.s32.totalorder %v4908, 4
    %vm5037 = vcmp.lt.s32.totalorder %v4909, 4
    %vm5038 = vcmp.lt.s32.totalorder %v4910, 4
    %vm5039 = vcmp.lt.s32.totalorder %v4911, 4
    %vm5040 = vcmp.lt.s32.totalorder %v4912, 4
    %vm5041 = vcmp.lt.s32.totalorder %v4913, 4
    %vm5042 = vcmp.lt.s32.totalorder %v4914, 4
    %vm5043 = vcmp.lt.s32.totalorder %v4915, 4
    %vm5044 = vcmp.lt.s32.totalorder %v4916, 4
    %vm5045 = vcmp.lt.s32.totalorder %v4917, 4
    %vm5046 = vcmp.lt.s32.totalorder %v4918, 4
    %vm5047 = vcmp.lt.s32.totalorder %v4919, 4
    %vm5048 = vcmp.lt.s32.totalorder %v4920, 4
    %vm5049 = vcmp.lt.s32.totalorder %v4921, 4
    %vm5050 = vcmp.lt.s32.totalorder %v4922, 4
    %vm5051 = vcmp.lt.s32.totalorder %v4923, 4
    %vm5052 = vcmp.lt.s32.totalorder %v4924, 4
    %vm5053 = vcmp.lt.s32.totalorder %v4925, 4
    %vm5054 = vcmp.lt.s32.totalorder %v4926, 4
    %vm5055 = vcmp.lt.s32.totalorder %v4927, 4
    %vm5056 = vcmp.lt.s32.totalorder %v4928, 4
    %vm5057 = vcmp.lt.s32.totalorder %v4929, 4
    %vm5058 = vcmp.lt.s32.totalorder %v4930, 4
    %vm5059 = vcmp.lt.s32.totalorder %v4931, 4
    %vm5060 = vcmp.lt.s32.totalorder %v4932, 4
    %vm5061 = vcmp.lt.s32.totalorder %v4933, 4
    %vm5062 = vcmp.lt.s32.totalorder %v4934, 4
    %vm5063 = vcmp.lt.s32.totalorder %v4935, 4
    %vm5064 = vcmp.lt.s32.totalorder %v4936, 4
    %vm5065 = vcmp.lt.s32.totalorder %v4937, 4
    %vm5066 = vcmp.lt.s32.totalorder %v4938, 4
    %vm5067 = vcmp.lt.s32.totalorder %v4939, 4
    %vm5068 = vcmp.lt.s32.totalorder %v4940, 4
    %vm5069 = vcmp.lt.s32.totalorder %v4941, 4
    %vm5070 = vcmp.lt.s32.totalorder %v4942, 4
    %vm5071 = vcmp.lt.s32.totalorder %v4943, 4
    %vm5072 = vcmp.lt.s32.totalorder %v4944, 4
    %vm5073 = vcmp.lt.s32.totalorder %v4945, 4
    %vm5074 = vcmp.lt.s32.totalorder %v4946, 4
    %vm5075 = vcmp.lt.s32.totalorder %v4947, 4
    %vm5076 = vcmp.lt.s32.totalorder %v4948, 4
    %vm5077 = vcmp.lt.s32.totalorder %v4949, 4
    %vm5078 = vcmp.lt.s32.totalorder %v4950, 4
    %vm5079 = vcmp.lt.s32.totalorder %v4951, 4
    %vm5080 = vcmp.lt.s32.totalorder %v4952, 4
    %vm5081 = vcmp.lt.s32.totalorder %v4953, 4
    %vm5082 = vcmp.lt.s32.totalorder %v4954, 4
    %vm5083 = vcmp.lt.s32.totalorder %v4955, 4
    %vm5084 = vcmp.lt.s32.totalorder %v4956, 4
    %vm5085 = vcmp.lt.s32.totalorder %v4957, 4
    %vm5086 = vcmp.lt.s32.totalorder %v4958, 4
    %vm5087 = vcmp.lt.s32.totalorder %v4959, 4
    %vm5088 = vcmp.lt.s32.totalorder %v4960, 4
    %vm5089 = vcmp.lt.s32.totalorder %v4961, 4
    %vm5090 = vcmp.lt.s32.totalorder %v4962, 4
    %vm5091 = vcmp.lt.s32.totalorder %v4963, 4
    %vm5092 = vcmp.lt.s32.totalorder %v4964, 4
    %vm5093 = vcmp.lt.s32.totalorder %v4965, 4
    %vm5094 = vcmp.lt.s32.totalorder %v4966, 4
    %vm5095 = vcmp.lt.s32.totalorder %v4967, 4
    %vm5096 = vcmp.lt.s32.totalorder %v4968, 4
    %vm5097 = vcmp.lt.s32.totalorder %v4969, 4
    %vm5098 = vcmp.lt.s32.totalorder %v4970, 4
    %vm5099 = vcmp.lt.s32.totalorder %v4971, 4
    %vm5100 = vcmp.lt.s32.totalorder %v4972, 4
    %vm5101 = vcmp.lt.s32.totalorder %v4973, 4
    %vm5102 = vcmp.lt.s32.totalorder %v4974, 4
    %vm5103 = vcmp.lt.s32.totalorder %v4975, 4
    %vm5104 = vcmp.lt.s32.totalorder %v4976, 4
    %vm5105 = vcmp.lt.s32.totalorder %v4977, 4
    %vm5106 = vcmp.lt.s32.totalorder %v4978, 4
    %vm5107 = vcmp.lt.s32.totalorder %v4979, 4
    %vm5108 = vcmp.lt.s32.totalorder %v4980, 4
    %vm5109 = vcmp.lt.s32.totalorder %v4981, 4
    %vm5110 = vcmp.lt.s32.totalorder %v4982, 4
    %vm5111 = vcmp.lt.s32.totalorder %v4983, 4
    %vm5112 = vcmp.lt.s32.totalorder %v4984, 4
    %vm5113 = vcmp.lt.s32.totalorder %v4985, 4
    %vm5114 = vcmp.lt.s32.totalorder %v4986, 4
    %vm5115 = vcmp.lt.s32.totalorder %v4987, 4
    %vm5116 = vcmp.lt.s32.totalorder %v4988, 4
    %vm5117 = vcmp.lt.s32.totalorder %v4989, 4
    %vm5118 = vcmp.lt.s32.totalorder %v4990, 4
    %vm5119 = vcmp.lt.s32.totalorder %v4991, 4
    %vm5120 = vcmp.lt.s32.totalorder %v4992, 4
    %vm5121 = vcmp.lt.s32.totalorder %v4993, 4
    %vm5122 = vcmp.lt.s32.totalorder %v4994, 4
    %vm5123 = vcmp.lt.s32.totalorder %v4995, 4
    %vm5124 = vcmp.lt.s32.totalorder %v4996, 4
    %vm5125 = vcmp.lt.s32.totalorder %v4997, 4
    %vm5126 = vcmp.lt.s32.totalorder %v4998, 4
    %vm5127 = vcmp.lt.s32.totalorder %v4999, 4
    %vm5128 = vcmp.lt.s32.totalorder %v5000, 4
    %vm5129 = vcmp.lt.s32.totalorder %v5001, 4
    %vm5130 = vcmp.lt.s32.totalorder %v5002, 4
    %vm5131 = vcmp.lt.s32.totalorder %v5003, 4
    %vm5132 = vcmp.lt.s32.totalorder %v5004, 4
    %5261 = vrot.lane.b32.xlu0 %v4110, 96
    %v5262 = vpop.permute.xlu0 %5261
    %5263 = vrot.lane.b32.xlu0 %v4115, 96
    %v5264 = vpop.permute.xlu0 %5263
    %5265 = vrot.lane.b32.xlu0 %v4120, 96
    %v5266 = vpop.permute.xlu0 %5265
    %5267 = vrot.lane.b32.xlu0 %v4125, 96
    %v5268 = vpop.permute.xlu0 %5267
    %5269 = vrot.lane.b32.xlu0 %v4130, 96
    %v5270 = vpop.permute.xlu0 %5269
    %5271 = vrot.lane.b32.xlu0 %v4135, 96
    %v5272 = vpop.permute.xlu0 %5271
    %5273 = vrot.lane.b32.xlu0 %v4140, 96
    %v5274 = vpop.permute.xlu0 %5273
    %5275 = vrot.lane.b32.xlu0 %v4145, 96
    %v5276 = vpop.permute.xlu0 %5275
    %5277 = vrot.lane.b32.xlu0 %v4150, 96
    %v5278 = vpop.permute.xlu0 %5277
    %5279 = vrot.lane.b32.xlu0 %v4155, 96
    %v5280 = vpop.permute.xlu0 %5279
    %5281 = vrot.lane.b32.xlu0 %v4160, 96
    %v5282 = vpop.permute.xlu0 %5281
    %5283 = vrot.lane.b32.xlu0 %v4165, 96
    %v5284 = vpop.permute.xlu0 %5283
    %5285 = vrot.lane.b32.xlu0 %v4170, 96
    %v5286 = vpop.permute.xlu0 %5285
    %5287 = vrot.lane.b32.xlu0 %v4175, 96
    %v5288 = vpop.permute.xlu0 %5287
    %5289 = vrot.lane.b32.xlu0 %v4180, 96
    %v5290 = vpop.permute.xlu0 %5289
    %5291 = vrot.lane.b32.xlu0 %v4185, 96
    %v5292 = vpop.permute.xlu0 %5291
    %5293 = vrot.lane.b32.xlu0 %v4190, 96
    %v5294 = vpop.permute.xlu0 %5293
    %5295 = vrot.lane.b32.xlu0 %v4195, 96
    %v5296 = vpop.permute.xlu0 %5295
    %5297 = vrot.lane.b32.xlu0 %v4200, 96
    %v5298 = vpop.permute.xlu0 %5297
    %5299 = vrot.lane.b32.xlu0 %v4205, 96
    %v5300 = vpop.permute.xlu0 %5299
    %5301 = vrot.lane.b32.xlu0 %v4210, 96
    %v5302 = vpop.permute.xlu0 %5301
    %5303 = vrot.lane.b32.xlu0 %v4215, 96
    %v5304 = vpop.permute.xlu0 %5303
    %5305 = vrot.lane.b32.xlu0 %v4220, 96
    %v5306 = vpop.permute.xlu0 %5305
    %5307 = vrot.lane.b32.xlu0 %v4225, 96
    %v5308 = vpop.permute.xlu0 %5307
    %5309 = vrot.lane.b32.xlu0 %v4230, 96
    %v5310 = vpop.permute.xlu0 %5309
    %5311 = vrot.lane.b32.xlu0 %v4235, 96
    %v5312 = vpop.permute.xlu0 %5311
    %5313 = vrot.lane.b32.xlu0 %v4240, 96
    %v5314 = vpop.permute.xlu0 %5313
    %5315 = vrot.lane.b32.xlu0 %v4245, 96
    %v5316 = vpop.permute.xlu0 %5315
    %5317 = vrot.lane.b32.xlu0 %v4250, 96
    %v5318 = vpop.permute.xlu0 %5317
    %5319 = vrot.lane.b32.xlu0 %v4255, 96
    %v5320 = vpop.permute.xlu0 %5319
    %5321 = vrot.lane.b32.xlu0 %v4260, 96
    %v5322 = vpop.permute.xlu0 %5321
    %5323 = vrot.lane.b32.xlu0 %v4265, 96
    %v5324 = vpop.permute.xlu0 %5323
    %5325 = vrot.lane.b32.xlu0 %v4270, 96
    %v5326 = vpop.permute.xlu0 %5325
    %5327 = vrot.lane.b32.xlu0 %v4275, 96
    %v5328 = vpop.permute.xlu0 %5327
    %5329 = vrot.lane.b32.xlu0 %v4280, 96
    %v5330 = vpop.permute.xlu0 %5329
    %5331 = vrot.lane.b32.xlu0 %v4285, 96
    %v5332 = vpop.permute.xlu0 %5331
    %5333 = vrot.lane.b32.xlu0 %v4290, 96
    %v5334 = vpop.permute.xlu0 %5333
    %5335 = vrot.lane.b32.xlu0 %v4295, 96
    %v5336 = vpop.permute.xlu0 %5335
    %5337 = vrot.lane.b32.xlu0 %v4300, 96
    %v5338 = vpop.permute.xlu0 %5337
    %5339 = vrot.lane.b32.xlu0 %v4305, 96
    %v5340 = vpop.permute.xlu0 %5339
    %5341 = vrot.lane.b32.xlu0 %v4310, 96
    %v5342 = vpop.permute.xlu0 %5341
    %5343 = vrot.lane.b32.xlu0 %v4315, 96
    %v5344 = vpop.permute.xlu0 %5343
    %5345 = vrot.lane.b32.xlu0 %v4320, 96
    %v5346 = vpop.permute.xlu0 %5345
    %5347 = vrot.lane.b32.xlu0 %v4325, 96
    %v5348 = vpop.permute.xlu0 %5347
    %5349 = vrot.lane.b32.xlu0 %v4330, 96
    %v5350 = vpop.permute.xlu0 %5349
    %5351 = vrot.lane.b32.xlu0 %v4335, 96
    %v5352 = vpop.permute.xlu0 %5351
    %5353 = vrot.lane.b32.xlu0 %v4340, 96
    %v5354 = vpop.permute.xlu0 %5353
    %5355 = vrot.lane.b32.xlu0 %v4345, 96
    %v5356 = vpop.permute.xlu0 %5355
    %5357 = vrot.lane.b32.xlu0 %v4350, 96
    %v5358 = vpop.permute.xlu0 %5357
    %5359 = vrot.lane.b32.xlu0 %v4355, 96
    %v5360 = vpop.permute.xlu0 %5359
    %5361 = vrot.lane.b32.xlu0 %v4360, 96
    %v5362 = vpop.permute.xlu0 %5361
    %5363 = vrot.lane.b32.xlu0 %v4365, 96
    %v5364 = vpop.permute.xlu0 %5363
    %5365 = vrot.lane.b32.xlu0 %v4370, 96
    %v5366 = vpop.permute.xlu0 %5365
    %5367 = vrot.lane.b32.xlu0 %v4375, 96
    %v5368 = vpop.permute.xlu0 %5367
    %5369 = vrot.lane.b32.xlu0 %v4380, 96
    %v5370 = vpop.permute.xlu0 %5369
    %5371 = vrot.lane.b32.xlu0 %v4385, 96
    %v5372 = vpop.permute.xlu0 %5371
    %5373 = vrot.lane.b32.xlu0 %v4390, 96
    %v5374 = vpop.permute.xlu0 %5373
    %5375 = vrot.lane.b32.xlu0 %v4395, 96
    %v5376 = vpop.permute.xlu0 %5375
    %5377 = vrot.lane.b32.xlu0 %v4400, 96
    %v5378 = vpop.permute.xlu0 %5377
    %5379 = vrot.lane.b32.xlu0 %v4405, 96
    %v5380 = vpop.permute.xlu0 %5379
    %5381 = vrot.lane.b32.xlu0 %v4410, 96
    %v5382 = vpop.permute.xlu0 %5381
    %5383 = vrot.lane.b32.xlu0 %v4415, 96
    %v5384 = vpop.permute.xlu0 %5383
    %5385 = vrot.lane.b32.xlu0 %v4420, 96
    %v5386 = vpop.permute.xlu0 %5385
    %5387 = vrot.lane.b32.xlu0 %v4425, 96
    %v5388 = vpop.permute.xlu0 %5387
    %5389 = vrot.lane.b32.xlu0 %v4430, 96
    %v5390 = vpop.permute.xlu0 %5389
    %5391 = vrot.lane.b32.xlu0 %v4435, 96
    %v5392 = vpop.permute.xlu0 %5391
    %5393 = vrot.lane.b32.xlu0 %v4440, 96
    %v5394 = vpop.permute.xlu0 %5393
    %5395 = vrot.lane.b32.xlu0 %v4445, 96
    %v5396 = vpop.permute.xlu0 %5395
    %5397 = vrot.lane.b32.xlu0 %v4450, 96
    %v5398 = vpop.permute.xlu0 %5397
    %5399 = vrot.lane.b32.xlu0 %v4455, 96
    %v5400 = vpop.permute.xlu0 %5399
    %5401 = vrot.lane.b32.xlu0 %v4460, 96
    %v5402 = vpop.permute.xlu0 %5401
    %5403 = vrot.lane.b32.xlu0 %v4465, 96
    %v5404 = vpop.permute.xlu0 %5403
    %5405 = vrot.lane.b32.xlu0 %v4470, 96
    %v5406 = vpop.permute.xlu0 %5405
    %5407 = vrot.lane.b32.xlu0 %v4475, 96
    %v5408 = vpop.permute.xlu0 %5407
    %5409 = vrot.lane.b32.xlu0 %v4480, 96
    %v5410 = vpop.permute.xlu0 %5409
    %5411 = vrot.lane.b32.xlu0 %v4485, 96
    %v5412 = vpop.permute.xlu0 %5411
    %5413 = vrot.lane.b32.xlu0 %v4490, 96
    %v5414 = vpop.permute.xlu0 %5413
    %5415 = vrot.lane.b32.xlu0 %v4495, 96
    %v5416 = vpop.permute.xlu0 %5415
    %5417 = vrot.lane.b32.xlu0 %v4500, 96
    %v5418 = vpop.permute.xlu0 %5417
    %5419 = vrot.lane.b32.xlu0 %v4505, 96
    %v5420 = vpop.permute.xlu0 %5419
    %5421 = vrot.lane.b32.xlu0 %v4510, 96
    %v5422 = vpop.permute.xlu0 %5421
    %5423 = vrot.lane.b32.xlu0 %v4515, 96
    %v5424 = vpop.permute.xlu0 %5423
    %5425 = vrot.lane.b32.xlu0 %v4520, 96
    %v5426 = vpop.permute.xlu0 %5425
    %5427 = vrot.lane.b32.xlu0 %v4525, 96
    %v5428 = vpop.permute.xlu0 %5427
    %5429 = vrot.lane.b32.xlu0 %v4530, 96
    %v5430 = vpop.permute.xlu0 %5429
    %5431 = vrot.lane.b32.xlu0 %v4535, 96
    %v5432 = vpop.permute.xlu0 %5431
    %5433 = vrot.lane.b32.xlu0 %v4540, 96
    %v5434 = vpop.permute.xlu0 %5433
    %5435 = vrot.lane.b32.xlu0 %v4545, 96
    %v5436 = vpop.permute.xlu0 %5435
    %5437 = vrot.lane.b32.xlu0 %v4550, 96
    %v5438 = vpop.permute.xlu0 %5437
    %5439 = vrot.lane.b32.xlu0 %v4555, 96
    %v5440 = vpop.permute.xlu0 %5439
    %5441 = vrot.lane.b32.xlu0 %v4560, 96
    %v5442 = vpop.permute.xlu0 %5441
    %5443 = vrot.lane.b32.xlu0 %v4565, 96
    %v5444 = vpop.permute.xlu0 %5443
    %5445 = vrot.lane.b32.xlu0 %v4570, 96
    %v5446 = vpop.permute.xlu0 %5445
    %5447 = vrot.lane.b32.xlu0 %v4575, 96
    %v5448 = vpop.permute.xlu0 %5447
    %5449 = vrot.lane.b32.xlu0 %v4580, 96
    %v5450 = vpop.permute.xlu0 %5449
    %5451 = vrot.lane.b32.xlu0 %v4585, 96
    %v5452 = vpop.permute.xlu0 %5451
    %5453 = vrot.lane.b32.xlu0 %v4590, 96
    %v5454 = vpop.permute.xlu0 %5453
    %5455 = vrot.lane.b32.xlu0 %v4595, 96
    %v5456 = vpop.permute.xlu0 %5455
    %5457 = vrot.lane.b32.xlu0 %v4600, 96
    %v5458 = vpop.permute.xlu0 %5457
    %5459 = vrot.lane.b32.xlu0 %v4605, 96
    %v5460 = vpop.permute.xlu0 %5459
    %5461 = vrot.lane.b32.xlu0 %v4610, 96
    %v5462 = vpop.permute.xlu0 %5461
    %5463 = vrot.lane.b32.xlu0 %v4615, 96
    %v5464 = vpop.permute.xlu0 %5463
    %5465 = vrot.lane.b32.xlu0 %v4620, 96
    %v5466 = vpop.permute.xlu0 %5465
    %5467 = vrot.lane.b32.xlu0 %v4625, 96
    %v5468 = vpop.permute.xlu0 %5467
    %5469 = vrot.lane.b32.xlu0 %v4630, 96
    %v5470 = vpop.permute.xlu0 %5469
    %5471 = vrot.lane.b32.xlu0 %v4635, 96
    %v5472 = vpop.permute.xlu0 %5471
    %5473 = vrot.lane.b32.xlu0 %v4640, 96
    %v5474 = vpop.permute.xlu0 %5473
    %5475 = vrot.lane.b32.xlu0 %v4645, 96
    %v5476 = vpop.permute.xlu0 %5475
    %5477 = vrot.lane.b32.xlu0 %v4650, 96
    %v5478 = vpop.permute.xlu0 %5477
    %5479 = vrot.lane.b32.xlu0 %v4655, 96
    %v5480 = vpop.permute.xlu0 %5479
    %5481 = vrot.lane.b32.xlu0 %v4660, 96
    %v5482 = vpop.permute.xlu0 %5481
    %5483 = vrot.lane.b32.xlu0 %v4665, 96
    %v5484 = vpop.permute.xlu0 %5483
    %5485 = vrot.lane.b32.xlu0 %v4670, 96
    %v5486 = vpop.permute.xlu0 %5485
    %5487 = vrot.lane.b32.xlu0 %v4675, 96
    %v5488 = vpop.permute.xlu0 %5487
    %5489 = vrot.lane.b32.xlu0 %v4680, 96
    %v5490 = vpop.permute.xlu0 %5489
    %5491 = vrot.lane.b32.xlu0 %v4685, 96
    %v5492 = vpop.permute.xlu0 %5491
    %5493 = vrot.lane.b32.xlu0 %v4690, 96
    %v5494 = vpop.permute.xlu0 %5493
    %5495 = vrot.lane.b32.xlu0 %v4695, 96
    %v5496 = vpop.permute.xlu0 %5495
    %5497 = vrot.lane.b32.xlu0 %v4700, 96
    %v5498 = vpop.permute.xlu0 %5497
    %5499 = vrot.lane.b32.xlu0 %v4705, 96
    %v5500 = vpop.permute.xlu0 %5499
    %5501 = vrot.lane.b32.xlu0 %v4710, 96
    %v5502 = vpop.permute.xlu0 %5501
    %5503 = vrot.lane.b32.xlu0 %v4715, 96
    %v5504 = vpop.permute.xlu0 %5503
    %5505 = vrot.lane.b32.xlu0 %v4720, 96
    %v5506 = vpop.permute.xlu0 %5505
    %5507 = vrot.lane.b32.xlu0 %v4725, 96
    %v5508 = vpop.permute.xlu0 %5507
    %5509 = vrot.lane.b32.xlu0 %v4730, 96
    %v5510 = vpop.permute.xlu0 %5509
    %5511 = vrot.lane.b32.xlu0 %v4735, 96
    %v5512 = vpop.permute.xlu0 %5511
    %5513 = vrot.lane.b32.xlu0 %v4740, 96
    %v5514 = vpop.permute.xlu0 %5513
    %5515 = vrot.lane.b32.xlu0 %v4745, 96
    %v5516 = vpop.permute.xlu0 %5515
    %v5645 = vsel %vm5005, %v4110, %v5262
    %v5646 = vsel %vm5006, %v4115, %v5264
    %v5647 = vsel %vm5007, %v4120, %v5266
    %v5648 = vsel %vm5008, %v4125, %v5268
    %v5649 = vsel %vm5009, %v4130, %v5270
    %v5650 = vsel %vm5010, %v4135, %v5272
    %v5651 = vsel %vm5011, %v4140, %v5274
    %v5652 = vsel %vm5012, %v4145, %v5276
    %v5653 = vsel %vm5013, %v4150, %v5278
    %v5654 = vsel %vm5014, %v4155, %v5280
    %v5655 = vsel %vm5015, %v4160, %v5282
    %v5656 = vsel %vm5016, %v4165, %v5284
    %v5657 = vsel %vm5017, %v4170, %v5286
    %v5658 = vsel %vm5018, %v4175, %v5288
    %v5659 = vsel %vm5019, %v4180, %v5290
    %v5660 = vsel %vm5020, %v4185, %v5292
    %v5661 = vsel %vm5021, %v4190, %v5294
    %v5662 = vsel %vm5022, %v4195, %v5296
    %v5663 = vsel %vm5023, %v4200, %v5298
    %v5664 = vsel %vm5024, %v4205, %v5300
    %v5665 = vsel %vm5025, %v4210, %v5302
    %v5666 = vsel %vm5026, %v4215, %v5304
    %v5667 = vsel %vm5027, %v4220, %v5306
    %v5668 = vsel %vm5028, %v4225, %v5308
    %v5669 = vsel %vm5029, %v4230, %v5310
    %v5670 = vsel %vm5030, %v4235, %v5312
    %v5671 = vsel %vm5031, %v4240, %v5314
    %v5672 = vsel %vm5032, %v4245, %v5316
    %v5673 = vsel %vm5033, %v4250, %v5318
    %v5674 = vsel %vm5034, %v4255, %v5320
    %v5675 = vsel %vm5035, %v4260, %v5322
    %v5676 = vsel %vm5036, %v4265, %v5324
    %v5677 = vsel %vm5037, %v4270, %v5326
    %v5678 = vsel %vm5038, %v4275, %v5328
    %v5679 = vsel %vm5039, %v4280, %v5330
    %v5680 = vsel %vm5040, %v4285, %v5332
    %v5681 = vsel %vm5041, %v4290, %v5334
    %v5682 = vsel %vm5042, %v4295, %v5336
    %v5683 = vsel %vm5043, %v4300, %v5338
    %v5684 = vsel %vm5044, %v4305, %v5340
    %v5685 = vsel %vm5045, %v4310, %v5342
    %v5686 = vsel %vm5046, %v4315, %v5344
    %v5687 = vsel %vm5047, %v4320, %v5346
    %v5688 = vsel %vm5048, %v4325, %v5348
    %v5689 = vsel %vm5049, %v4330, %v5350
    %v5690 = vsel %vm5050, %v4335, %v5352
    %v5691 = vsel %vm5051, %v4340, %v5354
    %v5692 = vsel %vm5052, %v4345, %v5356
    %v5693 = vsel %vm5053, %v4350, %v5358
    %v5694 = vsel %vm5054, %v4355, %v5360
    %v5695 = vsel %vm5055, %v4360, %v5362
    %v5696 = vsel %vm5056, %v4365, %v5364
    %v5697 = vsel %vm5057, %v4370, %v5366
    %v5698 = vsel %vm5058, %v4375, %v5368
    %v5699 = vsel %vm5059, %v4380, %v5370
    %v5700 = vsel %vm5060, %v4385, %v5372
    %v5701 = vsel %vm5061, %v4390, %v5374
    %v5702 = vsel %vm5062, %v4395, %v5376
    %v5703 = vsel %vm5063, %v4400, %v5378
    %v5704 = vsel %vm5064, %v4405, %v5380
    %v5705 = vsel %vm5065, %v4410, %v5382
    %v5706 = vsel %vm5066, %v4415, %v5384
    %v5707 = vsel %vm5067, %v4420, %v5386
    %v5708 = vsel %vm5068, %v4425, %v5388
    %v5709 = vsel %vm5069, %v4430, %v5390
    %v5710 = vsel %vm5070, %v4435, %v5392
    %v5711 = vsel %vm5071, %v4440, %v5394
    %v5712 = vsel %vm5072, %v4445, %v5396
    %v5713 = vsel %vm5073, %v4450, %v5398
    %v5714 = vsel %vm5074, %v4455, %v5400
    %v5715 = vsel %vm5075, %v4460, %v5402
    %v5716 = vsel %vm5076, %v4465, %v5404
    %v5717 = vsel %vm5077, %v4470, %v5406
    %v5718 = vsel %vm5078, %v4475, %v5408
    %v5719 = vsel %vm5079, %v4480, %v5410
    %v5720 = vsel %vm5080, %v4485, %v5412
    %v5721 = vsel %vm5081, %v4490, %v5414
    %v5722 = vsel %vm5082, %v4495, %v5416
    %v5723 = vsel %vm5083, %v4500, %v5418
    %v5724 = vsel %vm5084, %v4505, %v5420
    %v5725 = vsel %vm5085, %v4510, %v5422
    %v5726 = vsel %vm5086, %v4515, %v5424
    %v5727 = vsel %vm5087, %v4520, %v5426
    %v5728 = vsel %vm5088, %v4525, %v5428
    %v5729 = vsel %vm5089, %v4530, %v5430
    %v5730 = vsel %vm5090, %v4535, %v5432
    %v5731 = vsel %vm5091, %v4540, %v5434
    %v5732 = vsel %vm5092, %v4545, %v5436
    %v5733 = vsel %vm5093, %v4550, %v5438
    %v5734 = vsel %vm5094, %v4555, %v5440
    %v5735 = vsel %vm5095, %v4560, %v5442
    %v5736 = vsel %vm5096, %v4565, %v5444
    %v5737 = vsel %vm5097, %v4570, %v5446
    %v5738 = vsel %vm5098, %v4575, %v5448
    %v5739 = vsel %vm5099, %v4580, %v5450
    %v5740 = vsel %vm5100, %v4585, %v5452
    %v5741 = vsel %vm5101, %v4590, %v5454
    %v5742 = vsel %vm5102, %v4595, %v5456
    %v5743 = vsel %vm5103, %v4600, %v5458
    %v5744 = vsel %vm5104, %v4605, %v5460
    %v5745 = vsel %vm5105, %v4610, %v5462
    %v5746 = vsel %vm5106, %v4615, %v5464
    %v5747 = vsel %vm5107, %v4620, %v5466
    %v5748 = vsel %vm5108, %v4625, %v5468
    %v5749 = vsel %vm5109, %v4630, %v5470
    %v5750 = vsel %vm5110, %v4635, %v5472
    %v5751 = vsel %vm5111, %v4640, %v5474
    %v5752 = vsel %vm5112, %v4645, %v5476
    %v5753 = vsel %vm5113, %v4650, %v5478
    %v5754 = vsel %vm5114, %v4655, %v5480
    %v5755 = vsel %vm5115, %v4660, %v5482
    %v5756 = vsel %vm5116, %v4665, %v5484
    %v5757 = vsel %vm5117, %v4670, %v5486
    %v5758 = vsel %vm5118, %v4675, %v5488
    %v5759 = vsel %vm5119, %v4680, %v5490
    %v5760 = vsel %vm5120, %v4685, %v5492
    %v5761 = vsel %vm5121, %v4690, %v5494
    %v5762 = vsel %vm5122, %v4695, %v5496
    %v5763 = vsel %vm5123, %v4700, %v5498
    %v5764 = vsel %vm5124, %v4705, %v5500
    %v5765 = vsel %vm5125, %v4710, %v5502
    %v5766 = vsel %vm5126, %v4715, %v5504
    %v5767 = vsel %vm5127, %v4720, %v5506
    %v5768 = vsel %vm5128, %v4725, %v5508
    %v5769 = vsel %vm5129, %v4730, %v5510
    %v5770 = vsel %vm5130, %v4735, %v5512
    %v5771 = vsel %vm5131, %v4740, %v5514
    %v5772 = vsel %vm5132, %v4745, %v5516
    %vm5773 = vcmp.ge.f32.partialorder %v27, 0.0
    %vm5774 = vcmp.ge.f32.partialorder %v28, 0.0
    %vm5775 = vcmp.ge.f32.partialorder %v29, 0.0
    %vm5776 = vcmp.ge.f32.partialorder %v30, 0.0
    %vm5777 = vcmp.ge.f32.partialorder %v31, 0.0
    %vm5778 = vcmp.ge.f32.partialorder %v32, 0.0
    %vm5779 = vcmp.ge.f32.partialorder %v33, 0.0
    %vm5780 = vcmp.ge.f32.partialorder %v34, 0.0
    %vm5781 = vcmp.ge.f32.partialorder %v35, 0.0
    %vm5782 = vcmp.ge.f32.partialorder %v36, 0.0
    %vm5783 = vcmp.ge.f32.partialorder %v37, 0.0
    %vm5784 = vcmp.ge.f32.partialorder %v38, 0.0
    %vm5785 = vcmp.ge.f32.partialorder %v39, 0.0
    %vm5786 = vcmp.ge.f32.partialorder %v40, 0.0
    %vm5787 = vcmp.ge.f32.partialorder %v41, 0.0
    %vm5788 = vcmp.ge.f32.partialorder %v42, 0.0
    %vm5789 = vcmp.ge.f32.partialorder %v43, 0.0
    %vm5790 = vcmp.ge.f32.partialorder %v44, 0.0
    %vm5791 = vcmp.ge.f32.partialorder %v45, 0.0
    %vm5792 = vcmp.ge.f32.partialorder %v46, 0.0
    %vm5793 = vcmp.ge.f32.partialorder %v47, 0.0
    %vm5794 = vcmp.ge.f32.partialorder %v48, 0.0
    %vm5795 = vcmp.ge.f32.partialorder %v49, 0.0
    %vm5796 = vcmp.ge.f32.partialorder %v50, 0.0
    %vm5797 = vcmp.ge.f32.partialorder %v51, 0.0
    %vm5798 = vcmp.ge.f32.partialorder %v52, 0.0
    %vm5799 = vcmp.ge.f32.partialorder %v53, 0.0
    %vm5800 = vcmp.ge.f32.partialorder %v54, 0.0
    %vm5801 = vcmp.ge.f32.partialorder %v55, 0.0
    %vm5802 = vcmp.ge.f32.partialorder %v56, 0.0
    %vm5803 = vcmp.ge.f32.partialorder %v57, 0.0
    %vm5804 = vcmp.ge.f32.partialorder %v58, 0.0
    %vm5805 = vcmp.ge.f32.partialorder %v59, 0.0
    %vm5806 = vcmp.ge.f32.partialorder %v60, 0.0
    %vm5807 = vcmp.ge.f32.partialorder %v61, 0.0
    %vm5808 = vcmp.ge.f32.partialorder %v62, 0.0
    %vm5809 = vcmp.ge.f32.partialorder %v63, 0.0
    %vm5810 = vcmp.ge.f32.partialorder %v64, 0.0
    %vm5811 = vcmp.ge.f32.partialorder %v65, 0.0
    %vm5812 = vcmp.ge.f32.partialorder %v66, 0.0
    %vm5813 = vcmp.ge.f32.partialorder %v67, 0.0
    %vm5814 = vcmp.ge.f32.partialorder %v68, 0.0
    %vm5815 = vcmp.ge.f32.partialorder %v69, 0.0
    %vm5816 = vcmp.ge.f32.partialorder %v70, 0.0
    %vm5817 = vcmp.ge.f32.partialorder %v71, 0.0
    %vm5818 = vcmp.ge.f32.partialorder %v72, 0.0
    %vm5819 = vcmp.ge.f32.partialorder %v73, 0.0
    %vm5820 = vcmp.ge.f32.partialorder %v74, 0.0
    %vm5821 = vcmp.ge.f32.partialorder %v75, 0.0
    %vm5822 = vcmp.ge.f32.partialorder %v76, 0.0
    %vm5823 = vcmp.ge.f32.partialorder %v77, 0.0
    %vm5824 = vcmp.ge.f32.partialorder %v78, 0.0
    %vm5825 = vcmp.ge.f32.partialorder %v79, 0.0
    %vm5826 = vcmp.ge.f32.partialorder %v80, 0.0
    %vm5827 = vcmp.ge.f32.partialorder %v81, 0.0
    %vm5828 = vcmp.ge.f32.partialorder %v82, 0.0
    %vm5829 = vcmp.ge.f32.partialorder %v83, 0.0
    %vm5830 = vcmp.ge.f32.partialorder %v84, 0.0
    %vm5831 = vcmp.ge.f32.partialorder %v85, 0.0
    %vm5832 = vcmp.ge.f32.partialorder %v86, 0.0
    %vm5833 = vcmp.ge.f32.partialorder %v87, 0.0
    %vm5834 = vcmp.ge.f32.partialorder %v88, 0.0
    %vm5835 = vcmp.ge.f32.partialorder %v89, 0.0
    %vm5836 = vcmp.ge.f32.partialorder %v90, 0.0
    %vm5837 = vcmp.ge.f32.partialorder %v91, 0.0
    %vm5838 = vcmp.ge.f32.partialorder %v92, 0.0
    %vm5839 = vcmp.ge.f32.partialorder %v93, 0.0
    %vm5840 = vcmp.ge.f32.partialorder %v94, 0.0
    %vm5841 = vcmp.ge.f32.partialorder %v95, 0.0
    %vm5842 = vcmp.ge.f32.partialorder %v96, 0.0
    %vm5843 = vcmp.ge.f32.partialorder %v97, 0.0
    %vm5844 = vcmp.ge.f32.partialorder %v98, 0.0
    %vm5845 = vcmp.ge.f32.partialorder %v99, 0.0
    %vm5846 = vcmp.ge.f32.partialorder %v100, 0.0
    %vm5847 = vcmp.ge.f32.partialorder %v101, 0.0
    %vm5848 = vcmp.ge.f32.partialorder %v102, 0.0
    %vm5849 = vcmp.ge.f32.partialorder %v103, 0.0
    %vm5850 = vcmp.ge.f32.partialorder %v104, 0.0
    %vm5851 = vcmp.ge.f32.partialorder %v105, 0.0
    %vm5852 = vcmp.ge.f32.partialorder %v106, 0.0
    %vm5853 = vcmp.ge.f32.partialorder %v107, 0.0
    %vm5854 = vcmp.ge.f32.partialorder %v108, 0.0
    %vm5855 = vcmp.ge.f32.partialorder %v109, 0.0
    %vm5856 = vcmp.ge.f32.partialorder %v110, 0.0
    %vm5857 = vcmp.ge.f32.partialorder %v111, 0.0
    %vm5858 = vcmp.ge.f32.partialorder %v112, 0.0
    %vm5859 = vcmp.ge.f32.partialorder %v113, 0.0
    %vm5860 = vcmp.ge.f32.partialorder %v114, 0.0
    %vm5861 = vcmp.ge.f32.partialorder %v115, 0.0
    %vm5862 = vcmp.ge.f32.partialorder %v116, 0.0
    %vm5863 = vcmp.ge.f32.partialorder %v117, 0.0
    %vm5864 = vcmp.ge.f32.partialorder %v118, 0.0
    %vm5865 = vcmp.ge.f32.partialorder %v119, 0.0
    %vm5866 = vcmp.ge.f32.partialorder %v120, 0.0
    %vm5867 = vcmp.ge.f32.partialorder %v121, 0.0
    %vm5868 = vcmp.ge.f32.partialorder %v122, 0.0
    %vm5869 = vcmp.ge.f32.partialorder %v123, 0.0
    %vm5870 = vcmp.ge.f32.partialorder %v124, 0.0
    %vm5871 = vcmp.ge.f32.partialorder %v125, 0.0
    %vm5872 = vcmp.ge.f32.partialorder %v126, 0.0
    %vm5873 = vcmp.ge.f32.partialorder %v127, 0.0
    %vm5874 = vcmp.ge.f32.partialorder %v128, 0.0
    %vm5875 = vcmp.ge.f32.partialorder %v129, 0.0
    %vm5876 = vcmp.ge.f32.partialorder %v130, 0.0
    %vm5877 = vcmp.ge.f32.partialorder %v131, 0.0
    %vm5878 = vcmp.ge.f32.partialorder %v132, 0.0
    %vm5879 = vcmp.ge.f32.partialorder %v133, 0.0
    %vm5880 = vcmp.ge.f32.partialorder %v134, 0.0
    %vm5881 = vcmp.ge.f32.partialorder %v135, 0.0
    %vm5882 = vcmp.ge.f32.partialorder %v136, 0.0
    %vm5883 = vcmp.ge.f32.partialorder %v137, 0.0
    %vm5884 = vcmp.ge.f32.partialorder %v138, 0.0
    %vm5885 = vcmp.ge.f32.partialorder %v139, 0.0
    %vm5886 = vcmp.ge.f32.partialorder %v140, 0.0
    %vm5887 = vcmp.ge.f32.partialorder %v141, 0.0
    %vm5888 = vcmp.ge.f32.partialorder %v142, 0.0
    %vm5889 = vcmp.ge.f32.partialorder %v143, 0.0
    %vm5890 = vcmp.ge.f32.partialorder %v144, 0.0
    %vm5891 = vcmp.ge.f32.partialorder %v145, 0.0
    %vm5892 = vcmp.ge.f32.partialorder %v146, 0.0
    %vm5893 = vcmp.ge.f32.partialorder %v147, 0.0
    %vm5894 = vcmp.ge.f32.partialorder %v148, 0.0
    %vm5895 = vcmp.ge.f32.partialorder %v149, 0.0
    %vm5896 = vcmp.ge.f32.partialorder %v150, 0.0
    %vm5897 = vcmp.ge.f32.partialorder %v151, 0.0
    %vm5898 = vcmp.ge.f32.partialorder %v152, 0.0
    %vm5899 = vcmp.ge.f32.partialorder %v153, 0.0
    %vm5900 = vcmp.ge.f32.partialorder %v154, 0.0
    %v5901 = vsel %vm5773, 1, 0
    %v5902 = vsel %vm5774, 1, 0
    %v5903 = vsel %vm5775, 1, 0
    %v5904 = vsel %vm5776, 1, 0
    %v5905 = vsel %vm5777, 1, 0
    %v5906 = vsel %vm5778, 1, 0
    %v5907 = vsel %vm5779, 1, 0
    %v5908 = vsel %vm5780, 1, 0
    %v5909 = vsel %vm5781, 1, 0
    %v5910 = vsel %vm5782, 1, 0
    %v5911 = vsel %vm5783, 1, 0
    %v5912 = vsel %vm5784, 1, 0
    %v5913 = vsel %vm5785, 1, 0
    %v5914 = vsel %vm5786, 1, 0
    %v5915 = vsel %vm5787, 1, 0
    %v5916 = vsel %vm5788, 1, 0
    %v5917 = vsel %vm5789, 1, 0
    %v5918 = vsel %vm5790, 1, 0
    %v5919 = vsel %vm5791, 1, 0
    %v5920 = vsel %vm5792, 1, 0
    %v5921 = vsel %vm5793, 1, 0
    %v5922 = vsel %vm5794, 1, 0
    %v5923 = vsel %vm5795, 1, 0
    %v5924 = vsel %vm5796, 1, 0
    %v5925 = vsel %vm5797, 1, 0
    %v5926 = vsel %vm5798, 1, 0
    %v5927 = vsel %vm5799, 1, 0
    %v5928 = vsel %vm5800, 1, 0
    %v5929 = vsel %vm5801, 1, 0
    %v5930 = vsel %vm5802, 1, 0
    %v5931 = vsel %vm5803, 1, 0
    %v5932 = vsel %vm5804, 1, 0
    %v5933 = vsel %vm5805, 1, 0
    %v5934 = vsel %vm5806, 1, 0
    %v5935 = vsel %vm5807, 1, 0
    %v5936 = vsel %vm5808, 1, 0
    %v5937 = vsel %vm5809, 1, 0
    %v5938 = vsel %vm5810, 1, 0
    %v5939 = vsel %vm5811, 1, 0
    %v5940 = vsel %vm5812, 1, 0
    %v5941 = vsel %vm5813, 1, 0
    %v5942 = vsel %vm5814, 1, 0
    %v5943 = vsel %vm5815, 1, 0
    %v5944 = vsel %vm5816, 1, 0
    %v5945 = vsel %vm5817, 1, 0
    %v5946 = vsel %vm5818, 1, 0
    %v5947 = vsel %vm5819, 1, 0
    %v5948 = vsel %vm5820, 1, 0
    %v5949 = vsel %vm5821, 1, 0
    %v5950 = vsel %vm5822, 1, 0
    %v5951 = vsel %vm5823, 1, 0
    %v5952 = vsel %vm5824, 1, 0
    %v5953 = vsel %vm5825, 1, 0
    %v5954 = vsel %vm5826, 1, 0
    %v5955 = vsel %vm5827, 1, 0
    %v5956 = vsel %vm5828, 1, 0
    %v5957 = vsel %vm5829, 1, 0
    %v5958 = vsel %vm5830, 1, 0
    %v5959 = vsel %vm5831, 1, 0
    %v5960 = vsel %vm5832, 1, 0
    %v5961 = vsel %vm5833, 1, 0
    %v5962 = vsel %vm5834, 1, 0
    %v5963 = vsel %vm5835, 1, 0
    %v5964 = vsel %vm5836, 1, 0
    %v5965 = vsel %vm5837, 1, 0
    %v5966 = vsel %vm5838, 1, 0
    %v5967 = vsel %vm5839, 1, 0
    %v5968 = vsel %vm5840, 1, 0
    %v5969 = vsel %vm5841, 1, 0
    %v5970 = vsel %vm5842, 1, 0
    %v5971 = vsel %vm5843, 1, 0
    %v5972 = vsel %vm5844, 1, 0
    %v5973 = vsel %vm5845, 1, 0
    %v5974 = vsel %vm5846, 1, 0
    %v5975 = vsel %vm5847, 1, 0
    %v5976 = vsel %vm5848, 1, 0
    %v5977 = vsel %vm5849, 1, 0
    %v5978 = vsel %vm5850, 1, 0
    %v5979 = vsel %vm5851, 1, 0
    %v5980 = vsel %vm5852, 1, 0
    %v5981 = vsel %vm5853, 1, 0
    %v5982 = vsel %vm5854, 1, 0
    %v5983 = vsel %vm5855, 1, 0
    %v5984 = vsel %vm5856, 1, 0
    %v5985 = vsel %vm5857, 1, 0
    %v5986 = vsel %vm5858, 1, 0
    %v5987 = vsel %vm5859, 1, 0
    %v5988 = vsel %vm5860, 1, 0
    %v5989 = vsel %vm5861, 1, 0
    %v5990 = vsel %vm5862, 1, 0
    %v5991 = vsel %vm5863, 1, 0
    %v5992 = vsel %vm5864, 1, 0
    %v5993 = vsel %vm5865, 1, 0
    %v5994 = vsel %vm5866, 1, 0
    %v5995 = vsel %vm5867, 1, 0
    %v5996 = vsel %vm5868, 1, 0
    %v5997 = vsel %vm5869, 1, 0
    %v5998 = vsel %vm5870, 1, 0
    %v5999 = vsel %vm5871, 1, 0
    %v6000 = vsel %vm5872, 1, 0
    %v6001 = vsel %vm5873, 1, 0
    %v6002 = vsel %vm5874, 1, 0
    %v6003 = vsel %vm5875, 1, 0
    %v6004 = vsel %vm5876, 1, 0
    %v6005 = vsel %vm5877, 1, 0
    %v6006 = vsel %vm5878, 1, 0
    %v6007 = vsel %vm5879, 1, 0
    %v6008 = vsel %vm5880, 1, 0
    %v6009 = vsel %vm5881, 1, 0
    %v6010 = vsel %vm5882, 1, 0
    %v6011 = vsel %vm5883, 1, 0
    %v6012 = vsel %vm5884, 1, 0
    %v6013 = vsel %vm5885, 1, 0
    %v6014 = vsel %vm5886, 1, 0
    %v6015 = vsel %vm5887, 1, 0
    %v6016 = vsel %vm5888, 1, 0
    %v6017 = vsel %vm5889, 1, 0
    %v6018 = vsel %vm5890, 1, 0
    %v6019 = vsel %vm5891, 1, 0
    %v6020 = vsel %vm5892, 1, 0
    %v6021 = vsel %vm5893, 1, 0
    %v6022 = vsel %vm5894, 1, 0
    %v6023 = vsel %vm5895, 1, 0
    %v6024 = vsel %vm5896, 1, 0
    %v6025 = vsel %vm5897, 1, 0
    %v6026 = vsel %vm5898, 1, 0
    %v6027 = vsel %vm5899, 1, 0
    %v6028 = vsel %vm5900, 1, 0
    %6029 = vset.pattern.permute.xlu0 0
    %6030 = vperm.xlu0 %6029, %v5901
    %v6031 = vpop.permute.xlu0 %6030
    %6032 = vset.pattern.permute.xlu0 0
    %6033 = vperm.xlu0 %6032, %v5902
    %v6034 = vpop.permute.xlu0 %6033
    %6035 = vset.pattern.permute.xlu0 0
    %6036 = vperm.xlu0 %6035, %v5903
    %v6037 = vpop.permute.xlu0 %6036
    %6038 = vset.pattern.permute.xlu0 0
    %6039 = vperm.xlu0 %6038, %v5904
    %v6040 = vpop.permute.xlu0 %6039
    %6041 = vset.pattern.permute.xlu0 0
    %6042 = vperm.xlu0 %6041, %v5905
    %v6043 = vpop.permute.xlu0 %6042
    %6044 = vset.pattern.permute.xlu0 0
    %6045 = vperm.xlu0 %6044, %v5906
    %v6046 = vpop.permute.xlu0 %6045
    %6047 = vset.pattern.permute.xlu0 0
    %6048 = vperm.xlu0 %6047, %v5907
    %v6049 = vpop.permute.xlu0 %6048
    %6050 = vset.pattern.permute.xlu0 0
    %6051 = vperm.xlu0 %6050, %v5908
    %v6052 = vpop.permute.xlu0 %6051
    %6053 = vset.pattern.permute.xlu0 0
    %6054 = vperm.xlu0 %6053, %v5909
    %v6055 = vpop.permute.xlu0 %6054
    %6056 = vset.pattern.permute.xlu0 0
    %6057 = vperm.xlu0 %6056, %v5910
    %v6058 = vpop.permute.xlu0 %6057
    %6059 = vset.pattern.permute.xlu0 0
    %6060 = vperm.xlu0 %6059, %v5911
    %v6061 = vpop.permute.xlu0 %6060
    %6062 = vset.pattern.permute.xlu0 0
    %6063 = vperm.xlu0 %6062, %v5912
    %v6064 = vpop.permute.xlu0 %6063
    %6065 = vset.pattern.permute.xlu0 0
    %6066 = vperm.xlu0 %6065, %v5913
    %v6067 = vpop.permute.xlu0 %6066
    %6068 = vset.pattern.permute.xlu0 0
    %6069 = vperm.xlu0 %6068, %v5914
    %v6070 = vpop.permute.xlu0 %6069
    %6071 = vset.pattern.permute.xlu0 0
    %6072 = vperm.xlu0 %6071, %v5915
    %v6073 = vpop.permute.xlu0 %6072
    %6074 = vset.pattern.permute.xlu0 0
    %6075 = vperm.xlu0 %6074, %v5916
    %v6076 = vpop.permute.xlu0 %6075
    %6077 = vset.pattern.permute.xlu0 0
    %6078 = vperm.xlu0 %6077, %v5917
    %v6079 = vpop.permute.xlu0 %6078
    %6080 = vset.pattern.permute.xlu0 0
    %6081 = vperm.xlu0 %6080, %v5918
    %v6082 = vpop.permute.xlu0 %6081
    %6083 = vset.pattern.permute.xlu0 0
    %6084 = vperm.xlu0 %6083, %v5919
    %v6085 = vpop.permute.xlu0 %6084
    %6086 = vset.pattern.permute.xlu0 0
    %6087 = vperm.xlu0 %6086, %v5920
    %v6088 = vpop.permute.xlu0 %6087
    %6089 = vset.pattern.permute.xlu0 0
    %6090 = vperm.xlu0 %6089, %v5921
    %v6091 = vpop.permute.xlu0 %6090
    %6092 = vset.pattern.permute.xlu0 0
    %6093 = vperm.xlu0 %6092, %v5922
    %v6094 = vpop.permute.xlu0 %6093
    %6095 = vset.pattern.permute.xlu0 0
    %6096 = vperm.xlu0 %6095, %v5923
    %v6097 = vpop.permute.xlu0 %6096
    %6098 = vset.pattern.permute.xlu0 0
    %6099 = vperm.xlu0 %6098, %v5924
    %v6100 = vpop.permute.xlu0 %6099
    %6101 = vset.pattern.permute.xlu0 0
    %6102 = vperm.xlu0 %6101, %v5925
    %v6103 = vpop.permute.xlu0 %6102
    %6104 = vset.pattern.permute.xlu0 0
    %6105 = vperm.xlu0 %6104, %v5926
    %v6106 = vpop.permute.xlu0 %6105
    %6107 = vset.pattern.permute.xlu0 0
    %6108 = vperm.xlu0 %6107, %v5927
    %v6109 = vpop.permute.xlu0 %6108
    %6110 = vset.pattern.permute.xlu0 0
    %6111 = vperm.xlu0 %6110, %v5928
    %v6112 = vpop.permute.xlu0 %6111
    %6113 = vset.pattern.permute.xlu0 0
    %6114 = vperm.xlu0 %6113, %v5929
    %v6115 = vpop.permute.xlu0 %6114
    %6116 = vset.pattern.permute.xlu0 0
    %6117 = vperm.xlu0 %6116, %v5930
    %v6118 = vpop.permute.xlu0 %6117
    %6119 = vset.pattern.permute.xlu0 0
    %6120 = vperm.xlu0 %6119, %v5931
    %v6121 = vpop.permute.xlu0 %6120
    %6122 = vset.pattern.permute.xlu0 0
    %6123 = vperm.xlu0 %6122, %v5932
    %v6124 = vpop.permute.xlu0 %6123
    %6125 = vset.pattern.permute.xlu0 0
    %6126 = vperm.xlu0 %6125, %v5933
    %v6127 = vpop.permute.xlu0 %6126
    %6128 = vset.pattern.permute.xlu0 0
    %6129 = vperm.xlu0 %6128, %v5934
    %v6130 = vpop.permute.xlu0 %6129
    %6131 = vset.pattern.permute.xlu0 0
    %6132 = vperm.xlu0 %6131, %v5935
    %v6133 = vpop.permute.xlu0 %6132
    %6134 = vset.pattern.permute.xlu0 0
    %6135 = vperm.xlu0 %6134, %v5936
    %v6136 = vpop.permute.xlu0 %6135
    %6137 = vset.pattern.permute.xlu0 0
    %6138 = vperm.xlu0 %6137, %v5937
    %v6139 = vpop.permute.xlu0 %6138
    %6140 = vset.pattern.permute.xlu0 0
    %6141 = vperm.xlu0 %6140, %v5938
    %v6142 = vpop.permute.xlu0 %6141
    %6143 = vset.pattern.permute.xlu0 0
    %6144 = vperm.xlu0 %6143, %v5939
    %v6145 = vpop.permute.xlu0 %6144
    %6146 = vset.pattern.permute.xlu0 0
    %6147 = vperm.xlu0 %6146, %v5940
    %v6148 = vpop.permute.xlu0 %6147
    %6149 = vset.pattern.permute.xlu0 0
    %6150 = vperm.xlu0 %6149, %v5941
    %v6151 = vpop.permute.xlu0 %6150
    %6152 = vset.pattern.permute.xlu0 0
    %6153 = vperm.xlu0 %6152, %v5942
    %v6154 = vpop.permute.xlu0 %6153
    %6155 = vset.pattern.permute.xlu0 0
    %6156 = vperm.xlu0 %6155, %v5943
    %v6157 = vpop.permute.xlu0 %6156
    %6158 = vset.pattern.permute.xlu0 0
    %6159 = vperm.xlu0 %6158, %v5944
    %v6160 = vpop.permute.xlu0 %6159
    %6161 = vset.pattern.permute.xlu0 0
    %6162 = vperm.xlu0 %6161, %v5945
    %v6163 = vpop.permute.xlu0 %6162
    %6164 = vset.pattern.permute.xlu0 0
    %6165 = vperm.xlu0 %6164, %v5946
    %v6166 = vpop.permute.xlu0 %6165
    %6167 = vset.pattern.permute.xlu0 0
    %6168 = vperm.xlu0 %6167, %v5947
    %v6169 = vpop.permute.xlu0 %6168
    %6170 = vset.pattern.permute.xlu0 0
    %6171 = vperm.xlu0 %6170, %v5948
    %v6172 = vpop.permute.xlu0 %6171
    %6173 = vset.pattern.permute.xlu0 0
    %6174 = vperm.xlu0 %6173, %v5949
    %v6175 = vpop.permute.xlu0 %6174
    %6176 = vset.pattern.permute.xlu0 0
    %6177 = vperm.xlu0 %6176, %v5950
    %v6178 = vpop.permute.xlu0 %6177
    %6179 = vset.pattern.permute.xlu0 0
    %6180 = vperm.xlu0 %6179, %v5951
    %v6181 = vpop.permute.xlu0 %6180
    %6182 = vset.pattern.permute.xlu0 0
    %6183 = vperm.xlu0 %6182, %v5952
    %v6184 = vpop.permute.xlu0 %6183
    %6185 = vset.pattern.permute.xlu0 0
    %6186 = vperm.xlu0 %6185, %v5953
    %v6187 = vpop.permute.xlu0 %6186
    %6188 = vset.pattern.permute.xlu0 0
    %6189 = vperm.xlu0 %6188, %v5954
    %v6190 = vpop.permute.xlu0 %6189
    %6191 = vset.pattern.permute.xlu0 0
    %6192 = vperm.xlu0 %6191, %v5955
    %v6193 = vpop.permute.xlu0 %6192
    %6194 = vset.pattern.permute.xlu0 0
    %6195 = vperm.xlu0 %6194, %v5956
    %v6196 = vpop.permute.xlu0 %6195
    %6197 = vset.pattern.permute.xlu0 0
    %6198 = vperm.xlu0 %6197, %v5957
    %v6199 = vpop.permute.xlu0 %6198
    %6200 = vset.pattern.permute.xlu0 0
    %6201 = vperm.xlu0 %6200, %v5958
    %v6202 = vpop.permute.xlu0 %6201
    %6203 = vset.pattern.permute.xlu0 0
    %6204 = vperm.xlu0 %6203, %v5959
    %v6205 = vpop.permute.xlu0 %6204
    %6206 = vset.pattern.permute.xlu0 0
    %6207 = vperm.xlu0 %6206, %v5960
    %v6208 = vpop.permute.xlu0 %6207
    %6209 = vset.pattern.permute.xlu0 0
    %6210 = vperm.xlu0 %6209, %v5961
    %v6211 = vpop.permute.xlu0 %6210
    %6212 = vset.pattern.permute.xlu0 0
    %6213 = vperm.xlu0 %6212, %v5962
    %v6214 = vpop.permute.xlu0 %6213
    %6215 = vset.pattern.permute.xlu0 0
    %6216 = vperm.xlu0 %6215, %v5963
    %v6217 = vpop.permute.xlu0 %6216
    %6218 = vset.pattern.permute.xlu0 0
    %6219 = vperm.xlu0 %6218, %v5964
    %v6220 = vpop.permute.xlu0 %6219
    %6221 = vset.pattern.permute.xlu0 0
    %6222 = vperm.xlu0 %6221, %v5965
    %v6223 = vpop.permute.xlu0 %6222
    %6224 = vset.pattern.permute.xlu0 0
    %6225 = vperm.xlu0 %6224, %v5966
    %v6226 = vpop.permute.xlu0 %6225
    %6227 = vset.pattern.permute.xlu0 0
    %6228 = vperm.xlu0 %6227, %v5967
    %v6229 = vpop.permute.xlu0 %6228
    %6230 = vset.pattern.permute.xlu0 0
    %6231 = vperm.xlu0 %6230, %v5968
    %v6232 = vpop.permute.xlu0 %6231
    %6233 = vset.pattern.permute.xlu0 0
    %6234 = vperm.xlu0 %6233, %v5969
    %v6235 = vpop.permute.xlu0 %6234
    %6236 = vset.pattern.permute.xlu0 0
    %6237 = vperm.xlu0 %6236, %v5970
    %v6238 = vpop.permute.xlu0 %6237
    %6239 = vset.pattern.permute.xlu0 0
    %6240 = vperm.xlu0 %6239, %v5971
    %v6241 = vpop.permute.xlu0 %6240
    %6242 = vset.pattern.permute.xlu0 0
    %6243 = vperm.xlu0 %6242, %v5972
    %v6244 = vpop.permute.xlu0 %6243
    %6245 = vset.pattern.permute.xlu0 0
    %6246 = vperm.xlu0 %6245, %v5973
    %v6247 = vpop.permute.xlu0 %6246
    %6248 = vset.pattern.permute.xlu0 0
    %6249 = vperm.xlu0 %6248, %v5974
    %v6250 = vpop.permute.xlu0 %6249
    %6251 = vset.pattern.permute.xlu0 0
    %6252 = vperm.xlu0 %6251, %v5975
    %v6253 = vpop.permute.xlu0 %6252
    %6254 = vset.pattern.permute.xlu0 0
    %6255 = vperm.xlu0 %6254, %v5976
    %v6256 = vpop.permute.xlu0 %6255
    %6257 = vset.pattern.permute.xlu0 0
    %6258 = vperm.xlu0 %6257, %v5977
    %v6259 = vpop.permute.xlu0 %6258
    %6260 = vset.pattern.permute.xlu0 0
    %6261 = vperm.xlu0 %6260, %v5978
    %v6262 = vpop.permute.xlu0 %6261
    %6263 = vset.pattern.permute.xlu0 0
    %6264 = vperm.xlu0 %6263, %v5979
    %v6265 = vpop.permute.xlu0 %6264
    %6266 = vset.pattern.permute.xlu0 0
    %6267 = vperm.xlu0 %6266, %v5980
    %v6268 = vpop.permute.xlu0 %6267
    %6269 = vset.pattern.permute.xlu0 0
    %6270 = vperm.xlu0 %6269, %v5981
    %v6271 = vpop.permute.xlu0 %6270
    %6272 = vset.pattern.permute.xlu0 0
    %6273 = vperm.xlu0 %6272, %v5982
    %v6274 = vpop.permute.xlu0 %6273
    %6275 = vset.pattern.permute.xlu0 0
    %6276 = vperm.xlu0 %6275, %v5983
    %v6277 = vpop.permute.xlu0 %6276
    %6278 = vset.pattern.permute.xlu0 0
    %6279 = vperm.xlu0 %6278, %v5984
    %v6280 = vpop.permute.xlu0 %6279
    %6281 = vset.pattern.permute.xlu0 0
    %6282 = vperm.xlu0 %6281, %v5985
    %v6283 = vpop.permute.xlu0 %6282
    %6284 = vset.pattern.permute.xlu0 0
    %6285 = vperm.xlu0 %6284, %v5986
    %v6286 = vpop.permute.xlu0 %6285
    %6287 = vset.pattern.permute.xlu0 0
    %6288 = vperm.xlu0 %6287, %v5987
    %v6289 = vpop.permute.xlu0 %6288
    %6290 = vset.pattern.permute.xlu0 0
    %6291 = vperm.xlu0 %6290, %v5988
    %v6292 = vpop.permute.xlu0 %6291
    %6293 = vset.pattern.permute.xlu0 0
    %6294 = vperm.xlu0 %6293, %v5989
    %v6295 = vpop.permute.xlu0 %6294
    %6296 = vset.pattern.permute.xlu0 0
    %6297 = vperm.xlu0 %6296, %v5990
    %v6298 = vpop.permute.xlu0 %6297
    %6299 = vset.pattern.permute.xlu0 0
    %6300 = vperm.xlu0 %6299, %v5991
    %v6301 = vpop.permute.xlu0 %6300
    %6302 = vset.pattern.permute.xlu0 0
    %6303 = vperm.xlu0 %6302, %v5992
    %v6304 = vpop.permute.xlu0 %6303
    %6305 = vset.pattern.permute.xlu0 0
    %6306 = vperm.xlu0 %6305, %v5993
    %v6307 = vpop.permute.xlu0 %6306
    %6308 = vset.pattern.permute.xlu0 0
    %6309 = vperm.xlu0 %6308, %v5994
    %v6310 = vpop.permute.xlu0 %6309
    %6311 = vset.pattern.permute.xlu0 0
    %6312 = vperm.xlu0 %6311, %v5995
    %v6313 = vpop.permute.xlu0 %6312
    %6314 = vset.pattern.permute.xlu0 0
    %6315 = vperm.xlu0 %6314, %v5996
    %v6316 = vpop.permute.xlu0 %6315
    %6317 = vset.pattern.permute.xlu0 0
    %6318 = vperm.xlu0 %6317, %v5997
    %v6319 = vpop.permute.xlu0 %6318
    %6320 = vset.pattern.permute.xlu0 0
    %6321 = vperm.xlu0 %6320, %v5998
    %v6322 = vpop.permute.xlu0 %6321
    %6323 = vset.pattern.permute.xlu0 0
    %6324 = vperm.xlu0 %6323, %v5999
    %v6325 = vpop.permute.xlu0 %6324
    %6326 = vset.pattern.permute.xlu0 0
    %6327 = vperm.xlu0 %6326, %v6000
    %v6328 = vpop.permute.xlu0 %6327
    %6329 = vset.pattern.permute.xlu0 0
    %6330 = vperm.xlu0 %6329, %v6001
    %v6331 = vpop.permute.xlu0 %6330
    %6332 = vset.pattern.permute.xlu0 0
    %6333 = vperm.xlu0 %6332, %v6002
    %v6334 = vpop.permute.xlu0 %6333
    %6335 = vset.pattern.permute.xlu0 0
    %6336 = vperm.xlu0 %6335, %v6003
    %v6337 = vpop.permute.xlu0 %6336
    %6338 = vset.pattern.permute.xlu0 0
    %6339 = vperm.xlu0 %6338, %v6004
    %v6340 = vpop.permute.xlu0 %6339
    %6341 = vset.pattern.permute.xlu0 0
    %6342 = vperm.xlu0 %6341, %v6005
    %v6343 = vpop.permute.xlu0 %6342
    %6344 = vset.pattern.permute.xlu0 0
    %6345 = vperm.xlu0 %6344, %v6006
    %v6346 = vpop.permute.xlu0 %6345
    %6347 = vset.pattern.permute.xlu0 0
    %6348 = vperm.xlu0 %6347, %v6007
    %v6349 = vpop.permute.xlu0 %6348
    %6350 = vset.pattern.permute.xlu0 0
    %6351 = vperm.xlu0 %6350, %v6008
    %v6352 = vpop.permute.xlu0 %6351
    %6353 = vset.pattern.permute.xlu0 0
    %6354 = vperm.xlu0 %6353, %v6009
    %v6355 = vpop.permute.xlu0 %6354
    %6356 = vset.pattern.permute.xlu0 0
    %6357 = vperm.xlu0 %6356, %v6010
    %v6358 = vpop.permute.xlu0 %6357
    %6359 = vset.pattern.permute.xlu0 0
    %6360 = vperm.xlu0 %6359, %v6011
    %v6361 = vpop.permute.xlu0 %6360
    %6362 = vset.pattern.permute.xlu0 0
    %6363 = vperm.xlu0 %6362, %v6012
    %v6364 = vpop.permute.xlu0 %6363
    %6365 = vset.pattern.permute.xlu0 0
    %6366 = vperm.xlu0 %6365, %v6013
    %v6367 = vpop.permute.xlu0 %6366
    %6368 = vset.pattern.permute.xlu0 0
    %6369 = vperm.xlu0 %6368, %v6014
    %v6370 = vpop.permute.xlu0 %6369
    %6371 = vset.pattern.permute.xlu0 0
    %6372 = vperm.xlu0 %6371, %v6015
    %v6373 = vpop.permute.xlu0 %6372
    %6374 = vset.pattern.permute.xlu0 0
    %6375 = vperm.xlu0 %6374, %v6016
    %v6376 = vpop.permute.xlu0 %6375
    %6377 = vset.pattern.permute.xlu0 0
    %6378 = vperm.xlu0 %6377, %v6017
    %v6379 = vpop.permute.xlu0 %6378
    %6380 = vset.pattern.permute.xlu0 0
    %6381 = vperm.xlu0 %6380, %v6018
    %v6382 = vpop.permute.xlu0 %6381
    %6383 = vset.pattern.permute.xlu0 0
    %6384 = vperm.xlu0 %6383, %v6019
    %v6385 = vpop.permute.xlu0 %6384
    %6386 = vset.pattern.permute.xlu0 0
    %6387 = vperm.xlu0 %6386, %v6020
    %v6388 = vpop.permute.xlu0 %6387
    %6389 = vset.pattern.permute.xlu0 0
    %6390 = vperm.xlu0 %6389, %v6021
    %v6391 = vpop.permute.xlu0 %6390
    %6392 = vset.pattern.permute.xlu0 0
    %6393 = vperm.xlu0 %6392, %v6022
    %v6394 = vpop.permute.xlu0 %6393
    %6395 = vset.pattern.permute.xlu0 0
    %6396 = vperm.xlu0 %6395, %v6023
    %v6397 = vpop.permute.xlu0 %6396
    %6398 = vset.pattern.permute.xlu0 0
    %6399 = vperm.xlu0 %6398, %v6024
    %v6400 = vpop.permute.xlu0 %6399
    %6401 = vset.pattern.permute.xlu0 0
    %6402 = vperm.xlu0 %6401, %v6025
    %v6403 = vpop.permute.xlu0 %6402
    %6404 = vset.pattern.permute.xlu0 0
    %6405 = vperm.xlu0 %6404, %v6026
    %v6406 = vpop.permute.xlu0 %6405
    %6407 = vset.pattern.permute.xlu0 0
    %6408 = vperm.xlu0 %6407, %v6027
    %v6409 = vpop.permute.xlu0 %6408
    %6410 = vset.pattern.permute.xlu0 0
    %6411 = vperm.xlu0 %6410, %v6028
    %v6412 = vpop.permute.xlu0 %6411
    %vm6413 = vcmp.eq.s32.totalorder %v6031, 1
    %vm6414 = vcmp.eq.s32.totalorder %v6034, 1
    %vm6415 = vcmp.eq.s32.totalorder %v6037, 1
    %vm6416 = vcmp.eq.s32.totalorder %v6040, 1
    %vm6417 = vcmp.eq.s32.totalorder %v6043, 1
    %vm6418 = vcmp.eq.s32.totalorder %v6046, 1
    %vm6419 = vcmp.eq.s32.totalorder %v6049, 1
    %vm6420 = vcmp.eq.s32.totalorder %v6052, 1
    %vm6421 = vcmp.eq.s32.totalorder %v6055, 1
    %vm6422 = vcmp.eq.s32.totalorder %v6058, 1
    %vm6423 = vcmp.eq.s32.totalorder %v6061, 1
    %vm6424 = vcmp.eq.s32.totalorder %v6064, 1
    %vm6425 = vcmp.eq.s32.totalorder %v6067, 1
    %vm6426 = vcmp.eq.s32.totalorder %v6070, 1
    %vm6427 = vcmp.eq.s32.totalorder %v6073, 1
    %vm6428 = vcmp.eq.s32.totalorder %v6076, 1
    %vm6429 = vcmp.eq.s32.totalorder %v6079, 1
    %vm6430 = vcmp.eq.s32.totalorder %v6082, 1
    %vm6431 = vcmp.eq.s32.totalorder %v6085, 1
    %vm6432 = vcmp.eq.s32.totalorder %v6088, 1
    %vm6433 = vcmp.eq.s32.totalorder %v6091, 1
    %vm6434 = vcmp.eq.s32.totalorder %v6094, 1
    %vm6435 = vcmp.eq.s32.totalorder %v6097, 1
    %vm6436 = vcmp.eq.s32.totalorder %v6100, 1
    %vm6437 = vcmp.eq.s32.totalorder %v6103, 1
    %vm6438 = vcmp.eq.s32.totalorder %v6106, 1
    %vm6439 = vcmp.eq.s32.totalorder %v6109, 1
    %vm6440 = vcmp.eq.s32.totalorder %v6112, 1
    %vm6441 = vcmp.eq.s32.totalorder %v6115, 1
    %vm6442 = vcmp.eq.s32.totalorder %v6118, 1
    %vm6443 = vcmp.eq.s32.totalorder %v6121, 1
    %vm6444 = vcmp.eq.s32.totalorder %v6124, 1
    %vm6445 = vcmp.eq.s32.totalorder %v6127, 1
    %vm6446 = vcmp.eq.s32.totalorder %v6130, 1
    %vm6447 = vcmp.eq.s32.totalorder %v6133, 1
    %vm6448 = vcmp.eq.s32.totalorder %v6136, 1
    %vm6449 = vcmp.eq.s32.totalorder %v6139, 1
    %vm6450 = vcmp.eq.s32.totalorder %v6142, 1
    %vm6451 = vcmp.eq.s32.totalorder %v6145, 1
    %vm6452 = vcmp.eq.s32.totalorder %v6148, 1
    %vm6453 = vcmp.eq.s32.totalorder %v6151, 1
    %vm6454 = vcmp.eq.s32.totalorder %v6154, 1
    %vm6455 = vcmp.eq.s32.totalorder %v6157, 1
    %vm6456 = vcmp.eq.s32.totalorder %v6160, 1
    %vm6457 = vcmp.eq.s32.totalorder %v6163, 1
    %vm6458 = vcmp.eq.s32.totalorder %v6166, 1
    %vm6459 = vcmp.eq.s32.totalorder %v6169, 1
    %vm6460 = vcmp.eq.s32.totalorder %v6172, 1
    %vm6461 = vcmp.eq.s32.totalorder %v6175, 1
    %vm6462 = vcmp.eq.s32.totalorder %v6178, 1
    %vm6463 = vcmp.eq.s32.totalorder %v6181, 1
    %vm6464 = vcmp.eq.s32.totalorder %v6184, 1
    %vm6465 = vcmp.eq.s32.totalorder %v6187, 1
    %vm6466 = vcmp.eq.s32.totalorder %v6190, 1
    %vm6467 = vcmp.eq.s32.totalorder %v6193, 1
    %vm6468 = vcmp.eq.s32.totalorder %v6196, 1
    %vm6469 = vcmp.eq.s32.totalorder %v6199, 1
    %vm6470 = vcmp.eq.s32.totalorder %v6202, 1
    %vm6471 = vcmp.eq.s32.totalorder %v6205, 1
    %vm6472 = vcmp.eq.s32.totalorder %v6208, 1
    %vm6473 = vcmp.eq.s32.totalorder %v6211, 1
    %vm6474 = vcmp.eq.s32.totalorder %v6214, 1
    %vm6475 = vcmp.eq.s32.totalorder %v6217, 1
    %vm6476 = vcmp.eq.s32.totalorder %v6220, 1
    %vm6477 = vcmp.eq.s32.totalorder %v6223, 1
    %vm6478 = vcmp.eq.s32.totalorder %v6226, 1
    %vm6479 = vcmp.eq.s32.totalorder %v6229, 1
    %vm6480 = vcmp.eq.s32.totalorder %v6232, 1
    %vm6481 = vcmp.eq.s32.totalorder %v6235, 1
    %vm6482 = vcmp.eq.s32.totalorder %v6238, 1
    %vm6483 = vcmp.eq.s32.totalorder %v6241, 1
    %vm6484 = vcmp.eq.s32.totalorder %v6244, 1
    %vm6485 = vcmp.eq.s32.totalorder %v6247, 1
    %vm6486 = vcmp.eq.s32.totalorder %v6250, 1
    %vm6487 = vcmp.eq.s32.totalorder %v6253, 1
    %vm6488 = vcmp.eq.s32.totalorder %v6256, 1
    %vm6489 = vcmp.eq.s32.totalorder %v6259, 1
    %vm6490 = vcmp.eq.s32.totalorder %v6262, 1
    %vm6491 = vcmp.eq.s32.totalorder %v6265, 1
    %vm6492 = vcmp.eq.s32.totalorder %v6268, 1
    %vm6493 = vcmp.eq.s32.totalorder %v6271, 1
    %vm6494 = vcmp.eq.s32.totalorder %v6274, 1
    %vm6495 = vcmp.eq.s32.totalorder %v6277, 1
    %vm6496 = vcmp.eq.s32.totalorder %v6280, 1
    %vm6497 = vcmp.eq.s32.totalorder %v6283, 1
    %vm6498 = vcmp.eq.s32.totalorder %v6286, 1
    %vm6499 = vcmp.eq.s32.totalorder %v6289, 1
    %vm6500 = vcmp.eq.s32.totalorder %v6292, 1
    %vm6501 = vcmp.eq.s32.totalorder %v6295, 1
    %vm6502 = vcmp.eq.s32.totalorder %v6298, 1
    %vm6503 = vcmp.eq.s32.totalorder %v6301, 1
    %vm6504 = vcmp.eq.s32.totalorder %v6304, 1
    %vm6505 = vcmp.eq.s32.totalorder %v6307, 1
    %vm6506 = vcmp.eq.s32.totalorder %v6310, 1
    %vm6507 = vcmp.eq.s32.totalorder %v6313, 1
    %vm6508 = vcmp.eq.s32.totalorder %v6316, 1
    %vm6509 = vcmp.eq.s32.totalorder %v6319, 1
    %vm6510 = vcmp.eq.s32.totalorder %v6322, 1
    %vm6511 = vcmp.eq.s32.totalorder %v6325, 1
    %vm6512 = vcmp.eq.s32.totalorder %v6328, 1
    %vm6513 = vcmp.eq.s32.totalorder %v6331, 1
    %vm6514 = vcmp.eq.s32.totalorder %v6334, 1
    %vm6515 = vcmp.eq.s32.totalorder %v6337, 1
    %vm6516 = vcmp.eq.s32.totalorder %v6340, 1
    %vm6517 = vcmp.eq.s32.totalorder %v6343, 1
    %vm6518 = vcmp.eq.s32.totalorder %v6346, 1
    %vm6519 = vcmp.eq.s32.totalorder %v6349, 1
    %vm6520 = vcmp.eq.s32.totalorder %v6352, 1
    %vm6521 = vcmp.eq.s32.totalorder %v6355, 1
    %vm6522 = vcmp.eq.s32.totalorder %v6358, 1
    %vm6523 = vcmp.eq.s32.totalorder %v6361, 1
    %vm6524 = vcmp.eq.s32.totalorder %v6364, 1
    %vm6525 = vcmp.eq.s32.totalorder %v6367, 1
    %vm6526 = vcmp.eq.s32.totalorder %v6370, 1
    %vm6527 = vcmp.eq.s32.totalorder %v6373, 1
    %vm6528 = vcmp.eq.s32.totalorder %v6376, 1
    %vm6529 = vcmp.eq.s32.totalorder %v6379, 1
    %vm6530 = vcmp.eq.s32.totalorder %v6382, 1
    %vm6531 = vcmp.eq.s32.totalorder %v6385, 1
    %vm6532 = vcmp.eq.s32.totalorder %v6388, 1
    %vm6533 = vcmp.eq.s32.totalorder %v6391, 1
    %vm6534 = vcmp.eq.s32.totalorder %v6394, 1
    %vm6535 = vcmp.eq.s32.totalorder %v6397, 1
    %vm6536 = vcmp.eq.s32.totalorder %v6400, 1
    %vm6537 = vcmp.eq.s32.totalorder %v6403, 1
    %vm6538 = vcmp.eq.s32.totalorder %v6406, 1
    %vm6539 = vcmp.eq.s32.totalorder %v6409, 1
    %vm6540 = vcmp.eq.s32.totalorder %v6412, 1
    %v6541 = vsel %vm6413, 1.0, 0.0
    %v6542 = vsel %vm6414, 1.0, 0.0
    %v6543 = vsel %vm6415, 1.0, 0.0
    %v6544 = vsel %vm6416, 1.0, 0.0
    %v6545 = vsel %vm6417, 1.0, 0.0
    %v6546 = vsel %vm6418, 1.0, 0.0
    %v6547 = vsel %vm6419, 1.0, 0.0
    %v6548 = vsel %vm6420, 1.0, 0.0
    %v6549 = vsel %vm6421, 1.0, 0.0
    %v6550 = vsel %vm6422, 1.0, 0.0
    %v6551 = vsel %vm6423, 1.0, 0.0
    %v6552 = vsel %vm6424, 1.0, 0.0
    %v6553 = vsel %vm6425, 1.0, 0.0
    %v6554 = vsel %vm6426, 1.0, 0.0
    %v6555 = vsel %vm6427, 1.0, 0.0
    %v6556 = vsel %vm6428, 1.0, 0.0
    %v6557 = vsel %vm6429, 1.0, 0.0
    %v6558 = vsel %vm6430, 1.0, 0.0
    %v6559 = vsel %vm6431, 1.0, 0.0
    %v6560 = vsel %vm6432, 1.0, 0.0
    %v6561 = vsel %vm6433, 1.0, 0.0
    %v6562 = vsel %vm6434, 1.0, 0.0
    %v6563 = vsel %vm6435, 1.0, 0.0
    %v6564 = vsel %vm6436, 1.0, 0.0
    %v6565 = vsel %vm6437, 1.0, 0.0
    %v6566 = vsel %vm6438, 1.0, 0.0
    %v6567 = vsel %vm6439, 1.0, 0.0
    %v6568 = vsel %vm6440, 1.0, 0.0
    %v6569 = vsel %vm6441, 1.0, 0.0
    %v6570 = vsel %vm6442, 1.0, 0.0
    %v6571 = vsel %vm6443, 1.0, 0.0
    %v6572 = vsel %vm6444, 1.0, 0.0
    %v6573 = vsel %vm6445, 1.0, 0.0
    %v6574 = vsel %vm6446, 1.0, 0.0
    %v6575 = vsel %vm6447, 1.0, 0.0
    %v6576 = vsel %vm6448, 1.0, 0.0
    %v6577 = vsel %vm6449, 1.0, 0.0
    %v6578 = vsel %vm6450, 1.0, 0.0
    %v6579 = vsel %vm6451, 1.0, 0.0
    %v6580 = vsel %vm6452, 1.0, 0.0
    %v6581 = vsel %vm6453, 1.0, 0.0
    %v6582 = vsel %vm6454, 1.0, 0.0
    %v6583 = vsel %vm6455, 1.0, 0.0
    %v6584 = vsel %vm6456, 1.0, 0.0
    %v6585 = vsel %vm6457, 1.0, 0.0
    %v6586 = vsel %vm6458, 1.0, 0.0
    %v6587 = vsel %vm6459, 1.0, 0.0
    %v6588 = vsel %vm6460, 1.0, 0.0
    %v6589 = vsel %vm6461, 1.0, 0.0
    %v6590 = vsel %vm6462, 1.0, 0.0
    %v6591 = vsel %vm6463, 1.0, 0.0
    %v6592 = vsel %vm6464, 1.0, 0.0
    %v6593 = vsel %vm6465, 1.0, 0.0
    %v6594 = vsel %vm6466, 1.0, 0.0
    %v6595 = vsel %vm6467, 1.0, 0.0
    %v6596 = vsel %vm6468, 1.0, 0.0
    %v6597 = vsel %vm6469, 1.0, 0.0
    %v6598 = vsel %vm6470, 1.0, 0.0
    %v6599 = vsel %vm6471, 1.0, 0.0
    %v6600 = vsel %vm6472, 1.0, 0.0
    %v6601 = vsel %vm6473, 1.0, 0.0
    %v6602 = vsel %vm6474, 1.0, 0.0
    %v6603 = vsel %vm6475, 1.0, 0.0
    %v6604 = vsel %vm6476, 1.0, 0.0
    %v6605 = vsel %vm6477, 1.0, 0.0
    %v6606 = vsel %vm6478, 1.0, 0.0
    %v6607 = vsel %vm6479, 1.0, 0.0
    %v6608 = vsel %vm6480, 1.0, 0.0
    %v6609 = vsel %vm6481, 1.0, 0.0
    %v6610 = vsel %vm6482, 1.0, 0.0
    %v6611 = vsel %vm6483, 1.0, 0.0
    %v6612 = vsel %vm6484, 1.0, 0.0
    %v6613 = vsel %vm6485, 1.0, 0.0
    %v6614 = vsel %vm6486, 1.0, 0.0
    %v6615 = vsel %vm6487, 1.0, 0.0
    %v6616 = vsel %vm6488, 1.0, 0.0
    %v6617 = vsel %vm6489, 1.0, 0.0
    %v6618 = vsel %vm6490, 1.0, 0.0
    %v6619 = vsel %vm6491, 1.0, 0.0
    %v6620 = vsel %vm6492, 1.0, 0.0
    %v6621 = vsel %vm6493, 1.0, 0.0
    %v6622 = vsel %vm6494, 1.0, 0.0
    %v6623 = vsel %vm6495, 1.0, 0.0
    %v6624 = vsel %vm6496, 1.0, 0.0
    %v6625 = vsel %vm6497, 1.0, 0.0
    %v6626 = vsel %vm6498, 1.0, 0.0
    %v6627 = vsel %vm6499, 1.0, 0.0
    %v6628 = vsel %vm6500, 1.0, 0.0
    %v6629 = vsel %vm6501, 1.0, 0.0
    %v6630 = vsel %vm6502, 1.0, 0.0
    %v6631 = vsel %vm6503, 1.0, 0.0
    %v6632 = vsel %vm6504, 1.0, 0.0
    %v6633 = vsel %vm6505, 1.0, 0.0
    %v6634 = vsel %vm6506, 1.0, 0.0
    %v6635 = vsel %vm6507, 1.0, 0.0
    %v6636 = vsel %vm6508, 1.0, 0.0
    %v6637 = vsel %vm6509, 1.0, 0.0
    %v6638 = vsel %vm6510, 1.0, 0.0
    %v6639 = vsel %vm6511, 1.0, 0.0
    %v6640 = vsel %vm6512, 1.0, 0.0
    %v6641 = vsel %vm6513, 1.0, 0.0
    %v6642 = vsel %vm6514, 1.0, 0.0
    %v6643 = vsel %vm6515, 1.0, 0.0
    %v6644 = vsel %vm6516, 1.0, 0.0
    %v6645 = vsel %vm6517, 1.0, 0.0
    %v6646 = vsel %vm6518, 1.0, 0.0
    %v6647 = vsel %vm6519, 1.0, 0.0
    %v6648 = vsel %vm6520, 1.0, 0.0
    %v6649 = vsel %vm6521, 1.0, 0.0
    %v6650 = vsel %vm6522, 1.0, 0.0
    %v6651 = vsel %vm6523, 1.0, 0.0
    %v6652 = vsel %vm6524, 1.0, 0.0
    %v6653 = vsel %vm6525, 1.0, 0.0
    %v6654 = vsel %vm6526, 1.0, 0.0
    %v6655 = vsel %vm6527, 1.0, 0.0
    %v6656 = vsel %vm6528, 1.0, 0.0
    %v6657 = vsel %vm6529, 1.0, 0.0
    %v6658 = vsel %vm6530, 1.0, 0.0
    %v6659 = vsel %vm6531, 1.0, 0.0
    %v6660 = vsel %vm6532, 1.0, 0.0
    %v6661 = vsel %vm6533, 1.0, 0.0
    %v6662 = vsel %vm6534, 1.0, 0.0
    %v6663 = vsel %vm6535, 1.0, 0.0
    %v6664 = vsel %vm6536, 1.0, 0.0
    %v6665 = vsel %vm6537, 1.0, 0.0
    %v6666 = vsel %vm6538, 1.0, 0.0
    %v6667 = vsel %vm6539, 1.0, 0.0
    %v6668 = vsel %vm6540, 1.0, 0.0
    %v6669 = vmul.f32 %v5645, %v6541
    %v6670 = vmul.f32 %v5646, %v6542
    %v6671 = vmul.f32 %v5647, %v6543
    %v6672 = vmul.f32 %v5648, %v6544
    %v6673 = vmul.f32 %v5649, %v6545
    %v6674 = vmul.f32 %v5650, %v6546
    %v6675 = vmul.f32 %v5651, %v6547
    %v6676 = vmul.f32 %v5652, %v6548
    %v6677 = vmul.f32 %v5653, %v6549
    %v6678 = vmul.f32 %v5654, %v6550
    %v6679 = vmul.f32 %v5655, %v6551
    %v6680 = vmul.f32 %v5656, %v6552
    %v6681 = vmul.f32 %v5657, %v6553
    %v6682 = vmul.f32 %v5658, %v6554
    %v6683 = vmul.f32 %v5659, %v6555
    %v6684 = vmul.f32 %v5660, %v6556
    %v6685 = vmul.f32 %v5661, %v6557
    %v6686 = vmul.f32 %v5662, %v6558
    %v6687 = vmul.f32 %v5663, %v6559
    %v6688 = vmul.f32 %v5664, %v6560
    %v6689 = vmul.f32 %v5665, %v6561
    %v6690 = vmul.f32 %v5666, %v6562
    %v6691 = vmul.f32 %v5667, %v6563
    %v6692 = vmul.f32 %v5668, %v6564
    %v6693 = vmul.f32 %v5669, %v6565
    %v6694 = vmul.f32 %v5670, %v6566
    %v6695 = vmul.f32 %v5671, %v6567
    %v6696 = vmul.f32 %v5672, %v6568
    %v6697 = vmul.f32 %v5673, %v6569
    %v6698 = vmul.f32 %v5674, %v6570
    %v6699 = vmul.f32 %v5675, %v6571
    %v6700 = vmul.f32 %v5676, %v6572
    %v6701 = vmul.f32 %v5677, %v6573
    %v6702 = vmul.f32 %v5678, %v6574
    %v6703 = vmul.f32 %v5679, %v6575
    %v6704 = vmul.f32 %v5680, %v6576
    %v6705 = vmul.f32 %v5681, %v6577
    %v6706 = vmul.f32 %v5682, %v6578
    %v6707 = vmul.f32 %v5683, %v6579
    %v6708 = vmul.f32 %v5684, %v6580
    %v6709 = vmul.f32 %v5685, %v6581
    %v6710 = vmul.f32 %v5686, %v6582
    %v6711 = vmul.f32 %v5687, %v6583
    %v6712 = vmul.f32 %v5688, %v6584
    %v6713 = vmul.f32 %v5689, %v6585
    %v6714 = vmul.f32 %v5690, %v6586
    %v6715 = vmul.f32 %v5691, %v6587
    %v6716 = vmul.f32 %v5692, %v6588
    %v6717 = vmul.f32 %v5693, %v6589
    %v6718 = vmul.f32 %v5694, %v6590
    %v6719 = vmul.f32 %v5695, %v6591
    %v6720 = vmul.f32 %v5696, %v6592
    %v6721 = vmul.f32 %v5697, %v6593
    %v6722 = vmul.f32 %v5698, %v6594
    %v6723 = vmul.f32 %v5699, %v6595
    %v6724 = vmul.f32 %v5700, %v6596
    %v6725 = vmul.f32 %v5701, %v6597
    %v6726 = vmul.f32 %v5702, %v6598
    %v6727 = vmul.f32 %v5703, %v6599
    %v6728 = vmul.f32 %v5704, %v6600
    %v6729 = vmul.f32 %v5705, %v6601
    %v6730 = vmul.f32 %v5706, %v6602
    %v6731 = vmul.f32 %v5707, %v6603
    %v6732 = vmul.f32 %v5708, %v6604
    %v6733 = vmul.f32 %v5709, %v6605
    %v6734 = vmul.f32 %v5710, %v6606
    %v6735 = vmul.f32 %v5711, %v6607
    %v6736 = vmul.f32 %v5712, %v6608
    %v6737 = vmul.f32 %v5713, %v6609
    %v6738 = vmul.f32 %v5714, %v6610
    %v6739 = vmul.f32 %v5715, %v6611
    %v6740 = vmul.f32 %v5716, %v6612
    %v6741 = vmul.f32 %v5717, %v6613
    %v6742 = vmul.f32 %v5718, %v6614
    %v6743 = vmul.f32 %v5719, %v6615
    %v6744 = vmul.f32 %v5720, %v6616
    %v6745 = vmul.f32 %v5721, %v6617
    %v6746 = vmul.f32 %v5722, %v6618
    %v6747 = vmul.f32 %v5723, %v6619
    %v6748 = vmul.f32 %v5724, %v6620
    %v6749 = vmul.f32 %v5725, %v6621
    %v6750 = vmul.f32 %v5726, %v6622
    %v6751 = vmul.f32 %v5727, %v6623
    %v6752 = vmul.f32 %v5728, %v6624
    %v6753 = vmul.f32 %v5729, %v6625
    %v6754 = vmul.f32 %v5730, %v6626
    %v6755 = vmul.f32 %v5731, %v6627
    %v6756 = vmul.f32 %v5732, %v6628
    %v6757 = vmul.f32 %v5733, %v6629
    %v6758 = vmul.f32 %v5734, %v6630
    %v6759 = vmul.f32 %v5735, %v6631
    %v6760 = vmul.f32 %v5736, %v6632
    %v6761 = vmul.f32 %v5737, %v6633
    %v6762 = vmul.f32 %v5738, %v6634
    %v6763 = vmul.f32 %v5739, %v6635
    %v6764 = vmul.f32 %v5740, %v6636
    %v6765 = vmul.f32 %v5741, %v6637
    %v6766 = vmul.f32 %v5742, %v6638
    %v6767 = vmul.f32 %v5743, %v6639
    %v6768 = vmul.f32 %v5744, %v6640
    %v6769 = vmul.f32 %v5745, %v6641
    %v6770 = vmul.f32 %v5746, %v6642
    %v6771 = vmul.f32 %v5747, %v6643
    %v6772 = vmul.f32 %v5748, %v6644
    %v6773 = vmul.f32 %v5749, %v6645
    %v6774 = vmul.f32 %v5750, %v6646
    %v6775 = vmul.f32 %v5751, %v6647
    %v6776 = vmul.f32 %v5752, %v6648
    %v6777 = vmul.f32 %v5753, %v6649
    %v6778 = vmul.f32 %v5754, %v6650
    %v6779 = vmul.f32 %v5755, %v6651
    %v6780 = vmul.f32 %v5756, %v6652
    %v6781 = vmul.f32 %v5757, %v6653
    %v6782 = vmul.f32 %v5758, %v6654
    %v6783 = vmul.f32 %v5759, %v6655
    %v6784 = vmul.f32 %v5760, %v6656
    %v6785 = vmul.f32 %v5761, %v6657
    %v6786 = vmul.f32 %v5762, %v6658
    %v6787 = vmul.f32 %v5763, %v6659
    %v6788 = vmul.f32 %v5764, %v6660
    %v6789 = vmul.f32 %v5765, %v6661
    %v6790 = vmul.f32 %v5766, %v6662
    %v6791 = vmul.f32 %v5767, %v6663
    %v6792 = vmul.f32 %v5768, %v6664
    %v6793 = vmul.f32 %v5769, %v6665
    %v6794 = vmul.f32 %v5770, %v6666
    %v6795 = vmul.f32 %v5771, %v6667
    %v6796 = vmul.f32 %v5772, %v6668
    %vm6797 = vcmask 130048
    %v6798 = vsel %vm6797, %v6669, 0.0
    %v6799 = vrot.slane %v6798, 4
    %v6800 = vadd.f32 %v6798, %v6799
    %v6801 = vrot.slane %v6800, 2
    %v6802 = vadd.f32 %v6800, %v6801
    %v6803 = vrot.slane %v6802, 1
    %v6804 = vadd.f32 %v6802, %v6803
    %v6805 = vsel %vm6797, %v6670, 0.0
    %v6806 = vrot.slane %v6805, 4
    %v6807 = vadd.f32 %v6805, %v6806
    %v6808 = vrot.slane %v6807, 2
    %v6809 = vadd.f32 %v6807, %v6808
    %v6810 = vrot.slane %v6809, 1
    %v6811 = vadd.f32 %v6809, %v6810
    %v6812 = vsel %vm6797, %v6671, 0.0
    %v6813 = vrot.slane %v6812, 4
    %v6814 = vadd.f32 %v6812, %v6813
    %v6815 = vrot.slane %v6814, 2
    %v6816 = vadd.f32 %v6814, %v6815
    %v6817 = vrot.slane %v6816, 1
    %v6818 = vadd.f32 %v6816, %v6817
    %v6819 = vsel %vm6797, %v6672, 0.0
    %v6820 = vrot.slane %v6819, 4
    %v6821 = vadd.f32 %v6819, %v6820
    %v6822 = vrot.slane %v6821, 2
    %v6823 = vadd.f32 %v6821, %v6822
    %v6824 = vrot.slane %v6823, 1
    %v6825 = vadd.f32 %v6823, %v6824
    %v6826 = vsel %vm6797, %v6673, 0.0
    %v6827 = vrot.slane %v6826, 4
    %v6828 = vadd.f32 %v6826, %v6827
    %v6829 = vrot.slane %v6828, 2
    %v6830 = vadd.f32 %v6828, %v6829
    %v6831 = vrot.slane %v6830, 1
    %v6832 = vadd.f32 %v6830, %v6831
    %v6833 = vsel %vm6797, %v6674, 0.0
    %v6834 = vrot.slane %v6833, 4
    %v6835 = vadd.f32 %v6833, %v6834
    %v6836 = vrot.slane %v6835, 2
    %v6837 = vadd.f32 %v6835, %v6836
    %v6838 = vrot.slane %v6837, 1
    %v6839 = vadd.f32 %v6837, %v6838
    %v6840 = vsel %vm6797, %v6675, 0.0
    %v6841 = vrot.slane %v6840, 4
    %v6842 = vadd.f32 %v6840, %v6841
    %v6843 = vrot.slane %v6842, 2
    %v6844 = vadd.f32 %v6842, %v6843
    %v6845 = vrot.slane %v6844, 1
    %v6846 = vadd.f32 %v6844, %v6845
    %v6847 = vsel %vm6797, %v6676, 0.0
    %v6848 = vrot.slane %v6847, 4
    %v6849 = vadd.f32 %v6847, %v6848
    %v6850 = vrot.slane %v6849, 2
    %v6851 = vadd.f32 %v6849, %v6850
    %v6852 = vrot.slane %v6851, 1
    %v6853 = vadd.f32 %v6851, %v6852
    %v6854 = vsel %vm6797, %v6677, 0.0
    %v6855 = vrot.slane %v6854, 4
    %v6856 = vadd.f32 %v6854, %v6855
    %v6857 = vrot.slane %v6856, 2
    %v6858 = vadd.f32 %v6856, %v6857
    %v6859 = vrot.slane %v6858, 1
    %v6860 = vadd.f32 %v6858, %v6859
    %v6861 = vsel %vm6797, %v6678, 0.0
    %v6862 = vrot.slane %v6861, 4
    %v6863 = vadd.f32 %v6861, %v6862
    %v6864 = vrot.slane %v6863, 2
    %v6865 = vadd.f32 %v6863, %v6864
    %v6866 = vrot.slane %v6865, 1
    %v6867 = vadd.f32 %v6865, %v6866
    %v6868 = vsel %vm6797, %v6679, 0.0
    %v6869 = vrot.slane %v6868, 4
    %v6870 = vadd.f32 %v6868, %v6869
    %v6871 = vrot.slane %v6870, 2
    %v6872 = vadd.f32 %v6870, %v6871
    %v6873 = vrot.slane %v6872, 1
    %v6874 = vadd.f32 %v6872, %v6873
    %v6875 = vsel %vm6797, %v6680, 0.0
    %v6876 = vrot.slane %v6875, 4
    %v6877 = vadd.f32 %v6875, %v6876
    %v6878 = vrot.slane %v6877, 2
    %v6879 = vadd.f32 %v6877, %v6878
    %v6880 = vrot.slane %v6879, 1
    %v6881 = vadd.f32 %v6879, %v6880
    %v6882 = vsel %vm6797, %v6681, 0.0
    %v6883 = vrot.slane %v6882, 4
    %v6884 = vadd.f32 %v6882, %v6883
    %v6885 = vrot.slane %v6884, 2
    %v6886 = vadd.f32 %v6884, %v6885
    %v6887 = vrot.slane %v6886, 1
    %v6888 = vadd.f32 %v6886, %v6887
    %v6889 = vsel %vm6797, %v6682, 0.0
    %v6890 = vrot.slane %v6889, 4
    %v6891 = vadd.f32 %v6889, %v6890
    %v6892 = vrot.slane %v6891, 2
    %v6893 = vadd.f32 %v6891, %v6892
    %v6894 = vrot.slane %v6893, 1
    %v6895 = vadd.f32 %v6893, %v6894
    %v6896 = vsel %vm6797, %v6683, 0.0
    %v6897 = vrot.slane %v6896, 4
    %v6898 = vadd.f32 %v6896, %v6897
    %v6899 = vrot.slane %v6898, 2
    %v6900 = vadd.f32 %v6898, %v6899
    %v6901 = vrot.slane %v6900, 1
    %v6902 = vadd.f32 %v6900, %v6901
    %v6903 = vsel %vm6797, %v6684, 0.0
    %v6904 = vrot.slane %v6903, 4
    %v6905 = vadd.f32 %v6903, %v6904
    %v6906 = vrot.slane %v6905, 2
    %v6907 = vadd.f32 %v6905, %v6906
    %v6908 = vrot.slane %v6907, 1
    %v6909 = vadd.f32 %v6907, %v6908
    %v6910 = vsel %vm6797, %v6685, 0.0
    %v6911 = vrot.slane %v6910, 4
    %v6912 = vadd.f32 %v6910, %v6911
    %v6913 = vrot.slane %v6912, 2
    %v6914 = vadd.f32 %v6912, %v6913
    %v6915 = vrot.slane %v6914, 1
    %v6916 = vadd.f32 %v6914, %v6915
    %v6917 = vsel %vm6797, %v6686, 0.0
    %v6918 = vrot.slane %v6917, 4
    %v6919 = vadd.f32 %v6917, %v6918
    %v6920 = vrot.slane %v6919, 2
    %v6921 = vadd.f32 %v6919, %v6920
    %v6922 = vrot.slane %v6921, 1
    %v6923 = vadd.f32 %v6921, %v6922
    %v6924 = vsel %vm6797, %v6687, 0.0
    %v6925 = vrot.slane %v6924, 4
    %v6926 = vadd.f32 %v6924, %v6925
    %v6927 = vrot.slane %v6926, 2
    %v6928 = vadd.f32 %v6926, %v6927
    %v6929 = vrot.slane %v6928, 1
    %v6930 = vadd.f32 %v6928, %v6929
    %v6931 = vsel %vm6797, %v6688, 0.0
    %v6932 = vrot.slane %v6931, 4
    %v6933 = vadd.f32 %v6931, %v6932
    %v6934 = vrot.slane %v6933, 2
    %v6935 = vadd.f32 %v6933, %v6934
    %v6936 = vrot.slane %v6935, 1
    %v6937 = vadd.f32 %v6935, %v6936
    %v6938 = vsel %vm6797, %v6689, 0.0
    %v6939 = vrot.slane %v6938, 4
    %v6940 = vadd.f32 %v6938, %v6939
    %v6941 = vrot.slane %v6940, 2
    %v6942 = vadd.f32 %v6940, %v6941
    %v6943 = vrot.slane %v6942, 1
    %v6944 = vadd.f32 %v6942, %v6943
    %v6945 = vsel %vm6797, %v6690, 0.0
    %v6946 = vrot.slane %v6945, 4
    %v6947 = vadd.f32 %v6945, %v6946
    %v6948 = vrot.slane %v6947, 2
    %v6949 = vadd.f32 %v6947, %v6948
    %v6950 = vrot.slane %v6949, 1
    %v6951 = vadd.f32 %v6949, %v6950
    %v6952 = vsel %vm6797, %v6691, 0.0
    %v6953 = vrot.slane %v6952, 4
    %v6954 = vadd.f32 %v6952, %v6953
    %v6955 = vrot.slane %v6954, 2
    %v6956 = vadd.f32 %v6954, %v6955
    %v6957 = vrot.slane %v6956, 1
    %v6958 = vadd.f32 %v6956, %v6957
    %v6959 = vsel %vm6797, %v6692, 0.0
    %v6960 = vrot.slane %v6959, 4
    %v6961 = vadd.f32 %v6959, %v6960
    %v6962 = vrot.slane %v6961, 2
    %v6963 = vadd.f32 %v6961, %v6962
    %v6964 = vrot.slane %v6963, 1
    %v6965 = vadd.f32 %v6963, %v6964
    %v6966 = vsel %vm6797, %v6693, 0.0
    %v6967 = vrot.slane %v6966, 4
    %v6968 = vadd.f32 %v6966, %v6967
    %v6969 = vrot.slane %v6968, 2
    %v6970 = vadd.f32 %v6968, %v6969
    %v6971 = vrot.slane %v6970, 1
    %v6972 = vadd.f32 %v6970, %v6971
    %v6973 = vsel %vm6797, %v6694, 0.0
    %v6974 = vrot.slane %v6973, 4
    %v6975 = vadd.f32 %v6973, %v6974
    %v6976 = vrot.slane %v6975, 2
    %v6977 = vadd.f32 %v6975, %v6976
    %v6978 = vrot.slane %v6977, 1
    %v6979 = vadd.f32 %v6977, %v6978
    %v6980 = vsel %vm6797, %v6695, 0.0
    %v6981 = vrot.slane %v6980, 4
    %v6982 = vadd.f32 %v6980, %v6981
    %v6983 = vrot.slane %v6982, 2
    %v6984 = vadd.f32 %v6982, %v6983
    %v6985 = vrot.slane %v6984, 1
    %v6986 = vadd.f32 %v6984, %v6985
    %v6987 = vsel %vm6797, %v6696, 0.0
    %v6988 = vrot.slane %v6987, 4
    %v6989 = vadd.f32 %v6987, %v6988
    %v6990 = vrot.slane %v6989, 2
    %v6991 = vadd.f32 %v6989, %v6990
    %v6992 = vrot.slane %v6991, 1
    %v6993 = vadd.f32 %v6991, %v6992
    %v6994 = vsel %vm6797, %v6697, 0.0
    %v6995 = vrot.slane %v6994, 4
    %v6996 = vadd.f32 %v6994, %v6995
    %v6997 = vrot.slane %v6996, 2
    %v6998 = vadd.f32 %v6996, %v6997
    %v6999 = vrot.slane %v6998, 1
    %v7000 = vadd.f32 %v6998, %v6999
    %v7001 = vsel %vm6797, %v6698, 0.0
    %v7002 = vrot.slane %v7001, 4
    %v7003 = vadd.f32 %v7001, %v7002
    %v7004 = vrot.slane %v7003, 2
    %v7005 = vadd.f32 %v7003, %v7004
    %v7006 = vrot.slane %v7005, 1
    %v7007 = vadd.f32 %v7005, %v7006
    %v7008 = vsel %vm6797, %v6699, 0.0
    %v7009 = vrot.slane %v7008, 4
    %v7010 = vadd.f32 %v7008, %v7009
    %v7011 = vrot.slane %v7010, 2
    %v7012 = vadd.f32 %v7010, %v7011
    %v7013 = vrot.slane %v7012, 1
    %v7014 = vadd.f32 %v7012, %v7013
    %v7015 = vsel %vm6797, %v6700, 0.0
    %v7016 = vrot.slane %v7015, 4
    %v7017 = vadd.f32 %v7015, %v7016
    %v7018 = vrot.slane %v7017, 2
    %v7019 = vadd.f32 %v7017, %v7018
    %v7020 = vrot.slane %v7019, 1
    %v7021 = vadd.f32 %v7019, %v7020
    %v7022 = vsel %vm6797, %v6701, 0.0
    %v7023 = vrot.slane %v7022, 4
    %v7024 = vadd.f32 %v7022, %v7023
    %v7025 = vrot.slane %v7024, 2
    %v7026 = vadd.f32 %v7024, %v7025
    %v7027 = vrot.slane %v7026, 1
    %v7028 = vadd.f32 %v7026, %v7027
    %v7029 = vsel %vm6797, %v6702, 0.0
    %v7030 = vrot.slane %v7029, 4
    %v7031 = vadd.f32 %v7029, %v7030
    %v7032 = vrot.slane %v7031, 2
    %v7033 = vadd.f32 %v7031, %v7032
    %v7034 = vrot.slane %v7033, 1
    %v7035 = vadd.f32 %v7033, %v7034
    %v7036 = vsel %vm6797, %v6703, 0.0
    %v7037 = vrot.slane %v7036, 4
    %v7038 = vadd.f32 %v7036, %v7037
    %v7039 = vrot.slane %v7038, 2
    %v7040 = vadd.f32 %v7038, %v7039
    %v7041 = vrot.slane %v7040, 1
    %v7042 = vadd.f32 %v7040, %v7041
    %v7043 = vsel %vm6797, %v6704, 0.0
    %v7044 = vrot.slane %v7043, 4
    %v7045 = vadd.f32 %v7043, %v7044
    %v7046 = vrot.slane %v7045, 2
    %v7047 = vadd.f32 %v7045, %v7046
    %v7048 = vrot.slane %v7047, 1
    %v7049 = vadd.f32 %v7047, %v7048
    %v7050 = vsel %vm6797, %v6705, 0.0
    %v7051 = vrot.slane %v7050, 4
    %v7052 = vadd.f32 %v7050, %v7051
    %v7053 = vrot.slane %v7052, 2
    %v7054 = vadd.f32 %v7052, %v7053
    %v7055 = vrot.slane %v7054, 1
    %v7056 = vadd.f32 %v7054, %v7055
    %v7057 = vsel %vm6797, %v6706, 0.0
    %v7058 = vrot.slane %v7057, 4
    %v7059 = vadd.f32 %v7057, %v7058
    %v7060 = vrot.slane %v7059, 2
    %v7061 = vadd.f32 %v7059, %v7060
    %v7062 = vrot.slane %v7061, 1
    %v7063 = vadd.f32 %v7061, %v7062
    %v7064 = vsel %vm6797, %v6707, 0.0
    %v7065 = vrot.slane %v7064, 4
    %v7066 = vadd.f32 %v7064, %v7065
    %v7067 = vrot.slane %v7066, 2
    %v7068 = vadd.f32 %v7066, %v7067
    %v7069 = vrot.slane %v7068, 1
    %v7070 = vadd.f32 %v7068, %v7069
    %v7071 = vsel %vm6797, %v6708, 0.0
    %v7072 = vrot.slane %v7071, 4
    %v7073 = vadd.f32 %v7071, %v7072
    %v7074 = vrot.slane %v7073, 2
    %v7075 = vadd.f32 %v7073, %v7074
    %v7076 = vrot.slane %v7075, 1
    %v7077 = vadd.f32 %v7075, %v7076
    %v7078 = vsel %vm6797, %v6709, 0.0
    %v7079 = vrot.slane %v7078, 4
    %v7080 = vadd.f32 %v7078, %v7079
    %v7081 = vrot.slane %v7080, 2
    %v7082 = vadd.f32 %v7080, %v7081
    %v7083 = vrot.slane %v7082, 1
    %v7084 = vadd.f32 %v7082, %v7083
    %v7085 = vsel %vm6797, %v6710, 0.0
    %v7086 = vrot.slane %v7085, 4
    %v7087 = vadd.f32 %v7085, %v7086
    %v7088 = vrot.slane %v7087, 2
    %v7089 = vadd.f32 %v7087, %v7088
    %v7090 = vrot.slane %v7089, 1
    %v7091 = vadd.f32 %v7089, %v7090
    %v7092 = vsel %vm6797, %v6711, 0.0
    %v7093 = vrot.slane %v7092, 4
    %v7094 = vadd.f32 %v7092, %v7093
    %v7095 = vrot.slane %v7094, 2
    %v7096 = vadd.f32 %v7094, %v7095
    %v7097 = vrot.slane %v7096, 1
    %v7098 = vadd.f32 %v7096, %v7097
    %v7099 = vsel %vm6797, %v6712, 0.0
    %v7100 = vrot.slane %v7099, 4
    %v7101 = vadd.f32 %v7099, %v7100
    %v7102 = vrot.slane %v7101, 2
    %v7103 = vadd.f32 %v7101, %v7102
    %v7104 = vrot.slane %v7103, 1
    %v7105 = vadd.f32 %v7103, %v7104
    %v7106 = vsel %vm6797, %v6713, 0.0
    %v7107 = vrot.slane %v7106, 4
    %v7108 = vadd.f32 %v7106, %v7107
    %v7109 = vrot.slane %v7108, 2
    %v7110 = vadd.f32 %v7108, %v7109
    %v7111 = vrot.slane %v7110, 1
    %v7112 = vadd.f32 %v7110, %v7111
    %v7113 = vsel %vm6797, %v6714, 0.0
    %v7114 = vrot.slane %v7113, 4
    %v7115 = vadd.f32 %v7113, %v7114
    %v7116 = vrot.slane %v7115, 2
    %v7117 = vadd.f32 %v7115, %v7116
    %v7118 = vrot.slane %v7117, 1
    %v7119 = vadd.f32 %v7117, %v7118
    %v7120 = vsel %vm6797, %v6715, 0.0
    %v7121 = vrot.slane %v7120, 4
    %v7122 = vadd.f32 %v7120, %v7121
    %v7123 = vrot.slane %v7122, 2
    %v7124 = vadd.f32 %v7122, %v7123
    %v7125 = vrot.slane %v7124, 1
    %v7126 = vadd.f32 %v7124, %v7125
    %v7127 = vsel %vm6797, %v6716, 0.0
    %v7128 = vrot.slane %v7127, 4
    %v7129 = vadd.f32 %v7127, %v7128
    %v7130 = vrot.slane %v7129, 2
    %v7131 = vadd.f32 %v7129, %v7130
    %v7132 = vrot.slane %v7131, 1
    %v7133 = vadd.f32 %v7131, %v7132
    %v7134 = vsel %vm6797, %v6717, 0.0
    %v7135 = vrot.slane %v7134, 4
    %v7136 = vadd.f32 %v7134, %v7135
    %v7137 = vrot.slane %v7136, 2
    %v7138 = vadd.f32 %v7136, %v7137
    %v7139 = vrot.slane %v7138, 1
    %v7140 = vadd.f32 %v7138, %v7139
    %v7141 = vsel %vm6797, %v6718, 0.0
    %v7142 = vrot.slane %v7141, 4
    %v7143 = vadd.f32 %v7141, %v7142
    %v7144 = vrot.slane %v7143, 2
    %v7145 = vadd.f32 %v7143, %v7144
    %v7146 = vrot.slane %v7145, 1
    %v7147 = vadd.f32 %v7145, %v7146
    %v7148 = vsel %vm6797, %v6719, 0.0
    %v7149 = vrot.slane %v7148, 4
    %v7150 = vadd.f32 %v7148, %v7149
    %v7151 = vrot.slane %v7150, 2
    %v7152 = vadd.f32 %v7150, %v7151
    %v7153 = vrot.slane %v7152, 1
    %v7154 = vadd.f32 %v7152, %v7153
    %v7155 = vsel %vm6797, %v6720, 0.0
    %v7156 = vrot.slane %v7155, 4
    %v7157 = vadd.f32 %v7155, %v7156
    %v7158 = vrot.slane %v7157, 2
    %v7159 = vadd.f32 %v7157, %v7158
    %v7160 = vrot.slane %v7159, 1
    %v7161 = vadd.f32 %v7159, %v7160
    %v7162 = vsel %vm6797, %v6721, 0.0
    %v7163 = vrot.slane %v7162, 4
    %v7164 = vadd.f32 %v7162, %v7163
    %v7165 = vrot.slane %v7164, 2
    %v7166 = vadd.f32 %v7164, %v7165
    %v7167 = vrot.slane %v7166, 1
    %v7168 = vadd.f32 %v7166, %v7167
    %v7169 = vsel %vm6797, %v6722, 0.0
    %v7170 = vrot.slane %v7169, 4
    %v7171 = vadd.f32 %v7169, %v7170
    %v7172 = vrot.slane %v7171, 2
    %v7173 = vadd.f32 %v7171, %v7172
    %v7174 = vrot.slane %v7173, 1
    %v7175 = vadd.f32 %v7173, %v7174
    %v7176 = vsel %vm6797, %v6723, 0.0
    %v7177 = vrot.slane %v7176, 4
    %v7178 = vadd.f32 %v7176, %v7177
    %v7179 = vrot.slane %v7178, 2
    %v7180 = vadd.f32 %v7178, %v7179
    %v7181 = vrot.slane %v7180, 1
    %v7182 = vadd.f32 %v7180, %v7181
    %v7183 = vsel %vm6797, %v6724, 0.0
    %v7184 = vrot.slane %v7183, 4
    %v7185 = vadd.f32 %v7183, %v7184
    %v7186 = vrot.slane %v7185, 2
    %v7187 = vadd.f32 %v7185, %v7186
    %v7188 = vrot.slane %v7187, 1
    %v7189 = vadd.f32 %v7187, %v7188
    %v7190 = vsel %vm6797, %v6725, 0.0
    %v7191 = vrot.slane %v7190, 4
    %v7192 = vadd.f32 %v7190, %v7191
    %v7193 = vrot.slane %v7192, 2
    %v7194 = vadd.f32 %v7192, %v7193
    %v7195 = vrot.slane %v7194, 1
    %v7196 = vadd.f32 %v7194, %v7195
    %v7197 = vsel %vm6797, %v6726, 0.0
    %v7198 = vrot.slane %v7197, 4
    %v7199 = vadd.f32 %v7197, %v7198
    %v7200 = vrot.slane %v7199, 2
    %v7201 = vadd.f32 %v7199, %v7200
    %v7202 = vrot.slane %v7201, 1
    %v7203 = vadd.f32 %v7201, %v7202
    %v7204 = vsel %vm6797, %v6727, 0.0
    %v7205 = vrot.slane %v7204, 4
    %v7206 = vadd.f32 %v7204, %v7205
    %v7207 = vrot.slane %v7206, 2
    %v7208 = vadd.f32 %v7206, %v7207
    %v7209 = vrot.slane %v7208, 1
    %v7210 = vadd.f32 %v7208, %v7209
    %v7211 = vsel %vm6797, %v6728, 0.0
    %v7212 = vrot.slane %v7211, 4
    %v7213 = vadd.f32 %v7211, %v7212
    %v7214 = vrot.slane %v7213, 2
    %v7215 = vadd.f32 %v7213, %v7214
    %v7216 = vrot.slane %v7215, 1
    %v7217 = vadd.f32 %v7215, %v7216
    %v7218 = vsel %vm6797, %v6729, 0.0
    %v7219 = vrot.slane %v7218, 4
    %v7220 = vadd.f32 %v7218, %v7219
    %v7221 = vrot.slane %v7220, 2
    %v7222 = vadd.f32 %v7220, %v7221
    %v7223 = vrot.slane %v7222, 1
    %v7224 = vadd.f32 %v7222, %v7223
    %v7225 = vsel %vm6797, %v6730, 0.0
    %v7226 = vrot.slane %v7225, 4
    %v7227 = vadd.f32 %v7225, %v7226
    %v7228 = vrot.slane %v7227, 2
    %v7229 = vadd.f32 %v7227, %v7228
    %v7230 = vrot.slane %v7229, 1
    %v7231 = vadd.f32 %v7229, %v7230
    %v7232 = vsel %vm6797, %v6731, 0.0
    %v7233 = vrot.slane %v7232, 4
    %v7234 = vadd.f32 %v7232, %v7233
    %v7235 = vrot.slane %v7234, 2
    %v7236 = vadd.f32 %v7234, %v7235
    %v7237 = vrot.slane %v7236, 1
    %v7238 = vadd.f32 %v7236, %v7237
    %v7239 = vsel %vm6797, %v6732, 0.0
    %v7240 = vrot.slane %v7239, 4
    %v7241 = vadd.f32 %v7239, %v7240
    %v7242 = vrot.slane %v7241, 2
    %v7243 = vadd.f32 %v7241, %v7242
    %v7244 = vrot.slane %v7243, 1
    %v7245 = vadd.f32 %v7243, %v7244
    %v7246 = vsel %vm6797, %v6733, 0.0
    %v7247 = vrot.slane %v7246, 4
    %v7248 = vadd.f32 %v7246, %v7247
    %v7249 = vrot.slane %v7248, 2
    %v7250 = vadd.f32 %v7248, %v7249
    %v7251 = vrot.slane %v7250, 1
    %v7252 = vadd.f32 %v7250, %v7251
    %v7253 = vsel %vm6797, %v6734, 0.0
    %v7254 = vrot.slane %v7253, 4
    %v7255 = vadd.f32 %v7253, %v7254
    %v7256 = vrot.slane %v7255, 2
    %v7257 = vadd.f32 %v7255, %v7256
    %v7258 = vrot.slane %v7257, 1
    %v7259 = vadd.f32 %v7257, %v7258
    %v7260 = vsel %vm6797, %v6735, 0.0
    %v7261 = vrot.slane %v7260, 4
    %v7262 = vadd.f32 %v7260, %v7261
    %v7263 = vrot.slane %v7262, 2
    %v7264 = vadd.f32 %v7262, %v7263
    %v7265 = vrot.slane %v7264, 1
    %v7266 = vadd.f32 %v7264, %v7265
    %v7267 = vsel %vm6797, %v6736, 0.0
    %v7268 = vrot.slane %v7267, 4
    %v7269 = vadd.f32 %v7267, %v7268
    %v7270 = vrot.slane %v7269, 2
    %v7271 = vadd.f32 %v7269, %v7270
    %v7272 = vrot.slane %v7271, 1
    %v7273 = vadd.f32 %v7271, %v7272
    %v7274 = vsel %vm6797, %v6737, 0.0
    %v7275 = vrot.slane %v7274, 4
    %v7276 = vadd.f32 %v7274, %v7275
    %v7277 = vrot.slane %v7276, 2
    %v7278 = vadd.f32 %v7276, %v7277
    %v7279 = vrot.slane %v7278, 1
    %v7280 = vadd.f32 %v7278, %v7279
    %v7281 = vsel %vm6797, %v6738, 0.0
    %v7282 = vrot.slane %v7281, 4
    %v7283 = vadd.f32 %v7281, %v7282
    %v7284 = vrot.slane %v7283, 2
    %v7285 = vadd.f32 %v7283, %v7284
    %v7286 = vrot.slane %v7285, 1
    %v7287 = vadd.f32 %v7285, %v7286
    %v7288 = vsel %vm6797, %v6739, 0.0
    %v7289 = vrot.slane %v7288, 4
    %v7290 = vadd.f32 %v7288, %v7289
    %v7291 = vrot.slane %v7290, 2
    %v7292 = vadd.f32 %v7290, %v7291
    %v7293 = vrot.slane %v7292, 1
    %v7294 = vadd.f32 %v7292, %v7293
    %v7295 = vsel %vm6797, %v6740, 0.0
    %v7296 = vrot.slane %v7295, 4
    %v7297 = vadd.f32 %v7295, %v7296
    %v7298 = vrot.slane %v7297, 2
    %v7299 = vadd.f32 %v7297, %v7298
    %v7300 = vrot.slane %v7299, 1
    %v7301 = vadd.f32 %v7299, %v7300
    %v7302 = vsel %vm6797, %v6741, 0.0
    %v7303 = vrot.slane %v7302, 4
    %v7304 = vadd.f32 %v7302, %v7303
    %v7305 = vrot.slane %v7304, 2
    %v7306 = vadd.f32 %v7304, %v7305
    %v7307 = vrot.slane %v7306, 1
    %v7308 = vadd.f32 %v7306, %v7307
    %v7309 = vsel %vm6797, %v6742, 0.0
    %v7310 = vrot.slane %v7309, 4
    %v7311 = vadd.f32 %v7309, %v7310
    %v7312 = vrot.slane %v7311, 2
    %v7313 = vadd.f32 %v7311, %v7312
    %v7314 = vrot.slane %v7313, 1
    %v7315 = vadd.f32 %v7313, %v7314
    %v7316 = vsel %vm6797, %v6743, 0.0
    %v7317 = vrot.slane %v7316, 4
    %v7318 = vadd.f32 %v7316, %v7317
    %v7319 = vrot.slane %v7318, 2
    %v7320 = vadd.f32 %v7318, %v7319
    %v7321 = vrot.slane %v7320, 1
    %v7322 = vadd.f32 %v7320, %v7321
    %v7323 = vsel %vm6797, %v6744, 0.0
    %v7324 = vrot.slane %v7323, 4
    %v7325 = vadd.f32 %v7323, %v7324
    %v7326 = vrot.slane %v7325, 2
    %v7327 = vadd.f32 %v7325, %v7326
    %v7328 = vrot.slane %v7327, 1
    %v7329 = vadd.f32 %v7327, %v7328
    %v7330 = vsel %vm6797, %v6745, 0.0
    %v7331 = vrot.slane %v7330, 4
    %v7332 = vadd.f32 %v7330, %v7331
    %v7333 = vrot.slane %v7332, 2
    %v7334 = vadd.f32 %v7332, %v7333
    %v7335 = vrot.slane %v7334, 1
    %v7336 = vadd.f32 %v7334, %v7335
    %v7337 = vsel %vm6797, %v6746, 0.0
    %v7338 = vrot.slane %v7337, 4
    %v7339 = vadd.f32 %v7337, %v7338
    %v7340 = vrot.slane %v7339, 2
    %v7341 = vadd.f32 %v7339, %v7340
    %v7342 = vrot.slane %v7341, 1
    %v7343 = vadd.f32 %v7341, %v7342
    %v7344 = vsel %vm6797, %v6747, 0.0
    %v7345 = vrot.slane %v7344, 4
    %v7346 = vadd.f32 %v7344, %v7345
    %v7347 = vrot.slane %v7346, 2
    %v7348 = vadd.f32 %v7346, %v7347
    %v7349 = vrot.slane %v7348, 1
    %v7350 = vadd.f32 %v7348, %v7349
    %v7351 = vsel %vm6797, %v6748, 0.0
    %v7352 = vrot.slane %v7351, 4
    %v7353 = vadd.f32 %v7351, %v7352
    %v7354 = vrot.slane %v7353, 2
    %v7355 = vadd.f32 %v7353, %v7354
    %v7356 = vrot.slane %v7355, 1
    %v7357 = vadd.f32 %v7355, %v7356
    %v7358 = vsel %vm6797, %v6749, 0.0
    %v7359 = vrot.slane %v7358, 4
    %v7360 = vadd.f32 %v7358, %v7359
    %v7361 = vrot.slane %v7360, 2
    %v7362 = vadd.f32 %v7360, %v7361
    %v7363 = vrot.slane %v7362, 1
    %v7364 = vadd.f32 %v7362, %v7363
    %v7365 = vsel %vm6797, %v6750, 0.0
    %v7366 = vrot.slane %v7365, 4
    %v7367 = vadd.f32 %v7365, %v7366
    %v7368 = vrot.slane %v7367, 2
    %v7369 = vadd.f32 %v7367, %v7368
    %v7370 = vrot.slane %v7369, 1
    %v7371 = vadd.f32 %v7369, %v7370
    %v7372 = vsel %vm6797, %v6751, 0.0
    %v7373 = vrot.slane %v7372, 4
    %v7374 = vadd.f32 %v7372, %v7373
    %v7375 = vrot.slane %v7374, 2
    %v7376 = vadd.f32 %v7374, %v7375
    %v7377 = vrot.slane %v7376, 1
    %v7378 = vadd.f32 %v7376, %v7377
    %v7379 = vsel %vm6797, %v6752, 0.0
    %v7380 = vrot.slane %v7379, 4
    %v7381 = vadd.f32 %v7379, %v7380
    %v7382 = vrot.slane %v7381, 2
    %v7383 = vadd.f32 %v7381, %v7382
    %v7384 = vrot.slane %v7383, 1
    %v7385 = vadd.f32 %v7383, %v7384
    %v7386 = vsel %vm6797, %v6753, 0.0
    %v7387 = vrot.slane %v7386, 4
    %v7388 = vadd.f32 %v7386, %v7387
    %v7389 = vrot.slane %v7388, 2
    %v7390 = vadd.f32 %v7388, %v7389
    %v7391 = vrot.slane %v7390, 1
    %v7392 = vadd.f32 %v7390, %v7391
    %v7393 = vsel %vm6797, %v6754, 0.0
    %v7394 = vrot.slane %v7393, 4
    %v7395 = vadd.f32 %v7393, %v7394
    %v7396 = vrot.slane %v7395, 2
    %v7397 = vadd.f32 %v7395, %v7396
    %v7398 = vrot.slane %v7397, 1
    %v7399 = vadd.f32 %v7397, %v7398
    %v7400 = vsel %vm6797, %v6755, 0.0
    %v7401 = vrot.slane %v7400, 4
    %v7402 = vadd.f32 %v7400, %v7401
    %v7403 = vrot.slane %v7402, 2
    %v7404 = vadd.f32 %v7402, %v7403
    %v7405 = vrot.slane %v7404, 1
    %v7406 = vadd.f32 %v7404, %v7405
    %v7407 = vsel %vm6797, %v6756, 0.0
    %v7408 = vrot.slane %v7407, 4
    %v7409 = vadd.f32 %v7407, %v7408
    %v7410 = vrot.slane %v7409, 2
    %v7411 = vadd.f32 %v7409, %v7410
    %v7412 = vrot.slane %v7411, 1
    %v7413 = vadd.f32 %v7411, %v7412
    %v7414 = vsel %vm6797, %v6757, 0.0
    %v7415 = vrot.slane %v7414, 4
    %v7416 = vadd.f32 %v7414, %v7415
    %v7417 = vrot.slane %v7416, 2
    %v7418 = vadd.f32 %v7416, %v7417
    %v7419 = vrot.slane %v7418, 1
    %v7420 = vadd.f32 %v7418, %v7419
    %v7421 = vsel %vm6797, %v6758, 0.0
    %v7422 = vrot.slane %v7421, 4
    %v7423 = vadd.f32 %v7421, %v7422
    %v7424 = vrot.slane %v7423, 2
    %v7425 = vadd.f32 %v7423, %v7424
    %v7426 = vrot.slane %v7425, 1
    %v7427 = vadd.f32 %v7425, %v7426
    %v7428 = vsel %vm6797, %v6759, 0.0
    %v7429 = vrot.slane %v7428, 4
    %v7430 = vadd.f32 %v7428, %v7429
    %v7431 = vrot.slane %v7430, 2
    %v7432 = vadd.f32 %v7430, %v7431
    %v7433 = vrot.slane %v7432, 1
    %v7434 = vadd.f32 %v7432, %v7433
    %v7435 = vsel %vm6797, %v6760, 0.0
    %v7436 = vrot.slane %v7435, 4
    %v7437 = vadd.f32 %v7435, %v7436
    %v7438 = vrot.slane %v7437, 2
    %v7439 = vadd.f32 %v7437, %v7438
    %v7440 = vrot.slane %v7439, 1
    %v7441 = vadd.f32 %v7439, %v7440
    %v7442 = vsel %vm6797, %v6761, 0.0
    %v7443 = vrot.slane %v7442, 4
    %v7444 = vadd.f32 %v7442, %v7443
    %v7445 = vrot.slane %v7444, 2
    %v7446 = vadd.f32 %v7444, %v7445
    %v7447 = vrot.slane %v7446, 1
    %v7448 = vadd.f32 %v7446, %v7447
    %v7449 = vsel %vm6797, %v6762, 0.0
    %v7450 = vrot.slane %v7449, 4
    %v7451 = vadd.f32 %v7449, %v7450
    %v7452 = vrot.slane %v7451, 2
    %v7453 = vadd.f32 %v7451, %v7452
    %v7454 = vrot.slane %v7453, 1
    %v7455 = vadd.f32 %v7453, %v7454
    %v7456 = vsel %vm6797, %v6763, 0.0
    %v7457 = vrot.slane %v7456, 4
    %v7458 = vadd.f32 %v7456, %v7457
    %v7459 = vrot.slane %v7458, 2
    %v7460 = vadd.f32 %v7458, %v7459
    %v7461 = vrot.slane %v7460, 1
    %v7462 = vadd.f32 %v7460, %v7461
    %v7463 = vsel %vm6797, %v6764, 0.0
    %v7464 = vrot.slane %v7463, 4
    %v7465 = vadd.f32 %v7463, %v7464
    %v7466 = vrot.slane %v7465, 2
    %v7467 = vadd.f32 %v7465, %v7466
    %v7468 = vrot.slane %v7467, 1
    %v7469 = vadd.f32 %v7467, %v7468
    %v7470 = vsel %vm6797, %v6765, 0.0
    %v7471 = vrot.slane %v7470, 4
    %v7472 = vadd.f32 %v7470, %v7471
    %v7473 = vrot.slane %v7472, 2
    %v7474 = vadd.f32 %v7472, %v7473
    %v7475 = vrot.slane %v7474, 1
    %v7476 = vadd.f32 %v7474, %v7475
    %v7477 = vsel %vm6797, %v6766, 0.0
    %v7478 = vrot.slane %v7477, 4
    %v7479 = vadd.f32 %v7477, %v7478
    %v7480 = vrot.slane %v7479, 2
    %v7481 = vadd.f32 %v7479, %v7480
    %v7482 = vrot.slane %v7481, 1
    %v7483 = vadd.f32 %v7481, %v7482
    %v7484 = vsel %vm6797, %v6767, 0.0
    %v7485 = vrot.slane %v7484, 4
    %v7486 = vadd.f32 %v7484, %v7485
    %v7487 = vrot.slane %v7486, 2
    %v7488 = vadd.f32 %v7486, %v7487
    %v7489 = vrot.slane %v7488, 1
    %v7490 = vadd.f32 %v7488, %v7489
    %v7491 = vsel %vm6797, %v6768, 0.0
    %v7492 = vrot.slane %v7491, 4
    %v7493 = vadd.f32 %v7491, %v7492
    %v7494 = vrot.slane %v7493, 2
    %v7495 = vadd.f32 %v7493, %v7494
    %v7496 = vrot.slane %v7495, 1
    %v7497 = vadd.f32 %v7495, %v7496
    %v7498 = vsel %vm6797, %v6769, 0.0
    %v7499 = vrot.slane %v7498, 4
    %v7500 = vadd.f32 %v7498, %v7499
    %v7501 = vrot.slane %v7500, 2
    %v7502 = vadd.f32 %v7500, %v7501
    %v7503 = vrot.slane %v7502, 1
    %v7504 = vadd.f32 %v7502, %v7503
    %v7505 = vsel %vm6797, %v6770, 0.0
    %v7506 = vrot.slane %v7505, 4
    %v7507 = vadd.f32 %v7505, %v7506
    %v7508 = vrot.slane %v7507, 2
    %v7509 = vadd.f32 %v7507, %v7508
    %v7510 = vrot.slane %v7509, 1
    %v7511 = vadd.f32 %v7509, %v7510
    %v7512 = vsel %vm6797, %v6771, 0.0
    %v7513 = vrot.slane %v7512, 4
    %v7514 = vadd.f32 %v7512, %v7513
    %v7515 = vrot.slane %v7514, 2
    %v7516 = vadd.f32 %v7514, %v7515
    %v7517 = vrot.slane %v7516, 1
    %v7518 = vadd.f32 %v7516, %v7517
    %v7519 = vsel %vm6797, %v6772, 0.0
    %v7520 = vrot.slane %v7519, 4
    %v7521 = vadd.f32 %v7519, %v7520
    %v7522 = vrot.slane %v7521, 2
    %v7523 = vadd.f32 %v7521, %v7522
    %v7524 = vrot.slane %v7523, 1
    %v7525 = vadd.f32 %v7523, %v7524
    %v7526 = vsel %vm6797, %v6773, 0.0
    %v7527 = vrot.slane %v7526, 4
    %v7528 = vadd.f32 %v7526, %v7527
    %v7529 = vrot.slane %v7528, 2
    %v7530 = vadd.f32 %v7528, %v7529
    %v7531 = vrot.slane %v7530, 1
    %v7532 = vadd.f32 %v7530, %v7531
    %v7533 = vsel %vm6797, %v6774, 0.0
    %v7534 = vrot.slane %v7533, 4
    %v7535 = vadd.f32 %v7533, %v7534
    %v7536 = vrot.slane %v7535, 2
    %v7537 = vadd.f32 %v7535, %v7536
    %v7538 = vrot.slane %v7537, 1
    %v7539 = vadd.f32 %v7537, %v7538
    %v7540 = vsel %vm6797, %v6775, 0.0
    %v7541 = vrot.slane %v7540, 4
    %v7542 = vadd.f32 %v7540, %v7541
    %v7543 = vrot.slane %v7542, 2
    %v7544 = vadd.f32 %v7542, %v7543
    %v7545 = vrot.slane %v7544, 1
    %v7546 = vadd.f32 %v7544, %v7545
    %v7547 = vsel %vm6797, %v6776, 0.0
    %v7548 = vrot.slane %v7547, 4
    %v7549 = vadd.f32 %v7547, %v7548
    %v7550 = vrot.slane %v7549, 2
    %v7551 = vadd.f32 %v7549, %v7550
    %v7552 = vrot.slane %v7551, 1
    %v7553 = vadd.f32 %v7551, %v7552
    %v7554 = vsel %vm6797, %v6777, 0.0
    %v7555 = vrot.slane %v7554, 4
    %v7556 = vadd.f32 %v7554, %v7555
    %v7557 = vrot.slane %v7556, 2
    %v7558 = vadd.f32 %v7556, %v7557
    %v7559 = vrot.slane %v7558, 1
    %v7560 = vadd.f32 %v7558, %v7559
    %v7561 = vsel %vm6797, %v6778, 0.0
    %v7562 = vrot.slane %v7561, 4
    %v7563 = vadd.f32 %v7561, %v7562
    %v7564 = vrot.slane %v7563, 2
    %v7565 = vadd.f32 %v7563, %v7564
    %v7566 = vrot.slane %v7565, 1
    %v7567 = vadd.f32 %v7565, %v7566
    %v7568 = vsel %vm6797, %v6779, 0.0
    %v7569 = vrot.slane %v7568, 4
    %v7570 = vadd.f32 %v7568, %v7569
    %v7571 = vrot.slane %v7570, 2
    %v7572 = vadd.f32 %v7570, %v7571
    %v7573 = vrot.slane %v7572, 1
    %v7574 = vadd.f32 %v7572, %v7573
    %v7575 = vsel %vm6797, %v6780, 0.0
    %v7576 = vrot.slane %v7575, 4
    %v7577 = vadd.f32 %v7575, %v7576
    %v7578 = vrot.slane %v7577, 2
    %v7579 = vadd.f32 %v7577, %v7578
    %v7580 = vrot.slane %v7579, 1
    %v7581 = vadd.f32 %v7579, %v7580
    %v7582 = vsel %vm6797, %v6781, 0.0
    %v7583 = vrot.slane %v7582, 4
    %v7584 = vadd.f32 %v7582, %v7583
    %v7585 = vrot.slane %v7584, 2
    %v7586 = vadd.f32 %v7584, %v7585
    %v7587 = vrot.slane %v7586, 1
    %v7588 = vadd.f32 %v7586, %v7587
    %v7589 = vsel %vm6797, %v6782, 0.0
    %v7590 = vrot.slane %v7589, 4
    %v7591 = vadd.f32 %v7589, %v7590
    %v7592 = vrot.slane %v7591, 2
    %v7593 = vadd.f32 %v7591, %v7592
    %v7594 = vrot.slane %v7593, 1
    %v7595 = vadd.f32 %v7593, %v7594
    %v7596 = vsel %vm6797, %v6783, 0.0
    %v7597 = vrot.slane %v7596, 4
    %v7598 = vadd.f32 %v7596, %v7597
    %v7599 = vrot.slane %v7598, 2
    %v7600 = vadd.f32 %v7598, %v7599
    %v7601 = vrot.slane %v7600, 1
    %v7602 = vadd.f32 %v7600, %v7601
    %v7603 = vsel %vm6797, %v6784, 0.0
    %v7604 = vrot.slane %v7603, 4
    %v7605 = vadd.f32 %v7603, %v7604
    %v7606 = vrot.slane %v7605, 2
    %v7607 = vadd.f32 %v7605, %v7606
    %v7608 = vrot.slane %v7607, 1
    %v7609 = vadd.f32 %v7607, %v7608
    %v7610 = vsel %vm6797, %v6785, 0.0
    %v7611 = vrot.slane %v7610, 4
    %v7612 = vadd.f32 %v7610, %v7611
    %v7613 = vrot.slane %v7612, 2
    %v7614 = vadd.f32 %v7612, %v7613
    %v7615 = vrot.slane %v7614, 1
    %v7616 = vadd.f32 %v7614, %v7615
    %v7617 = vsel %vm6797, %v6786, 0.0
    %v7618 = vrot.slane %v7617, 4
    %v7619 = vadd.f32 %v7617, %v7618
    %v7620 = vrot.slane %v7619, 2
    %v7621 = vadd.f32 %v7619, %v7620
    %v7622 = vrot.slane %v7621, 1
    %v7623 = vadd.f32 %v7621, %v7622
    %v7624 = vsel %vm6797, %v6787, 0.0
    %v7625 = vrot.slane %v7624, 4
    %v7626 = vadd.f32 %v7624, %v7625
    %v7627 = vrot.slane %v7626, 2
    %v7628 = vadd.f32 %v7626, %v7627
    %v7629 = vrot.slane %v7628, 1
    %v7630 = vadd.f32 %v7628, %v7629
    %v7631 = vsel %vm6797, %v6788, 0.0
    %v7632 = vrot.slane %v7631, 4
    %v7633 = vadd.f32 %v7631, %v7632
    %v7634 = vrot.slane %v7633, 2
    %v7635 = vadd.f32 %v7633, %v7634
    %v7636 = vrot.slane %v7635, 1
    %v7637 = vadd.f32 %v7635, %v7636
    %v7638 = vsel %vm6797, %v6789, 0.0
    %v7639 = vrot.slane %v7638, 4
    %v7640 = vadd.f32 %v7638, %v7639
    %v7641 = vrot.slane %v7640, 2
    %v7642 = vadd.f32 %v7640, %v7641
    %v7643 = vrot.slane %v7642, 1
    %v7644 = vadd.f32 %v7642, %v7643
    %v7645 = vsel %vm6797, %v6790, 0.0
    %v7646 = vrot.slane %v7645, 4
    %v7647 = vadd.f32 %v7645, %v7646
    %v7648 = vrot.slane %v7647, 2
    %v7649 = vadd.f32 %v7647, %v7648
    %v7650 = vrot.slane %v7649, 1
    %v7651 = vadd.f32 %v7649, %v7650
    %v7652 = vsel %vm6797, %v6791, 0.0
    %v7653 = vrot.slane %v7652, 4
    %v7654 = vadd.f32 %v7652, %v7653
    %v7655 = vrot.slane %v7654, 2
    %v7656 = vadd.f32 %v7654, %v7655
    %v7657 = vrot.slane %v7656, 1
    %v7658 = vadd.f32 %v7656, %v7657
    %v7659 = vsel %vm6797, %v6792, 0.0
    %v7660 = vrot.slane %v7659, 4
    %v7661 = vadd.f32 %v7659, %v7660
    %v7662 = vrot.slane %v7661, 2
    %v7663 = vadd.f32 %v7661, %v7662
    %v7664 = vrot.slane %v7663, 1
    %v7665 = vadd.f32 %v7663, %v7664
    %v7666 = vsel %vm6797, %v6793, 0.0
    %v7667 = vrot.slane %v7666, 4
    %v7668 = vadd.f32 %v7666, %v7667
    %v7669 = vrot.slane %v7668, 2
    %v7670 = vadd.f32 %v7668, %v7669
    %v7671 = vrot.slane %v7670, 1
    %v7672 = vadd.f32 %v7670, %v7671
    %v7673 = vsel %vm6797, %v6794, 0.0
    %v7674 = vrot.slane %v7673, 4
    %v7675 = vadd.f32 %v7673, %v7674
    %v7676 = vrot.slane %v7675, 2
    %v7677 = vadd.f32 %v7675, %v7676
    %v7678 = vrot.slane %v7677, 1
    %v7679 = vadd.f32 %v7677, %v7678
    %v7680 = vsel %vm6797, %v6795, 0.0
    %v7681 = vrot.slane %v7680, 4
    %v7682 = vadd.f32 %v7680, %v7681
    %v7683 = vrot.slane %v7682, 2
    %v7684 = vadd.f32 %v7682, %v7683
    %v7685 = vrot.slane %v7684, 1
    %v7686 = vadd.f32 %v7684, %v7685
    %v7687 = vsel %vm6797, %v6796, 0.0
    %v7688 = vrot.slane %v7687, 4
    %v7689 = vadd.f32 %v7687, %v7688
    %v7690 = vrot.slane %v7689, 2
    %v7691 = vadd.f32 %v7689, %v7690
    %v7692 = vrot.slane %v7691, 1
    %v7693 = vadd.f32 %v7691, %v7692
    %v7694 = vrot.slane %v6541, 4
    %v7695 = vadd.f32 %v6541, %v7694
    %v7696 = vrot.slane %v7695, 2
    %v7697 = vadd.f32 %v7695, %v7696
    %v7698 = vrot.slane %v7697, 1
    %v7699 = vadd.f32 %v7697, %v7698
    %v7700 = vrot.slane %v6542, 4
    %v7701 = vadd.f32 %v6542, %v7700
    %v7702 = vrot.slane %v7701, 2
    %v7703 = vadd.f32 %v7701, %v7702
    %v7704 = vrot.slane %v7703, 1
    %v7705 = vadd.f32 %v7703, %v7704
    %v7706 = vrot.slane %v6543, 4
    %v7707 = vadd.f32 %v6543, %v7706
    %v7708 = vrot.slane %v7707, 2
    %v7709 = vadd.f32 %v7707, %v7708
    %v7710 = vrot.slane %v7709, 1
    %v7711 = vadd.f32 %v7709, %v7710
    %v7712 = vrot.slane %v6544, 4
    %v7713 = vadd.f32 %v6544, %v7712
    %v7714 = vrot.slane %v7713, 2
    %v7715 = vadd.f32 %v7713, %v7714
    %v7716 = vrot.slane %v7715, 1
    %v7717 = vadd.f32 %v7715, %v7716
    %v7718 = vrot.slane %v6545, 4
    %v7719 = vadd.f32 %v6545, %v7718
    %v7720 = vrot.slane %v7719, 2
    %v7721 = vadd.f32 %v7719, %v7720
    %v7722 = vrot.slane %v7721, 1
    %v7723 = vadd.f32 %v7721, %v7722
    %v7724 = vrot.slane %v6546, 4
    %v7725 = vadd.f32 %v6546, %v7724
    %v7726 = vrot.slane %v7725, 2
    %v7727 = vadd.f32 %v7725, %v7726
    %v7728 = vrot.slane %v7727, 1
    %v7729 = vadd.f32 %v7727, %v7728
    %v7730 = vrot.slane %v6547, 4
    %v7731 = vadd.f32 %v6547, %v7730
    %v7732 = vrot.slane %v7731, 2
    %v7733 = vadd.f32 %v7731, %v7732
    %v7734 = vrot.slane %v7733, 1
    %v7735 = vadd.f32 %v7733, %v7734
    %v7736 = vrot.slane %v6548, 4
    %v7737 = vadd.f32 %v6548, %v7736
    %v7738 = vrot.slane %v7737, 2
    %v7739 = vadd.f32 %v7737, %v7738
    %v7740 = vrot.slane %v7739, 1
    %v7741 = vadd.f32 %v7739, %v7740
    %v7742 = vrot.slane %v6549, 4
    %v7743 = vadd.f32 %v6549, %v7742
    %v7744 = vrot.slane %v7743, 2
    %v7745 = vadd.f32 %v7743, %v7744
    %v7746 = vrot.slane %v7745, 1
    %v7747 = vadd.f32 %v7745, %v7746
    %v7748 = vrot.slane %v6550, 4
    %v7749 = vadd.f32 %v6550, %v7748
    %v7750 = vrot.slane %v7749, 2
    %v7751 = vadd.f32 %v7749, %v7750
    %v7752 = vrot.slane %v7751, 1
    %v7753 = vadd.f32 %v7751, %v7752
    %v7754 = vrot.slane %v6551, 4
    %v7755 = vadd.f32 %v6551, %v7754
    %v7756 = vrot.slane %v7755, 2
    %v7757 = vadd.f32 %v7755, %v7756
    %v7758 = vrot.slane %v7757, 1
    %v7759 = vadd.f32 %v7757, %v7758
    %v7760 = vrot.slane %v6552, 4
    %v7761 = vadd.f32 %v6552, %v7760
    %v7762 = vrot.slane %v7761, 2
    %v7763 = vadd.f32 %v7761, %v7762
    %v7764 = vrot.slane %v7763, 1
    %v7765 = vadd.f32 %v7763, %v7764
    %v7766 = vrot.slane %v6553, 4
    %v7767 = vadd.f32 %v6553, %v7766
    %v7768 = vrot.slane %v7767, 2
    %v7769 = vadd.f32 %v7767, %v7768
    %v7770 = vrot.slane %v7769, 1
    %v7771 = vadd.f32 %v7769, %v7770
    %v7772 = vrot.slane %v6554, 4
    %v7773 = vadd.f32 %v6554, %v7772
    %v7774 = vrot.slane %v7773, 2
    %v7775 = vadd.f32 %v7773, %v7774
    %v7776 = vrot.slane %v7775, 1
    %v7777 = vadd.f32 %v7775, %v7776
    %v7778 = vrot.slane %v6555, 4
    %v7779 = vadd.f32 %v6555, %v7778
    %v7780 = vrot.slane %v7779, 2
    %v7781 = vadd.f32 %v7779, %v7780
    %v7782 = vrot.slane %v7781, 1
    %v7783 = vadd.f32 %v7781, %v7782
    %v7784 = vrot.slane %v6556, 4
    %v7785 = vadd.f32 %v6556, %v7784
    %v7786 = vrot.slane %v7785, 2
    %v7787 = vadd.f32 %v7785, %v7786
    %v7788 = vrot.slane %v7787, 1
    %v7789 = vadd.f32 %v7787, %v7788
    %v7790 = vrot.slane %v6557, 4
    %v7791 = vadd.f32 %v6557, %v7790
    %v7792 = vrot.slane %v7791, 2
    %v7793 = vadd.f32 %v7791, %v7792
    %v7794 = vrot.slane %v7793, 1
    %v7795 = vadd.f32 %v7793, %v7794
    %v7796 = vrot.slane %v6558, 4
    %v7797 = vadd.f32 %v6558, %v7796
    %v7798 = vrot.slane %v7797, 2
    %v7799 = vadd.f32 %v7797, %v7798
    %v7800 = vrot.slane %v7799, 1
    %v7801 = vadd.f32 %v7799, %v7800
    %v7802 = vrot.slane %v6559, 4
    %v7803 = vadd.f32 %v6559, %v7802
    %v7804 = vrot.slane %v7803, 2
    %v7805 = vadd.f32 %v7803, %v7804
    %v7806 = vrot.slane %v7805, 1
    %v7807 = vadd.f32 %v7805, %v7806
    %v7808 = vrot.slane %v6560, 4
    %v7809 = vadd.f32 %v6560, %v7808
    %v7810 = vrot.slane %v7809, 2
    %v7811 = vadd.f32 %v7809, %v7810
    %v7812 = vrot.slane %v7811, 1
    %v7813 = vadd.f32 %v7811, %v7812
    %v7814 = vrot.slane %v6561, 4
    %v7815 = vadd.f32 %v6561, %v7814
    %v7816 = vrot.slane %v7815, 2
    %v7817 = vadd.f32 %v7815, %v7816
    %v7818 = vrot.slane %v7817, 1
    %v7819 = vadd.f32 %v7817, %v7818
    %v7820 = vrot.slane %v6562, 4
    %v7821 = vadd.f32 %v6562, %v7820
    %v7822 = vrot.slane %v7821, 2
    %v7823 = vadd.f32 %v7821, %v7822
    %v7824 = vrot.slane %v7823, 1
    %v7825 = vadd.f32 %v7823, %v7824
    %v7826 = vrot.slane %v6563, 4
    %v7827 = vadd.f32 %v6563, %v7826
    %v7828 = vrot.slane %v7827, 2
    %v7829 = vadd.f32 %v7827, %v7828
    %v7830 = vrot.slane %v7829, 1
    %v7831 = vadd.f32 %v7829, %v7830
    %v7832 = vrot.slane %v6564, 4
    %v7833 = vadd.f32 %v6564, %v7832
    %v7834 = vrot.slane %v7833, 2
    %v7835 = vadd.f32 %v7833, %v7834
    %v7836 = vrot.slane %v7835, 1
    %v7837 = vadd.f32 %v7835, %v7836
    %v7838 = vrot.slane %v6565, 4
    %v7839 = vadd.f32 %v6565, %v7838
    %v7840 = vrot.slane %v7839, 2
    %v7841 = vadd.f32 %v7839, %v7840
    %v7842 = vrot.slane %v7841, 1
    %v7843 = vadd.f32 %v7841, %v7842
    %v7844 = vrot.slane %v6566, 4
    %v7845 = vadd.f32 %v6566, %v7844
    %v7846 = vrot.slane %v7845, 2
    %v7847 = vadd.f32 %v7845, %v7846
    %v7848 = vrot.slane %v7847, 1
    %v7849 = vadd.f32 %v7847, %v7848
    %v7850 = vrot.slane %v6567, 4
    %v7851 = vadd.f32 %v6567, %v7850
    %v7852 = vrot.slane %v7851, 2
    %v7853 = vadd.f32 %v7851, %v7852
    %v7854 = vrot.slane %v7853, 1
    %v7855 = vadd.f32 %v7853, %v7854
    %v7856 = vrot.slane %v6568, 4
    %v7857 = vadd.f32 %v6568, %v7856
    %v7858 = vrot.slane %v7857, 2
    %v7859 = vadd.f32 %v7857, %v7858
    %v7860 = vrot.slane %v7859, 1
    %v7861 = vadd.f32 %v7859, %v7860
    %v7862 = vrot.slane %v6569, 4
    %v7863 = vadd.f32 %v6569, %v7862
    %v7864 = vrot.slane %v7863, 2
    %v7865 = vadd.f32 %v7863, %v7864
    %v7866 = vrot.slane %v7865, 1
    %v7867 = vadd.f32 %v7865, %v7866
    %v7868 = vrot.slane %v6570, 4
    %v7869 = vadd.f32 %v6570, %v7868
    %v7870 = vrot.slane %v7869, 2
    %v7871 = vadd.f32 %v7869, %v7870
    %v7872 = vrot.slane %v7871, 1
    %v7873 = vadd.f32 %v7871, %v7872
    %v7874 = vrot.slane %v6571, 4
    %v7875 = vadd.f32 %v6571, %v7874
    %v7876 = vrot.slane %v7875, 2
    %v7877 = vadd.f32 %v7875, %v7876
    %v7878 = vrot.slane %v7877, 1
    %v7879 = vadd.f32 %v7877, %v7878
    %v7880 = vrot.slane %v6572, 4
    %v7881 = vadd.f32 %v6572, %v7880
    %v7882 = vrot.slane %v7881, 2
    %v7883 = vadd.f32 %v7881, %v7882
    %v7884 = vrot.slane %v7883, 1
    %v7885 = vadd.f32 %v7883, %v7884
    %v7886 = vrot.slane %v6573, 4
    %v7887 = vadd.f32 %v6573, %v7886
    %v7888 = vrot.slane %v7887, 2
    %v7889 = vadd.f32 %v7887, %v7888
    %v7890 = vrot.slane %v7889, 1
    %v7891 = vadd.f32 %v7889, %v7890
    %v7892 = vrot.slane %v6574, 4
    %v7893 = vadd.f32 %v6574, %v7892
    %v7894 = vrot.slane %v7893, 2
    %v7895 = vadd.f32 %v7893, %v7894
    %v7896 = vrot.slane %v7895, 1
    %v7897 = vadd.f32 %v7895, %v7896
    %v7898 = vrot.slane %v6575, 4
    %v7899 = vadd.f32 %v6575, %v7898
    %v7900 = vrot.slane %v7899, 2
    %v7901 = vadd.f32 %v7899, %v7900
    %v7902 = vrot.slane %v7901, 1
    %v7903 = vadd.f32 %v7901, %v7902
    %v7904 = vrot.slane %v6576, 4
    %v7905 = vadd.f32 %v6576, %v7904
    %v7906 = vrot.slane %v7905, 2
    %v7907 = vadd.f32 %v7905, %v7906
    %v7908 = vrot.slane %v7907, 1
    %v7909 = vadd.f32 %v7907, %v7908
    %v7910 = vrot.slane %v6577, 4
    %v7911 = vadd.f32 %v6577, %v7910
    %v7912 = vrot.slane %v7911, 2
    %v7913 = vadd.f32 %v7911, %v7912
    %v7914 = vrot.slane %v7913, 1
    %v7915 = vadd.f32 %v7913, %v7914
    %v7916 = vrot.slane %v6578, 4
    %v7917 = vadd.f32 %v6578, %v7916
    %v7918 = vrot.slane %v7917, 2
    %v7919 = vadd.f32 %v7917, %v7918
    %v7920 = vrot.slane %v7919, 1
    %v7921 = vadd.f32 %v7919, %v7920
    %v7922 = vrot.slane %v6579, 4
    %v7923 = vadd.f32 %v6579, %v7922
    %v7924 = vrot.slane %v7923, 2
    %v7925 = vadd.f32 %v7923, %v7924
    %v7926 = vrot.slane %v7925, 1
    %v7927 = vadd.f32 %v7925, %v7926
    %v7928 = vrot.slane %v6580, 4
    %v7929 = vadd.f32 %v6580, %v7928
    %v7930 = vrot.slane %v7929, 2
    %v7931 = vadd.f32 %v7929, %v7930
    %v7932 = vrot.slane %v7931, 1
    %v7933 = vadd.f32 %v7931, %v7932
    %v7934 = vrot.slane %v6581, 4
    %v7935 = vadd.f32 %v6581, %v7934
    %v7936 = vrot.slane %v7935, 2
    %v7937 = vadd.f32 %v7935, %v7936
    %v7938 = vrot.slane %v7937, 1
    %v7939 = vadd.f32 %v7937, %v7938
    %v7940 = vrot.slane %v6582, 4
    %v7941 = vadd.f32 %v6582, %v7940
    %v7942 = vrot.slane %v7941, 2
    %v7943 = vadd.f32 %v7941, %v7942
    %v7944 = vrot.slane %v7943, 1
    %v7945 = vadd.f32 %v7943, %v7944
    %v7946 = vrot.slane %v6583, 4
    %v7947 = vadd.f32 %v6583, %v7946
    %v7948 = vrot.slane %v7947, 2
    %v7949 = vadd.f32 %v7947, %v7948
    %v7950 = vrot.slane %v7949, 1
    %v7951 = vadd.f32 %v7949, %v7950
    %v7952 = vrot.slane %v6584, 4
    %v7953 = vadd.f32 %v6584, %v7952
    %v7954 = vrot.slane %v7953, 2
    %v7955 = vadd.f32 %v7953, %v7954
    %v7956 = vrot.slane %v7955, 1
    %v7957 = vadd.f32 %v7955, %v7956
    %v7958 = vrot.slane %v6585, 4
    %v7959 = vadd.f32 %v6585, %v7958
    %v7960 = vrot.slane %v7959, 2
    %v7961 = vadd.f32 %v7959, %v7960
    %v7962 = vrot.slane %v7961, 1
    %v7963 = vadd.f32 %v7961, %v7962
    %v7964 = vrot.slane %v6586, 4
    %v7965 = vadd.f32 %v6586, %v7964
    %v7966 = vrot.slane %v7965, 2
    %v7967 = vadd.f32 %v7965, %v7966
    %v7968 = vrot.slane %v7967, 1
    %v7969 = vadd.f32 %v7967, %v7968
    %v7970 = vrot.slane %v6587, 4
    %v7971 = vadd.f32 %v6587, %v7970
    %v7972 = vrot.slane %v7971, 2
    %v7973 = vadd.f32 %v7971, %v7972
    %v7974 = vrot.slane %v7973, 1
    %v7975 = vadd.f32 %v7973, %v7974
    %v7976 = vrot.slane %v6588, 4
    %v7977 = vadd.f32 %v6588, %v7976
    %v7978 = vrot.slane %v7977, 2
    %v7979 = vadd.f32 %v7977, %v7978
    %v7980 = vrot.slane %v7979, 1
    %v7981 = vadd.f32 %v7979, %v7980
    %v7982 = vrot.slane %v6589, 4
    %v7983 = vadd.f32 %v6589, %v7982
    %v7984 = vrot.slane %v7983, 2
    %v7985 = vadd.f32 %v7983, %v7984
    %v7986 = vrot.slane %v7985, 1
    %v7987 = vadd.f32 %v7985, %v7986
    %v7988 = vrot.slane %v6590, 4
    %v7989 = vadd.f32 %v6590, %v7988
    %v7990 = vrot.slane %v7989, 2
    %v7991 = vadd.f32 %v7989, %v7990
    %v7992 = vrot.slane %v7991, 1
    %v7993 = vadd.f32 %v7991, %v7992
    %v7994 = vrot.slane %v6591, 4
    %v7995 = vadd.f32 %v6591, %v7994
    %v7996 = vrot.slane %v7995, 2
    %v7997 = vadd.f32 %v7995, %v7996
    %v7998 = vrot.slane %v7997, 1
    %v7999 = vadd.f32 %v7997, %v7998
    %v8000 = vrot.slane %v6592, 4
    %v8001 = vadd.f32 %v6592, %v8000
    %v8002 = vrot.slane %v8001, 2
    %v8003 = vadd.f32 %v8001, %v8002
    %v8004 = vrot.slane %v8003, 1
    %v8005 = vadd.f32 %v8003, %v8004
    %v8006 = vrot.slane %v6593, 4
    %v8007 = vadd.f32 %v6593, %v8006
    %v8008 = vrot.slane %v8007, 2
    %v8009 = vadd.f32 %v8007, %v8008
    %v8010 = vrot.slane %v8009, 1
    %v8011 = vadd.f32 %v8009, %v8010
    %v8012 = vrot.slane %v6594, 4
    %v8013 = vadd.f32 %v6594, %v8012
    %v8014 = vrot.slane %v8013, 2
    %v8015 = vadd.f32 %v8013, %v8014
    %v8016 = vrot.slane %v8015, 1
    %v8017 = vadd.f32 %v8015, %v8016
    %v8018 = vrot.slane %v6595, 4
    %v8019 = vadd.f32 %v6595, %v8018
    %v8020 = vrot.slane %v8019, 2
    %v8021 = vadd.f32 %v8019, %v8020
    %v8022 = vrot.slane %v8021, 1
    %v8023 = vadd.f32 %v8021, %v8022
    %v8024 = vrot.slane %v6596, 4
    %v8025 = vadd.f32 %v6596, %v8024
    %v8026 = vrot.slane %v8025, 2
    %v8027 = vadd.f32 %v8025, %v8026
    %v8028 = vrot.slane %v8027, 1
    %v8029 = vadd.f32 %v8027, %v8028
    %v8030 = vrot.slane %v6597, 4
    %v8031 = vadd.f32 %v6597, %v8030
    %v8032 = vrot.slane %v8031, 2
    %v8033 = vadd.f32 %v8031, %v8032
    %v8034 = vrot.slane %v8033, 1
    %v8035 = vadd.f32 %v8033, %v8034
    %v8036 = vrot.slane %v6598, 4
    %v8037 = vadd.f32 %v6598, %v8036
    %v8038 = vrot.slane %v8037, 2
    %v8039 = vadd.f32 %v8037, %v8038
    %v8040 = vrot.slane %v8039, 1
    %v8041 = vadd.f32 %v8039, %v8040
    %v8042 = vrot.slane %v6599, 4
    %v8043 = vadd.f32 %v6599, %v8042
    %v8044 = vrot.slane %v8043, 2
    %v8045 = vadd.f32 %v8043, %v8044
    %v8046 = vrot.slane %v8045, 1
    %v8047 = vadd.f32 %v8045, %v8046
    %v8048 = vrot.slane %v6600, 4
    %v8049 = vadd.f32 %v6600, %v8048
    %v8050 = vrot.slane %v8049, 2
    %v8051 = vadd.f32 %v8049, %v8050
    %v8052 = vrot.slane %v8051, 1
    %v8053 = vadd.f32 %v8051, %v8052
    %v8054 = vrot.slane %v6601, 4
    %v8055 = vadd.f32 %v6601, %v8054
    %v8056 = vrot.slane %v8055, 2
    %v8057 = vadd.f32 %v8055, %v8056
    %v8058 = vrot.slane %v8057, 1
    %v8059 = vadd.f32 %v8057, %v8058
    %v8060 = vrot.slane %v6602, 4
    %v8061 = vadd.f32 %v6602, %v8060
    %v8062 = vrot.slane %v8061, 2
    %v8063 = vadd.f32 %v8061, %v8062
    %v8064 = vrot.slane %v8063, 1
    %v8065 = vadd.f32 %v8063, %v8064
    %v8066 = vrot.slane %v6603, 4
    %v8067 = vadd.f32 %v6603, %v8066
    %v8068 = vrot.slane %v8067, 2
    %v8069 = vadd.f32 %v8067, %v8068
    %v8070 = vrot.slane %v8069, 1
    %v8071 = vadd.f32 %v8069, %v8070
    %v8072 = vrot.slane %v6604, 4
    %v8073 = vadd.f32 %v6604, %v8072
    %v8074 = vrot.slane %v8073, 2
    %v8075 = vadd.f32 %v8073, %v8074
    %v8076 = vrot.slane %v8075, 1
    %v8077 = vadd.f32 %v8075, %v8076
    %v8078 = vrot.slane %v6605, 4
    %v8079 = vadd.f32 %v6605, %v8078
    %v8080 = vrot.slane %v8079, 2
    %v8081 = vadd.f32 %v8079, %v8080
    %v8082 = vrot.slane %v8081, 1
    %v8083 = vadd.f32 %v8081, %v8082
    %v8084 = vrot.slane %v6606, 4
    %v8085 = vadd.f32 %v6606, %v8084
    %v8086 = vrot.slane %v8085, 2
    %v8087 = vadd.f32 %v8085, %v8086
    %v8088 = vrot.slane %v8087, 1
    %v8089 = vadd.f32 %v8087, %v8088
    %v8090 = vrot.slane %v6607, 4
    %v8091 = vadd.f32 %v6607, %v8090
    %v8092 = vrot.slane %v8091, 2
    %v8093 = vadd.f32 %v8091, %v8092
    %v8094 = vrot.slane %v8093, 1
    %v8095 = vadd.f32 %v8093, %v8094
    %v8096 = vrot.slane %v6608, 4
    %v8097 = vadd.f32 %v6608, %v8096
    %v8098 = vrot.slane %v8097, 2
    %v8099 = vadd.f32 %v8097, %v8098
    %v8100 = vrot.slane %v8099, 1
    %v8101 = vadd.f32 %v8099, %v8100
    %v8102 = vrot.slane %v6609, 4
    %v8103 = vadd.f32 %v6609, %v8102
    %v8104 = vrot.slane %v8103, 2
    %v8105 = vadd.f32 %v8103, %v8104
    %v8106 = vrot.slane %v8105, 1
    %v8107 = vadd.f32 %v8105, %v8106
    %v8108 = vrot.slane %v6610, 4
    %v8109 = vadd.f32 %v6610, %v8108
    %v8110 = vrot.slane %v8109, 2
    %v8111 = vadd.f32 %v8109, %v8110
    %v8112 = vrot.slane %v8111, 1
    %v8113 = vadd.f32 %v8111, %v8112
    %v8114 = vrot.slane %v6611, 4
    %v8115 = vadd.f32 %v6611, %v8114
    %v8116 = vrot.slane %v8115, 2
    %v8117 = vadd.f32 %v8115, %v8116
    %v8118 = vrot.slane %v8117, 1
    %v8119 = vadd.f32 %v8117, %v8118
    %v8120 = vrot.slane %v6612, 4
    %v8121 = vadd.f32 %v6612, %v8120
    %v8122 = vrot.slane %v8121, 2
    %v8123 = vadd.f32 %v8121, %v8122
    %v8124 = vrot.slane %v8123, 1
    %v8125 = vadd.f32 %v8123, %v8124
    %v8126 = vrot.slane %v6613, 4
    %v8127 = vadd.f32 %v6613, %v8126
    %v8128 = vrot.slane %v8127, 2
    %v8129 = vadd.f32 %v8127, %v8128
    %v8130 = vrot.slane %v8129, 1
    %v8131 = vadd.f32 %v8129, %v8130
    %v8132 = vrot.slane %v6614, 4
    %v8133 = vadd.f32 %v6614, %v8132
    %v8134 = vrot.slane %v8133, 2
    %v8135 = vadd.f32 %v8133, %v8134
    %v8136 = vrot.slane %v8135, 1
    %v8137 = vadd.f32 %v8135, %v8136
    %v8138 = vrot.slane %v6615, 4
    %v8139 = vadd.f32 %v6615, %v8138
    %v8140 = vrot.slane %v8139, 2
    %v8141 = vadd.f32 %v8139, %v8140
    %v8142 = vrot.slane %v8141, 1
    %v8143 = vadd.f32 %v8141, %v8142
    %v8144 = vrot.slane %v6616, 4
    %v8145 = vadd.f32 %v6616, %v8144
    %v8146 = vrot.slane %v8145, 2
    %v8147 = vadd.f32 %v8145, %v8146
    %v8148 = vrot.slane %v8147, 1
    %v8149 = vadd.f32 %v8147, %v8148
    %v8150 = vrot.slane %v6617, 4
    %v8151 = vadd.f32 %v6617, %v8150
    %v8152 = vrot.slane %v8151, 2
    %v8153 = vadd.f32 %v8151, %v8152
    %v8154 = vrot.slane %v8153, 1
    %v8155 = vadd.f32 %v8153, %v8154
    %v8156 = vrot.slane %v6618, 4
    %v8157 = vadd.f32 %v6618, %v8156
    %v8158 = vrot.slane %v8157, 2
    %v8159 = vadd.f32 %v8157, %v8158
    %v8160 = vrot.slane %v8159, 1
    %v8161 = vadd.f32 %v8159, %v8160
    %v8162 = vrot.slane %v6619, 4
    %v8163 = vadd.f32 %v6619, %v8162
    %v8164 = vrot.slane %v8163, 2
    %v8165 = vadd.f32 %v8163, %v8164
    %v8166 = vrot.slane %v8165, 1
    %v8167 = vadd.f32 %v8165, %v8166
    %v8168 = vrot.slane %v6620, 4
    %v8169 = vadd.f32 %v6620, %v8168
    %v8170 = vrot.slane %v8169, 2
    %v8171 = vadd.f32 %v8169, %v8170
    %v8172 = vrot.slane %v8171, 1
    %v8173 = vadd.f32 %v8171, %v8172
    %v8174 = vrot.slane %v6621, 4
    %v8175 = vadd.f32 %v6621, %v8174
    %v8176 = vrot.slane %v8175, 2
    %v8177 = vadd.f32 %v8175, %v8176
    %v8178 = vrot.slane %v8177, 1
    %v8179 = vadd.f32 %v8177, %v8178
    %v8180 = vrot.slane %v6622, 4
    %v8181 = vadd.f32 %v6622, %v8180
    %v8182 = vrot.slane %v8181, 2
    %v8183 = vadd.f32 %v8181, %v8182
    %v8184 = vrot.slane %v8183, 1
    %v8185 = vadd.f32 %v8183, %v8184
    %v8186 = vrot.slane %v6623, 4
    %v8187 = vadd.f32 %v6623, %v8186
    %v8188 = vrot.slane %v8187, 2
    %v8189 = vadd.f32 %v8187, %v8188
    %v8190 = vrot.slane %v8189, 1
    %v8191 = vadd.f32 %v8189, %v8190
    %v8192 = vrot.slane %v6624, 4
    %v8193 = vadd.f32 %v6624, %v8192
    %v8194 = vrot.slane %v8193, 2
    %v8195 = vadd.f32 %v8193, %v8194
    %v8196 = vrot.slane %v8195, 1
    %v8197 = vadd.f32 %v8195, %v8196
    %v8198 = vrot.slane %v6625, 4
    %v8199 = vadd.f32 %v6625, %v8198
    %v8200 = vrot.slane %v8199, 2
    %v8201 = vadd.f32 %v8199, %v8200
    %v8202 = vrot.slane %v8201, 1
    %v8203 = vadd.f32 %v8201, %v8202
    %v8204 = vrot.slane %v6626, 4
    %v8205 = vadd.f32 %v6626, %v8204
    %v8206 = vrot.slane %v8205, 2
    %v8207 = vadd.f32 %v8205, %v8206
    %v8208 = vrot.slane %v8207, 1
    %v8209 = vadd.f32 %v8207, %v8208
    %v8210 = vrot.slane %v6627, 4
    %v8211 = vadd.f32 %v6627, %v8210
    %v8212 = vrot.slane %v8211, 2
    %v8213 = vadd.f32 %v8211, %v8212
    %v8214 = vrot.slane %v8213, 1
    %v8215 = vadd.f32 %v8213, %v8214
    %v8216 = vrot.slane %v6628, 4
    %v8217 = vadd.f32 %v6628, %v8216
    %v8218 = vrot.slane %v8217, 2
    %v8219 = vadd.f32 %v8217, %v8218
    %v8220 = vrot.slane %v8219, 1
    %v8221 = vadd.f32 %v8219, %v8220
    %v8222 = vrot.slane %v6629, 4
    %v8223 = vadd.f32 %v6629, %v8222
    %v8224 = vrot.slane %v8223, 2
    %v8225 = vadd.f32 %v8223, %v8224
    %v8226 = vrot.slane %v8225, 1
    %v8227 = vadd.f32 %v8225, %v8226
    %v8228 = vrot.slane %v6630, 4
    %v8229 = vadd.f32 %v6630, %v8228
    %v8230 = vrot.slane %v8229, 2
    %v8231 = vadd.f32 %v8229, %v8230
    %v8232 = vrot.slane %v8231, 1
    %v8233 = vadd.f32 %v8231, %v8232
    %v8234 = vrot.slane %v6631, 4
    %v8235 = vadd.f32 %v6631, %v8234
    %v8236 = vrot.slane %v8235, 2
    %v8237 = vadd.f32 %v8235, %v8236
    %v8238 = vrot.slane %v8237, 1
    %v8239 = vadd.f32 %v8237, %v8238
    %v8240 = vrot.slane %v6632, 4
    %v8241 = vadd.f32 %v6632, %v8240
    %v8242 = vrot.slane %v8241, 2
    %v8243 = vadd.f32 %v8241, %v8242
    %v8244 = vrot.slane %v8243, 1
    %v8245 = vadd.f32 %v8243, %v8244
    %v8246 = vrot.slane %v6633, 4
    %v8247 = vadd.f32 %v6633, %v8246
    %v8248 = vrot.slane %v8247, 2
    %v8249 = vadd.f32 %v8247, %v8248
    %v8250 = vrot.slane %v8249, 1
    %v8251 = vadd.f32 %v8249, %v8250
    %v8252 = vrot.slane %v6634, 4
    %v8253 = vadd.f32 %v6634, %v8252
    %v8254 = vrot.slane %v8253, 2
    %v8255 = vadd.f32 %v8253, %v8254
    %v8256 = vrot.slane %v8255, 1
    %v8257 = vadd.f32 %v8255, %v8256
    %v8258 = vrot.slane %v6635, 4
    %v8259 = vadd.f32 %v6635, %v8258
    %v8260 = vrot.slane %v8259, 2
    %v8261 = vadd.f32 %v8259, %v8260
    %v8262 = vrot.slane %v8261, 1
    %v8263 = vadd.f32 %v8261, %v8262
    %v8264 = vrot.slane %v6636, 4
    %v8265 = vadd.f32 %v6636, %v8264
    %v8266 = vrot.slane %v8265, 2
    %v8267 = vadd.f32 %v8265, %v8266
    %v8268 = vrot.slane %v8267, 1
    %v8269 = vadd.f32 %v8267, %v8268
    %v8270 = vrot.slane %v6637, 4
    %v8271 = vadd.f32 %v6637, %v8270
    %v8272 = vrot.slane %v8271, 2
    %v8273 = vadd.f32 %v8271, %v8272
    %v8274 = vrot.slane %v8273, 1
    %v8275 = vadd.f32 %v8273, %v8274
    %v8276 = vrot.slane %v6638, 4
    %v8277 = vadd.f32 %v6638, %v8276
    %v8278 = vrot.slane %v8277, 2
    %v8279 = vadd.f32 %v8277, %v8278
    %v8280 = vrot.slane %v8279, 1
    %v8281 = vadd.f32 %v8279, %v8280
    %v8282 = vrot.slane %v6639, 4
    %v8283 = vadd.f32 %v6639, %v8282
    %v8284 = vrot.slane %v8283, 2
    %v8285 = vadd.f32 %v8283, %v8284
    %v8286 = vrot.slane %v8285, 1
    %v8287 = vadd.f32 %v8285, %v8286
    %v8288 = vrot.slane %v6640, 4
    %v8289 = vadd.f32 %v6640, %v8288
    %v8290 = vrot.slane %v8289, 2
    %v8291 = vadd.f32 %v8289, %v8290
    %v8292 = vrot.slane %v8291, 1
    %v8293 = vadd.f32 %v8291, %v8292
    %v8294 = vrot.slane %v6641, 4
    %v8295 = vadd.f32 %v6641, %v8294
    %v8296 = vrot.slane %v8295, 2
    %v8297 = vadd.f32 %v8295, %v8296
    %v8298 = vrot.slane %v8297, 1
    %v8299 = vadd.f32 %v8297, %v8298
    %v8300 = vrot.slane %v6642, 4
    %v8301 = vadd.f32 %v6642, %v8300
    %v8302 = vrot.slane %v8301, 2
    %v8303 = vadd.f32 %v8301, %v8302
    %v8304 = vrot.slane %v8303, 1
    %v8305 = vadd.f32 %v8303, %v8304
    %v8306 = vrot.slane %v6643, 4
    %v8307 = vadd.f32 %v6643, %v8306
    %v8308 = vrot.slane %v8307, 2
    %v8309 = vadd.f32 %v8307, %v8308
    %v8310 = vrot.slane %v8309, 1
    %v8311 = vadd.f32 %v8309, %v8310
    %v8312 = vrot.slane %v6644, 4
    %v8313 = vadd.f32 %v6644, %v8312
    %v8314 = vrot.slane %v8313, 2
    %v8315 = vadd.f32 %v8313, %v8314
    %v8316 = vrot.slane %v8315, 1
    %v8317 = vadd.f32 %v8315, %v8316
    %v8318 = vrot.slane %v6645, 4
    %v8319 = vadd.f32 %v6645, %v8318
    %v8320 = vrot.slane %v8319, 2
    %v8321 = vadd.f32 %v8319, %v8320
    %v8322 = vrot.slane %v8321, 1
    %v8323 = vadd.f32 %v8321, %v8322
    %v8324 = vrot.slane %v6646, 4
    %v8325 = vadd.f32 %v6646, %v8324
    %v8326 = vrot.slane %v8325, 2
    %v8327 = vadd.f32 %v8325, %v8326
    %v8328 = vrot.slane %v8327, 1
    %v8329 = vadd.f32 %v8327, %v8328
    %v8330 = vrot.slane %v6647, 4
    %v8331 = vadd.f32 %v6647, %v8330
    %v8332 = vrot.slane %v8331, 2
    %v8333 = vadd.f32 %v8331, %v8332
    %v8334 = vrot.slane %v8333, 1
    %v8335 = vadd.f32 %v8333, %v8334
    %v8336 = vrot.slane %v6648, 4
    %v8337 = vadd.f32 %v6648, %v8336
    %v8338 = vrot.slane %v8337, 2
    %v8339 = vadd.f32 %v8337, %v8338
    %v8340 = vrot.slane %v8339, 1
    %v8341 = vadd.f32 %v8339, %v8340
    %v8342 = vrot.slane %v6649, 4
    %v8343 = vadd.f32 %v6649, %v8342
    %v8344 = vrot.slane %v8343, 2
    %v8345 = vadd.f32 %v8343, %v8344
    %v8346 = vrot.slane %v8345, 1
    %v8347 = vadd.f32 %v8345, %v8346
    %v8348 = vrot.slane %v6650, 4
    %v8349 = vadd.f32 %v6650, %v8348
    %v8350 = vrot.slane %v8349, 2
    %v8351 = vadd.f32 %v8349, %v8350
    %v8352 = vrot.slane %v8351, 1
    %v8353 = vadd.f32 %v8351, %v8352
    %v8354 = vrot.slane %v6651, 4
    %v8355 = vadd.f32 %v6651, %v8354
    %v8356 = vrot.slane %v8355, 2
    %v8357 = vadd.f32 %v8355, %v8356
    %v8358 = vrot.slane %v8357, 1
    %v8359 = vadd.f32 %v8357, %v8358
    %v8360 = vrot.slane %v6652, 4
    %v8361 = vadd.f32 %v6652, %v8360
    %v8362 = vrot.slane %v8361, 2
    %v8363 = vadd.f32 %v8361, %v8362
    %v8364 = vrot.slane %v8363, 1
    %v8365 = vadd.f32 %v8363, %v8364
    %v8366 = vrot.slane %v6653, 4
    %v8367 = vadd.f32 %v6653, %v8366
    %v8368 = vrot.slane %v8367, 2
    %v8369 = vadd.f32 %v8367, %v8368
    %v8370 = vrot.slane %v8369, 1
    %v8371 = vadd.f32 %v8369, %v8370
    %v8372 = vrot.slane %v6654, 4
    %v8373 = vadd.f32 %v6654, %v8372
    %v8374 = vrot.slane %v8373, 2
    %v8375 = vadd.f32 %v8373, %v8374
    %v8376 = vrot.slane %v8375, 1
    %v8377 = vadd.f32 %v8375, %v8376
    %v8378 = vrot.slane %v6655, 4
    %v8379 = vadd.f32 %v6655, %v8378
    %v8380 = vrot.slane %v8379, 2
    %v8381 = vadd.f32 %v8379, %v8380
    %v8382 = vrot.slane %v8381, 1
    %v8383 = vadd.f32 %v8381, %v8382
    %v8384 = vrot.slane %v6656, 4
    %v8385 = vadd.f32 %v6656, %v8384
    %v8386 = vrot.slane %v8385, 2
    %v8387 = vadd.f32 %v8385, %v8386
    %v8388 = vrot.slane %v8387, 1
    %v8389 = vadd.f32 %v8387, %v8388
    %v8390 = vrot.slane %v6657, 4
    %v8391 = vadd.f32 %v6657, %v8390
    %v8392 = vrot.slane %v8391, 2
    %v8393 = vadd.f32 %v8391, %v8392
    %v8394 = vrot.slane %v8393, 1
    %v8395 = vadd.f32 %v8393, %v8394
    %v8396 = vrot.slane %v6658, 4
    %v8397 = vadd.f32 %v6658, %v8396
    %v8398 = vrot.slane %v8397, 2
    %v8399 = vadd.f32 %v8397, %v8398
    %v8400 = vrot.slane %v8399, 1
    %v8401 = vadd.f32 %v8399, %v8400
    %v8402 = vrot.slane %v6659, 4
    %v8403 = vadd.f32 %v6659, %v8402
    %v8404 = vrot.slane %v8403, 2
    %v8405 = vadd.f32 %v8403, %v8404
    %v8406 = vrot.slane %v8405, 1
    %v8407 = vadd.f32 %v8405, %v8406
    %v8408 = vrot.slane %v6660, 4
    %v8409 = vadd.f32 %v6660, %v8408
    %v8410 = vrot.slane %v8409, 2
    %v8411 = vadd.f32 %v8409, %v8410
    %v8412 = vrot.slane %v8411, 1
    %v8413 = vadd.f32 %v8411, %v8412
    %v8414 = vrot.slane %v6661, 4
    %v8415 = vadd.f32 %v6661, %v8414
    %v8416 = vrot.slane %v8415, 2
    %v8417 = vadd.f32 %v8415, %v8416
    %v8418 = vrot.slane %v8417, 1
    %v8419 = vadd.f32 %v8417, %v8418
    %v8420 = vrot.slane %v6662, 4
    %v8421 = vadd.f32 %v6662, %v8420
    %v8422 = vrot.slane %v8421, 2
    %v8423 = vadd.f32 %v8421, %v8422
    %v8424 = vrot.slane %v8423, 1
    %v8425 = vadd.f32 %v8423, %v8424
    %v8426 = vrot.slane %v6663, 4
    %v8427 = vadd.f32 %v6663, %v8426
    %v8428 = vrot.slane %v8427, 2
    %v8429 = vadd.f32 %v8427, %v8428
    %v8430 = vrot.slane %v8429, 1
    %v8431 = vadd.f32 %v8429, %v8430
    %v8432 = vrot.slane %v6664, 4
    %v8433 = vadd.f32 %v6664, %v8432
    %v8434 = vrot.slane %v8433, 2
    %v8435 = vadd.f32 %v8433, %v8434
    %v8436 = vrot.slane %v8435, 1
    %v8437 = vadd.f32 %v8435, %v8436
    %v8438 = vrot.slane %v6665, 4
    %v8439 = vadd.f32 %v6665, %v8438
    %v8440 = vrot.slane %v8439, 2
    %v8441 = vadd.f32 %v8439, %v8440
    %v8442 = vrot.slane %v8441, 1
    %v8443 = vadd.f32 %v8441, %v8442
    %v8444 = vrot.slane %v6666, 4
    %v8445 = vadd.f32 %v6666, %v8444
    %v8446 = vrot.slane %v8445, 2
    %v8447 = vadd.f32 %v8445, %v8446
    %v8448 = vrot.slane %v8447, 1
    %v8449 = vadd.f32 %v8447, %v8448
    %v8450 = vrot.slane %v6667, 4
    %v8451 = vadd.f32 %v6667, %v8450
    %v8452 = vrot.slane %v8451, 2
    %v8453 = vadd.f32 %v8451, %v8452
    %v8454 = vrot.slane %v8453, 1
    %v8455 = vadd.f32 %v8453, %v8454
    %v8456 = vrot.slane %v6668, 4
    %v8457 = vadd.f32 %v6668, %v8456
    %v8458 = vrot.slane %v8457, 2
    %v8459 = vadd.f32 %v8457, %v8458
    %v8460 = vrot.slane %v8459, 1
    %v8461 = vadd.f32 %v8459, %v8460
    %v8462 = vadd.f32 %v7699, 1e-09
    %v8463 = vadd.f32 %v7705, 1e-09
    %v8464 = vadd.f32 %v7711, 1e-09
    %v8465 = vadd.f32 %v7717, 1e-09
    %v8466 = vadd.f32 %v7723, 1e-09
    %v8467 = vadd.f32 %v7729, 1e-09
    %v8468 = vadd.f32 %v7735, 1e-09
    %v8469 = vadd.f32 %v7741, 1e-09
    %v8470 = vadd.f32 %v7747, 1e-09
    %v8471 = vadd.f32 %v7753, 1e-09
    %v8472 = vadd.f32 %v7759, 1e-09
    %v8473 = vadd.f32 %v7765, 1e-09
    %v8474 = vadd.f32 %v7771, 1e-09
    %v8475 = vadd.f32 %v7777, 1e-09
    %v8476 = vadd.f32 %v7783, 1e-09
    %v8477 = vadd.f32 %v7789, 1e-09
    %v8478 = vadd.f32 %v7795, 1e-09
    %v8479 = vadd.f32 %v7801, 1e-09
    %v8480 = vadd.f32 %v7807, 1e-09
    %v8481 = vadd.f32 %v7813, 1e-09
    %v8482 = vadd.f32 %v7819, 1e-09
    %v8483 = vadd.f32 %v7825, 1e-09
    %v8484 = vadd.f32 %v7831, 1e-09
    %v8485 = vadd.f32 %v7837, 1e-09
    %v8486 = vadd.f32 %v7843, 1e-09
    %v8487 = vadd.f32 %v7849, 1e-09
    %v8488 = vadd.f32 %v7855, 1e-09
    %v8489 = vadd.f32 %v7861, 1e-09
    %v8490 = vadd.f32 %v7867, 1e-09
    %v8491 = vadd.f32 %v7873, 1e-09
    %v8492 = vadd.f32 %v7879, 1e-09
    %v8493 = vadd.f32 %v7885, 1e-09
    %v8494 = vadd.f32 %v7891, 1e-09
    %v8495 = vadd.f32 %v7897, 1e-09
    %v8496 = vadd.f32 %v7903, 1e-09
    %v8497 = vadd.f32 %v7909, 1e-09
    %v8498 = vadd.f32 %v7915, 1e-09
    %v8499 = vadd.f32 %v7921, 1e-09
    %v8500 = vadd.f32 %v7927, 1e-09
    %v8501 = vadd.f32 %v7933, 1e-09
    %v8502 = vadd.f32 %v7939, 1e-09
    %v8503 = vadd.f32 %v7945, 1e-09
    %v8504 = vadd.f32 %v7951, 1e-09
    %v8505 = vadd.f32 %v7957, 1e-09
    %v8506 = vadd.f32 %v7963, 1e-09
    %v8507 = vadd.f32 %v7969, 1e-09
    %v8508 = vadd.f32 %v7975, 1e-09
    %v8509 = vadd.f32 %v7981, 1e-09
    %v8510 = vadd.f32 %v7987, 1e-09
    %v8511 = vadd.f32 %v7993, 1e-09
    %v8512 = vadd.f32 %v7999, 1e-09
    %v8513 = vadd.f32 %v8005, 1e-09
    %v8514 = vadd.f32 %v8011, 1e-09
    %v8515 = vadd.f32 %v8017, 1e-09
    %v8516 = vadd.f32 %v8023, 1e-09
    %v8517 = vadd.f32 %v8029, 1e-09
    %v8518 = vadd.f32 %v8035, 1e-09
    %v8519 = vadd.f32 %v8041, 1e-09
    %v8520 = vadd.f32 %v8047, 1e-09
    %v8521 = vadd.f32 %v8053, 1e-09
    %v8522 = vadd.f32 %v8059, 1e-09
    %v8523 = vadd.f32 %v8065, 1e-09
    %v8524 = vadd.f32 %v8071, 1e-09
    %v8525 = vadd.f32 %v8077, 1e-09
    %v8526 = vadd.f32 %v8083, 1e-09
    %v8527 = vadd.f32 %v8089, 1e-09
    %v8528 = vadd.f32 %v8095, 1e-09
    %v8529 = vadd.f32 %v8101, 1e-09
    %v8530 = vadd.f32 %v8107, 1e-09
    %v8531 = vadd.f32 %v8113, 1e-09
    %v8532 = vadd.f32 %v8119, 1e-09
    %v8533 = vadd.f32 %v8125, 1e-09
    %v8534 = vadd.f32 %v8131, 1e-09
    %v8535 = vadd.f32 %v8137, 1e-09
    %v8536 = vadd.f32 %v8143, 1e-09
    %v8537 = vadd.f32 %v8149, 1e-09
    %v8538 = vadd.f32 %v8155, 1e-09
    %v8539 = vadd.f32 %v8161, 1e-09
    %v8540 = vadd.f32 %v8167, 1e-09
    %v8541 = vadd.f32 %v8173, 1e-09
    %v8542 = vadd.f32 %v8179, 1e-09
    %v8543 = vadd.f32 %v8185, 1e-09
    %v8544 = vadd.f32 %v8191, 1e-09
    %v8545 = vadd.f32 %v8197, 1e-09
    %v8546 = vadd.f32 %v8203, 1e-09
    %v8547 = vadd.f32 %v8209, 1e-09
    %v8548 = vadd.f32 %v8215, 1e-09
    %v8549 = vadd.f32 %v8221, 1e-09
    %v8550 = vadd.f32 %v8227, 1e-09
    %v8551 = vadd.f32 %v8233, 1e-09
    %v8552 = vadd.f32 %v8239, 1e-09
    %v8553 = vadd.f32 %v8245, 1e-09
    %v8554 = vadd.f32 %v8251, 1e-09
    %v8555 = vadd.f32 %v8257, 1e-09
    %v8556 = vadd.f32 %v8263, 1e-09
    %v8557 = vadd.f32 %v8269, 1e-09
    %v8558 = vadd.f32 %v8275, 1e-09
    %v8559 = vadd.f32 %v8281, 1e-09
    %v8560 = vadd.f32 %v8287, 1e-09
    %v8561 = vadd.f32 %v8293, 1e-09
    %v8562 = vadd.f32 %v8299, 1e-09
    %v8563 = vadd.f32 %v8305, 1e-09
    %v8564 = vadd.f32 %v8311, 1e-09
    %v8565 = vadd.f32 %v8317, 1e-09
    %v8566 = vadd.f32 %v8323, 1e-09
    %v8567 = vadd.f32 %v8329, 1e-09
    %v8568 = vadd.f32 %v8335, 1e-09
    %v8569 = vadd.f32 %v8341, 1e-09
    %v8570 = vadd.f32 %v8347, 1e-09
    %v8571 = vadd.f32 %v8353, 1e-09
    %v8572 = vadd.f32 %v8359, 1e-09
    %v8573 = vadd.f32 %v8365, 1e-09
    %v8574 = vadd.f32 %v8371, 1e-09
    %v8575 = vadd.f32 %v8377, 1e-09
    %v8576 = vadd.f32 %v8383, 1e-09
    %v8577 = vadd.f32 %v8389, 1e-09
    %v8578 = vadd.f32 %v8395, 1e-09
    %v8579 = vadd.f32 %v8401, 1e-09
    %v8580 = vadd.f32 %v8407, 1e-09
    %v8581 = vadd.f32 %v8413, 1e-09
    %v8582 = vadd.f32 %v8419, 1e-09
    %v8583 = vadd.f32 %v8425, 1e-09
    %v8584 = vadd.f32 %v8431, 1e-09
    %v8585 = vadd.f32 %v8437, 1e-09
    %v8586 = vadd.f32 %v8443, 1e-09
    %v8587 = vadd.f32 %v8449, 1e-09
    %v8588 = vadd.f32 %v8455, 1e-09
    %v8589 = vadd.f32 %v8461, 1e-09
    %v8590 = vrcp.pop %v8462
    %v8591 = vmul.f32 %v6804, %v8590
    %v8592 = vrcp.pop %v8463
    %v8593 = vmul.f32 %v6811, %v8592
    %v8594 = vrcp.pop %v8464
    %v8595 = vmul.f32 %v6818, %v8594
    %v8596 = vrcp.pop %v8465
    %v8597 = vmul.f32 %v6825, %v8596
    %v8598 = vrcp.pop %v8466
    %v8599 = vmul.f32 %v6832, %v8598
    %v8600 = vrcp.pop %v8467
    %v8601 = vmul.f32 %v6839, %v8600
    %v8602 = vrcp.pop %v8468
    %v8603 = vmul.f32 %v6846, %v8602
    %v8604 = vrcp.pop %v8469
    %v8605 = vmul.f32 %v6853, %v8604
    %v8606 = vrcp.pop %v8470
    %v8607 = vmul.f32 %v6860, %v8606
    %v8608 = vrcp.pop %v8471
    %v8609 = vmul.f32 %v6867, %v8608
    %v8610 = vrcp.pop %v8472
    %v8611 = vmul.f32 %v6874, %v8610
    %v8612 = vrcp.pop %v8473
    %v8613 = vmul.f32 %v6881, %v8612
    %v8614 = vrcp.pop %v8474
    %v8615 = vmul.f32 %v6888, %v8614
    %v8616 = vrcp.pop %v8475
    %v8617 = vmul.f32 %v6895, %v8616
    %v8618 = vrcp.pop %v8476
    %v8619 = vmul.f32 %v6902, %v8618
    %v8620 = vrcp.pop %v8477
    %v8621 = vmul.f32 %v6909, %v8620
    %v8622 = vrcp.pop %v8478
    %v8623 = vmul.f32 %v6916, %v8622
    %v8624 = vrcp.pop %v8479
    %v8625 = vmul.f32 %v6923, %v8624
    %v8626 = vrcp.pop %v8480
    %v8627 = vmul.f32 %v6930, %v8626
    %v8628 = vrcp.pop %v8481
    %v8629 = vmul.f32 %v6937, %v8628
    %v8630 = vrcp.pop %v8482
    %v8631 = vmul.f32 %v6944, %v8630
    %v8632 = vrcp.pop %v8483
    %v8633 = vmul.f32 %v6951, %v8632
    %v8634 = vrcp.pop %v8484
    %v8635 = vmul.f32 %v6958, %v8634
    %v8636 = vrcp.pop %v8485
    %v8637 = vmul.f32 %v6965, %v8636
    %v8638 = vrcp.pop %v8486
    %v8639 = vmul.f32 %v6972, %v8638
    %v8640 = vrcp.pop %v8487
    %v8641 = vmul.f32 %v6979, %v8640
    %v8642 = vrcp.pop %v8488
    %v8643 = vmul.f32 %v6986, %v8642
    %v8644 = vrcp.pop %v8489
    %v8645 = vmul.f32 %v6993, %v8644
    %v8646 = vrcp.pop %v8490
    %v8647 = vmul.f32 %v7000, %v8646
    %v8648 = vrcp.pop %v8491
    %v8649 = vmul.f32 %v7007, %v8648
    %v8650 = vrcp.pop %v8492
    %v8651 = vmul.f32 %v7014, %v8650
    %v8652 = vrcp.pop %v8493
    %v8653 = vmul.f32 %v7021, %v8652
    %v8654 = vrcp.pop %v8494
    %v8655 = vmul.f32 %v7028, %v8654
    %v8656 = vrcp.pop %v8495
    %v8657 = vmul.f32 %v7035, %v8656
    %v8658 = vrcp.pop %v8496
    %v8659 = vmul.f32 %v7042, %v8658
    %v8660 = vrcp.pop %v8497
    %v8661 = vmul.f32 %v7049, %v8660
    %v8662 = vrcp.pop %v8498
    %v8663 = vmul.f32 %v7056, %v8662
    %v8664 = vrcp.pop %v8499
    %v8665 = vmul.f32 %v7063, %v8664
    %v8666 = vrcp.pop %v8500
    %v8667 = vmul.f32 %v7070, %v8666
    %v8668 = vrcp.pop %v8501
    %v8669 = vmul.f32 %v7077, %v8668
    %v8670 = vrcp.pop %v8502
    %v8671 = vmul.f32 %v7084, %v8670
    %v8672 = vrcp.pop %v8503
    %v8673 = vmul.f32 %v7091, %v8672
    %v8674 = vrcp.pop %v8504
    %v8675 = vmul.f32 %v7098, %v8674
    %v8676 = vrcp.pop %v8505
    %v8677 = vmul.f32 %v7105, %v8676
    %v8678 = vrcp.pop %v8506
    %v8679 = vmul.f32 %v7112, %v8678
    %v8680 = vrcp.pop %v8507
    %v8681 = vmul.f32 %v7119, %v8680
    %v8682 = vrcp.pop %v8508
    %v8683 = vmul.f32 %v7126, %v8682
    %v8684 = vrcp.pop %v8509
    %v8685 = vmul.f32 %v7133, %v8684
    %v8686 = vrcp.pop %v8510
    %v8687 = vmul.f32 %v7140, %v8686
    %v8688 = vrcp.pop %v8511
    %v8689 = vmul.f32 %v7147, %v8688
    %v8690 = vrcp.pop %v8512
    %v8691 = vmul.f32 %v7154, %v8690
    %v8692 = vrcp.pop %v8513
    %v8693 = vmul.f32 %v7161, %v8692
    %v8694 = vrcp.pop %v8514
    %v8695 = vmul.f32 %v7168, %v8694
    %v8696 = vrcp.pop %v8515
    %v8697 = vmul.f32 %v7175, %v8696
    %v8698 = vrcp.pop %v8516
    %v8699 = vmul.f32 %v7182, %v8698
    %v8700 = vrcp.pop %v8517
    %v8701 = vmul.f32 %v7189, %v8700
    %v8702 = vrcp.pop %v8518
    %v8703 = vmul.f32 %v7196, %v8702
    %v8704 = vrcp.pop %v8519
    %v8705 = vmul.f32 %v7203, %v8704
    %v8706 = vrcp.pop %v8520
    %v8707 = vmul.f32 %v7210, %v8706
    %v8708 = vrcp.pop %v8521
    %v8709 = vmul.f32 %v7217, %v8708
    %v8710 = vrcp.pop %v8522
    %v8711 = vmul.f32 %v7224, %v8710
    %v8712 = vrcp.pop %v8523
    %v8713 = vmul.f32 %v7231, %v8712
    %v8714 = vrcp.pop %v8524
    %v8715 = vmul.f32 %v7238, %v8714
    %v8716 = vrcp.pop %v8525
    %v8717 = vmul.f32 %v7245, %v8716
    %v8718 = vrcp.pop %v8526
    %v8719 = vmul.f32 %v7252, %v8718
    %v8720 = vrcp.pop %v8527
    %v8721 = vmul.f32 %v7259, %v8720
    %v8722 = vrcp.pop %v8528
    %v8723 = vmul.f32 %v7266, %v8722
    %v8724 = vrcp.pop %v8529
    %v8725 = vmul.f32 %v7273, %v8724
    %v8726 = vrcp.pop %v8530
    %v8727 = vmul.f32 %v7280, %v8726
    %v8728 = vrcp.pop %v8531
    %v8729 = vmul.f32 %v7287, %v8728
    %v8730 = vrcp.pop %v8532
    %v8731 = vmul.f32 %v7294, %v8730
    %v8732 = vrcp.pop %v8533
    %v8733 = vmul.f32 %v7301, %v8732
    %v8734 = vrcp.pop %v8534
    %v8735 = vmul.f32 %v7308, %v8734
    %v8736 = vrcp.pop %v8535
    %v8737 = vmul.f32 %v7315, %v8736
    %v8738 = vrcp.pop %v8536
    %v8739 = vmul.f32 %v7322, %v8738
    %v8740 = vrcp.pop %v8537
    %v8741 = vmul.f32 %v7329, %v8740
    %v8742 = vrcp.pop %v8538
    %v8743 = vmul.f32 %v7336, %v8742
    %v8744 = vrcp.pop %v8539
    %v8745 = vmul.f32 %v7343, %v8744
    %v8746 = vrcp.pop %v8540
    %v8747 = vmul.f32 %v7350, %v8746
    %v8748 = vrcp.pop %v8541
    %v8749 = vmul.f32 %v7357, %v8748
    %v8750 = vrcp.pop %v8542
    %v8751 = vmul.f32 %v7364, %v8750
    %v8752 = vrcp.pop %v8543
    %v8753 = vmul.f32 %v7371, %v8752
    %v8754 = vrcp.pop %v8544
    %v8755 = vmul.f32 %v7378, %v8754
    %v8756 = vrcp.pop %v8545
    %v8757 = vmul.f32 %v7385, %v8756
    %v8758 = vrcp.pop %v8546
    %v8759 = vmul.f32 %v7392, %v8758
    %v8760 = vrcp.pop %v8547
    %v8761 = vmul.f32 %v7399, %v8760
    %v8762 = vrcp.pop %v8548
    %v8763 = vmul.f32 %v7406, %v8762
    %v8764 = vrcp.pop %v8549
    %v8765 = vmul.f32 %v7413, %v8764
    %v8766 = vrcp.pop %v8550
    %v8767 = vmul.f32 %v7420, %v8766
    %v8768 = vrcp.pop %v8551
    %v8769 = vmul.f32 %v7427, %v8768
    %v8770 = vrcp.pop %v8552
    %v8771 = vmul.f32 %v7434, %v8770
    %v8772 = vrcp.pop %v8553
    %v8773 = vmul.f32 %v7441, %v8772
    %v8774 = vrcp.pop %v8554
    %v8775 = vmul.f32 %v7448, %v8774
    %v8776 = vrcp.pop %v8555
    %v8777 = vmul.f32 %v7455, %v8776
    %v8778 = vrcp.pop %v8556
    %v8779 = vmul.f32 %v7462, %v8778
    %v8780 = vrcp.pop %v8557
    %v8781 = vmul.f32 %v7469, %v8780
    %v8782 = vrcp.pop %v8558
    %v8783 = vmul.f32 %v7476, %v8782
    %v8784 = vrcp.pop %v8559
    %v8785 = vmul.f32 %v7483, %v8784
    %v8786 = vrcp.pop %v8560
    %v8787 = vmul.f32 %v7490, %v8786
    %v8788 = vrcp.pop %v8561
    %v8789 = vmul.f32 %v7497, %v8788
    %v8790 = vrcp.pop %v8562
    %v8791 = vmul.f32 %v7504, %v8790
    %v8792 = vrcp.pop %v8563
    %v8793 = vmul.f32 %v7511, %v8792
    %v8794 = vrcp.pop %v8564
    %v8795 = vmul.f32 %v7518, %v8794
    %v8796 = vrcp.pop %v8565
    %v8797 = vmul.f32 %v7525, %v8796
    %v8798 = vrcp.pop %v8566
    %v8799 = vmul.f32 %v7532, %v8798
    %v8800 = vrcp.pop %v8567
    %v8801 = vmul.f32 %v7539, %v8800
    %v8802 = vrcp.pop %v8568
    %v8803 = vmul.f32 %v7546, %v8802
    %v8804 = vrcp.pop %v8569
    %v8805 = vmul.f32 %v7553, %v8804
    %v8806 = vrcp.pop %v8570
    %v8807 = vmul.f32 %v7560, %v8806
    %v8808 = vrcp.pop %v8571
    %v8809 = vmul.f32 %v7567, %v8808
    %v8810 = vrcp.pop %v8572
    %v8811 = vmul.f32 %v7574, %v8810
    %v8812 = vrcp.pop %v8573
    %v8813 = vmul.f32 %v7581, %v8812
    %v8814 = vrcp.pop %v8574
    %v8815 = vmul.f32 %v7588, %v8814
    %v8816 = vrcp.pop %v8575
    %v8817 = vmul.f32 %v7595, %v8816
    %v8818 = vrcp.pop %v8576
    %v8819 = vmul.f32 %v7602, %v8818
    %v8820 = vrcp.pop %v8577
    %v8821 = vmul.f32 %v7609, %v8820
    %v8822 = vrcp.pop %v8578
    %v8823 = vmul.f32 %v7616, %v8822
    %v8824 = vrcp.pop %v8579
    %v8825 = vmul.f32 %v7623, %v8824
    %v8826 = vrcp.pop %v8580
    %v8827 = vmul.f32 %v7630, %v8826
    %v8828 = vrcp.pop %v8581
    %v8829 = vmul.f32 %v7637, %v8828
    %v8830 = vrcp.pop %v8582
    %v8831 = vmul.f32 %v7644, %v8830
    %v8832 = vrcp.pop %v8583
    %v8833 = vmul.f32 %v7651, %v8832
    %v8834 = vrcp.pop %v8584
    %v8835 = vmul.f32 %v7658, %v8834
    %v8836 = vrcp.pop %v8585
    %v8837 = vmul.f32 %v7665, %v8836
    %v8838 = vrcp.pop %v8586
    %v8839 = vmul.f32 %v7672, %v8838
    %v8840 = vrcp.pop %v8587
    %v8841 = vmul.f32 %v7679, %v8840
    %v8842 = vrcp.pop %v8588
    %v8843 = vmul.f32 %v7686, %v8842
    %v8844 = vrcp.pop %v8589
    %v8845 = vmul.f32 %v7693, %v8844
    %vm8846 = vcmask 261248
    %v8847 = vsel %vm8846, %v5645, -inf
    %v8848 = vrot.slane %v8847, 4
    %v8849 = vmax.f32 %v8847, %v8848
    %v8850 = vrot.slane %v8849, 2
    %v8851 = vmax.f32 %v8849, %v8850
    %v8852 = vrot.slane %v8851, 1
    %v8853 = vmax.f32 %v8851, %v8852
    %v8854 = vsel %vm8846, %v5646, -inf
    %v8855 = vrot.slane %v8854, 4
    %v8856 = vmax.f32 %v8854, %v8855
    %v8857 = vrot.slane %v8856, 2
    %v8858 = vmax.f32 %v8856, %v8857
    %v8859 = vrot.slane %v8858, 1
    %v8860 = vmax.f32 %v8858, %v8859
    %v8861 = vsel %vm8846, %v5647, -inf
    %v8862 = vrot.slane %v8861, 4
    %v8863 = vmax.f32 %v8861, %v8862
    %v8864 = vrot.slane %v8863, 2
    %v8865 = vmax.f32 %v8863, %v8864
    %v8866 = vrot.slane %v8865, 1
    %v8867 = vmax.f32 %v8865, %v8866
    %v8868 = vsel %vm8846, %v5648, -inf
    %v8869 = vrot.slane %v8868, 4
    %v8870 = vmax.f32 %v8868, %v8869
    %v8871 = vrot.slane %v8870, 2
    %v8872 = vmax.f32 %v8870, %v8871
    %v8873 = vrot.slane %v8872, 1
    %v8874 = vmax.f32 %v8872, %v8873
    %v8875 = vsel %vm8846, %v5649, -inf
    %v8876 = vrot.slane %v8875, 4
    %v8877 = vmax.f32 %v8875, %v8876
    %v8878 = vrot.slane %v8877, 2
    %v8879 = vmax.f32 %v8877, %v8878
    %v8880 = vrot.slane %v8879, 1
    %v8881 = vmax.f32 %v8879, %v8880
    %v8882 = vsel %vm8846, %v5650, -inf
    %v8883 = vrot.slane %v8882, 4
    %v8884 = vmax.f32 %v8882, %v8883
    %v8885 = vrot.slane %v8884, 2
    %v8886 = vmax.f32 %v8884, %v8885
    %v8887 = vrot.slane %v8886, 1
    %v8888 = vmax.f32 %v8886, %v8887
    %v8889 = vsel %vm8846, %v5651, -inf
    %v8890 = vrot.slane %v8889, 4
    %v8891 = vmax.f32 %v8889, %v8890
    %v8892 = vrot.slane %v8891, 2
    %v8893 = vmax.f32 %v8891, %v8892
    %v8894 = vrot.slane %v8893, 1
    %v8895 = vmax.f32 %v8893, %v8894
    %v8896 = vsel %vm8846, %v5652, -inf
    %v8897 = vrot.slane %v8896, 4
    %v8898 = vmax.f32 %v8896, %v8897
    %v8899 = vrot.slane %v8898, 2
    %v8900 = vmax.f32 %v8898, %v8899
    %v8901 = vrot.slane %v8900, 1
    %v8902 = vmax.f32 %v8900, %v8901
    %v8903 = vsel %vm8846, %v5653, -inf
    %v8904 = vrot.slane %v8903, 4
    %v8905 = vmax.f32 %v8903, %v8904
    %v8906 = vrot.slane %v8905, 2
    %v8907 = vmax.f32 %v8905, %v8906
    %v8908 = vrot.slane %v8907, 1
    %v8909 = vmax.f32 %v8907, %v8908
    %v8910 = vsel %vm8846, %v5654, -inf
    %v8911 = vrot.slane %v8910, 4
    %v8912 = vmax.f32 %v8910, %v8911
    %v8913 = vrot.slane %v8912, 2
    %v8914 = vmax.f32 %v8912, %v8913
    %v8915 = vrot.slane %v8914, 1
    %v8916 = vmax.f32 %v8914, %v8915
    %v8917 = vsel %vm8846, %v5655, -inf
    %v8918 = vrot.slane %v8917, 4
    %v8919 = vmax.f32 %v8917, %v8918
    %v8920 = vrot.slane %v8919, 2
    %v8921 = vmax.f32 %v8919, %v8920
    %v8922 = vrot.slane %v8921, 1
    %v8923 = vmax.f32 %v8921, %v8922
    %v8924 = vsel %vm8846, %v5656, -inf
    %v8925 = vrot.slane %v8924, 4
    %v8926 = vmax.f32 %v8924, %v8925
    %v8927 = vrot.slane %v8926, 2
    %v8928 = vmax.f32 %v8926, %v8927
    %v8929 = vrot.slane %v8928, 1
    %v8930 = vmax.f32 %v8928, %v8929
    %v8931 = vsel %vm8846, %v5657, -inf
    %v8932 = vrot.slane %v8931, 4
    %v8933 = vmax.f32 %v8931, %v8932
    %v8934 = vrot.slane %v8933, 2
    %v8935 = vmax.f32 %v8933, %v8934
    %v8936 = vrot.slane %v8935, 1
    %v8937 = vmax.f32 %v8935, %v8936
    %v8938 = vsel %vm8846, %v5658, -inf
    %v8939 = vrot.slane %v8938, 4
    %v8940 = vmax.f32 %v8938, %v8939
    %v8941 = vrot.slane %v8940, 2
    %v8942 = vmax.f32 %v8940, %v8941
    %v8943 = vrot.slane %v8942, 1
    %v8944 = vmax.f32 %v8942, %v8943
    %v8945 = vsel %vm8846, %v5659, -inf
    %v8946 = vrot.slane %v8945, 4
    %v8947 = vmax.f32 %v8945, %v8946
    %v8948 = vrot.slane %v8947, 2
    %v8949 = vmax.f32 %v8947, %v8948
    %v8950 = vrot.slane %v8949, 1
    %v8951 = vmax.f32 %v8949, %v8950
    %v8952 = vsel %vm8846, %v5660, -inf
    %v8953 = vrot.slane %v8952, 4
    %v8954 = vmax.f32 %v8952, %v8953
    %v8955 = vrot.slane %v8954, 2
    %v8956 = vmax.f32 %v8954, %v8955
    %v8957 = vrot.slane %v8956, 1
    %v8958 = vmax.f32 %v8956, %v8957
    %v8959 = vsel %vm8846, %v5661, -inf
    %v8960 = vrot.slane %v8959, 4
    %v8961 = vmax.f32 %v8959, %v8960
    %v8962 = vrot.slane %v8961, 2
    %v8963 = vmax.f32 %v8961, %v8962
    %v8964 = vrot.slane %v8963, 1
    %v8965 = vmax.f32 %v8963, %v8964
    %v8966 = vsel %vm8846, %v5662, -inf
    %v8967 = vrot.slane %v8966, 4
    %v8968 = vmax.f32 %v8966, %v8967
    %v8969 = vrot.slane %v8968, 2
    %v8970 = vmax.f32 %v8968, %v8969
    %v8971 = vrot.slane %v8970, 1
    %v8972 = vmax.f32 %v8970, %v8971
    %v8973 = vsel %vm8846, %v5663, -inf
    %v8974 = vrot.slane %v8973, 4
    %v8975 = vmax.f32 %v8973, %v8974
    %v8976 = vrot.slane %v8975, 2
    %v8977 = vmax.f32 %v8975, %v8976
    %v8978 = vrot.slane %v8977, 1
    %v8979 = vmax.f32 %v8977, %v8978
    %v8980 = vsel %vm8846, %v5664, -inf
    %v8981 = vrot.slane %v8980, 4
    %v8982 = vmax.f32 %v8980, %v8981
    %v8983 = vrot.slane %v8982, 2
    %v8984 = vmax.f32 %v8982, %v8983
    %v8985 = vrot.slane %v8984, 1
    %v8986 = vmax.f32 %v8984, %v8985
    %v8987 = vsel %vm8846, %v5665, -inf
    %v8988 = vrot.slane %v8987, 4
    %v8989 = vmax.f32 %v8987, %v8988
    %v8990 = vrot.slane %v8989, 2
    %v8991 = vmax.f32 %v8989, %v8990
    %v8992 = vrot.slane %v8991, 1
    %v8993 = vmax.f32 %v8991, %v8992
    %v8994 = vsel %vm8846, %v5666, -inf
    %v8995 = vrot.slane %v8994, 4
    %v8996 = vmax.f32 %v8994, %v8995
    %v8997 = vrot.slane %v8996, 2
    %v8998 = vmax.f32 %v8996, %v8997
    %v8999 = vrot.slane %v8998, 1
    %v9000 = vmax.f32 %v8998, %v8999
    %v9001 = vsel %vm8846, %v5667, -inf
    %v9002 = vrot.slane %v9001, 4
    %v9003 = vmax.f32 %v9001, %v9002
    %v9004 = vrot.slane %v9003, 2
    %v9005 = vmax.f32 %v9003, %v9004
    %v9006 = vrot.slane %v9005, 1
    %v9007 = vmax.f32 %v9005, %v9006
    %v9008 = vsel %vm8846, %v5668, -inf
    %v9009 = vrot.slane %v9008, 4
    %v9010 = vmax.f32 %v9008, %v9009
    %v9011 = vrot.slane %v9010, 2
    %v9012 = vmax.f32 %v9010, %v9011
    %v9013 = vrot.slane %v9012, 1
    %v9014 = vmax.f32 %v9012, %v9013
    %v9015 = vsel %vm8846, %v5669, -inf
    %v9016 = vrot.slane %v9015, 4
    %v9017 = vmax.f32 %v9015, %v9016
    %v9018 = vrot.slane %v9017, 2
    %v9019 = vmax.f32 %v9017, %v9018
    %v9020 = vrot.slane %v9019, 1
    %v9021 = vmax.f32 %v9019, %v9020
    %v9022 = vsel %vm8846, %v5670, -inf
    %v9023 = vrot.slane %v9022, 4
    %v9024 = vmax.f32 %v9022, %v9023
    %v9025 = vrot.slane %v9024, 2
    %v9026 = vmax.f32 %v9024, %v9025
    %v9027 = vrot.slane %v9026, 1
    %v9028 = vmax.f32 %v9026, %v9027
    %v9029 = vsel %vm8846, %v5671, -inf
    %v9030 = vrot.slane %v9029, 4
    %v9031 = vmax.f32 %v9029, %v9030
    %v9032 = vrot.slane %v9031, 2
    %v9033 = vmax.f32 %v9031, %v9032
    %v9034 = vrot.slane %v9033, 1
    %v9035 = vmax.f32 %v9033, %v9034
    %v9036 = vsel %vm8846, %v5672, -inf
    %v9037 = vrot.slane %v9036, 4
    %v9038 = vmax.f32 %v9036, %v9037
    %v9039 = vrot.slane %v9038, 2
    %v9040 = vmax.f32 %v9038, %v9039
    %v9041 = vrot.slane %v9040, 1
    %v9042 = vmax.f32 %v9040, %v9041
    %v9043 = vsel %vm8846, %v5673, -inf
    %v9044 = vrot.slane %v9043, 4
    %v9045 = vmax.f32 %v9043, %v9044
    %v9046 = vrot.slane %v9045, 2
    %v9047 = vmax.f32 %v9045, %v9046
    %v9048 = vrot.slane %v9047, 1
    %v9049 = vmax.f32 %v9047, %v9048
    %v9050 = vsel %vm8846, %v5674, -inf
    %v9051 = vrot.slane %v9050, 4
    %v9052 = vmax.f32 %v9050, %v9051
    %v9053 = vrot.slane %v9052, 2
    %v9054 = vmax.f32 %v9052, %v9053
    %v9055 = vrot.slane %v9054, 1
    %v9056 = vmax.f32 %v9054, %v9055
    %v9057 = vsel %vm8846, %v5675, -inf
    %v9058 = vrot.slane %v9057, 4
    %v9059 = vmax.f32 %v9057, %v9058
    %v9060 = vrot.slane %v9059, 2
    %v9061 = vmax.f32 %v9059, %v9060
    %v9062 = vrot.slane %v9061, 1
    %v9063 = vmax.f32 %v9061, %v9062
    %v9064 = vsel %vm8846, %v5676, -inf
    %v9065 = vrot.slane %v9064, 4
    %v9066 = vmax.f32 %v9064, %v9065
    %v9067 = vrot.slane %v9066, 2
    %v9068 = vmax.f32 %v9066, %v9067
    %v9069 = vrot.slane %v9068, 1
    %v9070 = vmax.f32 %v9068, %v9069
    %v9071 = vsel %vm8846, %v5677, -inf
    %v9072 = vrot.slane %v9071, 4
    %v9073 = vmax.f32 %v9071, %v9072
    %v9074 = vrot.slane %v9073, 2
    %v9075 = vmax.f32 %v9073, %v9074
    %v9076 = vrot.slane %v9075, 1
    %v9077 = vmax.f32 %v9075, %v9076
    %v9078 = vsel %vm8846, %v5678, -inf
    %v9079 = vrot.slane %v9078, 4
    %v9080 = vmax.f32 %v9078, %v9079
    %v9081 = vrot.slane %v9080, 2
    %v9082 = vmax.f32 %v9080, %v9081
    %v9083 = vrot.slane %v9082, 1
    %v9084 = vmax.f32 %v9082, %v9083
    %v9085 = vsel %vm8846, %v5679, -inf
    %v9086 = vrot.slane %v9085, 4
    %v9087 = vmax.f32 %v9085, %v9086
    %v9088 = vrot.slane %v9087, 2
    %v9089 = vmax.f32 %v9087, %v9088
    %v9090 = vrot.slane %v9089, 1
    %v9091 = vmax.f32 %v9089, %v9090
    %v9092 = vsel %vm8846, %v5680, -inf
    %v9093 = vrot.slane %v9092, 4
    %v9094 = vmax.f32 %v9092, %v9093
    %v9095 = vrot.slane %v9094, 2
    %v9096 = vmax.f32 %v9094, %v9095
    %v9097 = vrot.slane %v9096, 1
    %v9098 = vmax.f32 %v9096, %v9097
    %v9099 = vsel %vm8846, %v5681, -inf
    %v9100 = vrot.slane %v9099, 4
    %v9101 = vmax.f32 %v9099, %v9100
    %v9102 = vrot.slane %v9101, 2
    %v9103 = vmax.f32 %v9101, %v9102
    %v9104 = vrot.slane %v9103, 1
    %v9105 = vmax.f32 %v9103, %v9104
    %v9106 = vsel %vm8846, %v5682, -inf
    %v9107 = vrot.slane %v9106, 4
    %v9108 = vmax.f32 %v9106, %v9107
    %v9109 = vrot.slane %v9108, 2
    %v9110 = vmax.f32 %v9108, %v9109
    %v9111 = vrot.slane %v9110, 1
    %v9112 = vmax.f32 %v9110, %v9111
    %v9113 = vsel %vm8846, %v5683, -inf
    %v9114 = vrot.slane %v9113, 4
    %v9115 = vmax.f32 %v9113, %v9114
    %v9116 = vrot.slane %v9115, 2
    %v9117 = vmax.f32 %v9115, %v9116
    %v9118 = vrot.slane %v9117, 1
    %v9119 = vmax.f32 %v9117, %v9118
    %v9120 = vsel %vm8846, %v5684, -inf
    %v9121 = vrot.slane %v9120, 4
    %v9122 = vmax.f32 %v9120, %v9121
    %v9123 = vrot.slane %v9122, 2
    %v9124 = vmax.f32 %v9122, %v9123
    %v9125 = vrot.slane %v9124, 1
    %v9126 = vmax.f32 %v9124, %v9125
    %v9127 = vsel %vm8846, %v5685, -inf
    %v9128 = vrot.slane %v9127, 4
    %v9129 = vmax.f32 %v9127, %v9128
    %v9130 = vrot.slane %v9129, 2
    %v9131 = vmax.f32 %v9129, %v9130
    %v9132 = vrot.slane %v9131, 1
    %v9133 = vmax.f32 %v9131, %v9132
    %v9134 = vsel %vm8846, %v5686, -inf
    %v9135 = vrot.slane %v9134, 4
    %v9136 = vmax.f32 %v9134, %v9135
    %v9137 = vrot.slane %v9136, 2
    %v9138 = vmax.f32 %v9136, %v9137
    %v9139 = vrot.slane %v9138, 1
    %v9140 = vmax.f32 %v9138, %v9139
    %v9141 = vsel %vm8846, %v5687, -inf
    %v9142 = vrot.slane %v9141, 4
    %v9143 = vmax.f32 %v9141, %v9142
    %v9144 = vrot.slane %v9143, 2
    %v9145 = vmax.f32 %v9143, %v9144
    %v9146 = vrot.slane %v9145, 1
    %v9147 = vmax.f32 %v9145, %v9146
    %v9148 = vsel %vm8846, %v5688, -inf
    %v9149 = vrot.slane %v9148, 4
    %v9150 = vmax.f32 %v9148, %v9149
    %v9151 = vrot.slane %v9150, 2
    %v9152 = vmax.f32 %v9150, %v9151
    %v9153 = vrot.slane %v9152, 1
    %v9154 = vmax.f32 %v9152, %v9153
    %v9155 = vsel %vm8846, %v5689, -inf
    %v9156 = vrot.slane %v9155, 4
    %v9157 = vmax.f32 %v9155, %v9156
    %v9158 = vrot.slane %v9157, 2
    %v9159 = vmax.f32 %v9157, %v9158
    %v9160 = vrot.slane %v9159, 1
    %v9161 = vmax.f32 %v9159, %v9160
    %v9162 = vsel %vm8846, %v5690, -inf
    %v9163 = vrot.slane %v9162, 4
    %v9164 = vmax.f32 %v9162, %v9163
    %v9165 = vrot.slane %v9164, 2
    %v9166 = vmax.f32 %v9164, %v9165
    %v9167 = vrot.slane %v9166, 1
    %v9168 = vmax.f32 %v9166, %v9167
    %v9169 = vsel %vm8846, %v5691, -inf
    %v9170 = vrot.slane %v9169, 4
    %v9171 = vmax.f32 %v9169, %v9170
    %v9172 = vrot.slane %v9171, 2
    %v9173 = vmax.f32 %v9171, %v9172
    %v9174 = vrot.slane %v9173, 1
    %v9175 = vmax.f32 %v9173, %v9174
    %v9176 = vsel %vm8846, %v5692, -inf
    %v9177 = vrot.slane %v9176, 4
    %v9178 = vmax.f32 %v9176, %v9177
    %v9179 = vrot.slane %v9178, 2
    %v9180 = vmax.f32 %v9178, %v9179
    %v9181 = vrot.slane %v9180, 1
    %v9182 = vmax.f32 %v9180, %v9181
    %v9183 = vsel %vm8846, %v5693, -inf
    %v9184 = vrot.slane %v9183, 4
    %v9185 = vmax.f32 %v9183, %v9184
    %v9186 = vrot.slane %v9185, 2
    %v9187 = vmax.f32 %v9185, %v9186
    %v9188 = vrot.slane %v9187, 1
    %v9189 = vmax.f32 %v9187, %v9188
    %v9190 = vsel %vm8846, %v5694, -inf
    %v9191 = vrot.slane %v9190, 4
    %v9192 = vmax.f32 %v9190, %v9191
    %v9193 = vrot.slane %v9192, 2
    %v9194 = vmax.f32 %v9192, %v9193
    %v9195 = vrot.slane %v9194, 1
    %v9196 = vmax.f32 %v9194, %v9195
    %v9197 = vsel %vm8846, %v5695, -inf
    %v9198 = vrot.slane %v9197, 4
    %v9199 = vmax.f32 %v9197, %v9198
    %v9200 = vrot.slane %v9199, 2
    %v9201 = vmax.f32 %v9199, %v9200
    %v9202 = vrot.slane %v9201, 1
    %v9203 = vmax.f32 %v9201, %v9202
    %v9204 = vsel %vm8846, %v5696, -inf
    %v9205 = vrot.slane %v9204, 4
    %v9206 = vmax.f32 %v9204, %v9205
    %v9207 = vrot.slane %v9206, 2
    %v9208 = vmax.f32 %v9206, %v9207
    %v9209 = vrot.slane %v9208, 1
    %v9210 = vmax.f32 %v9208, %v9209
    %v9211 = vsel %vm8846, %v5697, -inf
    %v9212 = vrot.slane %v9211, 4
    %v9213 = vmax.f32 %v9211, %v9212
    %v9214 = vrot.slane %v9213, 2
    %v9215 = vmax.f32 %v9213, %v9214
    %v9216 = vrot.slane %v9215, 1
    %v9217 = vmax.f32 %v9215, %v9216
    %v9218 = vsel %vm8846, %v5698, -inf
    %v9219 = vrot.slane %v9218, 4
    %v9220 = vmax.f32 %v9218, %v9219
    %v9221 = vrot.slane %v9220, 2
    %v9222 = vmax.f32 %v9220, %v9221
    %v9223 = vrot.slane %v9222, 1
    %v9224 = vmax.f32 %v9222, %v9223
    %v9225 = vsel %vm8846, %v5699, -inf
    %v9226 = vrot.slane %v9225, 4
    %v9227 = vmax.f32 %v9225, %v9226
    %v9228 = vrot.slane %v9227, 2
    %v9229 = vmax.f32 %v9227, %v9228
    %v9230 = vrot.slane %v9229, 1
    %v9231 = vmax.f32 %v9229, %v9230
    %v9232 = vsel %vm8846, %v5700, -inf
    %v9233 = vrot.slane %v9232, 4
    %v9234 = vmax.f32 %v9232, %v9233
    %v9235 = vrot.slane %v9234, 2
    %v9236 = vmax.f32 %v9234, %v9235
    %v9237 = vrot.slane %v9236, 1
    %v9238 = vmax.f32 %v9236, %v9237
    %v9239 = vsel %vm8846, %v5701, -inf
    %v9240 = vrot.slane %v9239, 4
    %v9241 = vmax.f32 %v9239, %v9240
    %v9242 = vrot.slane %v9241, 2
    %v9243 = vmax.f32 %v9241, %v9242
    %v9244 = vrot.slane %v9243, 1
    %v9245 = vmax.f32 %v9243, %v9244
    %v9246 = vsel %vm8846, %v5702, -inf
    %v9247 = vrot.slane %v9246, 4
    %v9248 = vmax.f32 %v9246, %v9247
    %v9249 = vrot.slane %v9248, 2
    %v9250 = vmax.f32 %v9248, %v9249
    %v9251 = vrot.slane %v9250, 1
    %v9252 = vmax.f32 %v9250, %v9251
    %v9253 = vsel %vm8846, %v5703, -inf
    %v9254 = vrot.slane %v9253, 4
    %v9255 = vmax.f32 %v9253, %v9254
    %v9256 = vrot.slane %v9255, 2
    %v9257 = vmax.f32 %v9255, %v9256
    %v9258 = vrot.slane %v9257, 1
    %v9259 = vmax.f32 %v9257, %v9258
    %v9260 = vsel %vm8846, %v5704, -inf
    %v9261 = vrot.slane %v9260, 4
    %v9262 = vmax.f32 %v9260, %v9261
    %v9263 = vrot.slane %v9262, 2
    %v9264 = vmax.f32 %v9262, %v9263
    %v9265 = vrot.slane %v9264, 1
    %v9266 = vmax.f32 %v9264, %v9265
    %v9267 = vsel %vm8846, %v5705, -inf
    %v9268 = vrot.slane %v9267, 4
    %v9269 = vmax.f32 %v9267, %v9268
    %v9270 = vrot.slane %v9269, 2
    %v9271 = vmax.f32 %v9269, %v9270
    %v9272 = vrot.slane %v9271, 1
    %v9273 = vmax.f32 %v9271, %v9272
    %v9274 = vsel %vm8846, %v5706, -inf
    %v9275 = vrot.slane %v9274, 4
    %v9276 = vmax.f32 %v9274, %v9275
    %v9277 = vrot.slane %v9276, 2
    %v9278 = vmax.f32 %v9276, %v9277
    %v9279 = vrot.slane %v9278, 1
    %v9280 = vmax.f32 %v9278, %v9279
    %v9281 = vsel %vm8846, %v5707, -inf
    %v9282 = vrot.slane %v9281, 4
    %v9283 = vmax.f32 %v9281, %v9282
    %v9284 = vrot.slane %v9283, 2
    %v9285 = vmax.f32 %v9283, %v9284
    %v9286 = vrot.slane %v9285, 1
    %v9287 = vmax.f32 %v9285, %v9286
    %v9288 = vsel %vm8846, %v5708, -inf
    %v9289 = vrot.slane %v9288, 4
    %v9290 = vmax.f32 %v9288, %v9289
    %v9291 = vrot.slane %v9290, 2
    %v9292 = vmax.f32 %v9290, %v9291
    %v9293 = vrot.slane %v9292, 1
    %v9294 = vmax.f32 %v9292, %v9293
    %v9295 = vsel %vm8846, %v5709, -inf
    %v9296 = vrot.slane %v9295, 4
    %v9297 = vmax.f32 %v9295, %v9296
    %v9298 = vrot.slane %v9297, 2
    %v9299 = vmax.f32 %v9297, %v9298
    %v9300 = vrot.slane %v9299, 1
    %v9301 = vmax.f32 %v9299, %v9300
    %v9302 = vsel %vm8846, %v5710, -inf
    %v9303 = vrot.slane %v9302, 4
    %v9304 = vmax.f32 %v9302, %v9303
    %v9305 = vrot.slane %v9304, 2
    %v9306 = vmax.f32 %v9304, %v9305
    %v9307 = vrot.slane %v9306, 1
    %v9308 = vmax.f32 %v9306, %v9307
    %v9309 = vsel %vm8846, %v5711, -inf
    %v9310 = vrot.slane %v9309, 4
    %v9311 = vmax.f32 %v9309, %v9310
    %v9312 = vrot.slane %v9311, 2
    %v9313 = vmax.f32 %v9311, %v9312
    %v9314 = vrot.slane %v9313, 1
    %v9315 = vmax.f32 %v9313, %v9314
    %v9316 = vsel %vm8846, %v5712, -inf
    %v9317 = vrot.slane %v9316, 4
    %v9318 = vmax.f32 %v9316, %v9317
    %v9319 = vrot.slane %v9318, 2
    %v9320 = vmax.f32 %v9318, %v9319
    %v9321 = vrot.slane %v9320, 1
    %v9322 = vmax.f32 %v9320, %v9321
    %v9323 = vsel %vm8846, %v5713, -inf
    %v9324 = vrot.slane %v9323, 4
    %v9325 = vmax.f32 %v9323, %v9324
    %v9326 = vrot.slane %v9325, 2
    %v9327 = vmax.f32 %v9325, %v9326
    %v9328 = vrot.slane %v9327, 1
    %v9329 = vmax.f32 %v9327, %v9328
    %v9330 = vsel %vm8846, %v5714, -inf
    %v9331 = vrot.slane %v9330, 4
    %v9332 = vmax.f32 %v9330, %v9331
    %v9333 = vrot.slane %v9332, 2
    %v9334 = vmax.f32 %v9332, %v9333
    %v9335 = vrot.slane %v9334, 1
    %v9336 = vmax.f32 %v9334, %v9335
    %v9337 = vsel %vm8846, %v5715, -inf
    %v9338 = vrot.slane %v9337, 4
    %v9339 = vmax.f32 %v9337, %v9338
    %v9340 = vrot.slane %v9339, 2
    %v9341 = vmax.f32 %v9339, %v9340
    %v9342 = vrot.slane %v9341, 1
    %v9343 = vmax.f32 %v9341, %v9342
    %v9344 = vsel %vm8846, %v5716, -inf
    %v9345 = vrot.slane %v9344, 4
    %v9346 = vmax.f32 %v9344, %v9345
    %v9347 = vrot.slane %v9346, 2
    %v9348 = vmax.f32 %v9346, %v9347
    %v9349 = vrot.slane %v9348, 1
    %v9350 = vmax.f32 %v9348, %v9349
    %v9351 = vsel %vm8846, %v5717, -inf
    %v9352 = vrot.slane %v9351, 4
    %v9353 = vmax.f32 %v9351, %v9352
    %v9354 = vrot.slane %v9353, 2
    %v9355 = vmax.f32 %v9353, %v9354
    %v9356 = vrot.slane %v9355, 1
    %v9357 = vmax.f32 %v9355, %v9356
    %v9358 = vsel %vm8846, %v5718, -inf
    %v9359 = vrot.slane %v9358, 4
    %v9360 = vmax.f32 %v9358, %v9359
    %v9361 = vrot.slane %v9360, 2
    %v9362 = vmax.f32 %v9360, %v9361
    %v9363 = vrot.slane %v9362, 1
    %v9364 = vmax.f32 %v9362, %v9363
    %v9365 = vsel %vm8846, %v5719, -inf
    %v9366 = vrot.slane %v9365, 4
    %v9367 = vmax.f32 %v9365, %v9366
    %v9368 = vrot.slane %v9367, 2
    %v9369 = vmax.f32 %v9367, %v9368
    %v9370 = vrot.slane %v9369, 1
    %v9371 = vmax.f32 %v9369, %v9370
    %v9372 = vsel %vm8846, %v5720, -inf
    %v9373 = vrot.slane %v9372, 4
    %v9374 = vmax.f32 %v9372, %v9373
    %v9375 = vrot.slane %v9374, 2
    %v9376 = vmax.f32 %v9374, %v9375
    %v9377 = vrot.slane %v9376, 1
    %v9378 = vmax.f32 %v9376, %v9377
    %v9379 = vsel %vm8846, %v5721, -inf
    %v9380 = vrot.slane %v9379, 4
    %v9381 = vmax.f32 %v9379, %v9380
    %v9382 = vrot.slane %v9381, 2
    %v9383 = vmax.f32 %v9381, %v9382
    %v9384 = vrot.slane %v9383, 1
    %v9385 = vmax.f32 %v9383, %v9384
    %v9386 = vsel %vm8846, %v5722, -inf
    %v9387 = vrot.slane %v9386, 4
    %v9388 = vmax.f32 %v9386, %v9387
    %v9389 = vrot.slane %v9388, 2
    %v9390 = vmax.f32 %v9388, %v9389
    %v9391 = vrot.slane %v9390, 1
    %v9392 = vmax.f32 %v9390, %v9391
    %v9393 = vsel %vm8846, %v5723, -inf
    %v9394 = vrot.slane %v9393, 4
    %v9395 = vmax.f32 %v9393, %v9394
    %v9396 = vrot.slane %v9395, 2
    %v9397 = vmax.f32 %v9395, %v9396
    %v9398 = vrot.slane %v9397, 1
    %v9399 = vmax.f32 %v9397, %v9398
    %v9400 = vsel %vm8846, %v5724, -inf
    %v9401 = vrot.slane %v9400, 4
    %v9402 = vmax.f32 %v9400, %v9401
    %v9403 = vrot.slane %v9402, 2
    %v9404 = vmax.f32 %v9402, %v9403
    %v9405 = vrot.slane %v9404, 1
    %v9406 = vmax.f32 %v9404, %v9405
    %v9407 = vsel %vm8846, %v5725, -inf
    %v9408 = vrot.slane %v9407, 4
    %v9409 = vmax.f32 %v9407, %v9408
    %v9410 = vrot.slane %v9409, 2
    %v9411 = vmax.f32 %v9409, %v9410
    %v9412 = vrot.slane %v9411, 1
    %v9413 = vmax.f32 %v9411, %v9412
    %v9414 = vsel %vm8846, %v5726, -inf
    %v9415 = vrot.slane %v9414, 4
    %v9416 = vmax.f32 %v9414, %v9415
    %v9417 = vrot.slane %v9416, 2
    %v9418 = vmax.f32 %v9416, %v9417
    %v9419 = vrot.slane %v9418, 1
    %v9420 = vmax.f32 %v9418, %v9419
    %v9421 = vsel %vm8846, %v5727, -inf
    %v9422 = vrot.slane %v9421, 4
    %v9423 = vmax.f32 %v9421, %v9422
    %v9424 = vrot.slane %v9423, 2
    %v9425 = vmax.f32 %v9423, %v9424
    %v9426 = vrot.slane %v9425, 1
    %v9427 = vmax.f32 %v9425, %v9426
    %v9428 = vsel %vm8846, %v5728, -inf
    %v9429 = vrot.slane %v9428, 4
    %v9430 = vmax.f32 %v9428, %v9429
    %v9431 = vrot.slane %v9430, 2
    %v9432 = vmax.f32 %v9430, %v9431
    %v9433 = vrot.slane %v9432, 1
    %v9434 = vmax.f32 %v9432, %v9433
    %v9435 = vsel %vm8846, %v5729, -inf
    %v9436 = vrot.slane %v9435, 4
    %v9437 = vmax.f32 %v9435, %v9436
    %v9438 = vrot.slane %v9437, 2
    %v9439 = vmax.f32 %v9437, %v9438
    %v9440 = vrot.slane %v9439, 1
    %v9441 = vmax.f32 %v9439, %v9440
    %v9442 = vsel %vm8846, %v5730, -inf
    %v9443 = vrot.slane %v9442, 4
    %v9444 = vmax.f32 %v9442, %v9443
    %v9445 = vrot.slane %v9444, 2
    %v9446 = vmax.f32 %v9444, %v9445
    %v9447 = vrot.slane %v9446, 1
    %v9448 = vmax.f32 %v9446, %v9447
    %v9449 = vsel %vm8846, %v5731, -inf
    %v9450 = vrot.slane %v9449, 4
    %v9451 = vmax.f32 %v9449, %v9450
    %v9452 = vrot.slane %v9451, 2
    %v9453 = vmax.f32 %v9451, %v9452
    %v9454 = vrot.slane %v9453, 1
    %v9455 = vmax.f32 %v9453, %v9454
    %v9456 = vsel %vm8846, %v5732, -inf
    %v9457 = vrot.slane %v9456, 4
    %v9458 = vmax.f32 %v9456, %v9457
    %v9459 = vrot.slane %v9458, 2
    %v9460 = vmax.f32 %v9458, %v9459
    %v9461 = vrot.slane %v9460, 1
    %v9462 = vmax.f32 %v9460, %v9461
    %v9463 = vsel %vm8846, %v5733, -inf
    %v9464 = vrot.slane %v9463, 4
    %v9465 = vmax.f32 %v9463, %v9464
    %v9466 = vrot.slane %v9465, 2
    %v9467 = vmax.f32 %v9465, %v9466
    %v9468 = vrot.slane %v9467, 1
    %v9469 = vmax.f32 %v9467, %v9468
    %v9470 = vsel %vm8846, %v5734, -inf
    %v9471 = vrot.slane %v9470, 4
    %v9472 = vmax.f32 %v9470, %v9471
    %v9473 = vrot.slane %v9472, 2
    %v9474 = vmax.f32 %v9472, %v9473
    %v9475 = vrot.slane %v9474, 1
    %v9476 = vmax.f32 %v9474, %v9475
    %v9477 = vsel %vm8846, %v5735, -inf
    %v9478 = vrot.slane %v9477, 4
    %v9479 = vmax.f32 %v9477, %v9478
    %v9480 = vrot.slane %v9479, 2
    %v9481 = vmax.f32 %v9479, %v9480
    %v9482 = vrot.slane %v9481, 1
    %v9483 = vmax.f32 %v9481, %v9482
    %v9484 = vsel %vm8846, %v5736, -inf
    %v9485 = vrot.slane %v9484, 4
    %v9486 = vmax.f32 %v9484, %v9485
    %v9487 = vrot.slane %v9486, 2
    %v9488 = vmax.f32 %v9486, %v9487
    %v9489 = vrot.slane %v9488, 1
    %v9490 = vmax.f32 %v9488, %v9489
    %v9491 = vsel %vm8846, %v5737, -inf
    %v9492 = vrot.slane %v9491, 4
    %v9493 = vmax.f32 %v9491, %v9492
    %v9494 = vrot.slane %v9493, 2
    %v9495 = vmax.f32 %v9493, %v9494
    %v9496 = vrot.slane %v9495, 1
    %v9497 = vmax.f32 %v9495, %v9496
    %v9498 = vsel %vm8846, %v5738, -inf
    %v9499 = vrot.slane %v9498, 4
    %v9500 = vmax.f32 %v9498, %v9499
    %v9501 = vrot.slane %v9500, 2
    %v9502 = vmax.f32 %v9500, %v9501
    %v9503 = vrot.slane %v9502, 1
    %v9504 = vmax.f32 %v9502, %v9503
    %v9505 = vsel %vm8846, %v5739, -inf
    %v9506 = vrot.slane %v9505, 4
    %v9507 = vmax.f32 %v9505, %v9506
    %v9508 = vrot.slane %v9507, 2
    %v9509 = vmax.f32 %v9507, %v9508
    %v9510 = vrot.slane %v9509, 1
    %v9511 = vmax.f32 %v9509, %v9510
    %v9512 = vsel %vm8846, %v5740, -inf
    %v9513 = vrot.slane %v9512, 4
    %v9514 = vmax.f32 %v9512, %v9513
    %v9515 = vrot.slane %v9514, 2
    %v9516 = vmax.f32 %v9514, %v9515
    %v9517 = vrot.slane %v9516, 1
    %v9518 = vmax.f32 %v9516, %v9517
    %v9519 = vsel %vm8846, %v5741, -inf
    %v9520 = vrot.slane %v9519, 4
    %v9521 = vmax.f32 %v9519, %v9520
    %v9522 = vrot.slane %v9521, 2
    %v9523 = vmax.f32 %v9521, %v9522
    %v9524 = vrot.slane %v9523, 1
    %v9525 = vmax.f32 %v9523, %v9524
    %v9526 = vsel %vm8846, %v5742, -inf
    %v9527 = vrot.slane %v9526, 4
    %v9528 = vmax.f32 %v9526, %v9527
    %v9529 = vrot.slane %v9528, 2
    %v9530 = vmax.f32 %v9528, %v9529
    %v9531 = vrot.slane %v9530, 1
    %v9532 = vmax.f32 %v9530, %v9531
    %v9533 = vsel %vm8846, %v5743, -inf
    %v9534 = vrot.slane %v9533, 4
    %v9535 = vmax.f32 %v9533, %v9534
    %v9536 = vrot.slane %v9535, 2
    %v9537 = vmax.f32 %v9535, %v9536
    %v9538 = vrot.slane %v9537, 1
    %v9539 = vmax.f32 %v9537, %v9538
    %v9540 = vsel %vm8846, %v5744, -inf
    %v9541 = vrot.slane %v9540, 4
    %v9542 = vmax.f32 %v9540, %v9541
    %v9543 = vrot.slane %v9542, 2
    %v9544 = vmax.f32 %v9542, %v9543
    %v9545 = vrot.slane %v9544, 1
    %v9546 = vmax.f32 %v9544, %v9545
    %v9547 = vsel %vm8846, %v5745, -inf
    %v9548 = vrot.slane %v9547, 4
    %v9549 = vmax.f32 %v9547, %v9548
    %v9550 = vrot.slane %v9549, 2
    %v9551 = vmax.f32 %v9549, %v9550
    %v9552 = vrot.slane %v9551, 1
    %v9553 = vmax.f32 %v9551, %v9552
    %v9554 = vsel %vm8846, %v5746, -inf
    %v9555 = vrot.slane %v9554, 4
    %v9556 = vmax.f32 %v9554, %v9555
    %v9557 = vrot.slane %v9556, 2
    %v9558 = vmax.f32 %v9556, %v9557
    %v9559 = vrot.slane %v9558, 1
    %v9560 = vmax.f32 %v9558, %v9559
    %v9561 = vsel %vm8846, %v5747, -inf
    %v9562 = vrot.slane %v9561, 4
    %v9563 = vmax.f32 %v9561, %v9562
    %v9564 = vrot.slane %v9563, 2
    %v9565 = vmax.f32 %v9563, %v9564
    %v9566 = vrot.slane %v9565, 1
    %v9567 = vmax.f32 %v9565, %v9566
    %v9568 = vsel %vm8846, %v5748, -inf
    %v9569 = vrot.slane %v9568, 4
    %v9570 = vmax.f32 %v9568, %v9569
    %v9571 = vrot.slane %v9570, 2
    %v9572 = vmax.f32 %v9570, %v9571
    %v9573 = vrot.slane %v9572, 1
    %v9574 = vmax.f32 %v9572, %v9573
    %v9575 = vsel %vm8846, %v5749, -inf
    %v9576 = vrot.slane %v9575, 4
    %v9577 = vmax.f32 %v9575, %v9576
    %v9578 = vrot.slane %v9577, 2
    %v9579 = vmax.f32 %v9577, %v9578
    %v9580 = vrot.slane %v9579, 1
    %v9581 = vmax.f32 %v9579, %v9580
    %v9582 = vsel %vm8846, %v5750, -inf
    %v9583 = vrot.slane %v9582, 4
    %v9584 = vmax.f32 %v9582, %v9583
    %v9585 = vrot.slane %v9584, 2
    %v9586 = vmax.f32 %v9584, %v9585
    %v9587 = vrot.slane %v9586, 1
    %v9588 = vmax.f32 %v9586, %v9587
    %v9589 = vsel %vm8846, %v5751, -inf
    %v9590 = vrot.slane %v9589, 4
    %v9591 = vmax.f32 %v9589, %v9590
    %v9592 = vrot.slane %v9591, 2
    %v9593 = vmax.f32 %v9591, %v9592
    %v9594 = vrot.slane %v9593, 1
    %v9595 = vmax.f32 %v9593, %v9594
    %v9596 = vsel %vm8846, %v5752, -inf
    %v9597 = vrot.slane %v9596, 4
    %v9598 = vmax.f32 %v9596, %v9597
    %v9599 = vrot.slane %v9598, 2
    %v9600 = vmax.f32 %v9598, %v9599
    %v9601 = vrot.slane %v9600, 1
    %v9602 = vmax.f32 %v9600, %v9601
    %v9603 = vsel %vm8846, %v5753, -inf
    %v9604 = vrot.slane %v9603, 4
    %v9605 = vmax.f32 %v9603, %v9604
    %v9606 = vrot.slane %v9605, 2
    %v9607 = vmax.f32 %v9605, %v9606
    %v9608 = vrot.slane %v9607, 1
    %v9609 = vmax.f32 %v9607, %v9608
    %v9610 = vsel %vm8846, %v5754, -inf
    %v9611 = vrot.slane %v9610, 4
    %v9612 = vmax.f32 %v9610, %v9611
    %v9613 = vrot.slane %v9612, 2
    %v9614 = vmax.f32 %v9612, %v9613
    %v9615 = vrot.slane %v9614, 1
    %v9616 = vmax.f32 %v9614, %v9615
    %v9617 = vsel %vm8846, %v5755, -inf
    %v9618 = vrot.slane %v9617, 4
    %v9619 = vmax.f32 %v9617, %v9618
    %v9620 = vrot.slane %v9619, 2
    %v9621 = vmax.f32 %v9619, %v9620
    %v9622 = vrot.slane %v9621, 1
    %v9623 = vmax.f32 %v9621, %v9622
    %v9624 = vsel %vm8846, %v5756, -inf
    %v9625 = vrot.slane %v9624, 4
    %v9626 = vmax.f32 %v9624, %v9625
    %v9627 = vrot.slane %v9626, 2
    %v9628 = vmax.f32 %v9626, %v9627
    %v9629 = vrot.slane %v9628, 1
    %v9630 = vmax.f32 %v9628, %v9629
    %v9631 = vsel %vm8846, %v5757, -inf
    %v9632 = vrot.slane %v9631, 4
    %v9633 = vmax.f32 %v9631, %v9632
    %v9634 = vrot.slane %v9633, 2
    %v9635 = vmax.f32 %v9633, %v9634
    %v9636 = vrot.slane %v9635, 1
    %v9637 = vmax.f32 %v9635, %v9636
    %v9638 = vsel %vm8846, %v5758, -inf
    %v9639 = vrot.slane %v9638, 4
    %v9640 = vmax.f32 %v9638, %v9639
    %v9641 = vrot.slane %v9640, 2
    %v9642 = vmax.f32 %v9640, %v9641
    %v9643 = vrot.slane %v9642, 1
    %v9644 = vmax.f32 %v9642, %v9643
    %v9645 = vsel %vm8846, %v5759, -inf
    %v9646 = vrot.slane %v9645, 4
    %v9647 = vmax.f32 %v9645, %v9646
    %v9648 = vrot.slane %v9647, 2
    %v9649 = vmax.f32 %v9647, %v9648
    %v9650 = vrot.slane %v9649, 1
    %v9651 = vmax.f32 %v9649, %v9650
    %v9652 = vsel %vm8846, %v5760, -inf
    %v9653 = vrot.slane %v9652, 4
    %v9654 = vmax.f32 %v9652, %v9653
    %v9655 = vrot.slane %v9654, 2
    %v9656 = vmax.f32 %v9654, %v9655
    %v9657 = vrot.slane %v9656, 1
    %v9658 = vmax.f32 %v9656, %v9657
    %v9659 = vsel %vm8846, %v5761, -inf
    %v9660 = vrot.slane %v9659, 4
    %v9661 = vmax.f32 %v9659, %v9660
    %v9662 = vrot.slane %v9661, 2
    %v9663 = vmax.f32 %v9661, %v9662
    %v9664 = vrot.slane %v9663, 1
    %v9665 = vmax.f32 %v9663, %v9664
    %v9666 = vsel %vm8846, %v5762, -inf
    %v9667 = vrot.slane %v9666, 4
    %v9668 = vmax.f32 %v9666, %v9667
    %v9669 = vrot.slane %v9668, 2
    %v9670 = vmax.f32 %v9668, %v9669
    %v9671 = vrot.slane %v9670, 1
    %v9672 = vmax.f32 %v9670, %v9671
    %v9673 = vsel %vm8846, %v5763, -inf
    %v9674 = vrot.slane %v9673, 4
    %v9675 = vmax.f32 %v9673, %v9674
    %v9676 = vrot.slane %v9675, 2
    %v9677 = vmax.f32 %v9675, %v9676
    %v9678 = vrot.slane %v9677, 1
    %v9679 = vmax.f32 %v9677, %v9678
    %v9680 = vsel %vm8846, %v5764, -inf
    %v9681 = vrot.slane %v9680, 4
    %v9682 = vmax.f32 %v9680, %v9681
    %v9683 = vrot.slane %v9682, 2
    %v9684 = vmax.f32 %v9682, %v9683
    %v9685 = vrot.slane %v9684, 1
    %v9686 = vmax.f32 %v9684, %v9685
    %v9687 = vsel %vm8846, %v5765, -inf
    %v9688 = vrot.slane %v9687, 4
    %v9689 = vmax.f32 %v9687, %v9688
    %v9690 = vrot.slane %v9689, 2
    %v9691 = vmax.f32 %v9689, %v9690
    %v9692 = vrot.slane %v9691, 1
    %v9693 = vmax.f32 %v9691, %v9692
    %v9694 = vsel %vm8846, %v5766, -inf
    %v9695 = vrot.slane %v9694, 4
    %v9696 = vmax.f32 %v9694, %v9695
    %v9697 = vrot.slane %v9696, 2
    %v9698 = vmax.f32 %v9696, %v9697
    %v9699 = vrot.slane %v9698, 1
    %v9700 = vmax.f32 %v9698, %v9699
    %v9701 = vsel %vm8846, %v5767, -inf
    %v9702 = vrot.slane %v9701, 4
    %v9703 = vmax.f32 %v9701, %v9702
    %v9704 = vrot.slane %v9703, 2
    %v9705 = vmax.f32 %v9703, %v9704
    %v9706 = vrot.slane %v9705, 1
    %v9707 = vmax.f32 %v9705, %v9706
    %v9708 = vsel %vm8846, %v5768, -inf
    %v9709 = vrot.slane %v9708, 4
    %v9710 = vmax.f32 %v9708, %v9709
    %v9711 = vrot.slane %v9710, 2
    %v9712 = vmax.f32 %v9710, %v9711
    %v9713 = vrot.slane %v9712, 1
    %v9714 = vmax.f32 %v9712, %v9713
    %v9715 = vsel %vm8846, %v5769, -inf
    %v9716 = vrot.slane %v9715, 4
    %v9717 = vmax.f32 %v9715, %v9716
    %v9718 = vrot.slane %v9717, 2
    %v9719 = vmax.f32 %v9717, %v9718
    %v9720 = vrot.slane %v9719, 1
    %v9721 = vmax.f32 %v9719, %v9720
    %v9722 = vsel %vm8846, %v5770, -inf
    %v9723 = vrot.slane %v9722, 4
    %v9724 = vmax.f32 %v9722, %v9723
    %v9725 = vrot.slane %v9724, 2
    %v9726 = vmax.f32 %v9724, %v9725
    %v9727 = vrot.slane %v9726, 1
    %v9728 = vmax.f32 %v9726, %v9727
    %v9729 = vsel %vm8846, %v5771, -inf
    %v9730 = vrot.slane %v9729, 4
    %v9731 = vmax.f32 %v9729, %v9730
    %v9732 = vrot.slane %v9731, 2
    %v9733 = vmax.f32 %v9731, %v9732
    %v9734 = vrot.slane %v9733, 1
    %v9735 = vmax.f32 %v9733, %v9734
    %v9736 = vsel %vm8846, %v5772, -inf
    %v9737 = vrot.slane %v9736, 4
    %v9738 = vmax.f32 %v9736, %v9737
    %v9739 = vrot.slane %v9738, 2
    %v9740 = vmax.f32 %v9738, %v9739
    %v9741 = vrot.slane %v9740, 1
    %v9742 = vmax.f32 %v9740, %v9741
    %vm9871 = vcmask 1041409
    %v9872 = vsel %vm9871, %v8860, %v8853
    %vm9873 = vcmask 1042434
    %v9874 = vsel %vm9873, %v8867, %v9872
    %vm9875 = vcmask 1043459
    %v9876 = vsel %vm9875, %v8874, %v9874
    %vm9877 = vcmask 1044484
    %v9878 = vsel %vm9877, %v8881, %v9876
    %vm9879 = vcmask 1045509
    %v9880 = vsel %vm9879, %v8888, %v9878
    %vm9881 = vcmask 1046534
    %v9882 = vsel %vm9881, %v8895, %v9880
    %vm9883 = vcmask 1047559
    %v9884 = vsel %vm9883, %v8902, %v9882
    %v9885 = vsel %vm9871, %v8916, %v8909
    %v9886 = vsel %vm9873, %v8923, %v9885
    %v9887 = vsel %vm9875, %v8930, %v9886
    %v9888 = vsel %vm9877, %v8937, %v9887
    %v9889 = vsel %vm9879, %v8944, %v9888
    %v9890 = vsel %vm9881, %v8951, %v9889
    %v9891 = vsel %vm9883, %v8958, %v9890
    %v9892 = vsel %vm9871, %v8972, %v8965
    %v9893 = vsel %vm9873, %v8979, %v9892
    %v9894 = vsel %vm9875, %v8986, %v9893
    %v9895 = vsel %vm9877, %v8993, %v9894
    %v9896 = vsel %vm9879, %v9000, %v9895
    %v9897 = vsel %vm9881, %v9007, %v9896
    %v9898 = vsel %vm9883, %v9014, %v9897
    %v9899 = vsel %vm9871, %v9028, %v9021
    %v9900 = vsel %vm9873, %v9035, %v9899
    %v9901 = vsel %vm9875, %v9042, %v9900
    %v9902 = vsel %vm9877, %v9049, %v9901
    %v9903 = vsel %vm9879, %v9056, %v9902
    %v9904 = vsel %vm9881, %v9063, %v9903
    %v9905 = vsel %vm9883, %v9070, %v9904
    %v9906 = vsel %vm9871, %v9084, %v9077
    %v9907 = vsel %vm9873, %v9091, %v9906
    %v9908 = vsel %vm9875, %v9098, %v9907
    %v9909 = vsel %vm9877, %v9105, %v9908
    %v9910 = vsel %vm9879, %v9112, %v9909
    %v9911 = vsel %vm9881, %v9119, %v9910
    %v9912 = vsel %vm9883, %v9126, %v9911
    %v9913 = vsel %vm9871, %v9140, %v9133
    %v9914 = vsel %vm9873, %v9147, %v9913
    %v9915 = vsel %vm9875, %v9154, %v9914
    %v9916 = vsel %vm9877, %v9161, %v9915
    %v9917 = vsel %vm9879, %v9168, %v9916
    %v9918 = vsel %vm9881, %v9175, %v9917
    %v9919 = vsel %vm9883, %v9182, %v9918
    %v9920 = vsel %vm9871, %v9196, %v9189
    %v9921 = vsel %vm9873, %v9203, %v9920
    %v9922 = vsel %vm9875, %v9210, %v9921
    %v9923 = vsel %vm9877, %v9217, %v9922
    %v9924 = vsel %vm9879, %v9224, %v9923
    %v9925 = vsel %vm9881, %v9231, %v9924
    %v9926 = vsel %vm9883, %v9238, %v9925
    %v9927 = vsel %vm9871, %v9252, %v9245
    %v9928 = vsel %vm9873, %v9259, %v9927
    %v9929 = vsel %vm9875, %v9266, %v9928
    %v9930 = vsel %vm9877, %v9273, %v9929
    %v9931 = vsel %vm9879, %v9280, %v9930
    %v9932 = vsel %vm9881, %v9287, %v9931
    %v9933 = vsel %vm9883, %v9294, %v9932
    %v9934 = vsel %vm9871, %v9308, %v9301
    %v9935 = vsel %vm9873, %v9315, %v9934
    %v9936 = vsel %vm9875, %v9322, %v9935
    %v9937 = vsel %vm9877, %v9329, %v9936
    %v9938 = vsel %vm9879, %v9336, %v9937
    %v9939 = vsel %vm9881, %v9343, %v9938
    %v9940 = vsel %vm9883, %v9350, %v9939
    %v9941 = vsel %vm9871, %v9364, %v9357
    %v9942 = vsel %vm9873, %v9371, %v9941
    %v9943 = vsel %vm9875, %v9378, %v9942
    %v9944 = vsel %vm9877, %v9385, %v9943
    %v9945 = vsel %vm9879, %v9392, %v9944
    %v9946 = vsel %vm9881, %v9399, %v9945
    %v9947 = vsel %vm9883, %v9406, %v9946
    %v9948 = vsel %vm9871, %v9420, %v9413
    %v9949 = vsel %vm9873, %v9427, %v9948
    %v9950 = vsel %vm9875, %v9434, %v9949
    %v9951 = vsel %vm9877, %v9441, %v9950
    %v9952 = vsel %vm9879, %v9448, %v9951
    %v9953 = vsel %vm9881, %v9455, %v9952
    %v9954 = vsel %vm9883, %v9462, %v9953
    %v9955 = vsel %vm9871, %v9476, %v9469
    %v9956 = vsel %vm9873, %v9483, %v9955
    %v9957 = vsel %vm9875, %v9490, %v9956
    %v9958 = vsel %vm9877, %v9497, %v9957
    %v9959 = vsel %vm9879, %v9504, %v9958
    %v9960 = vsel %vm9881, %v9511, %v9959
    %v9961 = vsel %vm9883, %v9518, %v9960
    %v9962 = vsel %vm9871, %v9532, %v9525
    %v9963 = vsel %vm9873, %v9539, %v9962
    %v9964 = vsel %vm9875, %v9546, %v9963
    %v9965 = vsel %vm9877, %v9553, %v9964
    %v9966 = vsel %vm9879, %v9560, %v9965
    %v9967 = vsel %vm9881, %v9567, %v9966
    %v9968 = vsel %vm9883, %v9574, %v9967
    %v9969 = vsel %vm9871, %v9588, %v9581
    %v9970 = vsel %vm9873, %v9595, %v9969
    %v9971 = vsel %vm9875, %v9602, %v9970
    %v9972 = vsel %vm9877, %v9609, %v9971
    %v9973 = vsel %vm9879, %v9616, %v9972
    %v9974 = vsel %vm9881, %v9623, %v9973
    %v9975 = vsel %vm9883, %v9630, %v9974
    %v9976 = vsel %vm9871, %v9644, %v9637
    %v9977 = vsel %vm9873, %v9651, %v9976
    %v9978 = vsel %vm9875, %v9658, %v9977
    %v9979 = vsel %vm9877, %v9665, %v9978
    %v9980 = vsel %vm9879, %v9672, %v9979
    %v9981 = vsel %vm9881, %v9679, %v9980
    %v9982 = vsel %vm9883, %v9686, %v9981
    %v9983 = vsel %vm9871, %v9700, %v9693
    %v9984 = vsel %vm9873, %v9707, %v9983
    %v9985 = vsel %vm9875, %v9714, %v9984
    %v9986 = vsel %vm9877, %v9721, %v9985
    %v9987 = vsel %vm9879, %v9728, %v9986
    %v9988 = vsel %vm9881, %v9735, %v9987
    %v9989 = vsel %vm9883, %v9742, %v9988
    %9990 = vrot.lane.b32.xlu0 %v9884, 112
    %v9991 = vpop.permute.xlu0 %9990
    %9992 = vrot.lane.b32.xlu0 %v9891, 112
    %v9993 = vpop.permute.xlu0 %9992
    %9994 = vrot.lane.b32.xlu0 %v9898, 112
    %v9995 = vpop.permute.xlu0 %9994
    %9996 = vrot.lane.b32.xlu0 %v9905, 112
    %v9997 = vpop.permute.xlu0 %9996
    %9998 = vrot.lane.b32.xlu0 %v9912, 112
    %v9999 = vpop.permute.xlu0 %9998
    %10000 = vrot.lane.b32.xlu0 %v9919, 112
    %v10001 = vpop.permute.xlu0 %10000
    %10002 = vrot.lane.b32.xlu0 %v9926, 112
    %v10003 = vpop.permute.xlu0 %10002
    %10004 = vrot.lane.b32.xlu0 %v9933, 112
    %v10005 = vpop.permute.xlu0 %10004
    %10006 = vrot.lane.b32.xlu0 %v9940, 112
    %v10007 = vpop.permute.xlu0 %10006
    %10008 = vrot.lane.b32.xlu0 %v9947, 112
    %v10009 = vpop.permute.xlu0 %10008
    %10010 = vrot.lane.b32.xlu0 %v9954, 112
    %v10011 = vpop.permute.xlu0 %10010
    %10012 = vrot.lane.b32.xlu0 %v9961, 112
    %v10013 = vpop.permute.xlu0 %10012
    %10014 = vrot.lane.b32.xlu0 %v9968, 112
    %v10015 = vpop.permute.xlu0 %10014
    %10016 = vrot.lane.b32.xlu0 %v9975, 112
    %v10017 = vpop.permute.xlu0 %10016
    %10018 = vrot.lane.b32.xlu0 %v9982, 112
    %v10019 = vpop.permute.xlu0 %10018
    %10020 = vrot.lane.b32.xlu0 %v9989, 112
    %v10021 = vpop.permute.xlu0 %10020
    %v10022 = vsel %vm6797, %v9991, 0
    %v10024 = vsel %vm6797, %v9993, 0
    %v10026 = vsel %vm6797, %v9995, 0
    %v10028 = vsel %vm6797, %v9997, 0
    %v10030 = vsel %vm6797, %v9999, 0
    %v10032 = vsel %vm6797, %v10001, 0
    %v10034 = vsel %vm6797, %v10003, 0
    %v10036 = vsel %vm6797, %v10005, 0
    %v10038 = vsel %vm6797, %v10007, 0
    %v10040 = vsel %vm6797, %v10009, 0
    %v10042 = vsel %vm6797, %v10011, 0
    %v10044 = vsel %vm6797, %v10013, 0
    %v10046 = vsel %vm6797, %v10015, 0
    %v10048 = vsel %vm6797, %v10017, 0
    %v10050 = vsel %vm6797, %v10019, 0
    %v10052 = vsel %vm6797, %v10021, 0
    %10054 = vmatprep.subr.mxu0 0.0
    %10055 = vmatpush1.msra.mxu0 %v175
    %10056 = vmatprep.subr.mxu0 0.0
    %10057 = vmatpush1.msra.mxu0 %v176
    %10058 = vmatprep.subr.mxu0 0.0
    %10059 = vmatpush1.msra.mxu0 0.0
    %10060 = vmatprep.subr.mxu0 0.0
    %10061 = vmatpush1.msra.mxu0 0.0
    %10062 = vmatprep.subr.mxu0 0.0
    %10063 = vmatpush1.msra.mxu0 0.0
    %10064 = vmatprep.subr.mxu0 0.0
    %10065 = vmatpush1.msra.mxu0 0.0
    %10066 = vmatprep.subr.mxu0 0.0
    %10067 = vmatpush1.msra.mxu0 0.0
    %10068 = vmatprep.subr.mxu0 0.0
    %10069 = vmatpush1.msra.mxu0 0.0
    %10070 = vmatprep.subr.mxu0 0.0
    %10071 = vmatpush1.msra.mxu0 0.0
    %10072 = vmatprep.subr.mxu0 0.0
    %10073 = vmatpush1.msra.mxu0 0.0
    %10074 = vmatprep.subr.mxu0 0.0
    %10075 = vmatpush1.msra.mxu0 0.0
    %10076 = vmatprep.subr.mxu0 0.0
    %10077 = vmatpush1.msra.mxu0 0.0
    %10078 = vmatprep.subr.mxu0 0.0
    %10079 = vmatpush1.msra.mxu0 0.0
    %10080 = vmatprep.subr.mxu0 0.0
    %10081 = vmatpush1.msra.mxu0 0.0
    %10082 = vmatprep.subr.mxu0 0.0
    %10083 = vmatpush1.msra.mxu0 0.0
    %10084 = vmatprep.subr.mxu0 0.0
    %10085 = vmatpush1.msra.mxu0 0.0
    %10086 = vmatprep.subr.mxu0 0.0
    %10087 = vmatpush1.msra.mxu0 0.0
    %10088 = vmatprep.subr.mxu0 0.0
    %10089 = vmatpush1.msra.mxu0 0.0
    %10090 = vmatprep.subr.mxu0 0.0
    %10091 = vmatpush1.msra.mxu0 0.0
    %10092 = vmatprep.subr.mxu0 0.0
    %10093 = vmatpush1.msra.mxu0 0.0
    %10094 = vmatprep.subr.mxu0 0.0
    %10095 = vmatpush1.msra.mxu0 0.0
    %10096 = vmatprep.subr.mxu0 0.0
    %10097 = vmatpush1.msra.mxu0 0.0
    %10098 = vmatprep.subr.mxu0 0.0
    %10099 = vmatpush1.msra.mxu0 0.0
    %10100 = vmatprep.subr.mxu0 0.0
    %10101 = vmatpush1.msra.mxu0 0.0
    %10102 = vmatprep.subr.mxu0 0.0
    %10103 = vmatpush1.msra.mxu0 0.0
    %10104 = vmatprep.subr.mxu0 0.0
    %10105 = vmatpush1.msra.mxu0 0.0
    %10106 = vmatprep.subr.mxu0 0.0
    %10107 = vmatpush1.msra.mxu0 0.0
    %10108 = vmatprep.subr.mxu0 0.0
    %10109 = vmatpush1.msra.mxu0 0.0
    %10110 = vmatprep.subr.mxu0 0.0
    %10111 = vmatpush1.msra.mxu0 0.0
    %10112 = vmatprep.subr.mxu0 0.0
    %10113 = vmatpush1.msra.mxu0 0.0
    %10114 = vmatprep.subr.mxu0 0.0
    %10115 = vmatpush1.msra.mxu0 0.0
    %10116 = vmatprep.subr.mxu0 0.0
    %10117 = vmatpush1.msra.mxu0 0.0
    %10118 = vmatprep.mubr.f32.mxu0 0.0
    %10119 = vmatmul.mubr.f32.gmra.mrb[0].mxu0 %v10022
    %v10120 = vpop.f32.mrb[0].mxu0
    %v10121 = vadd.f32 0.0, %v10120
    %v10122 = vpop.f32.mrb[0].mxu0
    %10123 = vmatprep.mubr.f32.mxu0 0.0
    %10124 = vmatmul.mubr.f32.gmra.mrb[0].mxu0 %v10024
    %v10125 = vpop.f32.mrb[0].mxu0
    %v10126 = vadd.f32 0.0, %v10125
    %v10127 = vpop.f32.mrb[0].mxu0
    %10128 = vmatprep.mubr.f32.mxu0 0.0
    %10129 = vmatmul.mubr.f32.gmra.mrb[0].mxu0 %v10026
    %v10130 = vpop.f32.mrb[0].mxu0
    %v10131 = vadd.f32 0.0, %v10130
    %v10132 = vpop.f32.mrb[0].mxu0
    %10133 = vmatprep.mubr.f32.mxu0 0.0
    %10134 = vmatmul.mubr.f32.gmra.mrb[0].mxu0 %v10028
    %v10135 = vpop.f32.mrb[0].mxu0
    %v10136 = vadd.f32 0.0, %v10135
    %v10137 = vpop.f32.mrb[0].mxu0
    %10138 = vmatprep.mubr.f32.mxu0 0.0
    %10139 = vmatmul.mubr.f32.gmra.mrb[0].mxu0 %v10030
    %v10140 = vpop.f32.mrb[0].mxu0
    %v10141 = vadd.f32 0.0, %v10140
    %v10142 = vpop.f32.mrb[0].mxu0
    %10143 = vmatprep.mubr.f32.mxu0 0.0
    %10144 = vmatmul.mubr.f32.gmra.mrb[0].mxu0 %v10032
    %v10145 = vpop.f32.mrb[0].mxu0
    %v10146 = vadd.f32 0.0, %v10145
    %v10147 = vpop.f32.mrb[0].mxu0
    %10148 = vmatprep.mubr.f32.mxu0 0.0
    %10149 = vmatmul.mubr.f32.gmra.mrb[0].mxu0 %v10034
    %v10150 = vpop.f32.mrb[0].mxu0
    %v10151 = vadd.f32 0.0, %v10150
    %v10152 = vpop.f32.mrb[0].mxu0
    %10153 = vmatprep.mubr.f32.mxu0 0.0
    %10154 = vmatmul.mubr.f32.gmra.mrb[0].mxu0 %v10036
    %v10155 = vpop.f32.mrb[0].mxu0
    %v10156 = vadd.f32 0.0, %v10155
    %v10157 = vpop.f32.mrb[0].mxu0
    %10158 = vmatprep.mubr.f32.mxu0 0.0
    %10159 = vmatmul.mubr.f32.gmra.mrb[0].mxu0 %v10038
    %v10160 = vpop.f32.mrb[0].mxu0
    %v10161 = vadd.f32 0.0, %v10160
    %v10162 = vpop.f32.mrb[0].mxu0
    %10163 = vmatprep.mubr.f32.mxu0 0.0
    %10164 = vmatmul.mubr.f32.gmra.mrb[0].mxu0 %v10040
    %v10165 = vpop.f32.mrb[0].mxu0
    %v10166 = vadd.f32 0.0, %v10165
    %v10167 = vpop.f32.mrb[0].mxu0
    %10168 = vmatprep.mubr.f32.mxu0 0.0
    %10169 = vmatmul.mubr.f32.gmra.mrb[0].mxu0 %v10042
    %v10170 = vpop.f32.mrb[0].mxu0
    %v10171 = vadd.f32 0.0, %v10170
    %v10172 = vpop.f32.mrb[0].mxu0
    %10173 = vmatprep.mubr.f32.mxu0 0.0
    %10174 = vmatmul.mubr.f32.gmra.mrb[0].mxu0 %v10044
    %v10175 = vpop.f32.mrb[0].mxu0
    %v10176 = vadd.f32 0.0, %v10175
    %v10177 = vpop.f32.mrb[0].mxu0
    %10178 = vmatprep.mubr.f32.mxu0 0.0
    %10179 = vmatmul.mubr.f32.gmra.mrb[0].mxu0 %v10046
    %v10180 = vpop.f32.mrb[0].mxu0
    %v10181 = vadd.f32 0.0, %v10180
    %v10182 = vpop.f32.mrb[0].mxu0
    %10183 = vmatprep.mubr.f32.mxu0 0.0
    %10184 = vmatmul.mubr.f32.gmra.mrb[0].mxu0 %v10048
    %v10185 = vpop.f32.mrb[0].mxu0
    %v10186 = vadd.f32 0.0, %v10185
    %v10187 = vpop.f32.mrb[0].mxu0
    %10188 = vmatprep.mubr.f32.mxu0 0.0
    %10189 = vmatmul.mubr.f32.gmra.mrb[0].mxu0 %v10050
    %v10190 = vpop.f32.mrb[0].mxu0
    %v10191 = vadd.f32 0.0, %v10190
    %v10192 = vpop.f32.mrb[0].mxu0
    %10193 = vmatprep.mubr.f32.mxu0 0.0
    %10194 = vmatmul.mubr.f32.gmra.mrb[0].mxu0 %v10052
    %v10195 = vpop.f32.mrb[0].mxu0
    %v10196 = vadd.f32 0.0, %v10195
    %v10197 = vpop.f32.mrb[0].mxu0
    %10198 = vdwg.mxu0
    %v10327 = vsel %vm9871, %v8593, %v8591
    %v10328 = vsel %vm9873, %v8595, %v10327
    %v10329 = vsel %vm9875, %v8597, %v10328
    %v10330 = vsel %vm9877, %v8599, %v10329
    %v10331 = vsel %vm9879, %v8601, %v10330
    %v10332 = vsel %vm9881, %v8603, %v10331
    %v10333 = vsel %vm9883, %v8605, %v10332
    %v10334 = vsel %vm9871, %v8609, %v8607
    %v10335 = vsel %vm9873, %v8611, %v10334
    %v10336 = vsel %vm9875, %v8613, %v10335
    %v10337 = vsel %vm9877, %v8615, %v10336
    %v10338 = vsel %vm9879, %v8617, %v10337
    %v10339 = vsel %vm9881, %v8619, %v10338
    %v10340 = vsel %vm9883, %v8621, %v10339
    %v10341 = vsel %vm9871, %v8625, %v8623
    %v10342 = vsel %vm9873, %v8627, %v10341
    %v10343 = vsel %vm9875, %v8629, %v10342
    %v10344 = vsel %vm9877, %v8631, %v10343
    %v10345 = vsel %vm9879, %v8633, %v10344
    %v10346 = vsel %vm9881, %v8635, %v10345
    %v10347 = vsel %vm9883, %v8637, %v10346
    %v10348 = vsel %vm9871, %v8641, %v8639
    %v10349 = vsel %vm9873, %v8643, %v10348
    %v10350 = vsel %vm9875, %v8645, %v10349
    %v10351 = vsel %vm9877, %v8647, %v10350
    %v10352 = vsel %vm9879, %v8649, %v10351
    %v10353 = vsel %vm9881, %v8651, %v10352
    %v10354 = vsel %vm9883, %v8653, %v10353
    %v10355 = vsel %vm9871, %v8657, %v8655
    %v10356 = vsel %vm9873, %v8659, %v10355
    %v10357 = vsel %vm9875, %v8661, %v10356
    %v10358 = vsel %vm9877, %v8663, %v10357
    %v10359 = vsel %vm9879, %v8665, %v10358
    %v10360 = vsel %vm9881, %v8667, %v10359
    %v10361 = vsel %vm9883, %v8669, %v10360
    %v10362 = vsel %vm9871, %v8673, %v8671
    %v10363 = vsel %vm9873, %v8675, %v10362
    %v10364 = vsel %vm9875, %v8677, %v10363
    %v10365 = vsel %vm9877, %v8679, %v10364
    %v10366 = vsel %vm9879, %v8681, %v10365
    %v10367 = vsel %vm9881, %v8683, %v10366
    %v10368 = vsel %vm9883, %v8685, %v10367
    %v10369 = vsel %vm9871, %v8689, %v8687
    %v10370 = vsel %vm9873, %v8691, %v10369
    %v10371 = vsel %vm9875, %v8693, %v10370
    %v10372 = vsel %vm9877, %v8695, %v10371
    %v10373 = vsel %vm9879, %v8697, %v10372
    %v10374 = vsel %vm9881, %v8699, %v10373
    %v10375 = vsel %vm9883, %v8701, %v10374
    %v10376 = vsel %vm9871, %v8705, %v8703
    %v10377 = vsel %vm9873, %v8707, %v10376
    %v10378 = vsel %vm9875, %v8709, %v10377
    %v10379 = vsel %vm9877, %v8711, %v10378
    %v10380 = vsel %vm9879, %v8713, %v10379
    %v10381 = vsel %vm9881, %v8715, %v10380
    %v10382 = vsel %vm9883, %v8717, %v10381
    %v10383 = vsel %vm9871, %v8721, %v8719
    %v10384 = vsel %vm9873, %v8723, %v10383
    %v10385 = vsel %vm9875, %v8725, %v10384
    %v10386 = vsel %vm9877, %v8727, %v10385
    %v10387 = vsel %vm9879, %v8729, %v10386
    %v10388 = vsel %vm9881, %v8731, %v10387
    %v10389 = vsel %vm9883, %v8733, %v10388
    %v10390 = vsel %vm9871, %v8737, %v8735
    %v10391 = vsel %vm9873, %v8739, %v10390
    %v10392 = vsel %vm9875, %v8741, %v10391
    %v10393 = vsel %vm9877, %v8743, %v10392
    %v10394 = vsel %vm9879, %v8745, %v10393
    %v10395 = vsel %vm9881, %v8747, %v10394
    %v10396 = vsel %vm9883, %v8749, %v10395
    %v10397 = vsel %vm9871, %v8753, %v8751
    %v10398 = vsel %vm9873, %v8755, %v10397
    %v10399 = vsel %vm9875, %v8757, %v10398
    %v10400 = vsel %vm9877, %v8759, %v10399
    %v10401 = vsel %vm9879, %v8761, %v10400
    %v10402 = vsel %vm9881, %v8763, %v10401
    %v10403 = vsel %vm9883, %v8765, %v10402
    %v10404 = vsel %vm9871, %v8769, %v8767
    %v10405 = vsel %vm9873, %v8771, %v10404
    %v10406 = vsel %vm9875, %v8773, %v10405
    %v10407 = vsel %vm9877, %v8775, %v10406
    %v10408 = vsel %vm9879, %v8777, %v10407
    %v10409 = vsel %vm9881, %v8779, %v10408
    %v10410 = vsel %vm9883, %v8781, %v10409
    %v10411 = vsel %vm9871, %v8785, %v8783
    %v10412 = vsel %vm9873, %v8787, %v10411
    %v10413 = vsel %vm9875, %v8789, %v10412
    %v10414 = vsel %vm9877, %v8791, %v10413
    %v10415 = vsel %vm9879, %v8793, %v10414
    %v10416 = vsel %vm9881, %v8795, %v10415
    %v10417 = vsel %vm9883, %v8797, %v10416
    %v10418 = vsel %vm9871, %v8801, %v8799
    %v10419 = vsel %vm9873, %v8803, %v10418
    %v10420 = vsel %vm9875, %v8805, %v10419
    %v10421 = vsel %vm9877, %v8807, %v10420
    %v10422 = vsel %vm9879, %v8809, %v10421
    %v10423 = vsel %vm9881, %v8811, %v10422
    %v10424 = vsel %vm9883, %v8813, %v10423
    %v10425 = vsel %vm9871, %v8817, %v8815
    %v10426 = vsel %vm9873, %v8819, %v10425
    %v10427 = vsel %vm9875, %v8821, %v10426
    %v10428 = vsel %vm9877, %v8823, %v10427
    %v10429 = vsel %vm9879, %v8825, %v10428
    %v10430 = vsel %vm9881, %v8827, %v10429
    %v10431 = vsel %vm9883, %v8829, %v10430
    %v10432 = vsel %vm9871, %v8833, %v8831
    %v10433 = vsel %vm9873, %v8835, %v10432
    %v10434 = vsel %vm9875, %v8837, %v10433
    %v10435 = vsel %vm9877, %v8839, %v10434
    %v10436 = vsel %vm9879, %v8841, %v10435
    %v10437 = vsel %vm9881, %v8843, %v10436
    %v10438 = vsel %vm9883, %v8845, %v10437
    %v10439 = vsel %vm6797, %v10333, 0
    %v10441 = vsel %vm6797, %v10340, 0
    %v10443 = vsel %vm6797, %v10347, 0
    %v10445 = vsel %vm6797, %v10354, 0
    %v10447 = vsel %vm6797, %v10361, 0
    %v10449 = vsel %vm6797, %v10368, 0
    %v10451 = vsel %vm6797, %v10375, 0
    %v10453 = vsel %vm6797, %v10382, 0
    %v10455 = vsel %vm6797, %v10389, 0
    %v10457 = vsel %vm6797, %v10396, 0
    %v10459 = vsel %vm6797, %v10403, 0
    %v10461 = vsel %vm6797, %v10410, 0
    %v10463 = vsel %vm6797, %v10417, 0
    %v10465 = vsel %vm6797, %v10424, 0
    %v10467 = vsel %vm6797, %v10431, 0
    %v10469 = vsel %vm6797, %v10438, 0
    %10471 = vmatprep.subr.mxu0 0.0
    %10472 = vmatpush1.msra.mxu0 %v173
    %10473 = vmatprep.subr.mxu0 0.0
    %10474 = vmatpush1.msra.mxu0 %v174
    %10475 = vmatprep.subr.mxu0 0.0
    %10476 = vmatpush1.msra.mxu0 0.0
    %10477 = vmatprep.subr.mxu0 0.0
    %10478 = vmatpush1.msra.mxu0 0.0
    %10479 = vmatprep.subr.mxu0 0.0
    %10480 = vmatpush1.msra.mxu0 0.0
    %10481 = vmatprep.subr.mxu0 0.0
    %10482 = vmatpush1.msra.mxu0 0.0
    %10483 = vmatprep.subr.mxu0 0.0
    %10484 = vmatpush1.msra.mxu0 0.0
    %10485 = vmatprep.subr.mxu0 0.0
    %10486 = vmatpush1.msra.mxu0 0.0
    %10487 = vmatprep.subr.mxu0 0.0
    %10488 = vmatpush1.msra.mxu0 0.0
    %10489 = vmatprep.subr.mxu0 0.0
    %10490 = vmatpush1.msra.mxu0 0.0
    %10491 = vmatprep.subr.mxu0 0.0
    %10492 = vmatpush1.msra.mxu0 0.0
    %10493 = vmatprep.subr.mxu0 0.0
    %10494 = vmatpush1.msra.mxu0 0.0
    %10495 = vmatprep.subr.mxu0 0.0
    %10496 = vmatpush1.msra.mxu0 0.0
    %10497 = vmatprep.subr.mxu0 0.0
    %10498 = vmatpush1.msra.mxu0 0.0
    %10499 = vmatprep.subr.mxu0 0.0
    %10500 = vmatpush1.msra.mxu0 0.0
    %10501 = vmatprep.subr.mxu0 0.0
    %10502 = vmatpush1.msra.mxu0 0.0
    %10503 = vmatprep.subr.mxu0 0.0
    %10504 = vmatpush1.msra.mxu0 0.0
    %10505 = vmatprep.subr.mxu0 0.0
    %10506 = vmatpush1.msra.mxu0 0.0
    %10507 = vmatprep.subr.mxu0 0.0
    %10508 = vmatpush1.msra.mxu0 0.0
    %10509 = vmatprep.subr.mxu0 0.0
    %10510 = vmatpush1.msra.mxu0 0.0
    %10511 = vmatprep.subr.mxu0 0.0
    %10512 = vmatpush1.msra.mxu0 0.0
    %10513 = vmatprep.subr.mxu0 0.0
    %10514 = vmatpush1.msra.mxu0 0.0
    %10515 = vmatprep.subr.mxu0 0.0
    %10516 = vmatpush1.msra.mxu0 0.0
    %10517 = vmatprep.subr.mxu0 0.0
    %10518 = vmatpush1.msra.mxu0 0.0
    %10519 = vmatprep.subr.mxu0 0.0
    %10520 = vmatpush1.msra.mxu0 0.0
    %10521 = vmatprep.subr.mxu0 0.0
    %10522 = vmatpush1.msra.mxu0 0.0
    %10523 = vmatprep.subr.mxu0 0.0
    %10524 = vmatpush1.msra.mxu0 0.0
    %10525 = vmatprep.subr.mxu0 0.0
    %10526 = vmatpush1.msra.mxu0 0.0
    %10527 = vmatprep.subr.mxu0 0.0
    %10528 = vmatpush1.msra.mxu0 0.0
    %10529 = vmatprep.subr.mxu0 0.0
    %10530 = vmatpush1.msra.mxu0 0.0
    %10531 = vmatprep.subr.mxu0 0.0
    %10532 = vmatpush1.msra.mxu0 0.0
    %10533 = vmatprep.subr.mxu0 0.0
    %10534 = vmatpush1.msra.mxu0 0.0
    %10535 = vmatprep.mubr.f32.mxu0 0.0
    %10536 = vmatmul.mubr.f32.gmra.mrb[0].mxu0 %v10439
    %v10537 = vpop.f32.mrb[0].mxu0
    %v10538 = vadd.f32 %v10121, %v10537
    %v10539 = vpop.f32.mrb[0].mxu0
    %10540 = vmatprep.mubr.f32.mxu0 0.0
    %10541 = vmatmul.mubr.f32.gmra.mrb[0].mxu0 %v10441
    %v10542 = vpop.f32.mrb[0].mxu0
    %v10543 = vadd.f32 %v10126, %v10542
    %v10544 = vpop.f32.mrb[0].mxu0
    %10545 = vmatprep.mubr.f32.mxu0 0.0
    %10546 = vmatmul.mubr.f32.gmra.mrb[0].mxu0 %v10443
    %v10547 = vpop.f32.mrb[0].mxu0
    %v10548 = vadd.f32 %v10131, %v10547
    %v10549 = vpop.f32.mrb[0].mxu0
    %10550 = vmatprep.mubr.f32.mxu0 0.0
    %10551 = vmatmul.mubr.f32.gmra.mrb[0].mxu0 %v10445
    %v10552 = vpop.f32.mrb[0].mxu0
    %v10553 = vadd.f32 %v10136, %v10552
    %v10554 = vpop.f32.mrb[0].mxu0
    %10555 = vmatprep.mubr.f32.mxu0 0.0
    %10556 = vmatmul.mubr.f32.gmra.mrb[0].mxu0 %v10447
    %v10557 = vpop.f32.mrb[0].mxu0
    %v10558 = vadd.f32 %v10141, %v10557
    %v10559 = vpop.f32.mrb[0].mxu0
    %10560 = vmatprep.mubr.f32.mxu0 0.0
    %10561 = vmatmul.mubr.f32.gmra.mrb[0].mxu0 %v10449
    %v10562 = vpop.f32.mrb[0].mxu0
    %v10563 = vadd.f32 %v10146, %v10562
    %v10564 = vpop.f32.mrb[0].mxu0
    %10565 = vmatprep.mubr.f32.mxu0 0.0
    %10566 = vmatmul.mubr.f32.gmra.mrb[0].mxu0 %v10451
    %v10567 = vpop.f32.mrb[0].mxu0
    %v10568 = vadd.f32 %v10151, %v10567
    %v10569 = vpop.f32.mrb[0].mxu0
    %10570 = vmatprep.mubr.f32.mxu0 0.0
    %10571 = vmatmul.mubr.f32.gmra.mrb[0].mxu0 %v10453
    %v10572 = vpop.f32.mrb[0].mxu0
    %v10573 = vadd.f32 %v10156, %v10572
    %v10574 = vpop.f32.mrb[0].mxu0
    %10575 = vmatprep.mubr.f32.mxu0 0.0
    %10576 = vmatmul.mubr.f32.gmra.mrb[0].mxu0 %v10455
    %v10577 = vpop.f32.mrb[0].mxu0
    %v10578 = vadd.f32 %v10161, %v10577
    %v10579 = vpop.f32.mrb[0].mxu0
    %10580 = vmatprep.mubr.f32.mxu0 0.0
    %10581 = vmatmul.mubr.f32.gmra.mrb[0].mxu0 %v10457
    %v10582 = vpop.f32.mrb[0].mxu0
    %v10583 = vadd.f32 %v10166, %v10582
    %v10584 = vpop.f32.mrb[0].mxu0
    %10585 = vmatprep.mubr.f32.mxu0 0.0
    %10586 = vmatmul.mubr.f32.gmra.mrb[0].mxu0 %v10459
    %v10587 = vpop.f32.mrb[0].mxu0
    %v10588 = vadd.f32 %v10171, %v10587
    %v10589 = vpop.f32.mrb[0].mxu0
    %10590 = vmatprep.mubr.f32.mxu0 0.0
    %10591 = vmatmul.mubr.f32.gmra.mrb[0].mxu0 %v10461
    %v10592 = vpop.f32.mrb[0].mxu0
    %v10593 = vadd.f32 %v10176, %v10592
    %v10594 = vpop.f32.mrb[0].mxu0
    %10595 = vmatprep.mubr.f32.mxu0 0.0
    %10596 = vmatmul.mubr.f32.gmra.mrb[0].mxu0 %v10463
    %v10597 = vpop.f32.mrb[0].mxu0
    %v10598 = vadd.f32 %v10181, %v10597
    %v10599 = vpop.f32.mrb[0].mxu0
    %10600 = vmatprep.mubr.f32.mxu0 0.0
    %10601 = vmatmul.mubr.f32.gmra.mrb[0].mxu0 %v10465
    %v10602 = vpop.f32.mrb[0].mxu0
    %v10603 = vadd.f32 %v10186, %v10602
    %v10604 = vpop.f32.mrb[0].mxu0
    %10605 = vmatprep.mubr.f32.mxu0 0.0
    %10606 = vmatmul.mubr.f32.gmra.mrb[0].mxu0 %v10467
    %v10607 = vpop.f32.mrb[0].mxu0
    %v10608 = vadd.f32 %v10191, %v10607
    %v10609 = vpop.f32.mrb[0].mxu0
    %10610 = vmatprep.mubr.f32.mxu0 0.0
    %10611 = vmatmul.mubr.f32.gmra.mrb[0].mxu0 %v10469
    %v10612 = vpop.f32.mrb[0].mxu0
    %v10613 = vadd.f32 %v10196, %v10612
    %v10614 = vpop.f32.mrb[0].mxu0
    %10615 = vdwg.mxu0
    %v10616 = vlaneseq
    %v10617 = vshrl.u32 %v10616, 7
    %v10618 = vsub.s32 0, %v10617
    %v10619 = vrot.slane %v181, %v10618
    %v10620 = vadd.f32 %v10538, %v10619
    %v10621 = vadd.f32 %v10543, %v10619
    %v10622 = vadd.f32 %v10548, %v10619
    %v10623 = vadd.f32 %v10553, %v10619
    %v10624 = vadd.f32 %v10558, %v10619
    %v10625 = vadd.f32 %v10563, %v10619
    %v10626 = vadd.f32 %v10568, %v10619
    %v10627 = vadd.f32 %v10573, %v10619
    %v10628 = vadd.f32 %v10578, %v10619
    %v10629 = vadd.f32 %v10583, %v10619
    %v10630 = vadd.f32 %v10588, %v10619
    %v10631 = vadd.f32 %v10593, %v10619
    %v10632 = vadd.f32 %v10598, %v10619
    %v10633 = vadd.f32 %v10603, %v10619
    %v10634 = vadd.f32 %v10608, %v10619
    %v10635 = vadd.f32 %v10613, %v10619
    %v10636 = vmul.f32 %v10620, 0.5
    %v10637 = vmul.f32 %v10621, 0.5
    %v10638 = vmul.f32 %v10622, 0.5
    %v10639 = vmul.f32 %v10623, 0.5
    %v10640 = vmul.f32 %v10624, 0.5
    %v10641 = vmul.f32 %v10625, 0.5
    %v10642 = vmul.f32 %v10626, 0.5
    %v10643 = vmul.f32 %v10627, 0.5
    %v10644 = vmul.f32 %v10628, 0.5
    %v10645 = vmul.f32 %v10629, 0.5
    %v10646 = vmul.f32 %v10630, 0.5
    %v10647 = vmul.f32 %v10631, 0.5
    %v10648 = vmul.f32 %v10632, 0.5
    %v10649 = vmul.f32 %v10633, 0.5
    %v10650 = vmul.f32 %v10634, 0.5
    %v10651 = vmul.f32 %v10635, 0.5
    %v10652 = vmul.f32 %v10620, 0.70710677
    %v10653 = vmul.f32 %v10621, 0.70710677
    %v10654 = vmul.f32 %v10622, 0.70710677
    %v10655 = vmul.f32 %v10623, 0.70710677
    %v10656 = vmul.f32 %v10624, 0.70710677
    %v10657 = vmul.f32 %v10625, 0.70710677
    %v10658 = vmul.f32 %v10626, 0.70710677
    %v10659 = vmul.f32 %v10627, 0.70710677
    %v10660 = vmul.f32 %v10628, 0.70710677
    %v10661 = vmul.f32 %v10629, 0.70710677
    %v10662 = vmul.f32 %v10630, 0.70710677
    %v10663 = vmul.f32 %v10631, 0.70710677
    %v10664 = vmul.f32 %v10632, 0.70710677
    %v10665 = vmul.f32 %v10633, 0.70710677
    %v10666 = vmul.f32 %v10634, 0.70710677
    %v10667 = vmul.f32 %v10635, 0.70710677
    %v10668 = verf.f32.pop %v10652
    %v10669 = verf.f32.pop %v10653
    %v10670 = verf.f32.pop %v10654
    %v10671 = verf.f32.pop %v10655
    %v10672 = verf.f32.pop %v10656
    %v10673 = verf.f32.pop %v10657
    %v10674 = verf.f32.pop %v10658
    %v10675 = verf.f32.pop %v10659
    %v10676 = verf.f32.pop %v10660
    %v10677 = verf.f32.pop %v10661
    %v10678 = verf.f32.pop %v10662
    %v10679 = verf.f32.pop %v10663
    %v10680 = verf.f32.pop %v10664
    %v10681 = verf.f32.pop %v10665
    %v10682 = verf.f32.pop %v10666
    %v10683 = verf.f32.pop %v10667
    %v10684 = vadd.f32 %v10668, 1.0
    %v10685 = vadd.f32 %v10669, 1.0
    %v10686 = vadd.f32 %v10670, 1.0
    %v10687 = vadd.f32 %v10671, 1.0
    %v10688 = vadd.f32 %v10672, 1.0
    %v10689 = vadd.f32 %v10673, 1.0
    %v10690 = vadd.f32 %v10674, 1.0
    %v10691 = vadd.f32 %v10675, 1.0
    %v10692 = vadd.f32 %v10676, 1.0
    %v10693 = vadd.f32 %v10677, 1.0
    %v10694 = vadd.f32 %v10678, 1.0
    %v10695 = vadd.f32 %v10679, 1.0
    %v10696 = vadd.f32 %v10680, 1.0
    %v10697 = vadd.f32 %v10681, 1.0
    %v10698 = vadd.f32 %v10682, 1.0
    %v10699 = vadd.f32 %v10683, 1.0
    %v10700 = vmul.f32 %v10636, %v10684
    %v10701 = vmul.f32 %v10637, %v10685
    %v10702 = vmul.f32 %v10638, %v10686
    %v10703 = vmul.f32 %v10639, %v10687
    %v10704 = vmul.f32 %v10640, %v10688
    %v10705 = vmul.f32 %v10641, %v10689
    %v10706 = vmul.f32 %v10642, %v10690
    %v10707 = vmul.f32 %v10643, %v10691
    %v10708 = vmul.f32 %v10644, %v10692
    %v10709 = vmul.f32 %v10645, %v10693
    %v10710 = vmul.f32 %v10646, %v10694
    %v10711 = vmul.f32 %v10647, %v10695
    %v10712 = vmul.f32 %v10648, %v10696
    %v10713 = vmul.f32 %v10649, %v10697
    %v10714 = vmul.f32 %v10650, %v10698
    %v10715 = vmul.f32 %v10651, %v10699
    %v10716 = vlaneseq
    %v10717 = vshrl.u32 %v10716, 7
    %v10718 = vsub.s32 1, %v10717
    %v10719 = vrot.slane %v181, %v10718
    %vm10720 = vcmask 261120
    %v10722 = vsel %vm10720, %v10700, 0
    %v10725 = vsel %vm10720, %v10701, 0
    %v10728 = vsel %vm10720, %v10702, 0
    %v10731 = vsel %vm10720, %v10703, 0
    %v10734 = vsel %vm10720, %v10704, 0
    %v10737 = vsel %vm10720, %v10705, 0
    %v10740 = vsel %vm10720, %v10706, 0
    %v10743 = vsel %vm10720, %v10707, 0
    %v10746 = vsel %vm10720, %v10708, 0
    %v10749 = vsel %vm10720, %v10709, 0
    %v10752 = vsel %vm10720, %v10710, 0
    %v10755 = vsel %vm10720, %v10711, 0
    %v10758 = vsel %vm10720, %v10712, 0
    %v10761 = vsel %vm10720, %v10713, 0
    %v10764 = vsel %vm10720, %v10714, 0
    %v10767 = vsel %vm10720, %v10715, 0
    %10769 = vmatprep.subr.mxu0 0.0
    %10770 = vmatpush1.msra.mxu0 %v177
    %10771 = vmatprep.subr.mxu0 0.0
    %10772 = vmatpush1.msra.mxu0 %v178
    %10773 = vmatprep.subr.mxu0 0.0
    %10774 = vmatpush1.msra.mxu0 %v179
    %10775 = vmatprep.subr.mxu0 0.0
    %10776 = vmatpush1.msra.mxu0 %v180
    %10777 = vmatprep.subr.mxu0 0.0
    %10778 = vmatpush1.msra.mxu0 0.0
    %10779 = vmatprep.subr.mxu0 0.0
    %10780 = vmatpush1.msra.mxu0 0.0
    %10781 = vmatprep.subr.mxu0 0.0
    %10782 = vmatpush1.msra.mxu0 0.0
    %10783 = vmatprep.subr.mxu0 0.0
    %10784 = vmatpush1.msra.mxu0 0.0
    %10785 = vmatprep.subr.mxu0 0.0
    %10786 = vmatpush1.msra.mxu0 0.0
    %10787 = vmatprep.subr.mxu0 0.0
    %10788 = vmatpush1.msra.mxu0 0.0
    %10789 = vmatprep.subr.mxu0 0.0
    %10790 = vmatpush1.msra.mxu0 0.0
    %10791 = vmatprep.subr.mxu0 0.0
    %10792 = vmatpush1.msra.mxu0 0.0
    %10793 = vmatprep.subr.mxu0 0.0
    %10794 = vmatpush1.msra.mxu0 0.0
    %10795 = vmatprep.subr.mxu0 0.0
    %10796 = vmatpush1.msra.mxu0 0.0
    %10797 = vmatprep.subr.mxu0 0.0
    %10798 = vmatpush1.msra.mxu0 0.0
    %10799 = vmatprep.subr.mxu0 0.0
    %10800 = vmatpush1.msra.mxu0 0.0
    %10801 = vmatprep.subr.mxu0 0.0
    %10802 = vmatpush1.msra.mxu0 0.0
    %10803 = vmatprep.subr.mxu0 0.0
    %10804 = vmatpush1.msra.mxu0 0.0
    %10805 = vmatprep.subr.mxu0 0.0
    %10806 = vmatpush1.msra.mxu0 0.0
    %10807 = vmatprep.subr.mxu0 0.0
    %10808 = vmatpush1.msra.mxu0 0.0
    %10809 = vmatprep.subr.mxu0 0.0
    %10810 = vmatpush1.msra.mxu0 0.0
    %10811 = vmatprep.subr.mxu0 0.0
    %10812 = vmatpush1.msra.mxu0 0.0
    %10813 = vmatprep.subr.mxu0 0.0
    %10814 = vmatpush1.msra.mxu0 0.0
    %10815 = vmatprep.subr.mxu0 0.0
    %10816 = vmatpush1.msra.mxu0 0.0
    %10817 = vmatprep.subr.mxu0 0.0
    %10818 = vmatpush1.msra.mxu0 0.0
    %10819 = vmatprep.subr.mxu0 0.0
    %10820 = vmatpush1.msra.mxu0 0.0
    %10821 = vmatprep.subr.mxu0 0.0
    %10822 = vmatpush1.msra.mxu0 0.0
    %10823 = vmatprep.subr.mxu0 0.0
    %10824 = vmatpush1.msra.mxu0 0.0
    %10825 = vmatprep.subr.mxu0 0.0
    %10826 = vmatpush1.msra.mxu0 0.0
    %10827 = vmatprep.subr.mxu0 0.0
    %10828 = vmatpush1.msra.mxu0 0.0
    %10829 = vmatprep.subr.mxu0 0.0
    %10830 = vmatpush1.msra.mxu0 0.0
    %10831 = vmatprep.subr.mxu0 0.0
    %10832 = vmatpush1.msra.mxu0 0.0
    %10833 = vmatprep.mubr.f32.mxu0 0.0
    %10834 = vmatmul.mubr.f32.gmra.mrb[0].mxu0 %v10722
    %v10835 = vpop.f32.mrb[0].mxu0
    %v10836 = vadd.f32 %v10719, %v10835
    %v10837 = vpop.f32.mrb[0].mxu0
    %10838 = vmatprep.mubr.f32.mxu0 0.0
    %10839 = vmatmul.mubr.f32.gmra.mrb[0].mxu0 %v10725
    %v10840 = vpop.f32.mrb[0].mxu0
    %v10841 = vadd.f32 %v10719, %v10840
    %v10842 = vpop.f32.mrb[0].mxu0
    %10843 = vmatprep.mubr.f32.mxu0 0.0
    %10844 = vmatmul.mubr.f32.gmra.mrb[0].mxu0 %v10728
    %v10845 = vpop.f32.mrb[0].mxu0
    %v10846 = vadd.f32 %v10719, %v10845
    %v10847 = vpop.f32.mrb[0].mxu0
    %10848 = vmatprep.mubr.f32.mxu0 0.0
    %10849 = vmatmul.mubr.f32.gmra.mrb[0].mxu0 %v10731
    %v10850 = vpop.f32.mrb[0].mxu0
    %v10851 = vadd.f32 %v10719, %v10850
    %v10852 = vpop.f32.mrb[0].mxu0
    %10853 = vmatprep.mubr.f32.mxu0 0.0
    %10854 = vmatmul.mubr.f32.gmra.mrb[0].mxu0 %v10734
    %v10855 = vpop.f32.mrb[0].mxu0
    %v10856 = vadd.f32 %v10719, %v10855
    %v10857 = vpop.f32.mrb[0].mxu0
    %10858 = vmatprep.mubr.f32.mxu0 0.0
    %10859 = vmatmul.mubr.f32.gmra.mrb[0].mxu0 %v10737
    %v10860 = vpop.f32.mrb[0].mxu0
    %v10861 = vadd.f32 %v10719, %v10860
    %v10862 = vpop.f32.mrb[0].mxu0
    %10863 = vmatprep.mubr.f32.mxu0 0.0
    %10864 = vmatmul.mubr.f32.gmra.mrb[0].mxu0 %v10740
    %v10865 = vpop.f32.mrb[0].mxu0
    %v10866 = vadd.f32 %v10719, %v10865
    %v10867 = vpop.f32.mrb[0].mxu0
    %10868 = vmatprep.mubr.f32.mxu0 0.0
    %10869 = vmatmul.mubr.f32.gmra.mrb[0].mxu0 %v10743
    %v10870 = vpop.f32.mrb[0].mxu0
    %v10871 = vadd.f32 %v10719, %v10870
    %v10872 = vpop.f32.mrb[0].mxu0
    %10873 = vmatprep.mubr.f32.mxu0 0.0
    %10874 = vmatmul.mubr.f32.gmra.mrb[0].mxu0 %v10746
    %v10875 = vpop.f32.mrb[0].mxu0
    %v10876 = vadd.f32 %v10719, %v10875
    %v10877 = vpop.f32.mrb[0].mxu0
    %10878 = vmatprep.mubr.f32.mxu0 0.0
    %10879 = vmatmul.mubr.f32.gmra.mrb[0].mxu0 %v10749
    %v10880 = vpop.f32.mrb[0].mxu0
    %v10881 = vadd.f32 %v10719, %v10880
    %v10882 = vpop.f32.mrb[0].mxu0
    %10883 = vmatprep.mubr.f32.mxu0 0.0
    %10884 = vmatmul.mubr.f32.gmra.mrb[0].mxu0 %v10752
    %v10885 = vpop.f32.mrb[0].mxu0
    %v10886 = vadd.f32 %v10719, %v10885
    %v10887 = vpop.f32.mrb[0].mxu0
    %10888 = vmatprep.mubr.f32.mxu0 0.0
    %10889 = vmatmul.mubr.f32.gmra.mrb[0].mxu0 %v10755
    %v10890 = vpop.f32.mrb[0].mxu0
    %v10891 = vadd.f32 %v10719, %v10890
    %v10892 = vpop.f32.mrb[0].mxu0
    %10893 = vmatprep.mubr.f32.mxu0 0.0
    %10894 = vmatmul.mubr.f32.gmra.mrb[0].mxu0 %v10758
    %v10895 = vpop.f32.mrb[0].mxu0
    %v10896 = vadd.f32 %v10719, %v10895
    %v10897 = vpop.f32.mrb[0].mxu0
    %10898 = vmatprep.mubr.f32.mxu0 0.0
    %10899 = vmatmul.mubr.f32.gmra.mrb[0].mxu0 %v10761
    %v10900 = vpop.f32.mrb[0].mxu0
    %v10901 = vadd.f32 %v10719, %v10900
    %v10902 = vpop.f32.mrb[0].mxu0
    %10903 = vmatprep.mubr.f32.mxu0 0.0
    %10904 = vmatmul.mubr.f32.gmra.mrb[0].mxu0 %v10764
    %v10905 = vpop.f32.mrb[0].mxu0
    %v10906 = vadd.f32 %v10719, %v10905
    %v10907 = vpop.f32.mrb[0].mxu0
    %10908 = vmatprep.mubr.f32.mxu0 0.0
    %10909 = vmatmul.mubr.f32.gmra.mrb[0].mxu0 %v10767
    %v10910 = vpop.f32.mrb[0].mxu0
    %v10911 = vadd.f32 %v10719, %v10910
    %v10912 = vpop.f32.mrb[0].mxu0
    %10913 = vdwg.mxu0
    %v10914 = vmul.f32 %v10836, 0.5
    %v10915 = vmul.f32 %v10841, 0.5
    %v10916 = vmul.f32 %v10846, 0.5
    %v10917 = vmul.f32 %v10851, 0.5
    %v10918 = vmul.f32 %v10856, 0.5
    %v10919 = vmul.f32 %v10861, 0.5
    %v10920 = vmul.f32 %v10866, 0.5
    %v10921 = vmul.f32 %v10871, 0.5
    %v10922 = vmul.f32 %v10876, 0.5
    %v10923 = vmul.f32 %v10881, 0.5
    %v10924 = vmul.f32 %v10886, 0.5
    %v10925 = vmul.f32 %v10891, 0.5
    %v10926 = vmul.f32 %v10896, 0.5
    %v10927 = vmul.f32 %v10901, 0.5
    %v10928 = vmul.f32 %v10906, 0.5
    %v10929 = vmul.f32 %v10911, 0.5
    %v10930 = vmul.f32 %v10836, 0.70710677
    %v10931 = vmul.f32 %v10841, 0.70710677
    %v10932 = vmul.f32 %v10846, 0.70710677
    %v10933 = vmul.f32 %v10851, 0.70710677
    %v10934 = vmul.f32 %v10856, 0.70710677
    %v10935 = vmul.f32 %v10861, 0.70710677
    %v10936 = vmul.f32 %v10866, 0.70710677
    %v10937 = vmul.f32 %v10871, 0.70710677
    %v10938 = vmul.f32 %v10876, 0.70710677
    %v10939 = vmul.f32 %v10881, 0.70710677
    %v10940 = vmul.f32 %v10886, 0.70710677
    %v10941 = vmul.f32 %v10891, 0.70710677
    %v10942 = vmul.f32 %v10896, 0.70710677
    %v10943 = vmul.f32 %v10901, 0.70710677
    %v10944 = vmul.f32 %v10906, 0.70710677
    %v10945 = vmul.f32 %v10911, 0.70710677
    %v10946 = verf.f32.pop %v10930
    %v10947 = verf.f32.pop %v10931
    %v10948 = verf.f32.pop %v10932
    %v10949 = verf.f32.pop %v10933
    %v10950 = verf.f32.pop %v10934
    %v10951 = verf.f32.pop %v10935
    %v10952 = verf.f32.pop %v10936
    %v10953 = verf.f32.pop %v10937
    %v10954 = verf.f32.pop %v10938
    %v10955 = verf.f32.pop %v10939
    %v10956 = verf.f32.pop %v10940
    %v10957 = verf.f32.pop %v10941
    %v10958 = verf.f32.pop %v10942
    %v10959 = verf.f32.pop %v10943
    %v10960 = verf.f32.pop %v10944
    %v10961 = verf.f32.pop %v10945
    %v10962 = vadd.f32 %v10946, 1.0
    %v10963 = vadd.f32 %v10947, 1.0
    %v10964 = vadd.f32 %v10948, 1.0
    %v10965 = vadd.f32 %v10949, 1.0
    %v10966 = vadd.f32 %v10950, 1.0
    %v10967 = vadd.f32 %v10951, 1.0
    %v10968 = vadd.f32 %v10952, 1.0
    %v10969 = vadd.f32 %v10953, 1.0
    %v10970 = vadd.f32 %v10954, 1.0
    %v10971 = vadd.f32 %v10955, 1.0
    %v10972 = vadd.f32 %v10956, 1.0
    %v10973 = vadd.f32 %v10957, 1.0
    %v10974 = vadd.f32 %v10958, 1.0
    %v10975 = vadd.f32 %v10959, 1.0
    %v10976 = vadd.f32 %v10960, 1.0
    %v10977 = vadd.f32 %v10961, 1.0
    %v10978 = vmul.f32 %v10914, %v10962
    %v10979 = vmul.f32 %v10915, %v10963
    %v10980 = vmul.f32 %v10916, %v10964
    %v10981 = vmul.f32 %v10917, %v10965
    %v10982 = vmul.f32 %v10918, %v10966
    %v10983 = vmul.f32 %v10919, %v10967
    %v10984 = vmul.f32 %v10920, %v10968
    %v10985 = vmul.f32 %v10921, %v10969
    %v10986 = vmul.f32 %v10922, %v10970
    %v10987 = vmul.f32 %v10923, %v10971
    %v10988 = vmul.f32 %v10924, %v10972
    %v10989 = vmul.f32 %v10925, %v10973
    %v10990 = vmul.f32 %v10926, %v10974
    %v10991 = vmul.f32 %v10927, %v10975
    %v10992 = vmul.f32 %v10928, %v10976
    %v10993 = vmul.f32 %v10929, %v10977
    %10994 = vxpose.xlu0.b32.start [1/16] %v10978, 128
    %10995 = vxpose.xlu0.b32.cont [2/16] %v10979, 128
    %10996 = vxpose.xlu0.b32.cont [3/16] %v10980, 128
    %10997 = vxpose.xlu0.b32.cont [4/16] %v10981, 128
    %10998 = vxpose.xlu0.b32.cont [5/16] %v10982, 128
    %10999 = vxpose.xlu0.b32.cont [6/16] %v10983, 128
    %11000 = vxpose.xlu0.b32.cont [7/16] %v10984, 128
    %11001 = vxpose.xlu0.b32.cont [8/16] %v10985, 128
    %11002 = vxpose.xlu0.b32.cont [9/16] %v10986, 128
    %11003 = vxpose.xlu0.b32.cont [10/16] %v10987, 128
    %11004 = vxpose.xlu0.b32.cont [11/16] %v10988, 128
    %11005 = vxpose.xlu0.b32.cont [12/16] %v10989, 128
    %11006 = vxpose.xlu0.b32.cont [13/16] %v10990, 128
    %11007 = vxpose.xlu0.b32.cont [14/16] %v10991, 128
    %11008 = vxpose.xlu0.b32.cont [15/16] %v10992, 128
    %11009 = vxpose.xlu0.b32.end [16/16] %v10993, 128
    %v11010 = vpop.trf.xlu0
    %v11011 = vpop.trf.xlu0
    %v11012 = vpop.trf.xlu0
    %v11013 = vpop.trf.xlu0
    %v11014 = vpop.trf.xlu0
    %v11015 = vpop.trf.xlu0
    %v11016 = vpop.trf.xlu0
    %v11017 = vpop.trf.xlu0
    %v11018 = vpop.trf.xlu0
    %v11019 = vpop.trf.xlu0
    %v11020 = vpop.trf.xlu0
    %v11021 = vpop.trf.xlu0
    %v11022 = vpop.trf.xlu0
    %v11023 = vpop.trf.xlu0
    %v11024 = vpop.trf.xlu0
    %v11025 = vpop.trf.xlu0
    %11027 = vset.pattern.permute.xlu0 0
    %11028 = vperm.xlu0 %11027, %v182
    %v11029 = vpop.permute.xlu0 %11028
    %11032 = vset.pattern.permute.xlu0 0
    %11033 = vperm.xlu0 %11032, %v183
    %v11034 = vpop.permute.xlu0 %11033
    %11037 = vset.pattern.permute.xlu0 0
    %11038 = vperm.xlu0 %11037, %v184
    %v11039 = vpop.permute.xlu0 %11038
    %11042 = vset.pattern.permute.xlu0 0
    %11043 = vperm.xlu0 %11042, %v185
    %v11044 = vpop.permute.xlu0 %11043
    %v11046 = vmul.f32 %v11010, %v11029
    %v11047 = vmul.f32 %v11011, %v11034
    %v11048 = vmul.f32 %v11012, %v11039
    %v11049 = vmul.f32 %v11013, %v11044
    %v11050 = vadd.f32 %v11046, %v11047
    %v11051 = vadd.f32 %v11050, %v11048
    %v11052 = vadd.f32 %v11051, %v11049
    %v11053 = vrot.slane %v11052, 4
    %v11054 = vadd.f32 %v11052, %v11053
    %v11055 = vrot.slane %v11054, 2
    %v11056 = vadd.f32 %v11054, %v11055
    %v11057 = vrot.slane %v11056, 1
    %v11058 = vadd.f32 %v11056, %v11057
    %11060 = vset.pattern.permute.xlu0 0
    %11061 = vperm.xlu0 %11060, %v186
    %v11062 = vpop.permute.xlu0 %11061
    %v11064 = vadd.f32 %v11058, %v11062
    %v11065 = vmul.f32 %v11064, 0.7
    %v11066 = vld [vmem:[%s1] sm:$0x1]
    %v11067 = vadd.f32 %v11065, %v11066
    %11068 = vst [vmem:[#allocation2] sm:$0x1] %v11067
    // Predicated region
    $region30: #{tpu_custom_call.1} parent=1 // pred_check
      _
    $region31: #{tpu_custom_call.1} parent=1 // pred_check_branch
      %11070 = sbr.rel (0) target = $region33
    $region32: #{tpu_custom_call.1} parent=1 // pred_region
      %s11072 = ssub.s32 16, 16
      %11073 = vsyncadd [#allocation3], %s11072
      %s11075 = sshll.u32 [#allocation2], 4
      %s11076 = int_to_ptr.vmem [resolvable:$true] %s11075
      %11078 = dma.vmem_to_hbm [thread:$0]  %s11076, 16, %s7, [#allocation3]
    $region33: #{tpu_custom_call.1} parent=1 // pred_fallthru
      _
    // Predicated region
    $region34: #{tpu_custom_call.1} parent=1 // pred_check
      _
    $region35: #{tpu_custom_call.1} parent=1 // pred_check_branch
      %11080 = sbr.rel (0) target = $region37
    $region36: #{tpu_custom_call.1} parent=1 // pred_region
      %11081 = dma.done [#allocation3], 16
    $region37: #{tpu_custom_call.1} parent=1 // pred_fallthru
      _
    %11082 = vsyncpa [#allocation3], 1

</llo_original>
